<compile_context>
chip_gen: v7x
topology: tpu7x:2x2x1
jax: 0.10.0
libtpu: 0.0.40
codegen_flags: <defaults>
</compile_context>

<pallas_src>
import jax
import jax.numpy as jnp
from jax import lax
from jax.experimental import pallas as pl
from jax.experimental.pallas import tpu as pltpu

SUBLANE = 8
LANE = 128
NEG_INF = -1e30


def _round_up(n, m):
    return ((n + m - 1) // m) * m


# ----------------------------- kernel --------------------------------------- #

def _lstm_step(xh_bf16, w_ref, b_ref, c, hp):
    """xh:(B,E_P+H_P) bf16, w:(E_P+H_P,4*H_P) bf16, b:(1,4*H_P) f32, c:(B,H_P) f32."""
    gates = jnp.dot(xh_bf16, w_ref[...],
                    preferred_element_type=jnp.float32) + b_ref[...]
    # Each gate occupies its own 128-lane-aligned tile -> no lane rotates.
    i = jax.nn.sigmoid(gates[:, 0 * hp:1 * hp])
    f = jax.nn.sigmoid(gates[:, 1 * hp:2 * hp])
    g = jnp.tanh(gates[:, 2 * hp:3 * hp])
    o = jax.nn.sigmoid(gates[:, 3 * hp:4 * hp])
    c_new = f * c + i * g
    h_new = o * jnp.tanh(c_new)
    return h_new, c_new


def seq2seq_kernel(flags_ref,                         # SMEM (T-1,) int32
                   tgt_ref,                           # VMEM (T-1,B_P,1) int32
                   xsrc_ref,                          # VMEM (S,B_P,E_P) bf16
                   w_enc_ref, b_enc_ref,              # VMEM enc LSTM
                   emb_ref,                           # VMEM (V_P,E_P) bf16
                   w_dec_ref, b_dec_ref,              # VMEM dec LSTM
                   fcw_ref, fcb_ref,                  # VMEM fc head
                   out_ref):                          # VMEM (T-1,B_P,V_P) f32
    S, B_P, _ = xsrc_ref.shape
    T1 = out_ref.shape[0]
    H_P = b_enc_ref.shape[1] // 4
    V_P = fcw_ref.shape[1]

    # ---------------- encoder: fully unrolled time loop -------------------- #
    h = jnp.zeros((B_P, H_P), jnp.float32)
    c = jnp.zeros((B_P, H_P), jnp.float32)
    for t in range(S):
        xh = jnp.concatenate([xsrc_ref[t], h.astype(jnp.bfloat16)], axis=-1)
        h, c = _lstm_step(xh, w_enc_ref, b_enc_ref, c, H_P)

    # ---------------- decoder: fully unrolled time loop -------------------- #
    col_i = lax.broadcasted_iota(jnp.int32, (B_P, V_P), 1)
    col_f = col_i.astype(jnp.float32)
    prev_tok = jnp.zeros((B_P, 1), jnp.int32)          # never used at step 0

    for s in range(T1):
        # Teacher-forcing select at the token-id level (flags[0] == 1).
        tf = flags_ref[s]
        tok = jnp.where(tf > 0, tgt_ref[s], prev_tok)            # (B_P,1) int32

        # One-hot via iota compare (bf16 is lossless for 0/1), embed on MXU.
        x_oh = (col_i == tok).astype(jnp.bfloat16)                # (B_P,V_P)
        x_emb = jnp.dot(x_oh, emb_ref[...],
                        preferred_element_type=jnp.float32)       # (B_P,E_P)

        xh = jnp.concatenate([x_emb.astype(jnp.bfloat16),
                              h.astype(jnp.bfloat16)], axis=-1)
        h, c = _lstm_step(xh, w_dec_ref, b_dec_ref, c, H_P)

        # FC head; padded vocab columns carry a -1e30 bias.
        logits = jnp.dot(h.astype(jnp.bfloat16), fcw_ref[...],
                         preferred_element_type=jnp.float32) + fcb_ref[...]
        out_ref[s] = logits                                       # t = s + 1

        # Greedy argmax (first max wins) feeding the next step.
        mx = jnp.max(logits, axis=-1, keepdims=True)
        cand = jnp.where(logits == mx, col_f, jnp.float32(V_P))
        prev_tok = jnp.min(cand, axis=-1, keepdims=True).astype(jnp.int32)


# ----------------------------- host-side packing ---------------------------- #

def _pack_lstm(wih, whh, bias, E, H, E_P, H_P):
    """Stack [W_ih; W_hh] with rows padded to E_P/H_P and each gate on its own
    128-lane tile.  Padded rows/columns/bias are zero so padded h/c lanes stay 0."""
    w = jnp.zeros((E_P + H_P, 4 * H_P), jnp.float32)
    b = jnp.zeros((1, 4 * H_P), jnp.float32)
    for k in range(4):
        w = w.at[:E, k * H_P:k * H_P + H].set(wih[:, k * H:(k + 1) * H])
        w = w.at[E_P:E_P + H, k * H_P:k * H_P + H].set(whh[:, k * H:(k + 1) * H])
        b = b.at[:, k * H_P:k * H_P + H].set(bias[:, k * H:(k + 1) * H])
    return w.astype(jnp.bfloat16), b


# ----------------------------- model ---------------------------------------- #

def init_params(key, src_vocab, tgt_vocab, emb_dim, hidden_dim):
    ks = jax.random.split(key, 10)
    u = lambda k, shape: jax.random.uniform(k, shape, jnp.float32, -0.1, 0.1)
    return {
        # encoder
        "enc_emb": u(ks[0], (src_vocab, emb_dim)),
        "enc_wih": u(ks[1], (emb_dim, 4 * hidden_dim)),
        "enc_whh": u(ks[2], (hidden_dim, 4 * hidden_dim)),
        "enc_b":   u(ks[3], (1, 4 * hidden_dim)),
        # decoder
        "dec_emb": u(ks[4], (tgt_vocab, emb_dim)),
        "dec_wih": u(ks[5], (emb_dim, 4 * hidden_dim)),
        "dec_whh": u(ks[6], (hidden_dim, 4 * hidden_dim)),
        "dec_b":   u(ks[7], (1, 4 * hidden_dim)),
        "fc_w":    u(ks[8], (hidden_dim, tgt_vocab)),
        "fc_b":    u(ks[9], (1, tgt_vocab)),
    }


def seq2seq_forward(params, source, target, teacher_forcing_ratio, tf_key):
    """source:(B,S) int32, target:(B,T) int32 -> (T, B, V) float32 logits."""
    B, _ = source.shape
    _, T = target.shape
    E = params["enc_emb"].shape[1]
    H = params["enc_whh"].shape[0]
    V = params["fc_w"].shape[1]

    B_P = _round_up(B, SUBLANE)    # sublane-aligned batch
    E_P = _round_up(E, LANE)       # lane-aligned embedding dim
    H_P = _round_up(H, LANE)       # lane-aligned hidden dim (gate tiles)
    V_P = _round_up(V, LANE)       # lane-aligned vocab (lane-dense logits)
    cdt = jnp.bfloat16             # MXU operand dtype (f32 accumulation)

    # Encoder embeddings: parallel gather on host (off the serial path).
    x_src = jnp.take(params["enc_emb"], source, axis=0)            # (B,S,E)
    x_src = jnp.transpose(x_src, (1, 0, 2))                        # (S,B,E)
    x_src = jnp.pad(x_src, ((0, 0), (0, B_P - B), (0, E_P - E))).astype(cdt)

    w_enc, b_enc = _pack_lstm(params["enc_wih"], params["enc_whh"],
                              params["enc_b"], E, H, E_P, H_P)
    w_dec, b_dec = _pack_lstm(params["dec_wih"], params["dec_whh"],
                              params["dec_b"], E, H, E_P, H_P)

    emb_dec = jnp.pad(params["dec_emb"], ((0, V_P - V), (0, E_P - E))).astype(cdt)
    fc_w = jnp.pad(params["fc_w"], ((0, H_P - H), (0, V_P - V))).astype(cdt)
    fc_b = jnp.pad(params["fc_b"], ((0, 0), (0, V_P - V)),
                   constant_values=NEG_INF)                        # mask padded vocab

    # Teacher-forced token ids for decoder steps 1..T-1 (columns 0..T-2).
    tgt_tok = jnp.transpose(target[:, :T - 1], (1, 0))[..., None]  # (T-1,B,1)
    tgt_tok = jnp.pad(tgt_tok, ((0, 0), (0, B_P - B), (0, 0))).astype(jnp.int32)

    # One Bernoulli draw per decode step (like torch.rand(1) per step),
    # precomputed so the whole forward is a single uninterrupted kernel.
    draws = jax.random.uniform(tf_key, (T - 1,))
    flags = (draws < teacher_forcing_ratio).astype(jnp.int32)
    flags = flags.at[0].set(1)     # step t=1 always consumes target[:, 0]

    vmem = pl.BlockSpec(memory_space=pltpu.MemorySpace.VMEM)
    smem = pl.BlockSpec(memory_space=pltpu.MemorySpace.SMEM)

    logits = pl.pallas_call(
        seq2seq_kernel,
        out_shape=jax.ShapeDtypeStruct((T - 1, B_P, V_P), jnp.float32),
        in_specs=[smem,            # flags
                  vmem,            # tgt token ids
                  vmem,            # x_src
                  vmem, vmem,      # encoder LSTM weight / bias
                  vmem,            # decoder embedding
                  vmem, vmem,      # decoder LSTM weight / bias
                  vmem, vmem],     # fc weight / bias
        out_specs=vmem,
        compiler_params=pltpu.CompilerParams(
            vmem_limit_bytes=32 * 1024 * 1024),   # explicit (v5e default is 16 MiB)
    )(flags, tgt_tok, x_src, w_enc, b_enc, emb_dec, w_dec, b_dec, fc_w, fc_b)

    # Row t=0 is all zeros, exactly like the PyTorch reference.
    return jnp.concatenate(
        [jnp.zeros((1, B, V), jnp.float32), logits[:, :B, :V]], axis=0)


# ----------------------------- main ------------------------------------------ #

if __name__ == "__main__":
    BATCH = 2
    SRC_LEN = 8
    TGT_LEN = 8
    EMB_DIM = 32
    HIDDEN = 32
    SRC_VOCAB = 48
    TGT_VOCAB = 64

    root = jax.random.PRNGKey(0)
    k_params, k_src, k_tgt, k_tf = jax.random.split(root, 4)

    params = init_params(k_params, SRC_VOCAB, TGT_VOCAB, EMB_DIM, HIDDEN)
    source = jax.random.randint(k_src, (BATCH, SRC_LEN), 0, SRC_VOCAB, jnp.int32)
    target = jax.random.randint(k_tgt, (BATCH, TGT_LEN), 0, TGT_VOCAB, jnp.int32)

    fwd = jax.jit(seq2seq_forward)
    outputs = jax.block_until_ready(fwd(params, source, target, 0.5, k_tf))

    assert outputs.shape == (TGT_LEN, BATCH, TGT_VOCAB)
    assert bool(jnp.all(outputs[0] == 0.0))          # t=0 row untouched, like PyTorch
    assert bool(jnp.all(jnp.isfinite(outputs)))
    print("KERNEL_OK")
</pallas_src>

<mosaic_0001>
module attributes {stable_mosaic.version = 11 : i64} {
  func.func @seq2seq_kernel(%arg0: memref<7xi32, #tpu.memory_space<smem>>, %arg1: memref<7x8x1xi32, #tpu.memory_space<vmem>>, %arg2: memref<8x8x128xbf16, #tpu.memory_space<vmem>>, %arg3: memref<256x512xbf16, #tpu.memory_space<vmem>>, %arg4: memref<1x512xf32, #tpu.memory_space<vmem>>, %arg5: memref<128x128xbf16, #tpu.memory_space<vmem>>, %arg6: memref<256x512xbf16, #tpu.memory_space<vmem>>, %arg7: memref<1x512xf32, #tpu.memory_space<vmem>>, %arg8: memref<128x128xbf16, #tpu.memory_space<vmem>>, %arg9: memref<1x128xf32, #tpu.memory_space<vmem>>, %arg10: memref<7x8x128xf32, #tpu.memory_space<vmem>>) attributes {dimension_semantics = [], scalar_prefetch = 0 : i64, scratch_operands = 0 : i64, tpu.core_type = #tpu.core_type<tc>} {
    %cst = arith.constant 0.000000e+00 : f32
    %0 = vector.broadcast %cst : f32 to vector<8x128xf32>
    %cst_0 = arith.constant 0.000000e+00 : f32
    %1 = vector.broadcast %cst_0 : f32 to vector<8x128xf32>
    %c0 = arith.constant 0 : index
    %c0_1 = arith.constant 0 : index
    %c0_2 = arith.constant 0 : index
    %2 = vector.load %arg2[%c0, %c0_1, %c0_2] : memref<8x8x128xbf16, #tpu.memory_space<vmem>>, vector<1x8x128xbf16>
    %3 = vector.shape_cast %2 : vector<1x8x128xbf16> to vector<8x128xbf16>
    %4 = arith.truncf %0 : vector<8x128xf32> to vector<8x128xbf16>
    %5 = tpu.concatenate %3, %4 in 1 : vector<8x128xbf16>, vector<8x128xbf16> -> vector<8x256xbf16>
    %c0_3 = arith.constant 0 : index
    %c0_4 = arith.constant 0 : index
    %6 = vector.load %arg3[%c0_3, %c0_4] : memref<256x512xbf16, #tpu.memory_space<vmem>>, vector<256x512xbf16>
    %cst_5 = arith.constant dense<0.000000e+00> : vector<8x512xf32>
    %7 = tpu.matmul %5, %6, %cst_5 {dimension_numbers = #tpu.dot_dimension_numbers<[1], [0], [0], [1], [0, 0, 1, 1], [], []>} : vector<8x256xbf16>, vector<256x512xbf16>, vector<8x512xf32> -> vector<8x512xf32>
    %c0_6 = arith.constant 0 : index
    %c0_7 = arith.constant 0 : index
    %8 = vector.load %arg4[%c0_6, %c0_7] : memref<1x512xf32, #tpu.memory_space<vmem>>, vector<1x512xf32>
    %9 = vector.broadcast %8 : vector<1x512xf32> to vector<8x512xf32>
    %10 = arith.addf %7, %9 : vector<8x512xf32>
    %11 = vector.extract_strided_slice %10 {offsets = [0, 0], sizes = [8, 128], strides = [1, 1]} : vector<8x512xf32> to vector<8x128xf32>
    %12 = arith.negf %11 : vector<8x128xf32>
    %13 = math.exp %12 : vector<8x128xf32>
    %cst_8 = arith.constant 1.000000e+00 : f32
    %14 = vector.broadcast %cst_8 : f32 to vector<8x128xf32>
    %15 = arith.addf %14, %13 : vector<8x128xf32>
    %16 = arith.divf %14, %15 : vector<8x128xf32>
    %17 = vector.extract_strided_slice %10 {offsets = [0, 128], sizes = [8, 128], strides = [1, 1]} : vector<8x512xf32> to vector<8x128xf32>
    %18 = arith.negf %17 : vector<8x128xf32>
    %19 = math.exp %18 : vector<8x128xf32>
    %cst_9 = arith.constant 1.000000e+00 : f32
    %20 = vector.broadcast %cst_9 : f32 to vector<8x128xf32>
    %21 = arith.addf %20, %19 : vector<8x128xf32>
    %22 = arith.divf %20, %21 : vector<8x128xf32>
    %23 = vector.extract_strided_slice %10 {offsets = [0, 256], sizes = [8, 128], strides = [1, 1]} : vector<8x512xf32> to vector<8x128xf32>
    %24 = math.tanh %23 : vector<8x128xf32>
    %25 = vector.extract_strided_slice %10 {offsets = [0, 384], sizes = [8, 128], strides = [1, 1]} : vector<8x512xf32> to vector<8x128xf32>
    %26 = arith.negf %25 : vector<8x128xf32>
    %27 = math.exp %26 : vector<8x128xf32>
    %cst_10 = arith.constant 1.000000e+00 : f32
    %28 = vector.broadcast %cst_10 : f32 to vector<8x128xf32>
    %29 = arith.addf %28, %27 : vector<8x128xf32>
    %30 = arith.divf %28, %29 : vector<8x128xf32>
    %31 = arith.mulf %22, %1 : vector<8x128xf32>
    %32 = arith.mulf %16, %24 : vector<8x128xf32>
    %33 = arith.addf %31, %32 : vector<8x128xf32>
    %34 = math.tanh %33 : vector<8x128xf32>
    %35 = arith.mulf %30, %34 : vector<8x128xf32>
    %c1 = arith.constant 1 : index
    %c0_11 = arith.constant 0 : index
    %c0_12 = arith.constant 0 : index
    %36 = vector.load %arg2[%c1, %c0_11, %c0_12] : memref<8x8x128xbf16, #tpu.memory_space<vmem>>, vector<1x8x128xbf16>
    %37 = vector.shape_cast %36 : vector<1x8x128xbf16> to vector<8x128xbf16>
    %38 = arith.truncf %35 : vector<8x128xf32> to vector<8x128xbf16>
    %39 = tpu.concatenate %37, %38 in 1 : vector<8x128xbf16>, vector<8x128xbf16> -> vector<8x256xbf16>
    %c0_13 = arith.constant 0 : index
    %c0_14 = arith.constant 0 : index
    %40 = vector.load %arg3[%c0_13, %c0_14] : memref<256x512xbf16, #tpu.memory_space<vmem>>, vector<256x512xbf16>
    %cst_15 = arith.constant dense<0.000000e+00> : vector<8x512xf32>
    %41 = tpu.matmul %39, %40, %cst_15 {dimension_numbers = #tpu.dot_dimension_numbers<[1], [0], [0], [1], [0, 0, 1, 1], [], []>} : vector<8x256xbf16>, vector<256x512xbf16>, vector<8x512xf32> -> vector<8x512xf32>
    %c0_16 = arith.constant 0 : index
    %c0_17 = arith.constant 0 : index
    %42 = vector.load %arg4[%c0_16, %c0_17] : memref<1x512xf32, #tpu.memory_space<vmem>>, vector<1x512xf32>
    %43 = vector.broadcast %42 : vector<1x512xf32> to vector<8x512xf32>
    %44 = arith.addf %41, %43 : vector<8x512xf32>
    %45 = vector.extract_strided_slice %44 {offsets = [0, 0], sizes = [8, 128], strides = [1, 1]} : vector<8x512xf32> to vector<8x128xf32>
    %46 = arith.negf %45 : vector<8x128xf32>
    %47 = math.exp %46 : vector<8x128xf32>
    %cst_18 = arith.constant 1.000000e+00 : f32
    %48 = vector.broadcast %cst_18 : f32 to vector<8x128xf32>
    %49 = arith.addf %48, %47 : vector<8x128xf32>
    %50 = arith.divf %48, %49 : vector<8x128xf32>
    %51 = vector.extract_strided_slice %44 {offsets = [0, 128], sizes = [8, 128], strides = [1, 1]} : vector<8x512xf32> to vector<8x128xf32>
    %52 = arith.negf %51 : vector<8x128xf32>
    %53 = math.exp %52 : vector<8x128xf32>
    %cst_19 = arith.constant 1.000000e+00 : f32
    %54 = vector.broadcast %cst_19 : f32 to vector<8x128xf32>
    %55 = arith.addf %54, %53 : vector<8x128xf32>
    %56 = arith.divf %54, %55 : vector<8x128xf32>
    %57 = vector.extract_strided_slice %44 {offsets = [0, 256], sizes = [8, 128], strides = [1, 1]} : vector<8x512xf32> to vector<8x128xf32>
    %58 = math.tanh %57 : vector<8x128xf32>
    %59 = vector.extract_strided_slice %44 {offsets = [0, 384], sizes = [8, 128], strides = [1, 1]} : vector<8x512xf32> to vector<8x128xf32>
    %60 = arith.negf %59 : vector<8x128xf32>
    %61 = math.exp %60 : vector<8x128xf32>
    %cst_20 = arith.constant 1.000000e+00 : f32
    %62 = vector.broadcast %cst_20 : f32 to vector<8x128xf32>
    %63 = arith.addf %62, %61 : vector<8x128xf32>
    %64 = arith.divf %62, %63 : vector<8x128xf32>
    %65 = arith.mulf %56, %33 : vector<8x128xf32>
    %66 = arith.mulf %50, %58 : vector<8x128xf32>
    %67 = arith.addf %65, %66 : vector<8x128xf32>
    %68 = math.tanh %67 : vector<8x128xf32>
    %69 = arith.mulf %64, %68 : vector<8x128xf32>
    %c2 = arith.constant 2 : index
    %c0_21 = arith.constant 0 : index
    %c0_22 = arith.constant 0 : index
    %70 = vector.load %arg2[%c2, %c0_21, %c0_22] : memref<8x8x128xbf16, #tpu.memory_space<vmem>>, vector<1x8x128xbf16>
    %71 = vector.shape_cast %70 : vector<1x8x128xbf16> to vector<8x128xbf16>
    %72 = arith.truncf %69 : vector<8x128xf32> to vector<8x128xbf16>
    %73 = tpu.concatenate %71, %72 in 1 : vector<8x128xbf16>, vector<8x128xbf16> -> vector<8x256xbf16>
    %c0_23 = arith.constant 0 : index
    %c0_24 = arith.constant 0 : index
    %74 = vector.load %arg3[%c0_23, %c0_24] : memref<256x512xbf16, #tpu.memory_space<vmem>>, vector<256x512xbf16>
    %cst_25 = arith.constant dense<0.000000e+00> : vector<8x512xf32>
    %75 = tpu.matmul %73, %74, %cst_25 {dimension_numbers = #tpu.dot_dimension_numbers<[1], [0], [0], [1], [0, 0, 1, 1], [], []>} : vector<8x256xbf16>, vector<256x512xbf16>, vector<8x512xf32> -> vector<8x512xf32>
    %c0_26 = arith.constant 0 : index
    %c0_27 = arith.constant 0 : index
    %76 = vector.load %arg4[%c0_26, %c0_27] : memref<1x512xf32, #tpu.memory_space<vmem>>, vector<1x512xf32>
    %77 = vector.broadcast %76 : vector<1x512xf32> to vector<8x512xf32>
    %78 = arith.addf %75, %77 : vector<8x512xf32>
    %79 = vector.extract_strided_slice %78 {offsets = [0, 0], sizes = [8, 128], strides = [1, 1]} : vector<8x512xf32> to vector<8x128xf32>
    %80 = arith.negf %79 : vector<8x128xf32>
    %81 = math.exp %80 : vector<8x128xf32>
    %cst_28 = arith.constant 1.000000e+00 : f32
    %82 = vector.broadcast %cst_28 : f32 to vector<8x128xf32>
    %83 = arith.addf %82, %81 : vector<8x128xf32>
    %84 = arith.divf %82, %83 : vector<8x128xf32>
    %85 = vector.extract_strided_slice %78 {offsets = [0, 128], sizes = [8, 128], strides = [1, 1]} : vector<8x512xf32> to vector<8x128xf32>
    %86 = arith.negf %85 : vector<8x128xf32>
    %87 = math.exp %86 : vector<8x128xf32>
    %cst_29 = arith.constant 1.000000e+00 : f32
    %88 = vector.broadcast %cst_29 : f32 to vector<8x128xf32>
    %89 = arith.addf %88, %87 : vector<8x128xf32>
    %90 = arith.divf %88, %89 : vector<8x128xf32>
    %91 = vector.extract_strided_slice %78 {offsets = [0, 256], sizes = [8, 128], strides = [1, 1]} : vector<8x512xf32> to vector<8x128xf32>
    %92 = math.tanh %91 : vector<8x128xf32>
    %93 = vector.extract_strided_slice %78 {offsets = [0, 384], sizes = [8, 128], strides = [1, 1]} : vector<8x512xf32> to vector<8x128xf32>
    %94 = arith.negf %93 : vector<8x128xf32>
    %95 = math.exp %94 : vector<8x128xf32>
    %cst_30 = arith.constant 1.000000e+00 : f32
    %96 = vector.broadcast %cst_30 : f32 to vector<8x128xf32>
    %97 = arith.addf %96, %95 : vector<8x128xf32>
    %98 = arith.divf %96, %97 : vector<8x128xf32>
    %99 = arith.mulf %90, %67 : vector<8x128xf32>
    %100 = arith.mulf %84, %92 : vector<8x128xf32>
    %101 = arith.addf %99, %100 : vector<8x128xf32>
    %102 = math.tanh %101 : vector<8x128xf32>
    %103 = arith.mulf %98, %102 : vector<8x128xf32>
    %c3 = arith.constant 3 : index
    %c0_31 = arith.constant 0 : index
    %c0_32 = arith.constant 0 : index
    %104 = vector.load %arg2[%c3, %c0_31, %c0_32] : memref<8x8x128xbf16, #tpu.memory_space<vmem>>, vector<1x8x128xbf16>
    %105 = vector.shape_cast %104 : vector<1x8x128xbf16> to vector<8x128xbf16>
    %106 = arith.truncf %103 : vector<8x128xf32> to vector<8x128xbf16>
    %107 = tpu.concatenate %105, %106 in 1 : vector<8x128xbf16>, vector<8x128xbf16> -> vector<8x256xbf16>
    %c0_33 = arith.constant 0 : index
    %c0_34 = arith.constant 0 : index
    %108 = vector.load %arg3[%c0_33, %c0_34] : memref<256x512xbf16, #tpu.memory_space<vmem>>, vector<256x512xbf16>
    %cst_35 = arith.constant dense<0.000000e+00> : vector<8x512xf32>
    %109 = tpu.matmul %107, %108, %cst_35 {dimension_numbers = #tpu.dot_dimension_numbers<[1], [0], [0], [1], [0, 0, 1, 1], [], []>} : vector<8x256xbf16>, vector<256x512xbf16>, vector<8x512xf32> -> vector<8x512xf32>
    %c0_36 = arith.constant 0 : index
    %c0_37 = arith.constant 0 : index
    %110 = vector.load %arg4[%c0_36, %c0_37] : memref<1x512xf32, #tpu.memory_space<vmem>>, vector<1x512xf32>
    %111 = vector.broadcast %110 : vector<1x512xf32> to vector<8x512xf32>
    %112 = arith.addf %109, %111 : vector<8x512xf32>
    %113 = vector.extract_strided_slice %112 {offsets = [0, 0], sizes = [8, 128], strides = [1, 1]} : vector<8x512xf32> to vector<8x128xf32>
    %114 = arith.negf %113 : vector<8x128xf32>
    %115 = math.exp %114 : vector<8x128xf32>
    %cst_38 = arith.constant 1.000000e+00 : f32
    %116 = vector.broadcast %cst_38 : f32 to vector<8x128xf32>
    %117 = arith.addf %116, %115 : vector<8x128xf32>
    %118 = arith.divf %116, %117 : vector<8x128xf32>
    %119 = vector.extract_strided_slice %112 {offsets = [0, 128], sizes = [8, 128], strides = [1, 1]} : vector<8x512xf32> to vector<8x128xf32>
    %120 = arith.negf %119 : vector<8x128xf32>
    %121 = math.exp %120 : vector<8x128xf32>
    %cst_39 = arith.constant 1.000000e+00 : f32
    %122 = vector.broadcast %cst_39 : f32 to vector<8x128xf32>
    %123 = arith.addf %122, %121 : vector<8x128xf32>
    %124 = arith.divf %122, %123 : vector<8x128xf32>
    %125 = vector.extract_strided_slice %112 {offsets = [0, 256], sizes = [8, 128], strides = [1, 1]} : vector<8x512xf32> to vector<8x128xf32>
    %126 = math.tanh %125 : vector<8x128xf32>
    %127 = vector.extract_strided_slice %112 {offsets = [0, 384], sizes = [8, 128], strides = [1, 1]} : vector<8x512xf32> to vector<8x128xf32>
    %128 = arith.negf %127 : vector<8x128xf32>
    %129 = math.exp %128 : vector<8x128xf32>
    %cst_40 = arith.constant 1.000000e+00 : f32
    %130 = vector.broadcast %cst_40 : f32 to vector<8x128xf32>
    %131 = arith.addf %130, %129 : vector<8x128xf32>
    %132 = arith.divf %130, %131 : vector<8x128xf32>
    %133 = arith.mulf %124, %101 : vector<8x128xf32>
    %134 = arith.mulf %118, %126 : vector<8x128xf32>
    %135 = arith.addf %133, %134 : vector<8x128xf32>
    %136 = math.tanh %135 : vector<8x128xf32>
    %137 = arith.mulf %132, %136 : vector<8x128xf32>
    %c4 = arith.constant 4 : index
    %c0_41 = arith.constant 0 : index
    %c0_42 = arith.constant 0 : index
    %138 = vector.load %arg2[%c4, %c0_41, %c0_42] : memref<8x8x128xbf16, #tpu.memory_space<vmem>>, vector<1x8x128xbf16>
    %139 = vector.shape_cast %138 : vector<1x8x128xbf16> to vector<8x128xbf16>
    %140 = arith.truncf %137 : vector<8x128xf32> to vector<8x128xbf16>
    %141 = tpu.concatenate %139, %140 in 1 : vector<8x128xbf16>, vector<8x128xbf16> -> vector<8x256xbf16>
    %c0_43 = arith.constant 0 : index
    %c0_44 = arith.constant 0 : index
    %142 = vector.load %arg3[%c0_43, %c0_44] : memref<256x512xbf16, #tpu.memory_space<vmem>>, vector<256x512xbf16>
    %cst_45 = arith.constant dense<0.000000e+00> : vector<8x512xf32>
    %143 = tpu.matmul %141, %142, %cst_45 {dimension_numbers = #tpu.dot_dimension_numbers<[1], [0], [0], [1], [0, 0, 1, 1], [], []>} : vector<8x256xbf16>, vector<256x512xbf16>, vector<8x512xf32> -> vector<8x512xf32>
    %c0_46 = arith.constant 0 : index
    %c0_47 = arith.constant 0 : index
    %144 = vector.load %arg4[%c0_46, %c0_47] : memref<1x512xf32, #tpu.memory_space<vmem>>, vector<1x512xf32>
    %145 = vector.broadcast %144 : vector<1x512xf32> to vector<8x512xf32>
    %146 = arith.addf %143, %145 : vector<8x512xf32>
    %147 = vector.extract_strided_slice %146 {offsets = [0, 0], sizes = [8, 128], strides = [1, 1]} : vector<8x512xf32> to vector<8x128xf32>
    %148 = arith.negf %147 : vector<8x128xf32>
    %149 = math.exp %148 : vector<8x128xf32>
    %cst_48 = arith.constant 1.000000e+00 : f32
    %150 = vector.broadcast %cst_48 : f32 to vector<8x128xf32>
    %151 = arith.addf %150, %149 : vector<8x128xf32>
    %152 = arith.divf %150, %151 : vector<8x128xf32>
    %153 = vector.extract_strided_slice %146 {offsets = [0, 128], sizes = [8, 128], strides = [1, 1]} : vector<8x512xf32> to vector<8x128xf32>
    %154 = arith.negf %153 : vector<8x128xf32>
    %155 = math.exp %154 : vector<8x128xf32>
    %cst_49 = arith.constant 1.000000e+00 : f32
    %156 = vector.broadcast %cst_49 : f32 to vector<8x128xf32>
    %157 = arith.addf %156, %155 : vector<8x128xf32>
    %158 = arith.divf %156, %157 : vector<8x128xf32>
    %159 = vector.extract_strided_slice %146 {offsets = [0, 256], sizes = [8, 128], strides = [1, 1]} : vector<8x512xf32> to vector<8x128xf32>
    %160 = math.tanh %159 : vector<8x128xf32>
    %161 = vector.extract_strided_slice %146 {offsets = [0, 384], sizes = [8, 128], strides = [1, 1]} : vector<8x512xf32> to vector<8x128xf32>
    %162 = arith.negf %161 : vector<8x128xf32>
    %163 = math.exp %162 : vector<8x128xf32>
    %cst_50 = arith.constant 1.000000e+00 : f32
    %164 = vector.broadcast %cst_50 : f32 to vector<8x128xf32>
    %165 = arith.addf %164, %163 : vector<8x128xf32>
    %166 = arith.divf %164, %165 : vector<8x128xf32>
    %167 = arith.mulf %158, %135 : vector<8x128xf32>
    %168 = arith.mulf %152, %160 : vector<8x128xf32>
    %169 = arith.addf %167, %168 : vector<8x128xf32>
    %170 = math.tanh %169 : vector<8x128xf32>
    %171 = arith.mulf %166, %170 : vector<8x128xf32>
    %c5 = arith.constant 5 : index
    %c0_51 = arith.constant 0 : index
    %c0_52 = arith.constant 0 : index
    %172 = vector.load %arg2[%c5, %c0_51, %c0_52] : memref<8x8x128xbf16, #tpu.memory_space<vmem>>, vector<1x8x128xbf16>
    %173 = vector.shape_cast %172 : vector<1x8x128xbf16> to vector<8x128xbf16>
    %174 = arith.truncf %171 : vector<8x128xf32> to vector<8x128xbf16>
    %175 = tpu.concatenate %173, %174 in 1 : vector<8x128xbf16>, vector<8x128xbf16> -> vector<8x256xbf16>
    %c0_53 = arith.constant 0 : index
    %c0_54 = arith.constant 0 : index
    %176 = vector.load %arg3[%c0_53, %c0_54] : memref<256x512xbf16, #tpu.memory_space<vmem>>, vector<256x512xbf16>
    %cst_55 = arith.constant dense<0.000000e+00> : vector<8x512xf32>
    %177 = tpu.matmul %175, %176, %cst_55 {dimension_numbers = #tpu.dot_dimension_numbers<[1], [0], [0], [1], [0, 0, 1, 1], [], []>} : vector<8x256xbf16>, vector<256x512xbf16>, vector<8x512xf32> -> vector<8x512xf32>
    %c0_56 = arith.constant 0 : index
    %c0_57 = arith.constant 0 : index
    %178 = vector.load %arg4[%c0_56, %c0_57] : memref<1x512xf32, #tpu.memory_space<vmem>>, vector<1x512xf32>
    %179 = vector.broadcast %178 : vector<1x512xf32> to vector<8x512xf32>
    %180 = arith.addf %177, %179 : vector<8x512xf32>
    %181 = vector.extract_strided_slice %180 {offsets = [0, 0], sizes = [8, 128], strides = [1, 1]} : vector<8x512xf32> to vector<8x128xf32>
    %182 = arith.negf %181 : vector<8x128xf32>
    %183 = math.exp %182 : vector<8x128xf32>
    %cst_58 = arith.constant 1.000000e+00 : f32
    %184 = vector.broadcast %cst_58 : f32 to vector<8x128xf32>
    %185 = arith.addf %184, %183 : vector<8x128xf32>
    %186 = arith.divf %184, %185 : vector<8x128xf32>
    %187 = vector.extract_strided_slice %180 {offsets = [0, 128], sizes = [8, 128], strides = [1, 1]} : vector<8x512xf32> to vector<8x128xf32>
    %188 = arith.negf %187 : vector<8x128xf32>
    %189 = math.exp %188 : vector<8x128xf32>
    %cst_59 = arith.constant 1.000000e+00 : f32
    %190 = vector.broadcast %cst_59 : f32 to vector<8x128xf32>
    %191 = arith.addf %190, %189 : vector<8x128xf32>
    %192 = arith.divf %190, %191 : vector<8x128xf32>
    %193 = vector.extract_strided_slice %180 {offsets = [0, 256], sizes = [8, 128], strides = [1, 1]} : vector<8x512xf32> to vector<8x128xf32>
    %194 = math.tanh %193 : vector<8x128xf32>
    %195 = vector.extract_strided_slice %180 {offsets = [0, 384], sizes = [8, 128], strides = [1, 1]} : vector<8x512xf32> to vector<8x128xf32>
    %196 = arith.negf %195 : vector<8x128xf32>
    %197 = math.exp %196 : vector<8x128xf32>
    %cst_60 = arith.constant 1.000000e+00 : f32
    %198 = vector.broadcast %cst_60 : f32 to vector<8x128xf32>
    %199 = arith.addf %198, %197 : vector<8x128xf32>
    %200 = arith.divf %198, %199 : vector<8x128xf32>
    %201 = arith.mulf %192, %169 : vector<8x128xf32>
    %202 = arith.mulf %186, %194 : vector<8x128xf32>
    %203 = arith.addf %201, %202 : vector<8x128xf32>
    %204 = math.tanh %203 : vector<8x128xf32>
    %205 = arith.mulf %200, %204 : vector<8x128xf32>
    %c6 = arith.constant 6 : index
    %c0_61 = arith.constant 0 : index
    %c0_62 = arith.constant 0 : index
    %206 = vector.load %arg2[%c6, %c0_61, %c0_62] : memref<8x8x128xbf16, #tpu.memory_space<vmem>>, vector<1x8x128xbf16>
    %207 = vector.shape_cast %206 : vector<1x8x128xbf16> to vector<8x128xbf16>
    %208 = arith.truncf %205 : vector<8x128xf32> to vector<8x128xbf16>
    %209 = tpu.concatenate %207, %208 in 1 : vector<8x128xbf16>, vector<8x128xbf16> -> vector<8x256xbf16>
    %c0_63 = arith.constant 0 : index
    %c0_64 = arith.constant 0 : index
    %210 = vector.load %arg3[%c0_63, %c0_64] : memref<256x512xbf16, #tpu.memory_space<vmem>>, vector<256x512xbf16>
    %cst_65 = arith.constant dense<0.000000e+00> : vector<8x512xf32>
    %211 = tpu.matmul %209, %210, %cst_65 {dimension_numbers = #tpu.dot_dimension_numbers<[1], [0], [0], [1], [0, 0, 1, 1], [], []>} : vector<8x256xbf16>, vector<256x512xbf16>, vector<8x512xf32> -> vector<8x512xf32>
    %c0_66 = arith.constant 0 : index
    %c0_67 = arith.constant 0 : index
    %212 = vector.load %arg4[%c0_66, %c0_67] : memref<1x512xf32, #tpu.memory_space<vmem>>, vector<1x512xf32>
    %213 = vector.broadcast %212 : vector<1x512xf32> to vector<8x512xf32>
    %214 = arith.addf %211, %213 : vector<8x512xf32>
    %215 = vector.extract_strided_slice %214 {offsets = [0, 0], sizes = [8, 128], strides = [1, 1]} : vector<8x512xf32> to vector<8x128xf32>
    %216 = arith.negf %215 : vector<8x128xf32>
    %217 = math.exp %216 : vector<8x128xf32>
    %cst_68 = arith.constant 1.000000e+00 : f32
    %218 = vector.broadcast %cst_68 : f32 to vector<8x128xf32>
    %219 = arith.addf %218, %217 : vector<8x128xf32>
    %220 = arith.divf %218, %219 : vector<8x128xf32>
    %221 = vector.extract_strided_slice %214 {offsets = [0, 128], sizes = [8, 128], strides = [1, 1]} : vector<8x512xf32> to vector<8x128xf32>
    %222 = arith.negf %221 : vector<8x128xf32>
    %223 = math.exp %222 : vector<8x128xf32>
    %cst_69 = arith.constant 1.000000e+00 : f32
    %224 = vector.broadcast %cst_69 : f32 to vector<8x128xf32>
    %225 = arith.addf %224, %223 : vector<8x128xf32>
    %226 = arith.divf %224, %225 : vector<8x128xf32>
    %227 = vector.extract_strided_slice %214 {offsets = [0, 256], sizes = [8, 128], strides = [1, 1]} : vector<8x512xf32> to vector<8x128xf32>
    %228 = math.tanh %227 : vector<8x128xf32>
    %229 = vector.extract_strided_slice %214 {offsets = [0, 384], sizes = [8, 128], strides = [1, 1]} : vector<8x512xf32> to vector<8x128xf32>
    %230 = arith.negf %229 : vector<8x128xf32>
    %231 = math.exp %230 : vector<8x128xf32>
    %cst_70 = arith.constant 1.000000e+00 : f32
    %232 = vector.broadcast %cst_70 : f32 to vector<8x128xf32>
    %233 = arith.addf %232, %231 : vector<8x128xf32>
    %234 = arith.divf %232, %233 : vector<8x128xf32>
    %235 = arith.mulf %226, %203 : vector<8x128xf32>
    %236 = arith.mulf %220, %228 : vector<8x128xf32>
    %237 = arith.addf %235, %236 : vector<8x128xf32>
    %238 = math.tanh %237 : vector<8x128xf32>
    %239 = arith.mulf %234, %238 : vector<8x128xf32>
    %c7 = arith.constant 7 : index
    %c0_71 = arith.constant 0 : index
    %c0_72 = arith.constant 0 : index
    %240 = vector.load %arg2[%c7, %c0_71, %c0_72] : memref<8x8x128xbf16, #tpu.memory_space<vmem>>, vector<1x8x128xbf16>
    %241 = vector.shape_cast %240 : vector<1x8x128xbf16> to vector<8x128xbf16>
    %242 = arith.truncf %239 : vector<8x128xf32> to vector<8x128xbf16>
    %243 = tpu.concatenate %241, %242 in 1 : vector<8x128xbf16>, vector<8x128xbf16> -> vector<8x256xbf16>
    %c0_73 = arith.constant 0 : index
    %c0_74 = arith.constant 0 : index
    %244 = vector.load %arg3[%c0_73, %c0_74] : memref<256x512xbf16, #tpu.memory_space<vmem>>, vector<256x512xbf16>
    %cst_75 = arith.constant dense<0.000000e+00> : vector<8x512xf32>
    %245 = tpu.matmul %243, %244, %cst_75 {dimension_numbers = #tpu.dot_dimension_numbers<[1], [0], [0], [1], [0, 0, 1, 1], [], []>} : vector<8x256xbf16>, vector<256x512xbf16>, vector<8x512xf32> -> vector<8x512xf32>
    %c0_76 = arith.constant 0 : index
    %c0_77 = arith.constant 0 : index
    %246 = vector.load %arg4[%c0_76, %c0_77] : memref<1x512xf32, #tpu.memory_space<vmem>>, vector<1x512xf32>
    %247 = vector.broadcast %246 : vector<1x512xf32> to vector<8x512xf32>
    %248 = arith.addf %245, %247 : vector<8x512xf32>
    %249 = vector.extract_strided_slice %248 {offsets = [0, 0], sizes = [8, 128], strides = [1, 1]} : vector<8x512xf32> to vector<8x128xf32>
    %250 = arith.negf %249 : vector<8x128xf32>
    %251 = math.exp %250 : vector<8x128xf32>
    %cst_78 = arith.constant 1.000000e+00 : f32
    %252 = vector.broadcast %cst_78 : f32 to vector<8x128xf32>
    %253 = arith.addf %252, %251 : vector<8x128xf32>
    %254 = arith.divf %252, %253 : vector<8x128xf32>
    %255 = vector.extract_strided_slice %248 {offsets = [0, 128], sizes = [8, 128], strides = [1, 1]} : vector<8x512xf32> to vector<8x128xf32>
    %256 = arith.negf %255 : vector<8x128xf32>
    %257 = math.exp %256 : vector<8x128xf32>
    %cst_79 = arith.constant 1.000000e+00 : f32
    %258 = vector.broadcast %cst_79 : f32 to vector<8x128xf32>
    %259 = arith.addf %258, %257 : vector<8x128xf32>
    %260 = arith.divf %258, %259 : vector<8x128xf32>
    %261 = vector.extract_strided_slice %248 {offsets = [0, 256], sizes = [8, 128], strides = [1, 1]} : vector<8x512xf32> to vector<8x128xf32>
    %262 = math.tanh %261 : vector<8x128xf32>
    %263 = vector.extract_strided_slice %248 {offsets = [0, 384], sizes = [8, 128], strides = [1, 1]} : vector<8x512xf32> to vector<8x128xf32>
    %264 = arith.negf %263 : vector<8x128xf32>
    %265 = math.exp %264 : vector<8x128xf32>
    %cst_80 = arith.constant 1.000000e+00 : f32
    %266 = vector.broadcast %cst_80 : f32 to vector<8x128xf32>
    %267 = arith.addf %266, %265 : vector<8x128xf32>
    %268 = arith.divf %266, %267 : vector<8x128xf32>
    %269 = arith.mulf %260, %237 : vector<8x128xf32>
    %270 = arith.mulf %254, %262 : vector<8x128xf32>
    %271 = arith.addf %269, %270 : vector<8x128xf32>
    %272 = math.tanh %271 : vector<8x128xf32>
    %273 = arith.mulf %268, %272 : vector<8x128xf32>
    %274 = tpu.iota {dimensions = array<i32: 1>} : vector<8x128xi32>
    %275 = arith.sitofp %274 : vector<8x128xi32> to vector<8x128xf32>
    %c0_i32 = arith.constant 0 : i32
    %276 = vector.broadcast %c0_i32 : i32 to vector<8x1xi32>
    %c0_81 = arith.constant 0 : index
    %277 = memref.load %arg0[%c0_81] : memref<7xi32, #tpu.memory_space<smem>>
    %c0_i32_82 = arith.constant 0 : i32
    %278 = arith.cmpi sgt, %277, %c0_i32_82 : i32
    %c0_83 = arith.constant 0 : index
    %c0_84 = arith.constant 0 : index
    %c0_85 = arith.constant 0 : index
    %279 = vector.load %arg1[%c0_83, %c0_84, %c0_85] : memref<7x8x1xi32, #tpu.memory_space<vmem>>, vector<1x8x1xi32>
    %280 = vector.shape_cast %279 : vector<1x8x1xi32> to vector<8x1xi32>
    %281 = arith.select %278, %280, %276 : vector<8x1xi32>
    %282 = vector.broadcast %281 : vector<8x1xi32> to vector<8x128xi32>
    %283 = arith.cmpi eq, %274, %282 : vector<8x128xi32>
    %284 = arith.extui %283 : vector<8x128xi1> to vector<8x128xi32>
    %285 = arith.sitofp %284 : vector<8x128xi32> to vector<8x128xf32>
    %286 = arith.truncf %285 : vector<8x128xf32> to vector<8x128xbf16>
    %c0_86 = arith.constant 0 : index
    %c0_87 = arith.constant 0 : index
    %287 = vector.load %arg5[%c0_86, %c0_87] : memref<128x128xbf16, #tpu.memory_space<vmem>>, vector<128x128xbf16>
    %cst_88 = arith.constant dense<0.000000e+00> : vector<8x128xf32>
    %288 = tpu.matmul %286, %287, %cst_88 {dimension_numbers = #tpu.dot_dimension_numbers<[1], [0], [0], [1], [0, 0, 1, 1], [], []>} : vector<8x128xbf16>, vector<128x128xbf16>, vector<8x128xf32> -> vector<8x128xf32>
    %289 = arith.truncf %288 : vector<8x128xf32> to vector<8x128xbf16>
    %290 = arith.truncf %273 : vector<8x128xf32> to vector<8x128xbf16>
    %291 = tpu.concatenate %289, %290 in 1 : vector<8x128xbf16>, vector<8x128xbf16> -> vector<8x256xbf16>
    %c0_89 = arith.constant 0 : index
    %c0_90 = arith.constant 0 : index
    %292 = vector.load %arg6[%c0_89, %c0_90] : memref<256x512xbf16, #tpu.memory_space<vmem>>, vector<256x512xbf16>
    %cst_91 = arith.constant dense<0.000000e+00> : vector<8x512xf32>
    %293 = tpu.matmul %291, %292, %cst_91 {dimension_numbers = #tpu.dot_dimension_numbers<[1], [0], [0], [1], [0, 0, 1, 1], [], []>} : vector<8x256xbf16>, vector<256x512xbf16>, vector<8x512xf32> -> vector<8x512xf32>
    %c0_92 = arith.constant 0 : index
    %c0_93 = arith.constant 0 : index
    %294 = vector.load %arg7[%c0_92, %c0_93] : memref<1x512xf32, #tpu.memory_space<vmem>>, vector<1x512xf32>
    %295 = vector.broadcast %294 : vector<1x512xf32> to vector<8x512xf32>
    %296 = arith.addf %293, %295 : vector<8x512xf32>
    %297 = vector.extract_strided_slice %296 {offsets = [0, 0], sizes = [8, 128], strides = [1, 1]} : vector<8x512xf32> to vector<8x128xf32>
    %298 = arith.negf %297 : vector<8x128xf32>
    %299 = math.exp %298 : vector<8x128xf32>
    %cst_94 = arith.constant 1.000000e+00 : f32
    %300 = vector.broadcast %cst_94 : f32 to vector<8x128xf32>
    %301 = arith.addf %300, %299 : vector<8x128xf32>
    %302 = arith.divf %300, %301 : vector<8x128xf32>
    %303 = vector.extract_strided_slice %296 {offsets = [0, 128], sizes = [8, 128], strides = [1, 1]} : vector<8x512xf32> to vector<8x128xf32>
    %304 = arith.negf %303 : vector<8x128xf32>
    %305 = math.exp %304 : vector<8x128xf32>
    %cst_95 = arith.constant 1.000000e+00 : f32
    %306 = vector.broadcast %cst_95 : f32 to vector<8x128xf32>
    %307 = arith.addf %306, %305 : vector<8x128xf32>
    %308 = arith.divf %306, %307 : vector<8x128xf32>
    %309 = vector.extract_strided_slice %296 {offsets = [0, 256], sizes = [8, 128], strides = [1, 1]} : vector<8x512xf32> to vector<8x128xf32>
    %310 = math.tanh %309 : vector<8x128xf32>
    %311 = vector.extract_strided_slice %296 {offsets = [0, 384], sizes = [8, 128], strides = [1, 1]} : vector<8x512xf32> to vector<8x128xf32>
    %312 = arith.negf %311 : vector<8x128xf32>
    %313 = math.exp %312 : vector<8x128xf32>
    %cst_96 = arith.constant 1.000000e+00 : f32
    %314 = vector.broadcast %cst_96 : f32 to vector<8x128xf32>
    %315 = arith.addf %314, %313 : vector<8x128xf32>
    %316 = arith.divf %314, %315 : vector<8x128xf32>
    %317 = arith.mulf %308, %271 : vector<8x128xf32>
    %318 = arith.mulf %302, %310 : vector<8x128xf32>
    %319 = arith.addf %317, %318 : vector<8x128xf32>
    %320 = math.tanh %319 : vector<8x128xf32>
    %321 = arith.mulf %316, %320 : vector<8x128xf32>
    %322 = arith.truncf %321 : vector<8x128xf32> to vector<8x128xbf16>
    %c0_97 = arith.constant 0 : index
    %c0_98 = arith.constant 0 : index
    %323 = vector.load %arg8[%c0_97, %c0_98] : memref<128x128xbf16, #tpu.memory_space<vmem>>, vector<128x128xbf16>
    %cst_99 = arith.constant dense<0.000000e+00> : vector<8x128xf32>
    %324 = tpu.matmul %322, %323, %cst_99 {dimension_numbers = #tpu.dot_dimension_numbers<[1], [0], [0], [1], [0, 0, 1, 1], [], []>} : vector<8x128xbf16>, vector<128x128xbf16>, vector<8x128xf32> -> vector<8x128xf32>
    %c0_100 = arith.constant 0 : index
    %c0_101 = arith.constant 0 : index
    %325 = vector.load %arg9[%c0_100, %c0_101] : memref<1x128xf32, #tpu.memory_space<vmem>>, vector<1x128xf32>
    %326 = vector.broadcast %325 : vector<1x128xf32> to vector<8x128xf32>
    %327 = arith.addf %324, %326 : vector<8x128xf32>
    %c0_102 = arith.constant 0 : index
    %c0_103 = arith.constant 0 : index
    %c0_104 = arith.constant 0 : index
    %328 = vector.load %arg10[%c0_102, %c0_103, %c0_104] : memref<7x8x128xf32, #tpu.memory_space<vmem>>, vector<1x8x128xf32>
    %329 = vector.shape_cast %328 : vector<1x8x128xf32> to vector<8x128xf32>
    %330 = vector.shape_cast %327 : vector<8x128xf32> to vector<1x8x128xf32>
    tpu.vector_store %arg10[%c0_102, %c0_103, %c0_104], %330 {strides = array<i32>} : memref<7x8x128xf32, #tpu.memory_space<vmem>>, vector<1x8x128xf32>,
    %cst_105 = arith.constant dense<0xFF800000> : vector<8xf32>
    %331 = vector.multi_reduction <maximumf>, %327, %cst_105 [1] : vector<8x128xf32> to vector<8xf32>
    %332 = vector.shape_cast %331 : vector<8xf32> to vector<8x1xf32>
    %333 = vector.broadcast %332 : vector<8x1xf32> to vector<8x128xf32>
    %334 = arith.cmpf oeq, %327, %333 : vector<8x128xf32>
    %cst_106 = arith.constant 1.280000e+02 : f32
    %335 = vector.broadcast %cst_106 : f32 to vector<8x128xf32>
    %336 = arith.select %334, %275, %335 : vector<8x128xi1>, vector<8x128xf32>
    %cst_107 = arith.constant dense<0x7F800000> : vector<8xf32>
    %337 = vector.multi_reduction <minimumf>, %336, %cst_107 [1] : vector<8x128xf32> to vector<8xf32>
    %338 = vector.shape_cast %337 : vector<8xf32> to vector<8x1xf32>
    %339 = arith.fptosi %338 : vector<8x1xf32> to vector<8x1xi32>
    %c1_108 = arith.constant 1 : index
    %340 = memref.load %arg0[%c1_108] : memref<7xi32, #tpu.memory_space<smem>>
    %c0_i32_109 = arith.constant 0 : i32
    %341 = arith.cmpi sgt, %340, %c0_i32_109 : i32
    %c1_110 = arith.constant 1 : index
    %c0_111 = arith.constant 0 : index
    %c0_112 = arith.constant 0 : index
    %342 = vector.load %arg1[%c1_110, %c0_111, %c0_112] : memref<7x8x1xi32, #tpu.memory_space<vmem>>, vector<1x8x1xi32>
    %343 = vector.shape_cast %342 : vector<1x8x1xi32> to vector<8x1xi32>
    %344 = arith.select %341, %343, %339 : vector<8x1xi32>
    %345 = vector.broadcast %344 : vector<8x1xi32> to vector<8x128xi32>
    %346 = arith.cmpi eq, %274, %345 : vector<8x128xi32>
    %347 = arith.extui %346 : vector<8x128xi1> to vector<8x128xi32>
    %348 = arith.sitofp %347 : vector<8x128xi32> to vector<8x128xf32>
    %349 = arith.truncf %348 : vector<8x128xf32> to vector<8x128xbf16>
    %c0_113 = arith.constant 0 : index
    %c0_114 = arith.constant 0 : index
    %350 = vector.load %arg5[%c0_113, %c0_114] : memref<128x128xbf16, #tpu.memory_space<vmem>>, vector<128x128xbf16>
    %cst_115 = arith.constant dense<0.000000e+00> : vector<8x128xf32>
    %351 = tpu.matmul %349, %350, %cst_115 {dimension_numbers = #tpu.dot_dimension_numbers<[1], [0], [0], [1], [0, 0, 1, 1], [], []>} : vector<8x128xbf16>, vector<128x128xbf16>, vector<8x128xf32> -> vector<8x128xf32>
    %352 = arith.truncf %351 : vector<8x128xf32> to vector<8x128xbf16>
    %353 = arith.truncf %321 : vector<8x128xf32> to vector<8x128xbf16>
    %354 = tpu.concatenate %352, %353 in 1 : vector<8x128xbf16>, vector<8x128xbf16> -> vector<8x256xbf16>
    %c0_116 = arith.constant 0 : index
    %c0_117 = arith.constant 0 : index
    %355 = vector.load %arg6[%c0_116, %c0_117] : memref<256x512xbf16, #tpu.memory_space<vmem>>, vector<256x512xbf16>
    %cst_118 = arith.constant dense<0.000000e+00> : vector<8x512xf32>
    %356 = tpu.matmul %354, %355, %cst_118 {dimension_numbers = #tpu.dot_dimension_numbers<[1], [0], [0], [1], [0, 0, 1, 1], [], []>} : vector<8x256xbf16>, vector<256x512xbf16>, vector<8x512xf32> -> vector<8x512xf32>
    %c0_119 = arith.constant 0 : index
    %c0_120 = arith.constant 0 : index
    %357 = vector.load %arg7[%c0_119, %c0_120] : memref<1x512xf32, #tpu.memory_space<vmem>>, vector<1x512xf32>
    %358 = vector.broadcast %357 : vector<1x512xf32> to vector<8x512xf32>
    %359 = arith.addf %356, %358 : vector<8x512xf32>
    %360 = vector.extract_strided_slice %359 {offsets = [0, 0], sizes = [8, 128], strides = [1, 1]} : vector<8x512xf32> to vector<8x128xf32>
    %361 = arith.negf %360 : vector<8x128xf32>
    %362 = math.exp %361 : vector<8x128xf32>
    %cst_121 = arith.constant 1.000000e+00 : f32
    %363 = vector.broadcast %cst_121 : f32 to vector<8x128xf32>
    %364 = arith.addf %363, %362 : vector<8x128xf32>
    %365 = arith.divf %363, %364 : vector<8x128xf32>
    %366 = vector.extract_strided_slice %359 {offsets = [0, 128], sizes = [8, 128], strides = [1, 1]} : vector<8x512xf32> to vector<8x128xf32>
    %367 = arith.negf %366 : vector<8x128xf32>
    %368 = math.exp %367 : vector<8x128xf32>
    %cst_122 = arith.constant 1.000000e+00 : f32
    %369 = vector.broadcast %cst_122 : f32 to vector<8x128xf32>
    %370 = arith.addf %369, %368 : vector<8x128xf32>
    %371 = arith.divf %369, %370 : vector<8x128xf32>
    %372 = vector.extract_strided_slice %359 {offsets = [0, 256], sizes = [8, 128], strides = [1, 1]} : vector<8x512xf32> to vector<8x128xf32>
    %373 = math.tanh %372 : vector<8x128xf32>
    %374 = vector.extract_strided_slice %359 {offsets = [0, 384], sizes = [8, 128], strides = [1, 1]} : vector<8x512xf32> to vector<8x128xf32>
    %375 = arith.negf %374 : vector<8x128xf32>
    %376 = math.exp %375 : vector<8x128xf32>
    %cst_123 = arith.constant 1.000000e+00 : f32
    %377 = vector.broadcast %cst_123 : f32 to vector<8x128xf32>
    %378 = arith.addf %377, %376 : vector<8x128xf32>
    %379 = arith.divf %377, %378 : vector<8x128xf32>
    %380 = arith.mulf %371, %319 : vector<8x128xf32>
    %381 = arith.mulf %365, %373 : vector<8x128xf32>
    %382 = arith.addf %380, %381 : vector<8x128xf32>
    %383 = math.tanh %382 : vector<8x128xf32>
    %384 = arith.mulf %379, %383 : vector<8x128xf32>
    %385 = arith.truncf %384 : vector<8x128xf32> to vector<8x128xbf16>
    %c0_124 = arith.constant 0 : index
    %c0_125 = arith.constant 0 : index
    %386 = vector.load %arg8[%c0_124, %c0_125] : memref<128x128xbf16, #tpu.memory_space<vmem>>, vector<128x128xbf16>
    %cst_126 = arith.constant dense<0.000000e+00> : vector<8x128xf32>
    %387 = tpu.matmul %385, %386, %cst_126 {dimension_numbers = #tpu.dot_dimension_numbers<[1], [0], [0], [1], [0, 0, 1, 1], [], []>} : vector<8x128xbf16>, vector<128x128xbf16>, vector<8x128xf32> -> vector<8x128xf32>
    %c0_127 = arith.constant 0 : index
    %c0_128 = arith.constant 0 : index
    %388 = vector.load %arg9[%c0_127, %c0_128] : memref<1x128xf32, #tpu.memory_space<vmem>>, vector<1x128xf32>
    %389 = vector.broadcast %388 : vector<1x128xf32> to vector<8x128xf32>
    %390 = arith.addf %387, %389 : vector<8x128xf32>
    %c1_129 = arith.constant 1 : index
    %c0_130 = arith.constant 0 : index
    %c0_131 = arith.constant 0 : index
    %391 = vector.load %arg10[%c1_129, %c0_130, %c0_131] : memref<7x8x128xf32, #tpu.memory_space<vmem>>, vector<1x8x128xf32>
    %392 = vector.shape_cast %391 : vector<1x8x128xf32> to vector<8x128xf32>
    %393 = vector.shape_cast %390 : vector<8x128xf32> to vector<1x8x128xf32>
    tpu.vector_store %arg10[%c1_129, %c0_130, %c0_131], %393 {strides = array<i32>} : memref<7x8x128xf32, #tpu.memory_space<vmem>>, vector<1x8x128xf32>,
    %cst_132 = arith.constant dense<0xFF800000> : vector<8xf32>
    %394 = vector.multi_reduction <maximumf>, %390, %cst_132 [1] : vector<8x128xf32> to vector<8xf32>
    %395 = vector.shape_cast %394 : vector<8xf32> to vector<8x1xf32>
    %396 = vector.broadcast %395 : vector<8x1xf32> to vector<8x128xf32>
    %397 = arith.cmpf oeq, %390, %396 : vector<8x128xf32>
    %cst_133 = arith.constant 1.280000e+02 : f32
    %398 = vector.broadcast %cst_133 : f32 to vector<8x128xf32>
    %399 = arith.select %397, %275, %398 : vector<8x128xi1>, vector<8x128xf32>
    %cst_134 = arith.constant dense<0x7F800000> : vector<8xf32>
    %400 = vector.multi_reduction <minimumf>, %399, %cst_134 [1] : vector<8x128xf32> to vector<8xf32>
    %401 = vector.shape_cast %400 : vector<8xf32> to vector<8x1xf32>
    %402 = arith.fptosi %401 : vector<8x1xf32> to vector<8x1xi32>
    %c2_135 = arith.constant 2 : index
    %403 = memref.load %arg0[%c2_135] : memref<7xi32, #tpu.memory_space<smem>>
    %c0_i32_136 = arith.constant 0 : i32
    %404 = arith.cmpi sgt, %403, %c0_i32_136 : i32
    %c2_137 = arith.constant 2 : index
    %c0_138 = arith.constant 0 : index
    %c0_139 = arith.constant 0 : index
    %405 = vector.load %arg1[%c2_137, %c0_138, %c0_139] : memref<7x8x1xi32, #tpu.memory_space<vmem>>, vector<1x8x1xi32>
    %406 = vector.shape_cast %405 : vector<1x8x1xi32> to vector<8x1xi32>
    %407 = arith.select %404, %406, %402 : vector<8x1xi32>
    %408 = vector.broadcast %407 : vector<8x1xi32> to vector<8x128xi32>
    %409 = arith.cmpi eq, %274, %408 : vector<8x128xi32>
    %410 = arith.extui %409 : vector<8x128xi1> to vector<8x128xi32>
    %411 = arith.sitofp %410 : vector<8x128xi32> to vector<8x128xf32>
    %412 = arith.truncf %411 : vector<8x128xf32> to vector<8x128xbf16>
    %c0_140 = arith.constant 0 : index
    %c0_141 = arith.constant 0 : index
    %413 = vector.load %arg5[%c0_140, %c0_141] : memref<128x128xbf16, #tpu.memory_space<vmem>>, vector<128x128xbf16>
    %cst_142 = arith.constant dense<0.000000e+00> : vector<8x128xf32>
    %414 = tpu.matmul %412, %413, %cst_142 {dimension_numbers = #tpu.dot_dimension_numbers<[1], [0], [0], [1], [0, 0, 1, 1], [], []>} : vector<8x128xbf16>, vector<128x128xbf16>, vector<8x128xf32> -> vector<8x128xf32>
    %415 = arith.truncf %414 : vector<8x128xf32> to vector<8x128xbf16>
    %416 = arith.truncf %384 : vector<8x128xf32> to vector<8x128xbf16>
    %417 = tpu.concatenate %415, %416 in 1 : vector<8x128xbf16>, vector<8x128xbf16> -> vector<8x256xbf16>
    %c0_143 = arith.constant 0 : index
    %c0_144 = arith.constant 0 : index
    %418 = vector.load %arg6[%c0_143, %c0_144] : memref<256x512xbf16, #tpu.memory_space<vmem>>, vector<256x512xbf16>
    %cst_145 = arith.constant dense<0.000000e+00> : vector<8x512xf32>
    %419 = tpu.matmul %417, %418, %cst_145 {dimension_numbers = #tpu.dot_dimension_numbers<[1], [0], [0], [1], [0, 0, 1, 1], [], []>} : vector<8x256xbf16>, vector<256x512xbf16>, vector<8x512xf32> -> vector<8x512xf32>
    %c0_146 = arith.constant 0 : index
    %c0_147 = arith.constant 0 : index
    %420 = vector.load %arg7[%c0_146, %c0_147] : memref<1x512xf32, #tpu.memory_space<vmem>>, vector<1x512xf32>
    %421 = vector.broadcast %420 : vector<1x512xf32> to vector<8x512xf32>
    %422 = arith.addf %419, %421 : vector<8x512xf32>
    %423 = vector.extract_strided_slice %422 {offsets = [0, 0], sizes = [8, 128], strides = [1, 1]} : vector<8x512xf32> to vector<8x128xf32>
    %424 = arith.negf %423 : vector<8x128xf32>
    %425 = math.exp %424 : vector<8x128xf32>
    %cst_148 = arith.constant 1.000000e+00 : f32
    %426 = vector.broadcast %cst_148 : f32 to vector<8x128xf32>
    %427 = arith.addf %426, %425 : vector<8x128xf32>
    %428 = arith.divf %426, %427 : vector<8x128xf32>
    %429 = vector.extract_strided_slice %422 {offsets = [0, 128], sizes = [8, 128], strides = [1, 1]} : vector<8x512xf32> to vector<8x128xf32>
    %430 = arith.negf %429 : vector<8x128xf32>
    %431 = math.exp %430 : vector<8x128xf32>
    %cst_149 = arith.constant 1.000000e+00 : f32
    %432 = vector.broadcast %cst_149 : f32 to vector<8x128xf32>
    %433 = arith.addf %432, %431 : vector<8x128xf32>
    %434 = arith.divf %432, %433 : vector<8x128xf32>
    %435 = vector.extract_strided_slice %422 {offsets = [0, 256], sizes = [8, 128], strides = [1, 1]} : vector<8x512xf32> to vector<8x128xf32>
    %436 = math.tanh %435 : vector<8x128xf32>
    %437 = vector.extract_strided_slice %422 {offsets = [0, 384], sizes = [8, 128], strides = [1, 1]} : vector<8x512xf32> to vector<8x128xf32>
    %438 = arith.negf %437 : vector<8x128xf32>
    %439 = math.exp %438 : vector<8x128xf32>
    %cst_150 = arith.constant 1.000000e+00 : f32
    %440 = vector.broadcast %cst_150 : f32 to vector<8x128xf32>
    %441 = arith.addf %440, %439 : vector<8x128xf32>
    %442 = arith.divf %440, %441 : vector<8x128xf32>
    %443 = arith.mulf %434, %382 : vector<8x128xf32>
    %444 = arith.mulf %428, %436 : vector<8x128xf32>
    %445 = arith.addf %443, %444 : vector<8x128xf32>
    %446 = math.tanh %445 : vector<8x128xf32>
    %447 = arith.mulf %442, %446 : vector<8x128xf32>
    %448 = arith.truncf %447 : vector<8x128xf32> to vector<8x128xbf16>
    %c0_151 = arith.constant 0 : index
    %c0_152 = arith.constant 0 : index
    %449 = vector.load %arg8[%c0_151, %c0_152] : memref<128x128xbf16, #tpu.memory_space<vmem>>, vector<128x128xbf16>
    %cst_153 = arith.constant dense<0.000000e+00> : vector<8x128xf32>
    %450 = tpu.matmul %448, %449, %cst_153 {dimension_numbers = #tpu.dot_dimension_numbers<[1], [0], [0], [1], [0, 0, 1, 1], [], []>} : vector<8x128xbf16>, vector<128x128xbf16>, vector<8x128xf32> -> vector<8x128xf32>
    %c0_154 = arith.constant 0 : index
    %c0_155 = arith.constant 0 : index
    %451 = vector.load %arg9[%c0_154, %c0_155] : memref<1x128xf32, #tpu.memory_space<vmem>>, vector<1x128xf32>
    %452 = vector.broadcast %451 : vector<1x128xf32> to vector<8x128xf32>
    %453 = arith.addf %450, %452 : vector<8x128xf32>
    %c2_156 = arith.constant 2 : index
    %c0_157 = arith.constant 0 : index
    %c0_158 = arith.constant 0 : index
    %454 = vector.load %arg10[%c2_156, %c0_157, %c0_158] : memref<7x8x128xf32, #tpu.memory_space<vmem>>, vector<1x8x128xf32>
    %455 = vector.shape_cast %454 : vector<1x8x128xf32> to vector<8x128xf32>
    %456 = vector.shape_cast %453 : vector<8x128xf32> to vector<1x8x128xf32>
    tpu.vector_store %arg10[%c2_156, %c0_157, %c0_158], %456 {strides = array<i32>} : memref<7x8x128xf32, #tpu.memory_space<vmem>>, vector<1x8x128xf32>,
    %cst_159 = arith.constant dense<0xFF800000> : vector<8xf32>
    %457 = vector.multi_reduction <maximumf>, %453, %cst_159 [1] : vector<8x128xf32> to vector<8xf32>
    %458 = vector.shape_cast %457 : vector<8xf32> to vector<8x1xf32>
    %459 = vector.broadcast %458 : vector<8x1xf32> to vector<8x128xf32>
    %460 = arith.cmpf oeq, %453, %459 : vector<8x128xf32>
    %cst_160 = arith.constant 1.280000e+02 : f32
    %461 = vector.broadcast %cst_160 : f32 to vector<8x128xf32>
    %462 = arith.select %460, %275, %461 : vector<8x128xi1>, vector<8x128xf32>
    %cst_161 = arith.constant dense<0x7F800000> : vector<8xf32>
    %463 = vector.multi_reduction <minimumf>, %462, %cst_161 [1] : vector<8x128xf32> to vector<8xf32>
    %464 = vector.shape_cast %463 : vector<8xf32> to vector<8x1xf32>
    %465 = arith.fptosi %464 : vector<8x1xf32> to vector<8x1xi32>
    %c3_162 = arith.constant 3 : index
    %466 = memref.load %arg0[%c3_162] : memref<7xi32, #tpu.memory_space<smem>>
    %c0_i32_163 = arith.constant 0 : i32
    %467 = arith.cmpi sgt, %466, %c0_i32_163 : i32
    %c3_164 = arith.constant 3 : index
    %c0_165 = arith.constant 0 : index
    %c0_166 = arith.constant 0 : index
    %468 = vector.load %arg1[%c3_164, %c0_165, %c0_166] : memref<7x8x1xi32, #tpu.memory_space<vmem>>, vector<1x8x1xi32>
    %469 = vector.shape_cast %468 : vector<1x8x1xi32> to vector<8x1xi32>
    %470 = arith.select %467, %469, %465 : vector<8x1xi32>
    %471 = vector.broadcast %470 : vector<8x1xi32> to vector<8x128xi32>
    %472 = arith.cmpi eq, %274, %471 : vector<8x128xi32>
    %473 = arith.extui %472 : vector<8x128xi1> to vector<8x128xi32>
    %474 = arith.sitofp %473 : vector<8x128xi32> to vector<8x128xf32>
    %475 = arith.truncf %474 : vector<8x128xf32> to vector<8x128xbf16>
    %c0_167 = arith.constant 0 : index
    %c0_168 = arith.constant 0 : index
    %476 = vector.load %arg5[%c0_167, %c0_168] : memref<128x128xbf16, #tpu.memory_space<vmem>>, vector<128x128xbf16>
    %cst_169 = arith.constant dense<0.000000e+00> : vector<8x128xf32>
    %477 = tpu.matmul %475, %476, %cst_169 {dimension_numbers = #tpu.dot_dimension_numbers<[1], [0], [0], [1], [0, 0, 1, 1], [], []>} : vector<8x128xbf16>, vector<128x128xbf16>, vector<8x128xf32> -> vector<8x128xf32>
    %478 = arith.truncf %477 : vector<8x128xf32> to vector<8x128xbf16>
    %479 = arith.truncf %447 : vector<8x128xf32> to vector<8x128xbf16>
    %480 = tpu.concatenate %478, %479 in 1 : vector<8x128xbf16>, vector<8x128xbf16> -> vector<8x256xbf16>
    %c0_170 = arith.constant 0 : index
    %c0_171 = arith.constant 0 : index
    %481 = vector.load %arg6[%c0_170, %c0_171] : memref<256x512xbf16, #tpu.memory_space<vmem>>, vector<256x512xbf16>
    %cst_172 = arith.constant dense<0.000000e+00> : vector<8x512xf32>
    %482 = tpu.matmul %480, %481, %cst_172 {dimension_numbers = #tpu.dot_dimension_numbers<[1], [0], [0], [1], [0, 0, 1, 1], [], []>} : vector<8x256xbf16>, vector<256x512xbf16>, vector<8x512xf32> -> vector<8x512xf32>
    %c0_173 = arith.constant 0 : index
    %c0_174 = arith.constant 0 : index
    %483 = vector.load %arg7[%c0_173, %c0_174] : memref<1x512xf32, #tpu.memory_space<vmem>>, vector<1x512xf32>
    %484 = vector.broadcast %483 : vector<1x512xf32> to vector<8x512xf32>
    %485 = arith.addf %482, %484 : vector<8x512xf32>
    %486 = vector.extract_strided_slice %485 {offsets = [0, 0], sizes = [8, 128], strides = [1, 1]} : vector<8x512xf32> to vector<8x128xf32>
    %487 = arith.negf %486 : vector<8x128xf32>
    %488 = math.exp %487 : vector<8x128xf32>
    %cst_175 = arith.constant 1.000000e+00 : f32
    %489 = vector.broadcast %cst_175 : f32 to vector<8x128xf32>
    %490 = arith.addf %489, %488 : vector<8x128xf32>
    %491 = arith.divf %489, %490 : vector<8x128xf32>
    %492 = vector.extract_strided_slice %485 {offsets = [0, 128], sizes = [8, 128], strides = [1, 1]} : vector<8x512xf32> to vector<8x128xf32>
    %493 = arith.negf %492 : vector<8x128xf32>
    %494 = math.exp %493 : vector<8x128xf32>
    %cst_176 = arith.constant 1.000000e+00 : f32
    %495 = vector.broadcast %cst_176 : f32 to vector<8x128xf32>
    %496 = arith.addf %495, %494 : vector<8x128xf32>
    %497 = arith.divf %495, %496 : vector<8x128xf32>
    %498 = vector.extract_strided_slice %485 {offsets = [0, 256], sizes = [8, 128], strides = [1, 1]} : vector<8x512xf32> to vector<8x128xf32>
    %499 = math.tanh %498 : vector<8x128xf32>
    %500 = vector.extract_strided_slice %485 {offsets = [0, 384], sizes = [8, 128], strides = [1, 1]} : vector<8x512xf32> to vector<8x128xf32>
    %501 = arith.negf %500 : vector<8x128xf32>
    %502 = math.exp %501 : vector<8x128xf32>
    %cst_177 = arith.constant 1.000000e+00 : f32
    %503 = vector.broadcast %cst_177 : f32 to vector<8x128xf32>
    %504 = arith.addf %503, %502 : vector<8x128xf32>
    %505 = arith.divf %503, %504 : vector<8x128xf32>
    %506 = arith.mulf %497, %445 : vector<8x128xf32>
    %507 = arith.mulf %491, %499 : vector<8x128xf32>
    %508 = arith.addf %506, %507 : vector<8x128xf32>
    %509 = math.tanh %508 : vector<8x128xf32>
    %510 = arith.mulf %505, %509 : vector<8x128xf32>
    %511 = arith.truncf %510 : vector<8x128xf32> to vector<8x128xbf16>
    %c0_178 = arith.constant 0 : index
    %c0_179 = arith.constant 0 : index
    %512 = vector.load %arg8[%c0_178, %c0_179] : memref<128x128xbf16, #tpu.memory_space<vmem>>, vector<128x128xbf16>
    %cst_180 = arith.constant dense<0.000000e+00> : vector<8x128xf32>
    %513 = tpu.matmul %511, %512, %cst_180 {dimension_numbers = #tpu.dot_dimension_numbers<[1], [0], [0], [1], [0, 0, 1, 1], [], []>} : vector<8x128xbf16>, vector<128x128xbf16>, vector<8x128xf32> -> vector<8x128xf32>
    %c0_181 = arith.constant 0 : index
    %c0_182 = arith.constant 0 : index
    %514 = vector.load %arg9[%c0_181, %c0_182] : memref<1x128xf32, #tpu.memory_space<vmem>>, vector<1x128xf32>
    %515 = vector.broadcast %514 : vector<1x128xf32> to vector<8x128xf32>
    %516 = arith.addf %513, %515 : vector<8x128xf32>
    %c3_183 = arith.constant 3 : index
    %c0_184 = arith.constant 0 : index
    %c0_185 = arith.constant 0 : index
    %517 = vector.load %arg10[%c3_183, %c0_184, %c0_185] : memref<7x8x128xf32, #tpu.memory_space<vmem>>, vector<1x8x128xf32>
    %518 = vector.shape_cast %517 : vector<1x8x128xf32> to vector<8x128xf32>
    %519 = vector.shape_cast %516 : vector<8x128xf32> to vector<1x8x128xf32>
    tpu.vector_store %arg10[%c3_183, %c0_184, %c0_185], %519 {strides = array<i32>} : memref<7x8x128xf32, #tpu.memory_space<vmem>>, vector<1x8x128xf32>,
    %cst_186 = arith.constant dense<0xFF800000> : vector<8xf32>
    %520 = vector.multi_reduction <maximumf>, %516, %cst_186 [1] : vector<8x128xf32> to vector<8xf32>
    %521 = vector.shape_cast %520 : vector<8xf32> to vector<8x1xf32>
    %522 = vector.broadcast %521 : vector<8x1xf32> to vector<8x128xf32>
    %523 = arith.cmpf oeq, %516, %522 : vector<8x128xf32>
    %cst_187 = arith.constant 1.280000e+02 : f32
    %524 = vector.broadcast %cst_187 : f32 to vector<8x128xf32>
    %525 = arith.select %523, %275, %524 : vector<8x128xi1>, vector<8x128xf32>
    %cst_188 = arith.constant dense<0x7F800000> : vector<8xf32>
    %526 = vector.multi_reduction <minimumf>, %525, %cst_188 [1] : vector<8x128xf32> to vector<8xf32>
    %527 = vector.shape_cast %526 : vector<8xf32> to vector<8x1xf32>
    %528 = arith.fptosi %527 : vector<8x1xf32> to vector<8x1xi32>
    %c4_189 = arith.constant 4 : index
    %529 = memref.load %arg0[%c4_189] : memref<7xi32, #tpu.memory_space<smem>>
    %c0_i32_190 = arith.constant 0 : i32
    %530 = arith.cmpi sgt, %529, %c0_i32_190 : i32
    %c4_191 = arith.constant 4 : index
    %c0_192 = arith.constant 0 : index
    %c0_193 = arith.constant 0 : index
    %531 = vector.load %arg1[%c4_191, %c0_192, %c0_193] : memref<7x8x1xi32, #tpu.memory_space<vmem>>, vector<1x8x1xi32>
    %532 = vector.shape_cast %531 : vector<1x8x1xi32> to vector<8x1xi32>
    %533 = arith.select %530, %532, %528 : vector<8x1xi32>
    %534 = vector.broadcast %533 : vector<8x1xi32> to vector<8x128xi32>
    %535 = arith.cmpi eq, %274, %534 : vector<8x128xi32>
    %536 = arith.extui %535 : vector<8x128xi1> to vector<8x128xi32>
    %537 = arith.sitofp %536 : vector<8x128xi32> to vector<8x128xf32>
    %538 = arith.truncf %537 : vector<8x128xf32> to vector<8x128xbf16>
    %c0_194 = arith.constant 0 : index
    %c0_195 = arith.constant 0 : index
    %539 = vector.load %arg5[%c0_194, %c0_195] : memref<128x128xbf16, #tpu.memory_space<vmem>>, vector<128x128xbf16>
    %cst_196 = arith.constant dense<0.000000e+00> : vector<8x128xf32>
    %540 = tpu.matmul %538, %539, %cst_196 {dimension_numbers = #tpu.dot_dimension_numbers<[1], [0], [0], [1], [0, 0, 1, 1], [], []>} : vector<8x128xbf16>, vector<128x128xbf16>, vector<8x128xf32> -> vector<8x128xf32>
    %541 = arith.truncf %540 : vector<8x128xf32> to vector<8x128xbf16>
    %542 = arith.truncf %510 : vector<8x128xf32> to vector<8x128xbf16>
    %543 = tpu.concatenate %541, %542 in 1 : vector<8x128xbf16>, vector<8x128xbf16> -> vector<8x256xbf16>
    %c0_197 = arith.constant 0 : index
    %c0_198 = arith.constant 0 : index
    %544 = vector.load %arg6[%c0_197, %c0_198] : memref<256x512xbf16, #tpu.memory_space<vmem>>, vector<256x512xbf16>
    %cst_199 = arith.constant dense<0.000000e+00> : vector<8x512xf32>
    %545 = tpu.matmul %543, %544, %cst_199 {dimension_numbers = #tpu.dot_dimension_numbers<[1], [0], [0], [1], [0, 0, 1, 1], [], []>} : vector<8x256xbf16>, vector<256x512xbf16>, vector<8x512xf32> -> vector<8x512xf32>
    %c0_200 = arith.constant 0 : index
    %c0_201 = arith.constant 0 : index
    %546 = vector.load %arg7[%c0_200, %c0_201] : memref<1x512xf32, #tpu.memory_space<vmem>>, vector<1x512xf32>
    %547 = vector.broadcast %546 : vector<1x512xf32> to vector<8x512xf32>
    %548 = arith.addf %545, %547 : vector<8x512xf32>
    %549 = vector.extract_strided_slice %548 {offsets = [0, 0], sizes = [8, 128], strides = [1, 1]} : vector<8x512xf32> to vector<8x128xf32>
    %550 = arith.negf %549 : vector<8x128xf32>
    %551 = math.exp %550 : vector<8x128xf32>
    %cst_202 = arith.constant 1.000000e+00 : f32
    %552 = vector.broadcast %cst_202 : f32 to vector<8x128xf32>
    %553 = arith.addf %552, %551 : vector<8x128xf32>
    %554 = arith.divf %552, %553 : vector<8x128xf32>
    %555 = vector.extract_strided_slice %548 {offsets = [0, 128], sizes = [8, 128], strides = [1, 1]} : vector<8x512xf32> to vector<8x128xf32>
    %556 = arith.negf %555 : vector<8x128xf32>
    %557 = math.exp %556 : vector<8x128xf32>
    %cst_203 = arith.constant 1.000000e+00 : f32
    %558 = vector.broadcast %cst_203 : f32 to vector<8x128xf32>
    %559 = arith.addf %558, %557 : vector<8x128xf32>
    %560 = arith.divf %558, %559 : vector<8x128xf32>
    %561 = vector.extract_strided_slice %548 {offsets = [0, 256], sizes = [8, 128], strides = [1, 1]} : vector<8x512xf32> to vector<8x128xf32>
    %562 = math.tanh %561 : vector<8x128xf32>
    %563 = vector.extract_strided_slice %548 {offsets = [0, 384], sizes = [8, 128], strides = [1, 1]} : vector<8x512xf32> to vector<8x128xf32>
    %564 = arith.negf %563 : vector<8x128xf32>
    %565 = math.exp %564 : vector<8x128xf32>
    %cst_204 = arith.constant 1.000000e+00 : f32
    %566 = vector.broadcast %cst_204 : f32 to vector<8x128xf32>
    %567 = arith.addf %566, %565 : vector<8x128xf32>
    %568 = arith.divf %566, %567 : vector<8x128xf32>
    %569 = arith.mulf %560, %508 : vector<8x128xf32>
    %570 = arith.mulf %554, %562 : vector<8x128xf32>
    %571 = arith.addf %569, %570 : vector<8x128xf32>
    %572 = math.tanh %571 : vector<8x128xf32>
    %573 = arith.mulf %568, %572 : vector<8x128xf32>
    %574 = arith.truncf %573 : vector<8x128xf32> to vector<8x128xbf16>
    %c0_205 = arith.constant 0 : index
    %c0_206 = arith.constant 0 : index
    %575 = vector.load %arg8[%c0_205, %c0_206] : memref<128x128xbf16, #tpu.memory_space<vmem>>, vector<128x128xbf16>
    %cst_207 = arith.constant dense<0.000000e+00> : vector<8x128xf32>
    %576 = tpu.matmul %574, %575, %cst_207 {dimension_numbers = #tpu.dot_dimension_numbers<[1], [0], [0], [1], [0, 0, 1, 1], [], []>} : vector<8x128xbf16>, vector<128x128xbf16>, vector<8x128xf32> -> vector<8x128xf32>
    %c0_208 = arith.constant 0 : index
    %c0_209 = arith.constant 0 : index
    %577 = vector.load %arg9[%c0_208, %c0_209] : memref<1x128xf32, #tpu.memory_space<vmem>>, vector<1x128xf32>
    %578 = vector.broadcast %577 : vector<1x128xf32> to vector<8x128xf32>
    %579 = arith.addf %576, %578 : vector<8x128xf32>
    %c4_210 = arith.constant 4 : index
    %c0_211 = arith.constant 0 : index
    %c0_212 = arith.constant 0 : index
    %580 = vector.load %arg10[%c4_210, %c0_211, %c0_212] : memref<7x8x128xf32, #tpu.memory_space<vmem>>, vector<1x8x128xf32>
    %581 = vector.shape_cast %580 : vector<1x8x128xf32> to vector<8x128xf32>
    %582 = vector.shape_cast %579 : vector<8x128xf32> to vector<1x8x128xf32>
    tpu.vector_store %arg10[%c4_210, %c0_211, %c0_212], %582 {strides = array<i32>} : memref<7x8x128xf32, #tpu.memory_space<vmem>>, vector<1x8x128xf32>,
    %cst_213 = arith.constant dense<0xFF800000> : vector<8xf32>
    %583 = vector.multi_reduction <maximumf>, %579, %cst_213 [1] : vector<8x128xf32> to vector<8xf32>
    %584 = vector.shape_cast %583 : vector<8xf32> to vector<8x1xf32>
    %585 = vector.broadcast %584 : vector<8x1xf32> to vector<8x128xf32>
    %586 = arith.cmpf oeq, %579, %585 : vector<8x128xf32>
    %cst_214 = arith.constant 1.280000e+02 : f32
    %587 = vector.broadcast %cst_214 : f32 to vector<8x128xf32>
    %588 = arith.select %586, %275, %587 : vector<8x128xi1>, vector<8x128xf32>
    %cst_215 = arith.constant dense<0x7F800000> : vector<8xf32>
    %589 = vector.multi_reduction <minimumf>, %588, %cst_215 [1] : vector<8x128xf32> to vector<8xf32>
    %590 = vector.shape_cast %589 : vector<8xf32> to vector<8x1xf32>
    %591 = arith.fptosi %590 : vector<8x1xf32> to vector<8x1xi32>
    %c5_216 = arith.constant 5 : index
    %592 = memref.load %arg0[%c5_216] : memref<7xi32, #tpu.memory_space<smem>>
    %c0_i32_217 = arith.constant 0 : i32
    %593 = arith.cmpi sgt, %592, %c0_i32_217 : i32
    %c5_218 = arith.constant 5 : index
    %c0_219 = arith.constant 0 : index
    %c0_220 = arith.constant 0 : index
    %594 = vector.load %arg1[%c5_218, %c0_219, %c0_220] : memref<7x8x1xi32, #tpu.memory_space<vmem>>, vector<1x8x1xi32>
    %595 = vector.shape_cast %594 : vector<1x8x1xi32> to vector<8x1xi32>
    %596 = arith.select %593, %595, %591 : vector<8x1xi32>
    %597 = vector.broadcast %596 : vector<8x1xi32> to vector<8x128xi32>
    %598 = arith.cmpi eq, %274, %597 : vector<8x128xi32>
    %599 = arith.extui %598 : vector<8x128xi1> to vector<8x128xi32>
    %600 = arith.sitofp %599 : vector<8x128xi32> to vector<8x128xf32>
    %601 = arith.truncf %600 : vector<8x128xf32> to vector<8x128xbf16>
    %c0_221 = arith.constant 0 : index
    %c0_222 = arith.constant 0 : index
    %602 = vector.load %arg5[%c0_221, %c0_222] : memref<128x128xbf16, #tpu.memory_space<vmem>>, vector<128x128xbf16>
    %cst_223 = arith.constant dense<0.000000e+00> : vector<8x128xf32>
    %603 = tpu.matmul %601, %602, %cst_223 {dimension_numbers = #tpu.dot_dimension_numbers<[1], [0], [0], [1], [0, 0, 1, 1], [], []>} : vector<8x128xbf16>, vector<128x128xbf16>, vector<8x128xf32> -> vector<8x128xf32>
    %604 = arith.truncf %603 : vector<8x128xf32> to vector<8x128xbf16>
    %605 = arith.truncf %573 : vector<8x128xf32> to vector<8x128xbf16>
    %606 = tpu.concatenate %604, %605 in 1 : vector<8x128xbf16>, vector<8x128xbf16> -> vector<8x256xbf16>
    %c0_224 = arith.constant 0 : index
    %c0_225 = arith.constant 0 : index
    %607 = vector.load %arg6[%c0_224, %c0_225] : memref<256x512xbf16, #tpu.memory_space<vmem>>, vector<256x512xbf16>
    %cst_226 = arith.constant dense<0.000000e+00> : vector<8x512xf32>
    %608 = tpu.matmul %606, %607, %cst_226 {dimension_numbers = #tpu.dot_dimension_numbers<[1], [0], [0], [1], [0, 0, 1, 1], [], []>} : vector<8x256xbf16>, vector<256x512xbf16>, vector<8x512xf32> -> vector<8x512xf32>
    %c0_227 = arith.constant 0 : index
    %c0_228 = arith.constant 0 : index
    %609 = vector.load %arg7[%c0_227, %c0_228] : memref<1x512xf32, #tpu.memory_space<vmem>>, vector<1x512xf32>
    %610 = vector.broadcast %609 : vector<1x512xf32> to vector<8x512xf32>
    %611 = arith.addf %608, %610 : vector<8x512xf32>
    %612 = vector.extract_strided_slice %611 {offsets = [0, 0], sizes = [8, 128], strides = [1, 1]} : vector<8x512xf32> to vector<8x128xf32>
    %613 = arith.negf %612 : vector<8x128xf32>
    %614 = math.exp %613 : vector<8x128xf32>
    %cst_229 = arith.constant 1.000000e+00 : f32
    %615 = vector.broadcast %cst_229 : f32 to vector<8x128xf32>
    %616 = arith.addf %615, %614 : vector<8x128xf32>
    %617 = arith.divf %615, %616 : vector<8x128xf32>
    %618 = vector.extract_strided_slice %611 {offsets = [0, 128], sizes = [8, 128], strides = [1, 1]} : vector<8x512xf32> to vector<8x128xf32>
    %619 = arith.negf %618 : vector<8x128xf32>
    %620 = math.exp %619 : vector<8x128xf32>
    %cst_230 = arith.constant 1.000000e+00 : f32
    %621 = vector.broadcast %cst_230 : f32 to vector<8x128xf32>
    %622 = arith.addf %621, %620 : vector<8x128xf32>
    %623 = arith.divf %621, %622 : vector<8x128xf32>
    %624 = vector.extract_strided_slice %611 {offsets = [0, 256], sizes = [8, 128], strides = [1, 1]} : vector<8x512xf32> to vector<8x128xf32>
    %625 = math.tanh %624 : vector<8x128xf32>
    %626 = vector.extract_strided_slice %611 {offsets = [0, 384], sizes = [8, 128], strides = [1, 1]} : vector<8x512xf32> to vector<8x128xf32>
    %627 = arith.negf %626 : vector<8x128xf32>
    %628 = math.exp %627 : vector<8x128xf32>
    %cst_231 = arith.constant 1.000000e+00 : f32
    %629 = vector.broadcast %cst_231 : f32 to vector<8x128xf32>
    %630 = arith.addf %629, %628 : vector<8x128xf32>
    %631 = arith.divf %629, %630 : vector<8x128xf32>
    %632 = arith.mulf %623, %571 : vector<8x128xf32>
    %633 = arith.mulf %617, %625 : vector<8x128xf32>
    %634 = arith.addf %632, %633 : vector<8x128xf32>
    %635 = math.tanh %634 : vector<8x128xf32>
    %636 = arith.mulf %631, %635 : vector<8x128xf32>
    %637 = arith.truncf %636 : vector<8x128xf32> to vector<8x128xbf16>
    %c0_232 = arith.constant 0 : index
    %c0_233 = arith.constant 0 : index
    %638 = vector.load %arg8[%c0_232, %c0_233] : memref<128x128xbf16, #tpu.memory_space<vmem>>, vector<128x128xbf16>
    %cst_234 = arith.constant dense<0.000000e+00> : vector<8x128xf32>
    %639 = tpu.matmul %637, %638, %cst_234 {dimension_numbers = #tpu.dot_dimension_numbers<[1], [0], [0], [1], [0, 0, 1, 1], [], []>} : vector<8x128xbf16>, vector<128x128xbf16>, vector<8x128xf32> -> vector<8x128xf32>
    %c0_235 = arith.constant 0 : index
    %c0_236 = arith.constant 0 : index
    %640 = vector.load %arg9[%c0_235, %c0_236] : memref<1x128xf32, #tpu.memory_space<vmem>>, vector<1x128xf32>
    %641 = vector.broadcast %640 : vector<1x128xf32> to vector<8x128xf32>
    %642 = arith.addf %639, %641 : vector<8x128xf32>
    %c5_237 = arith.constant 5 : index
    %c0_238 = arith.constant 0 : index
    %c0_239 = arith.constant 0 : index
    %643 = vector.load %arg10[%c5_237, %c0_238, %c0_239] : memref<7x8x128xf32, #tpu.memory_space<vmem>>, vector<1x8x128xf32>
    %644 = vector.shape_cast %643 : vector<1x8x128xf32> to vector<8x128xf32>
    %645 = vector.shape_cast %642 : vector<8x128xf32> to vector<1x8x128xf32>
    tpu.vector_store %arg10[%c5_237, %c0_238, %c0_239], %645 {strides = array<i32>} : memref<7x8x128xf32, #tpu.memory_space<vmem>>, vector<1x8x128xf32>,
    %cst_240 = arith.constant dense<0xFF800000> : vector<8xf32>
    %646 = vector.multi_reduction <maximumf>, %642, %cst_240 [1] : vector<8x128xf32> to vector<8xf32>
    %647 = vector.shape_cast %646 : vector<8xf32> to vector<8x1xf32>
    %648 = vector.broadcast %647 : vector<8x1xf32> to vector<8x128xf32>
    %649 = arith.cmpf oeq, %642, %648 : vector<8x128xf32>
    %cst_241 = arith.constant 1.280000e+02 : f32
    %650 = vector.broadcast %cst_241 : f32 to vector<8x128xf32>
    %651 = arith.select %649, %275, %650 : vector<8x128xi1>, vector<8x128xf32>
    %cst_242 = arith.constant dense<0x7F800000> : vector<8xf32>
    %652 = vector.multi_reduction <minimumf>, %651, %cst_242 [1] : vector<8x128xf32> to vector<8xf32>
    %653 = vector.shape_cast %652 : vector<8xf32> to vector<8x1xf32>
    %654 = arith.fptosi %653 : vector<8x1xf32> to vector<8x1xi32>
    %c6_243 = arith.constant 6 : index
    %655 = memref.load %arg0[%c6_243] : memref<7xi32, #tpu.memory_space<smem>>
    %c0_i32_244 = arith.constant 0 : i32
    %656 = arith.cmpi sgt, %655, %c0_i32_244 : i32
    %c6_245 = arith.constant 6 : index
    %c0_246 = arith.constant 0 : index
    %c0_247 = arith.constant 0 : index
    %657 = vector.load %arg1[%c6_245, %c0_246, %c0_247] : memref<7x8x1xi32, #tpu.memory_space<vmem>>, vector<1x8x1xi32>
    %658 = vector.shape_cast %657 : vector<1x8x1xi32> to vector<8x1xi32>
    %659 = arith.select %656, %658, %654 : vector<8x1xi32>
    %660 = vector.broadcast %659 : vector<8x1xi32> to vector<8x128xi32>
    %661 = arith.cmpi eq, %274, %660 : vector<8x128xi32>
    %662 = arith.extui %661 : vector<8x128xi1> to vector<8x128xi32>
    %663 = arith.sitofp %662 : vector<8x128xi32> to vector<8x128xf32>
    %664 = arith.truncf %663 : vector<8x128xf32> to vector<8x128xbf16>
    %c0_248 = arith.constant 0 : index
    %c0_249 = arith.constant 0 : index
    %665 = vector.load %arg5[%c0_248, %c0_249] : memref<128x128xbf16, #tpu.memory_space<vmem>>, vector<128x128xbf16>
    %cst_250 = arith.constant dense<0.000000e+00> : vector<8x128xf32>
    %666 = tpu.matmul %664, %665, %cst_250 {dimension_numbers = #tpu.dot_dimension_numbers<[1], [0], [0], [1], [0, 0, 1, 1], [], []>} : vector<8x128xbf16>, vector<128x128xbf16>, vector<8x128xf32> -> vector<8x128xf32>
    %667 = arith.truncf %666 : vector<8x128xf32> to vector<8x128xbf16>
    %668 = arith.truncf %636 : vector<8x128xf32> to vector<8x128xbf16>
    %669 = tpu.concatenate %667, %668 in 1 : vector<8x128xbf16>, vector<8x128xbf16> -> vector<8x256xbf16>
    %c0_251 = arith.constant 0 : index
    %c0_252 = arith.constant 0 : index
    %670 = vector.load %arg6[%c0_251, %c0_252] : memref<256x512xbf16, #tpu.memory_space<vmem>>, vector<256x512xbf16>
    %cst_253 = arith.constant dense<0.000000e+00> : vector<8x512xf32>
    %671 = tpu.matmul %669, %670, %cst_253 {dimension_numbers = #tpu.dot_dimension_numbers<[1], [0], [0], [1], [0, 0, 1, 1], [], []>} : vector<8x256xbf16>, vector<256x512xbf16>, vector<8x512xf32> -> vector<8x512xf32>
    %c0_254 = arith.constant 0 : index
    %c0_255 = arith.constant 0 : index
    %672 = vector.load %arg7[%c0_254, %c0_255] : memref<1x512xf32, #tpu.memory_space<vmem>>, vector<1x512xf32>
    %673 = vector.broadcast %672 : vector<1x512xf32> to vector<8x512xf32>
    %674 = arith.addf %671, %673 : vector<8x512xf32>
    %675 = vector.extract_strided_slice %674 {offsets = [0, 0], sizes = [8, 128], strides = [1, 1]} : vector<8x512xf32> to vector<8x128xf32>
    %676 = arith.negf %675 : vector<8x128xf32>
    %677 = math.exp %676 : vector<8x128xf32>
    %cst_256 = arith.constant 1.000000e+00 : f32
    %678 = vector.broadcast %cst_256 : f32 to vector<8x128xf32>
    %679 = arith.addf %678, %677 : vector<8x128xf32>
    %680 = arith.divf %678, %679 : vector<8x128xf32>
    %681 = vector.extract_strided_slice %674 {offsets = [0, 128], sizes = [8, 128], strides = [1, 1]} : vector<8x512xf32> to vector<8x128xf32>
    %682 = arith.negf %681 : vector<8x128xf32>
    %683 = math.exp %682 : vector<8x128xf32>
    %cst_257 = arith.constant 1.000000e+00 : f32
    %684 = vector.broadcast %cst_257 : f32 to vector<8x128xf32>
    %685 = arith.addf %684, %683 : vector<8x128xf32>
    %686 = arith.divf %684, %685 : vector<8x128xf32>
    %687 = vector.extract_strided_slice %674 {offsets = [0, 256], sizes = [8, 128], strides = [1, 1]} : vector<8x512xf32> to vector<8x128xf32>
    %688 = math.tanh %687 : vector<8x128xf32>
    %689 = vector.extract_strided_slice %674 {offsets = [0, 384], sizes = [8, 128], strides = [1, 1]} : vector<8x512xf32> to vector<8x128xf32>
    %690 = arith.negf %689 : vector<8x128xf32>
    %691 = math.exp %690 : vector<8x128xf32>
    %cst_258 = arith.constant 1.000000e+00 : f32
    %692 = vector.broadcast %cst_258 : f32 to vector<8x128xf32>
    %693 = arith.addf %692, %691 : vector<8x128xf32>
    %694 = arith.divf %692, %693 : vector<8x128xf32>
    %695 = arith.mulf %686, %634 : vector<8x128xf32>
    %696 = arith.mulf %680, %688 : vector<8x128xf32>
    %697 = arith.addf %695, %696 : vector<8x128xf32>
    %698 = math.tanh %697 : vector<8x128xf32>
    %699 = arith.mulf %694, %698 : vector<8x128xf32>
    %700 = arith.truncf %699 : vector<8x128xf32> to vector<8x128xbf16>
    %c0_259 = arith.constant 0 : index
    %c0_260 = arith.constant 0 : index
    %701 = vector.load %arg8[%c0_259, %c0_260] : memref<128x128xbf16, #tpu.memory_space<vmem>>, vector<128x128xbf16>
    %cst_261 = arith.constant dense<0.000000e+00> : vector<8x128xf32>
    %702 = tpu.matmul %700, %701, %cst_261 {dimension_numbers = #tpu.dot_dimension_numbers<[1], [0], [0], [1], [0, 0, 1, 1], [], []>} : vector<8x128xbf16>, vector<128x128xbf16>, vector<8x128xf32> -> vector<8x128xf32>
    %c0_262 = arith.constant 0 : index
    %c0_263 = arith.constant 0 : index
    %703 = vector.load %arg9[%c0_262, %c0_263] : memref<1x128xf32, #tpu.memory_space<vmem>>, vector<1x128xf32>
    %704 = vector.broadcast %703 : vector<1x128xf32> to vector<8x128xf32>
    %705 = arith.addf %702, %704 : vector<8x128xf32>
    %c6_264 = arith.constant 6 : index
    %c0_265 = arith.constant 0 : index
    %c0_266 = arith.constant 0 : index
    %706 = vector.load %arg10[%c6_264, %c0_265, %c0_266] : memref<7x8x128xf32, #tpu.memory_space<vmem>>, vector<1x8x128xf32>
    %707 = vector.shape_cast %706 : vector<1x8x128xf32> to vector<8x128xf32>
    %708 = vector.shape_cast %705 : vector<8x128xf32> to vector<1x8x128xf32>
    tpu.vector_store %arg10[%c6_264, %c0_265, %c0_266], %708 {strides = array<i32>} : memref<7x8x128xf32, #tpu.memory_space<vmem>>, vector<1x8x128xf32>,
    return
  }
}

</mosaic_0001>

<llo_original>
// kernel: seq2seq_forward.1
$region0: #{seq2seq_forward.1}
  #allocation0 [shape = 'u32[]', space=smem, size = 0x4, offset = 0x4, fixed_abs, tag = 'smem constant byte address 0x4 - core index']
  #allocation1 [shape = 'u32[144,128]{1,0:T(1,128)}', space=vmem, size = 0x12000, scoped, tag = 'internal scratch']
  %s0 = inlined_call_operand.vmem [shape: s32[7], index: 0, kind: input, shape index: {}]
  %s1 = inlined_call_operand.vmem [shape: s32[7,8,1], index: 1, kind: input, shape index: {}]
  %s2 = inlined_call_operand.vmem [shape: bf16[8,8,128], index: 2, kind: input, shape index: {}]
  %s3 = inlined_call_operand.vmem [shape: bf16[256,512], index: 3, kind: input, shape index: {}]
  %s4 = inlined_call_operand.vmem [shape: f32[1,512], index: 4, kind: input, shape index: {}]
  %s5 = inlined_call_operand.vmem [shape: bf16[128,128], index: 5, kind: input, shape index: {}]
  %s6 = inlined_call_operand.vmem [shape: bf16[256,512], index: 6, kind: input, shape index: {}]
  %s7 = inlined_call_operand.vmem [shape: f32[1,512], index: 7, kind: input, shape index: {}]
  %s8 = inlined_call_operand.vmem [shape: bf16[128,128], index: 8, kind: input, shape index: {}]
  %s9 = inlined_call_operand.vmem [shape: f32[1,128], index: 9, kind: input, shape index: {}]
  %s10 = inlined_call_operand.vmem [shape: f32[7,8,128], index: 10, kind: output, shape index: {}]
  %s11 = sld [smem:[#allocation0]]
  $region54: #{seq2seq_forward.1} parent=0
    _
  %s13 = ssub.s32 1, %s11
  %s14 = scalar_select 0, %s13, %s11
  $region1: #{seq2seq_forward.1} parent=0
    #allocation2 [shape = 'u8[512]{0}', space=smem, size = 0x200, scoped, tag = 'input window, operand 0, single buffered']
    #allocation3 [shape = 's32[1]{0}', space=sflag, size = 0x4, scoped, tag = 'scoped memory for seq2seq_forward.1']
    %15 = vsyncpa [#allocation3], 0
    // Predicated region
    $region2: #{seq2seq_forward.1} parent=1 // pred_check
      _
    $region3: #{seq2seq_forward.1} parent=1 // pred_check_branch
      %17 = sbr.rel (0) target = $region5
    $region4: #{seq2seq_forward.1} parent=1 // pred_region
      %s19 = ssub.s32 16, 16
      %20 = vsyncadd [#allocation3], %s19
      %s22 = sshll.u32 %s0, 4
      %s23 = int_to_ptr.vmem [resolvable:$true] %s22
      %25 = dma.vmem_to_smem %s23, 16, [#allocation2], [#allocation3]
    $region5: #{seq2seq_forward.1} parent=1 // pred_fallthru
      _
    // Predicated region
    $region6: #{seq2seq_forward.1} parent=1 // pred_check
      _
    $region7: #{seq2seq_forward.1} parent=1 // pred_check_branch
      %27 = sbr.rel (0) target = $region9
    $region8: #{seq2seq_forward.1} parent=1 // pred_region
      _
    $region9: #{seq2seq_forward.1} parent=1 // pred_fallthru
      _
    // Predicated region
    $region10: #{seq2seq_forward.1} parent=1 // pred_check
      _
    $region11: #{seq2seq_forward.1} parent=1 // pred_check_branch
      %29 = sbr.rel (0) target = $region13
    $region12: #{seq2seq_forward.1} parent=1 // pred_region
      _
    $region13: #{seq2seq_forward.1} parent=1 // pred_fallthru
      _
    // Predicated region
    $region14: #{seq2seq_forward.1} parent=1 // pred_check
      _
    $region15: #{seq2seq_forward.1} parent=1 // pred_check_branch
      %31 = sbr.rel (0) target = $region17
    $region16: #{seq2seq_forward.1} parent=1 // pred_region
      _
    $region17: #{seq2seq_forward.1} parent=1 // pred_fallthru
      _
    // Predicated region
    $region18: #{seq2seq_forward.1} parent=1 // pred_check
      _
    $region19: #{seq2seq_forward.1} parent=1 // pred_check_branch
      %33 = sbr.rel (0) target = $region21
    $region20: #{seq2seq_forward.1} parent=1 // pred_region
      _
    $region21: #{seq2seq_forward.1} parent=1 // pred_fallthru
      _
    // Predicated region
    $region22: #{seq2seq_forward.1} parent=1 // pred_check
      _
    $region23: #{seq2seq_forward.1} parent=1 // pred_check_branch
      %35 = sbr.rel (0) target = $region25
    $region24: #{seq2seq_forward.1} parent=1 // pred_region
      _
    $region25: #{seq2seq_forward.1} parent=1 // pred_fallthru
      _
    // Predicated region
    $region26: #{seq2seq_forward.1} parent=1 // pred_check
      _
    $region27: #{seq2seq_forward.1} parent=1 // pred_check_branch
      %37 = sbr.rel (0) target = $region29
    $region28: #{seq2seq_forward.1} parent=1 // pred_region
      _
    $region29: #{seq2seq_forward.1} parent=1 // pred_fallthru
      _
    // Predicated region
    $region30: #{seq2seq_forward.1} parent=1 // pred_check
      _
    $region31: #{seq2seq_forward.1} parent=1 // pred_check_branch
      %39 = sbr.rel (0) target = $region33
    $region32: #{seq2seq_forward.1} parent=1 // pred_region
      _
    $region33: #{seq2seq_forward.1} parent=1 // pred_fallthru
      _
    // Predicated region
    $region34: #{seq2seq_forward.1} parent=1 // pred_check
      _
    $region35: #{seq2seq_forward.1} parent=1 // pred_check_branch
      %41 = sbr.rel (0) target = $region37
    $region36: #{seq2seq_forward.1} parent=1 // pred_region
      _
    $region37: #{seq2seq_forward.1} parent=1 // pred_fallthru
      _
    // Predicated region
    $region38: #{seq2seq_forward.1} parent=1 // pred_check
      _
    $region39: #{seq2seq_forward.1} parent=1 // pred_check_branch
      %43 = sbr.rel (0) target = $region41
    $region40: #{seq2seq_forward.1} parent=1 // pred_region
      _
    $region41: #{seq2seq_forward.1} parent=1 // pred_fallthru
      _
    // Predicated region
    $region42: #{seq2seq_forward.1} parent=1 // pred_check
      _
    $region43: #{seq2seq_forward.1} parent=1 // pred_check_branch
      %45 = sbr.rel (0) target = $region45
    $region44: #{seq2seq_forward.1} parent=1 // pred_region
      %46 = dma.done [#allocation3], 16
    $region45: #{seq2seq_forward.1} parent=1 // pred_fallthru
      _
    %47 = sfence
    %v49 = vld [vmem:[%s2] sm:$0xf]
    %v50 = vld [vmem:[%s3] sm:$0xff]
    %v51 = vld [vmem:[%s3 + $0x8] sm:$0xff]
    %v52 = vld [vmem:[%s3 + $0x10] sm:$0xff]
    %v53 = vld [vmem:[%s3 + $0x18] sm:$0xff]
    %v54 = vld [vmem:[%s3 + $0x20] sm:$0xff]
    %v55 = vld [vmem:[%s3 + $0x28] sm:$0xff]
    %v56 = vld [vmem:[%s3 + $0x30] sm:$0xff]
    %v57 = vld [vmem:[%s3 + $0x38] sm:$0xff]
    %v58 = vld [vmem:[%s3 + $0x40] sm:$0xff]
    %v59 = vld [vmem:[%s3 + $0x48] sm:$0xff]
    %v60 = vld [vmem:[%s3 + $0x50] sm:$0xff]
    %v61 = vld [vmem:[%s3 + $0x58] sm:$0xff]
    %v62 = vld [vmem:[%s3 + $0x60] sm:$0xff]
    %v63 = vld [vmem:[%s3 + $0x68] sm:$0xff]
    %v64 = vld [vmem:[%s3 + $0x70] sm:$0xff]
    %v65 = vld [vmem:[%s3 + $0x78] sm:$0xff]
    %v66 = vld [vmem:[%s3 + $0x80] sm:$0xff]
    %v67 = vld [vmem:[%s3 + $0x88] sm:$0xff]
    %v68 = vld [vmem:[%s3 + $0x90] sm:$0xff]
    %v69 = vld [vmem:[%s3 + $0x98] sm:$0xff]
    %v70 = vld [vmem:[%s3 + $0xa0] sm:$0xff]
    %v71 = vld [vmem:[%s3 + $0xa8] sm:$0xff]
    %v72 = vld [vmem:[%s3 + $0xb0] sm:$0xff]
    %v73 = vld [vmem:[%s3 + $0xb8] sm:$0xff]
    %v74 = vld [vmem:[%s3 + $0xc0] sm:$0xff]
    %v75 = vld [vmem:[%s3 + $0xc8] sm:$0xff]
    %v76 = vld [vmem:[%s3 + $0xd0] sm:$0xff]
    %v77 = vld [vmem:[%s3 + $0xd8] sm:$0xff]
    %v78 = vld [vmem:[%s3 + $0xe0] sm:$0xff]
    %v79 = vld [vmem:[%s3 + $0xe8] sm:$0xff]
    %v80 = vld [vmem:[%s3 + $0xf0] sm:$0xff]
    %v81 = vld [vmem:[%s3 + $0xf8] sm:$0xff]
    %v82 = vld [vmem:[%s3 + $0x100] sm:$0xff]
    %v83 = vld [vmem:[%s3 + $0x108] sm:$0xff]
    %v84 = vld [vmem:[%s3 + $0x110] sm:$0xff]
    %v85 = vld [vmem:[%s3 + $0x118] sm:$0xff]
    %v86 = vld [vmem:[%s3 + $0x120] sm:$0xff]
    %v87 = vld [vmem:[%s3 + $0x128] sm:$0xff]
    %v88 = vld [vmem:[%s3 + $0x130] sm:$0xff]
    %v89 = vld [vmem:[%s3 + $0x138] sm:$0xff]
    %v90 = vld [vmem:[%s3 + $0x140] sm:$0xff]
    %v91 = vld [vmem:[%s3 + $0x148] sm:$0xff]
    %v92 = vld [vmem:[%s3 + $0x150] sm:$0xff]
    %v93 = vld [vmem:[%s3 + $0x158] sm:$0xff]
    %v94 = vld [vmem:[%s3 + $0x160] sm:$0xff]
    %v95 = vld [vmem:[%s3 + $0x168] sm:$0xff]
    %v96 = vld [vmem:[%s3 + $0x170] sm:$0xff]
    %v97 = vld [vmem:[%s3 + $0x178] sm:$0xff]
    %v98 = vld [vmem:[%s3 + $0x180] sm:$0xff]
    %v99 = vld [vmem:[%s3 + $0x188] sm:$0xff]
    %v100 = vld [vmem:[%s3 + $0x190] sm:$0xff]
    %v101 = vld [vmem:[%s3 + $0x198] sm:$0xff]
    %v102 = vld [vmem:[%s3 + $0x1a0] sm:$0xff]
    %v103 = vld [vmem:[%s3 + $0x1a8] sm:$0xff]
    %v104 = vld [vmem:[%s3 + $0x1b0] sm:$0xff]
    %v105 = vld [vmem:[%s3 + $0x1b8] sm:$0xff]
    %v106 = vld [vmem:[%s3 + $0x1c0] sm:$0xff]
    %v107 = vld [vmem:[%s3 + $0x1c8] sm:$0xff]
    %v108 = vld [vmem:[%s3 + $0x1d0] sm:$0xff]
    %v109 = vld [vmem:[%s3 + $0x1d8] sm:$0xff]
    %v110 = vld [vmem:[%s3 + $0x1e0] sm:$0xff]
    %v111 = vld [vmem:[%s3 + $0x1e8] sm:$0xff]
    %v112 = vld [vmem:[%s3 + $0x1f0] sm:$0xff]
    %v113 = vld [vmem:[%s3 + $0x1f8] sm:$0xff]
    %v114 = vld [vmem:[%s4] sm:$0xf]
    %v116 = vlaneseq
    %v117 = vshrl.u32 %v116, 7
    %v118 = vsub.s32 0, %v117
    %v119 = vrot.slane %v114, %v118
    %v120 = vlaneseq
    %v121 = vshrl.u32 %v120, 7
    %v122 = vsub.s32 1, %v121
    %v123 = vrot.slane %v114, %v122
    %v124 = vlaneseq
    %v125 = vshrl.u32 %v124, 7
    %v126 = vsub.s32 2, %v125
    %v127 = vrot.slane %v114, %v126
    %v128 = vlaneseq
    %v129 = vshrl.u32 %v128, 7
    %v130 = vsub.s32 3, %v129
    %v131 = vrot.slane %v114, %v130
    %v200 = vunpack.c.l.b16 %v50
    %v201 = vunpack.c.h.b16 %v50
    %v202 = vunpack.c.l.b16 %v51
    %v203 = vunpack.c.h.b16 %v51
    %v204 = vunpack.c.l.b16 %v52
    %v205 = vunpack.c.h.b16 %v52
    %v206 = vunpack.c.l.b16 %v53
    %v207 = vunpack.c.h.b16 %v53
    %v208 = vunpack.c.l.b16 %v54
    %v209 = vunpack.c.h.b16 %v54
    %v210 = vunpack.c.l.b16 %v55
    %v211 = vunpack.c.h.b16 %v55
    %v212 = vunpack.c.l.b16 %v56
    %v213 = vunpack.c.h.b16 %v56
    %v214 = vunpack.c.l.b16 %v57
    %v215 = vunpack.c.h.b16 %v57
    %v216 = vunpack.c.l.b16 %v58
    %v217 = vunpack.c.h.b16 %v58
    %v218 = vunpack.c.l.b16 %v59
    %v219 = vunpack.c.h.b16 %v59
    %v220 = vunpack.c.l.b16 %v60
    %v221 = vunpack.c.h.b16 %v60
    %v222 = vunpack.c.l.b16 %v61
    %v223 = vunpack.c.h.b16 %v61
    %v224 = vunpack.c.l.b16 %v62
    %v225 = vunpack.c.h.b16 %v62
    %v226 = vunpack.c.l.b16 %v63
    %v227 = vunpack.c.h.b16 %v63
    %v228 = vunpack.c.l.b16 %v64
    %v229 = vunpack.c.h.b16 %v64
    %v230 = vunpack.c.l.b16 %v65
    %v231 = vunpack.c.h.b16 %v65
    %v232 = vunpack.c.l.b16 %v66
    %v233 = vunpack.c.h.b16 %v66
    %v234 = vunpack.c.l.b16 %v67
    %v235 = vunpack.c.h.b16 %v67
    %v236 = vunpack.c.l.b16 %v68
    %v237 = vunpack.c.h.b16 %v68
    %v238 = vunpack.c.l.b16 %v69
    %v239 = vunpack.c.h.b16 %v69
    %v240 = vunpack.c.l.b16 %v70
    %v241 = vunpack.c.h.b16 %v70
    %v242 = vunpack.c.l.b16 %v71
    %v243 = vunpack.c.h.b16 %v71
    %v244 = vunpack.c.l.b16 %v72
    %v245 = vunpack.c.h.b16 %v72
    %v246 = vunpack.c.l.b16 %v73
    %v247 = vunpack.c.h.b16 %v73
    %v248 = vunpack.c.l.b16 %v74
    %v249 = vunpack.c.h.b16 %v74
    %v250 = vunpack.c.l.b16 %v75
    %v251 = vunpack.c.h.b16 %v75
    %v252 = vunpack.c.l.b16 %v76
    %v253 = vunpack.c.h.b16 %v76
    %v254 = vunpack.c.l.b16 %v77
    %v255 = vunpack.c.h.b16 %v77
    %v256 = vunpack.c.l.b16 %v78
    %v257 = vunpack.c.h.b16 %v78
    %v258 = vunpack.c.l.b16 %v79
    %v259 = vunpack.c.h.b16 %v79
    %v260 = vunpack.c.l.b16 %v80
    %v261 = vunpack.c.h.b16 %v80
    %v262 = vunpack.c.l.b16 %v81
    %v263 = vunpack.c.h.b16 %v81
    %v264 = vunpack.c.l.b16 %v82
    %v265 = vunpack.c.h.b16 %v82
    %v266 = vunpack.c.l.b16 %v83
    %v267 = vunpack.c.h.b16 %v83
    %v268 = vunpack.c.l.b16 %v84
    %v269 = vunpack.c.h.b16 %v84
    %v270 = vunpack.c.l.b16 %v85
    %v271 = vunpack.c.h.b16 %v85
    %v272 = vunpack.c.l.b16 %v86
    %v273 = vunpack.c.h.b16 %v86
    %v274 = vunpack.c.l.b16 %v87
    %v275 = vunpack.c.h.b16 %v87
    %v276 = vunpack.c.l.b16 %v88
    %v277 = vunpack.c.h.b16 %v88
    %v278 = vunpack.c.l.b16 %v89
    %v279 = vunpack.c.h.b16 %v89
    %v280 = vunpack.c.l.b16 %v90
    %v281 = vunpack.c.h.b16 %v90
    %v282 = vunpack.c.l.b16 %v91
    %v283 = vunpack.c.h.b16 %v91
    %v284 = vunpack.c.l.b16 %v92
    %v285 = vunpack.c.h.b16 %v92
    %v286 = vunpack.c.l.b16 %v93
    %v287 = vunpack.c.h.b16 %v93
    %v288 = vunpack.c.l.b16 %v94
    %v289 = vunpack.c.h.b16 %v94
    %v290 = vunpack.c.l.b16 %v95
    %v291 = vunpack.c.h.b16 %v95
    %v292 = vunpack.c.l.b16 %v96
    %v293 = vunpack.c.h.b16 %v96
    %v294 = vunpack.c.l.b16 %v97
    %v295 = vunpack.c.h.b16 %v97
    %v296 = vunpack.c.l.b16 %v98
    %v297 = vunpack.c.h.b16 %v98
    %v298 = vunpack.c.l.b16 %v99
    %v299 = vunpack.c.h.b16 %v99
    %v300 = vunpack.c.l.b16 %v100
    %v301 = vunpack.c.h.b16 %v100
    %v302 = vunpack.c.l.b16 %v101
    %v303 = vunpack.c.h.b16 %v101
    %v304 = vunpack.c.l.b16 %v102
    %v305 = vunpack.c.h.b16 %v102
    %v306 = vunpack.c.l.b16 %v103
    %v307 = vunpack.c.h.b16 %v103
    %v308 = vunpack.c.l.b16 %v104
    %v309 = vunpack.c.h.b16 %v104
    %v310 = vunpack.c.l.b16 %v105
    %v311 = vunpack.c.h.b16 %v105
    %v312 = vunpack.c.l.b16 %v106
    %v313 = vunpack.c.h.b16 %v106
    %v314 = vunpack.c.l.b16 %v107
    %v315 = vunpack.c.h.b16 %v107
    %v316 = vunpack.c.l.b16 %v108
    %v317 = vunpack.c.h.b16 %v108
    %v318 = vunpack.c.l.b16 %v109
    %v319 = vunpack.c.h.b16 %v109
    %v320 = vunpack.c.l.b16 %v110
    %v321 = vunpack.c.h.b16 %v110
    %v322 = vunpack.c.l.b16 %v111
    %v323 = vunpack.c.h.b16 %v111
    %v324 = vunpack.c.l.b16 %v112
    %v325 = vunpack.c.h.b16 %v112
    %v326 = vunpack.c.l.b16 %v113
    %v327 = vunpack.c.h.b16 %v113
    %v328 = vpack.c.b16 %v204, %v200
    %v329 = vpack.c.b16 %v205, %v201
    %v330 = vpack.c.b16 %v206, %v202
    %v331 = vpack.c.b16 %v207, %v203
    %v332 = vpack.c.b16 %v212, %v208
    %v333 = vpack.c.b16 %v213, %v209
    %v334 = vpack.c.b16 %v214, %v210
    %v335 = vpack.c.b16 %v215, %v211
    %v336 = vpack.c.b16 %v220, %v216
    %v337 = vpack.c.b16 %v221, %v217
    %v338 = vpack.c.b16 %v222, %v218
    %v339 = vpack.c.b16 %v223, %v219
    %v340 = vpack.c.b16 %v228, %v224
    %v341 = vpack.c.b16 %v229, %v225
    %v342 = vpack.c.b16 %v230, %v226
    %v343 = vpack.c.b16 %v231, %v227
    %v344 = vpack.c.b16 %v236, %v232
    %v345 = vpack.c.b16 %v237, %v233
    %v346 = vpack.c.b16 %v238, %v234
    %v347 = vpack.c.b16 %v239, %v235
    %v348 = vpack.c.b16 %v244, %v240
    %v349 = vpack.c.b16 %v245, %v241
    %v350 = vpack.c.b16 %v246, %v242
    %v351 = vpack.c.b16 %v247, %v243
    %v352 = vpack.c.b16 %v252, %v248
    %v353 = vpack.c.b16 %v253, %v249
    %v354 = vpack.c.b16 %v254, %v250
    %v355 = vpack.c.b16 %v255, %v251
    %v356 = vpack.c.b16 %v260, %v256
    %v357 = vpack.c.b16 %v261, %v257
    %v358 = vpack.c.b16 %v262, %v258
    %v359 = vpack.c.b16 %v263, %v259
    %v360 = vpack.c.b16 %v268, %v264
    %v361 = vpack.c.b16 %v269, %v265
    %v362 = vpack.c.b16 %v270, %v266
    %v363 = vpack.c.b16 %v271, %v267
    %v364 = vpack.c.b16 %v276, %v272
    %v365 = vpack.c.b16 %v277, %v273
    %v366 = vpack.c.b16 %v278, %v274
    %v367 = vpack.c.b16 %v279, %v275
    %v368 = vpack.c.b16 %v284, %v280
    %v369 = vpack.c.b16 %v285, %v281
    %v370 = vpack.c.b16 %v286, %v282
    %v371 = vpack.c.b16 %v287, %v283
    %v372 = vpack.c.b16 %v292, %v288
    %v373 = vpack.c.b16 %v293, %v289
    %v374 = vpack.c.b16 %v294, %v290
    %v375 = vpack.c.b16 %v295, %v291
    %v376 = vpack.c.b16 %v300, %v296
    %v377 = vpack.c.b16 %v301, %v297
    %v378 = vpack.c.b16 %v302, %v298
    %v379 = vpack.c.b16 %v303, %v299
    %v380 = vpack.c.b16 %v308, %v304
    %v381 = vpack.c.b16 %v309, %v305
    %v382 = vpack.c.b16 %v310, %v306
    %v383 = vpack.c.b16 %v311, %v307
    %v384 = vpack.c.b16 %v316, %v312
    %v385 = vpack.c.b16 %v317, %v313
    %v386 = vpack.c.b16 %v318, %v314
    %v387 = vpack.c.b16 %v319, %v315
    %v388 = vpack.c.b16 %v324, %v320
    %v389 = vpack.c.b16 %v325, %v321
    %v390 = vpack.c.b16 %v326, %v322
    %v391 = vpack.c.b16 %v327, %v323
    %456 = vmatprep.subr.bf16.mxu0 %v329
    %457 = vmatpush1.bf16.msra.mxu0 %v328
    %458 = vmatprep.subr.bf16.mxu0 %v333
    %459 = vmatpush1.bf16.msra.mxu0 %v332
    %460 = vmatprep.subr.bf16.mxu0 %v337
    %461 = vmatpush1.bf16.msra.mxu0 %v336
    %462 = vmatprep.subr.bf16.mxu0 %v341
    %463 = vmatpush1.bf16.msra.mxu0 %v340
    %464 = vmatprep.subr.bf16.mxu0 %v345
    %465 = vmatpush1.bf16.msra.mxu0 %v344
    %466 = vmatprep.subr.bf16.mxu0 %v349
    %467 = vmatpush1.bf16.msra.mxu0 %v348
    %468 = vmatprep.subr.bf16.mxu0 %v353
    %469 = vmatpush1.bf16.msra.mxu0 %v352
    %470 = vmatprep.subr.bf16.mxu0 %v357
    %471 = vmatpush1.bf16.msra.mxu0 %v356
    %472 = vmatprep.subr.bf16.mxu0 %v361
    %473 = vmatpush1.bf16.msra.mxu0 %v360
    %474 = vmatprep.subr.bf16.mxu0 %v365
    %475 = vmatpush1.bf16.msra.mxu0 %v364
    %476 = vmatprep.subr.bf16.mxu0 %v369
    %477 = vmatpush1.bf16.msra.mxu0 %v368
    %478 = vmatprep.subr.bf16.mxu0 %v373
    %479 = vmatpush1.bf16.msra.mxu0 %v372
    %480 = vmatprep.subr.bf16.mxu0 %v377
    %481 = vmatpush1.bf16.msra.mxu0 %v376
    %482 = vmatprep.subr.bf16.mxu0 %v381
    %483 = vmatpush1.bf16.msra.mxu0 %v380
    %484 = vmatprep.subr.bf16.mxu0 %v385
    %485 = vmatpush1.bf16.msra.mxu0 %v384
    %486 = vmatprep.subr.bf16.mxu0 %v389
    %487 = vmatpush1.bf16.msra.mxu0 %v388
    %488 = vmatprep.mubr.bf16.mxu0 0
    %489 = vmatmul.mubr.bf16.gmra.mrb[0].mxu0 %v49
    %v490 = vpop.f32.mrb[0].mxu0
    %v491 = vadd.f32 %v119, %v490
    %v492 = vpop.f32.mrb[0].mxu0
    %v493 = vadd.f32 %v123, %v492
    %v494 = vpop.f32.mrb[0].mxu0
    %v495 = vpop.f32.mrb[0].mxu0
    %496 = vdwg.mxu0
    %497 = vmatprep.subr.bf16.mxu0 %v331
    %498 = vmatpush1.bf16.msra.mxu0 %v330
    %499 = vmatprep.subr.bf16.mxu0 %v335
    %500 = vmatpush1.bf16.msra.mxu0 %v334
    %501 = vmatprep.subr.bf16.mxu0 %v339
    %502 = vmatpush1.bf16.msra.mxu0 %v338
    %503 = vmatprep.subr.bf16.mxu0 %v343
    %504 = vmatpush1.bf16.msra.mxu0 %v342
    %505 = vmatprep.subr.bf16.mxu0 %v347
    %506 = vmatpush1.bf16.msra.mxu0 %v346
    %507 = vmatprep.subr.bf16.mxu0 %v351
    %508 = vmatpush1.bf16.msra.mxu0 %v350
    %509 = vmatprep.subr.bf16.mxu0 %v355
    %510 = vmatpush1.bf16.msra.mxu0 %v354
    %511 = vmatprep.subr.bf16.mxu0 %v359
    %512 = vmatpush1.bf16.msra.mxu0 %v358
    %513 = vmatprep.subr.bf16.mxu0 %v363
    %514 = vmatpush1.bf16.msra.mxu0 %v362
    %515 = vmatprep.subr.bf16.mxu0 %v367
    %516 = vmatpush1.bf16.msra.mxu0 %v366
    %517 = vmatprep.subr.bf16.mxu0 %v371
    %518 = vmatpush1.bf16.msra.mxu0 %v370
    %519 = vmatprep.subr.bf16.mxu0 %v375
    %520 = vmatpush1.bf16.msra.mxu0 %v374
    %521 = vmatprep.subr.bf16.mxu0 %v379
    %522 = vmatpush1.bf16.msra.mxu0 %v378
    %523 = vmatprep.subr.bf16.mxu0 %v383
    %524 = vmatpush1.bf16.msra.mxu0 %v382
    %525 = vmatprep.subr.bf16.mxu0 %v387
    %526 = vmatpush1.bf16.msra.mxu0 %v386
    %527 = vmatprep.subr.bf16.mxu0 %v391
    %528 = vmatpush1.bf16.msra.mxu0 %v390
    %529 = vmatprep.mubr.bf16.mxu0 0
    %530 = vmatmul.mubr.bf16.gmra.mrb[0].mxu0 %v49
    %v531 = vpop.f32.mrb[0].mxu0
    %v532 = vadd.f32 %v127, %v531
    %v533 = vpop.f32.mrb[0].mxu0
    %v534 = vadd.f32 %v131, %v533
    %v535 = vpop.f32.mrb[0].mxu0
    %v536 = vpop.f32.mrb[0].mxu0
    %537 = vdwg.mxu0
    %v538 = vxor.u32 %v491, 2147483648
    %v539 = vmul.f32 %v538, 1.442695
    %v540 = vpow.pop %v539
    %v541 = vadd.f32 %v540, 1.0
    %v542 = vrcp.pop %v541
    %v543 = vmul.f32 1.0, %v542
    %v544 = vxor.u32 %v493, 2147483648
    %v545 = vmul.f32 %v544, 1.442695
    %v546 = vpow.pop %v545
    %v547 = vadd.f32 %v546, 1.0
    %v548 = vrcp.pop %v547
    %v549 = vmul.f32 1.0, %v548
    %v550 = vtanh.pop %v532
    %v551 = vxor.u32 %v534, 2147483648
    %v552 = vmul.f32 %v551, 1.442695
    %v553 = vpow.pop %v552
    %v554 = vadd.f32 %v553, 1.0
    %v555 = vrcp.pop %v554
    %v556 = vmul.f32 1.0, %v555
    %v557 = vmul.f32 %v549, 0.0
    %v558 = vmul.f32 %v543, %v550
    %v559 = vadd.f32 %v557, %v558
    %v560 = vtanh.pop %v559
    %v561 = vmul.f32 %v556, %v560
    %s562 = scalar_lea.vmem %s2, 4
    %v563 = vld [vmem:[%s562] sm:$0xf]
    %v564 = vpack.c.bf16 %v561, %v561
    %565 = vmatprep.subr.bf16.mxu0 %v329
    %566 = vmatpush1.bf16.msra.mxu0 %v328
    %567 = vmatprep.subr.bf16.mxu0 %v333
    %568 = vmatpush1.bf16.msra.mxu0 %v332
    %569 = vmatprep.subr.bf16.mxu0 %v337
    %570 = vmatpush1.bf16.msra.mxu0 %v336
    %571 = vmatprep.subr.bf16.mxu0 %v341
    %572 = vmatpush1.bf16.msra.mxu0 %v340
    %573 = vmatprep.subr.bf16.mxu0 %v345
    %574 = vmatpush1.bf16.msra.mxu0 %v344
    %575 = vmatprep.subr.bf16.mxu0 %v349
    %576 = vmatpush1.bf16.msra.mxu0 %v348
    %577 = vmatprep.subr.bf16.mxu0 %v353
    %578 = vmatpush1.bf16.msra.mxu0 %v352
    %579 = vmatprep.subr.bf16.mxu0 %v357
    %580 = vmatpush1.bf16.msra.mxu0 %v356
    %581 = vmatprep.subr.bf16.mxu0 %v361
    %582 = vmatpush1.bf16.msra.mxu0 %v360
    %583 = vmatprep.subr.bf16.mxu0 %v365
    %584 = vmatpush1.bf16.msra.mxu0 %v364
    %585 = vmatprep.subr.bf16.mxu0 %v369
    %586 = vmatpush1.bf16.msra.mxu0 %v368
    %587 = vmatprep.subr.bf16.mxu0 %v373
    %588 = vmatpush1.bf16.msra.mxu0 %v372
    %589 = vmatprep.subr.bf16.mxu0 %v377
    %590 = vmatpush1.bf16.msra.mxu0 %v376
    %591 = vmatprep.subr.bf16.mxu0 %v381
    %592 = vmatpush1.bf16.msra.mxu0 %v380
    %593 = vmatprep.subr.bf16.mxu0 %v385
    %594 = vmatpush1.bf16.msra.mxu0 %v384
    %595 = vmatprep.subr.bf16.mxu0 %v389
    %596 = vmatpush1.bf16.msra.mxu0 %v388
    %597 = vmatprep.mubr.bf16.mxu0 %v564
    %598 = vmatmul.mubr.bf16.gmra.mrb[0].mxu0 %v563
    %v599 = vpop.f32.mrb[0].mxu0
    %v600 = vadd.f32 %v119, %v599
    %v601 = vpop.f32.mrb[0].mxu0
    %v602 = vadd.f32 %v123, %v601
    %v603 = vpop.f32.mrb[0].mxu0
    %v604 = vpop.f32.mrb[0].mxu0
    %605 = vdwg.mxu0
    %606 = vmatprep.subr.bf16.mxu0 %v331
    %607 = vmatpush1.bf16.msra.mxu0 %v330
    %608 = vmatprep.subr.bf16.mxu0 %v335
    %609 = vmatpush1.bf16.msra.mxu0 %v334
    %610 = vmatprep.subr.bf16.mxu0 %v339
    %611 = vmatpush1.bf16.msra.mxu0 %v338
    %612 = vmatprep.subr.bf16.mxu0 %v343
    %613 = vmatpush1.bf16.msra.mxu0 %v342
    %614 = vmatprep.subr.bf16.mxu0 %v347
    %615 = vmatpush1.bf16.msra.mxu0 %v346
    %616 = vmatprep.subr.bf16.mxu0 %v351
    %617 = vmatpush1.bf16.msra.mxu0 %v350
    %618 = vmatprep.subr.bf16.mxu0 %v355
    %619 = vmatpush1.bf16.msra.mxu0 %v354
    %620 = vmatprep.subr.bf16.mxu0 %v359
    %621 = vmatpush1.bf16.msra.mxu0 %v358
    %622 = vmatprep.subr.bf16.mxu0 %v363
    %623 = vmatpush1.bf16.msra.mxu0 %v362
    %624 = vmatprep.subr.bf16.mxu0 %v367
    %625 = vmatpush1.bf16.msra.mxu0 %v366
    %626 = vmatprep.subr.bf16.mxu0 %v371
    %627 = vmatpush1.bf16.msra.mxu0 %v370
    %628 = vmatprep.subr.bf16.mxu0 %v375
    %629 = vmatpush1.bf16.msra.mxu0 %v374
    %630 = vmatprep.subr.bf16.mxu0 %v379
    %631 = vmatpush1.bf16.msra.mxu0 %v378
    %632 = vmatprep.subr.bf16.mxu0 %v383
    %633 = vmatpush1.bf16.msra.mxu0 %v382
    %634 = vmatprep.subr.bf16.mxu0 %v387
    %635 = vmatpush1.bf16.msra.mxu0 %v386
    %636 = vmatprep.subr.bf16.mxu0 %v391
    %637 = vmatpush1.bf16.msra.mxu0 %v390
    %638 = vmatprep.mubr.bf16.mxu0 %v564
    %639 = vmatmul.mubr.bf16.gmra.mrb[0].mxu0 %v563
    %v640 = vpop.f32.mrb[0].mxu0
    %v641 = vadd.f32 %v127, %v640
    %v642 = vpop.f32.mrb[0].mxu0
    %v643 = vadd.f32 %v131, %v642
    %v644 = vpop.f32.mrb[0].mxu0
    %v645 = vpop.f32.mrb[0].mxu0
    %646 = vdwg.mxu0
    %v647 = vxor.u32 %v600, 2147483648
    %v648 = vmul.f32 %v647, 1.442695
    %v649 = vpow.pop %v648
    %v650 = vadd.f32 %v649, 1.0
    %v651 = vrcp.pop %v650
    %v652 = vmul.f32 1.0, %v651
    %v653 = vxor.u32 %v602, 2147483648
    %v654 = vmul.f32 %v653, 1.442695
    %v655 = vpow.pop %v654
    %v656 = vadd.f32 %v655, 1.0
    %v657 = vrcp.pop %v656
    %v658 = vmul.f32 1.0, %v657
    %v659 = vtanh.pop %v641
    %v660 = vxor.u32 %v643, 2147483648
    %v661 = vmul.f32 %v660, 1.442695
    %v662 = vpow.pop %v661
    %v663 = vadd.f32 %v662, 1.0
    %v664 = vrcp.pop %v663
    %v665 = vmul.f32 1.0, %v664
    %v666 = vmul.f32 %v658, %v559
    %v667 = vmul.f32 %v652, %v659
    %v668 = vadd.f32 %v666, %v667
    %v669 = vtanh.pop %v668
    %v670 = vmul.f32 %v665, %v669
    %s671 = scalar_lea.vmem %s2, 8
    %v672 = vld [vmem:[%s671] sm:$0xf]
    %v673 = vpack.c.bf16 %v670, %v670
    %674 = vmatprep.subr.bf16.mxu0 %v329
    %675 = vmatpush1.bf16.msra.mxu0 %v328
    %676 = vmatprep.subr.bf16.mxu0 %v333
    %677 = vmatpush1.bf16.msra.mxu0 %v332
    %678 = vmatprep.subr.bf16.mxu0 %v337
    %679 = vmatpush1.bf16.msra.mxu0 %v336
    %680 = vmatprep.subr.bf16.mxu0 %v341
    %681 = vmatpush1.bf16.msra.mxu0 %v340
    %682 = vmatprep.subr.bf16.mxu0 %v345
    %683 = vmatpush1.bf16.msra.mxu0 %v344
    %684 = vmatprep.subr.bf16.mxu0 %v349
    %685 = vmatpush1.bf16.msra.mxu0 %v348
    %686 = vmatprep.subr.bf16.mxu0 %v353
    %687 = vmatpush1.bf16.msra.mxu0 %v352
    %688 = vmatprep.subr.bf16.mxu0 %v357
    %689 = vmatpush1.bf16.msra.mxu0 %v356
    %690 = vmatprep.subr.bf16.mxu0 %v361
    %691 = vmatpush1.bf16.msra.mxu0 %v360
    %692 = vmatprep.subr.bf16.mxu0 %v365
    %693 = vmatpush1.bf16.msra.mxu0 %v364
    %694 = vmatprep.subr.bf16.mxu0 %v369
    %695 = vmatpush1.bf16.msra.mxu0 %v368
    %696 = vmatprep.subr.bf16.mxu0 %v373
    %697 = vmatpush1.bf16.msra.mxu0 %v372
    %698 = vmatprep.subr.bf16.mxu0 %v377
    %699 = vmatpush1.bf16.msra.mxu0 %v376
    %700 = vmatprep.subr.bf16.mxu0 %v381
    %701 = vmatpush1.bf16.msra.mxu0 %v380
    %702 = vmatprep.subr.bf16.mxu0 %v385
    %703 = vmatpush1.bf16.msra.mxu0 %v384
    %704 = vmatprep.subr.bf16.mxu0 %v389
    %705 = vmatpush1.bf16.msra.mxu0 %v388
    %706 = vmatprep.mubr.bf16.mxu0 %v673
    %707 = vmatmul.mubr.bf16.gmra.mrb[0].mxu0 %v672
    %v708 = vpop.f32.mrb[0].mxu0
    %v709 = vadd.f32 %v119, %v708
    %v710 = vpop.f32.mrb[0].mxu0
    %v711 = vadd.f32 %v123, %v710
    %v712 = vpop.f32.mrb[0].mxu0
    %v713 = vpop.f32.mrb[0].mxu0
    %714 = vdwg.mxu0
    %715 = vmatprep.subr.bf16.mxu0 %v331
    %716 = vmatpush1.bf16.msra.mxu0 %v330
    %717 = vmatprep.subr.bf16.mxu0 %v335
    %718 = vmatpush1.bf16.msra.mxu0 %v334
    %719 = vmatprep.subr.bf16.mxu0 %v339
    %720 = vmatpush1.bf16.msra.mxu0 %v338
    %721 = vmatprep.subr.bf16.mxu0 %v343
    %722 = vmatpush1.bf16.msra.mxu0 %v342
    %723 = vmatprep.subr.bf16.mxu0 %v347
    %724 = vmatpush1.bf16.msra.mxu0 %v346
    %725 = vmatprep.subr.bf16.mxu0 %v351
    %726 = vmatpush1.bf16.msra.mxu0 %v350
    %727 = vmatprep.subr.bf16.mxu0 %v355
    %728 = vmatpush1.bf16.msra.mxu0 %v354
    %729 = vmatprep.subr.bf16.mxu0 %v359
    %730 = vmatpush1.bf16.msra.mxu0 %v358
    %731 = vmatprep.subr.bf16.mxu0 %v363
    %732 = vmatpush1.bf16.msra.mxu0 %v362
    %733 = vmatprep.subr.bf16.mxu0 %v367
    %734 = vmatpush1.bf16.msra.mxu0 %v366
    %735 = vmatprep.subr.bf16.mxu0 %v371
    %736 = vmatpush1.bf16.msra.mxu0 %v370
    %737 = vmatprep.subr.bf16.mxu0 %v375
    %738 = vmatpush1.bf16.msra.mxu0 %v374
    %739 = vmatprep.subr.bf16.mxu0 %v379
    %740 = vmatpush1.bf16.msra.mxu0 %v378
    %741 = vmatprep.subr.bf16.mxu0 %v383
    %742 = vmatpush1.bf16.msra.mxu0 %v382
    %743 = vmatprep.subr.bf16.mxu0 %v387
    %744 = vmatpush1.bf16.msra.mxu0 %v386
    %745 = vmatprep.subr.bf16.mxu0 %v391
    %746 = vmatpush1.bf16.msra.mxu0 %v390
    %747 = vmatprep.mubr.bf16.mxu0 %v673
    %748 = vmatmul.mubr.bf16.gmra.mrb[0].mxu0 %v672
    %v749 = vpop.f32.mrb[0].mxu0
    %v750 = vadd.f32 %v127, %v749
    %v751 = vpop.f32.mrb[0].mxu0
    %v752 = vadd.f32 %v131, %v751
    %v753 = vpop.f32.mrb[0].mxu0
    %v754 = vpop.f32.mrb[0].mxu0
    %755 = vdwg.mxu0
    %v756 = vxor.u32 %v709, 2147483648
    %v757 = vmul.f32 %v756, 1.442695
    %v758 = vpow.pop %v757
    %v759 = vadd.f32 %v758, 1.0
    %v760 = vrcp.pop %v759
    %v761 = vmul.f32 1.0, %v760
    %v762 = vxor.u32 %v711, 2147483648
    %v763 = vmul.f32 %v762, 1.442695
    %v764 = vpow.pop %v763
    %v765 = vadd.f32 %v764, 1.0
    %v766 = vrcp.pop %v765
    %v767 = vmul.f32 1.0, %v766
    %v768 = vtanh.pop %v750
    %v769 = vxor.u32 %v752, 2147483648
    %v770 = vmul.f32 %v769, 1.442695
    %v771 = vpow.pop %v770
    %v772 = vadd.f32 %v771, 1.0
    %v773 = vrcp.pop %v772
    %v774 = vmul.f32 1.0, %v773
    %v775 = vmul.f32 %v767, %v668
    %v776 = vmul.f32 %v761, %v768
    %v777 = vadd.f32 %v775, %v776
    %v778 = vtanh.pop %v777
    %v779 = vmul.f32 %v774, %v778
    %s780 = scalar_lea.vmem %s2, 12
    %v781 = vld [vmem:[%s780] sm:$0xf]
    %v782 = vpack.c.bf16 %v779, %v779
    %783 = vmatprep.subr.bf16.mxu0 %v329
    %784 = vmatpush1.bf16.msra.mxu0 %v328
    %785 = vmatprep.subr.bf16.mxu0 %v333
    %786 = vmatpush1.bf16.msra.mxu0 %v332
    %787 = vmatprep.subr.bf16.mxu0 %v337
    %788 = vmatpush1.bf16.msra.mxu0 %v336
    %789 = vmatprep.subr.bf16.mxu0 %v341
    %790 = vmatpush1.bf16.msra.mxu0 %v340
    %791 = vmatprep.subr.bf16.mxu0 %v345
    %792 = vmatpush1.bf16.msra.mxu0 %v344
    %793 = vmatprep.subr.bf16.mxu0 %v349
    %794 = vmatpush1.bf16.msra.mxu0 %v348
    %795 = vmatprep.subr.bf16.mxu0 %v353
    %796 = vmatpush1.bf16.msra.mxu0 %v352
    %797 = vmatprep.subr.bf16.mxu0 %v357
    %798 = vmatpush1.bf16.msra.mxu0 %v356
    %799 = vmatprep.subr.bf16.mxu0 %v361
    %800 = vmatpush1.bf16.msra.mxu0 %v360
    %801 = vmatprep.subr.bf16.mxu0 %v365
    %802 = vmatpush1.bf16.msra.mxu0 %v364
    %803 = vmatprep.subr.bf16.mxu0 %v369
    %804 = vmatpush1.bf16.msra.mxu0 %v368
    %805 = vmatprep.subr.bf16.mxu0 %v373
    %806 = vmatpush1.bf16.msra.mxu0 %v372
    %807 = vmatprep.subr.bf16.mxu0 %v377
    %808 = vmatpush1.bf16.msra.mxu0 %v376
    %809 = vmatprep.subr.bf16.mxu0 %v381
    %810 = vmatpush1.bf16.msra.mxu0 %v380
    %811 = vmatprep.subr.bf16.mxu0 %v385
    %812 = vmatpush1.bf16.msra.mxu0 %v384
    %813 = vmatprep.subr.bf16.mxu0 %v389
    %814 = vmatpush1.bf16.msra.mxu0 %v388
    %815 = vmatprep.mubr.bf16.mxu0 %v782
    %816 = vmatmul.mubr.bf16.gmra.mrb[0].mxu0 %v781
    %v817 = vpop.f32.mrb[0].mxu0
    %v818 = vadd.f32 %v119, %v817
    %v819 = vpop.f32.mrb[0].mxu0
    %v820 = vadd.f32 %v123, %v819
    %v821 = vpop.f32.mrb[0].mxu0
    %v822 = vpop.f32.mrb[0].mxu0
    %823 = vdwg.mxu0
    %824 = vmatprep.subr.bf16.mxu0 %v331
    %825 = vmatpush1.bf16.msra.mxu0 %v330
    %826 = vmatprep.subr.bf16.mxu0 %v335
    %827 = vmatpush1.bf16.msra.mxu0 %v334
    %828 = vmatprep.subr.bf16.mxu0 %v339
    %829 = vmatpush1.bf16.msra.mxu0 %v338
    %830 = vmatprep.subr.bf16.mxu0 %v343
    %831 = vmatpush1.bf16.msra.mxu0 %v342
    %832 = vmatprep.subr.bf16.mxu0 %v347
    %833 = vmatpush1.bf16.msra.mxu0 %v346
    %834 = vmatprep.subr.bf16.mxu0 %v351
    %835 = vmatpush1.bf16.msra.mxu0 %v350
    %836 = vmatprep.subr.bf16.mxu0 %v355
    %837 = vmatpush1.bf16.msra.mxu0 %v354
    %838 = vmatprep.subr.bf16.mxu0 %v359
    %839 = vmatpush1.bf16.msra.mxu0 %v358
    %840 = vmatprep.subr.bf16.mxu0 %v363
    %841 = vmatpush1.bf16.msra.mxu0 %v362
    %842 = vmatprep.subr.bf16.mxu0 %v367
    %843 = vmatpush1.bf16.msra.mxu0 %v366
    %844 = vmatprep.subr.bf16.mxu0 %v371
    %845 = vmatpush1.bf16.msra.mxu0 %v370
    %846 = vmatprep.subr.bf16.mxu0 %v375
    %847 = vmatpush1.bf16.msra.mxu0 %v374
    %848 = vmatprep.subr.bf16.mxu0 %v379
    %849 = vmatpush1.bf16.msra.mxu0 %v378
    %850 = vmatprep.subr.bf16.mxu0 %v383
    %851 = vmatpush1.bf16.msra.mxu0 %v382
    %852 = vmatprep.subr.bf16.mxu0 %v387
    %853 = vmatpush1.bf16.msra.mxu0 %v386
    %854 = vmatprep.subr.bf16.mxu0 %v391
    %855 = vmatpush1.bf16.msra.mxu0 %v390
    %856 = vmatprep.mubr.bf16.mxu0 %v782
    %857 = vmatmul.mubr.bf16.gmra.mrb[0].mxu0 %v781
    %v858 = vpop.f32.mrb[0].mxu0
    %v859 = vadd.f32 %v127, %v858
    %v860 = vpop.f32.mrb[0].mxu0
    %v861 = vadd.f32 %v131, %v860
    %v862 = vpop.f32.mrb[0].mxu0
    %v863 = vpop.f32.mrb[0].mxu0
    %864 = vdwg.mxu0
    %v865 = vxor.u32 %v818, 2147483648
    %v866 = vmul.f32 %v865, 1.442695
    %v867 = vpow.pop %v866
    %v868 = vadd.f32 %v867, 1.0
    %v869 = vrcp.pop %v868
    %v870 = vmul.f32 1.0, %v869
    %v871 = vxor.u32 %v820, 2147483648
    %v872 = vmul.f32 %v871, 1.442695
    %v873 = vpow.pop %v872
    %v874 = vadd.f32 %v873, 1.0
    %v875 = vrcp.pop %v874
    %v876 = vmul.f32 1.0, %v875
    %v877 = vtanh.pop %v859
    %v878 = vxor.u32 %v861, 2147483648
    %v879 = vmul.f32 %v878, 1.442695
    %v880 = vpow.pop %v879
    %v881 = vadd.f32 %v880, 1.0
    %v882 = vrcp.pop %v881
    %v883 = vmul.f32 1.0, %v882
    %v884 = vmul.f32 %v876, %v777
    %v885 = vmul.f32 %v870, %v877
    %v886 = vadd.f32 %v884, %v885
    %v887 = vtanh.pop %v886
    %v888 = vmul.f32 %v883, %v887
    %s889 = scalar_lea.vmem %s2, 16
    %v890 = vld [vmem:[%s889] sm:$0xf]
    %v891 = vpack.c.bf16 %v888, %v888
    %892 = vmatprep.subr.bf16.mxu0 %v329
    %893 = vmatpush1.bf16.msra.mxu0 %v328
    %894 = vmatprep.subr.bf16.mxu0 %v333
    %895 = vmatpush1.bf16.msra.mxu0 %v332
    %896 = vmatprep.subr.bf16.mxu0 %v337
    %897 = vmatpush1.bf16.msra.mxu0 %v336
    %898 = vmatprep.subr.bf16.mxu0 %v341
    %899 = vmatpush1.bf16.msra.mxu0 %v340
    %900 = vmatprep.subr.bf16.mxu0 %v345
    %901 = vmatpush1.bf16.msra.mxu0 %v344
    %902 = vmatprep.subr.bf16.mxu0 %v349
    %903 = vmatpush1.bf16.msra.mxu0 %v348
    %904 = vmatprep.subr.bf16.mxu0 %v353
    %905 = vmatpush1.bf16.msra.mxu0 %v352
    %906 = vmatprep.subr.bf16.mxu0 %v357
    %907 = vmatpush1.bf16.msra.mxu0 %v356
    %908 = vmatprep.subr.bf16.mxu0 %v361
    %909 = vmatpush1.bf16.msra.mxu0 %v360
    %910 = vmatprep.subr.bf16.mxu0 %v365
    %911 = vmatpush1.bf16.msra.mxu0 %v364
    %912 = vmatprep.subr.bf16.mxu0 %v369
    %913 = vmatpush1.bf16.msra.mxu0 %v368
    %914 = vmatprep.subr.bf16.mxu0 %v373
    %915 = vmatpush1.bf16.msra.mxu0 %v372
    %916 = vmatprep.subr.bf16.mxu0 %v377
    %917 = vmatpush1.bf16.msra.mxu0 %v376
    %918 = vmatprep.subr.bf16.mxu0 %v381
    %919 = vmatpush1.bf16.msra.mxu0 %v380
    %920 = vmatprep.subr.bf16.mxu0 %v385
    %921 = vmatpush1.bf16.msra.mxu0 %v384
    %922 = vmatprep.subr.bf16.mxu0 %v389
    %923 = vmatpush1.bf16.msra.mxu0 %v388
    %924 = vmatprep.mubr.bf16.mxu0 %v891
    %925 = vmatmul.mubr.bf16.gmra.mrb[0].mxu0 %v890
    %v926 = vpop.f32.mrb[0].mxu0
    %v927 = vadd.f32 %v119, %v926
    %v928 = vpop.f32.mrb[0].mxu0
    %v929 = vadd.f32 %v123, %v928
    %v930 = vpop.f32.mrb[0].mxu0
    %v931 = vpop.f32.mrb[0].mxu0
    %932 = vdwg.mxu0
    %933 = vmatprep.subr.bf16.mxu0 %v331
    %934 = vmatpush1.bf16.msra.mxu0 %v330
    %935 = vmatprep.subr.bf16.mxu0 %v335
    %936 = vmatpush1.bf16.msra.mxu0 %v334
    %937 = vmatprep.subr.bf16.mxu0 %v339
    %938 = vmatpush1.bf16.msra.mxu0 %v338
    %939 = vmatprep.subr.bf16.mxu0 %v343
    %940 = vmatpush1.bf16.msra.mxu0 %v342
    %941 = vmatprep.subr.bf16.mxu0 %v347
    %942 = vmatpush1.bf16.msra.mxu0 %v346
    %943 = vmatprep.subr.bf16.mxu0 %v351
    %944 = vmatpush1.bf16.msra.mxu0 %v350
    %945 = vmatprep.subr.bf16.mxu0 %v355
    %946 = vmatpush1.bf16.msra.mxu0 %v354
    %947 = vmatprep.subr.bf16.mxu0 %v359
    %948 = vmatpush1.bf16.msra.mxu0 %v358
    %949 = vmatprep.subr.bf16.mxu0 %v363
    %950 = vmatpush1.bf16.msra.mxu0 %v362
    %951 = vmatprep.subr.bf16.mxu0 %v367
    %952 = vmatpush1.bf16.msra.mxu0 %v366
    %953 = vmatprep.subr.bf16.mxu0 %v371
    %954 = vmatpush1.bf16.msra.mxu0 %v370
    %955 = vmatprep.subr.bf16.mxu0 %v375
    %956 = vmatpush1.bf16.msra.mxu0 %v374
    %957 = vmatprep.subr.bf16.mxu0 %v379
    %958 = vmatpush1.bf16.msra.mxu0 %v378
    %959 = vmatprep.subr.bf16.mxu0 %v383
    %960 = vmatpush1.bf16.msra.mxu0 %v382
    %961 = vmatprep.subr.bf16.mxu0 %v387
    %962 = vmatpush1.bf16.msra.mxu0 %v386
    %963 = vmatprep.subr.bf16.mxu0 %v391
    %964 = vmatpush1.bf16.msra.mxu0 %v390
    %965 = vmatprep.mubr.bf16.mxu0 %v891
    %966 = vmatmul.mubr.bf16.gmra.mrb[0].mxu0 %v890
    %v967 = vpop.f32.mrb[0].mxu0
    %v968 = vadd.f32 %v127, %v967
    %v969 = vpop.f32.mrb[0].mxu0
    %v970 = vadd.f32 %v131, %v969
    %v971 = vpop.f32.mrb[0].mxu0
    %v972 = vpop.f32.mrb[0].mxu0
    %973 = vdwg.mxu0
    %v974 = vxor.u32 %v927, 2147483648
    %v975 = vmul.f32 %v974, 1.442695
    %v976 = vpow.pop %v975
    %v977 = vadd.f32 %v976, 1.0
    %v978 = vrcp.pop %v977
    %v979 = vmul.f32 1.0, %v978
    %v980 = vxor.u32 %v929, 2147483648
    %v981 = vmul.f32 %v980, 1.442695
    %v982 = vpow.pop %v981
    %v983 = vadd.f32 %v982, 1.0
    %v984 = vrcp.pop %v983
    %v985 = vmul.f32 1.0, %v984
    %v986 = vtanh.pop %v968
    %v987 = vxor.u32 %v970, 2147483648
    %v988 = vmul.f32 %v987, 1.442695
    %v989 = vpow.pop %v988
    %v990 = vadd.f32 %v989, 1.0
    %v991 = vrcp.pop %v990
    %v992 = vmul.f32 1.0, %v991
    %v993 = vmul.f32 %v985, %v886
    %v994 = vmul.f32 %v979, %v986
    %v995 = vadd.f32 %v993, %v994
    %v996 = vtanh.pop %v995
    %v997 = vmul.f32 %v992, %v996
    %s998 = scalar_lea.vmem %s2, 20
    %v999 = vld [vmem:[%s998] sm:$0xf]
    %v1000 = vpack.c.bf16 %v997, %v997
    %1001 = vmatprep.subr.bf16.mxu0 %v329
    %1002 = vmatpush1.bf16.msra.mxu0 %v328
    %1003 = vmatprep.subr.bf16.mxu0 %v333
    %1004 = vmatpush1.bf16.msra.mxu0 %v332
    %1005 = vmatprep.subr.bf16.mxu0 %v337
    %1006 = vmatpush1.bf16.msra.mxu0 %v336
    %1007 = vmatprep.subr.bf16.mxu0 %v341
    %1008 = vmatpush1.bf16.msra.mxu0 %v340
    %1009 = vmatprep.subr.bf16.mxu0 %v345
    %1010 = vmatpush1.bf16.msra.mxu0 %v344
    %1011 = vmatprep.subr.bf16.mxu0 %v349
    %1012 = vmatpush1.bf16.msra.mxu0 %v348
    %1013 = vmatprep.subr.bf16.mxu0 %v353
    %1014 = vmatpush1.bf16.msra.mxu0 %v352
    %1015 = vmatprep.subr.bf16.mxu0 %v357
    %1016 = vmatpush1.bf16.msra.mxu0 %v356
    %1017 = vmatprep.subr.bf16.mxu0 %v361
    %1018 = vmatpush1.bf16.msra.mxu0 %v360
    %1019 = vmatprep.subr.bf16.mxu0 %v365
    %1020 = vmatpush1.bf16.msra.mxu0 %v364
    %1021 = vmatprep.subr.bf16.mxu0 %v369
    %1022 = vmatpush1.bf16.msra.mxu0 %v368
    %1023 = vmatprep.subr.bf16.mxu0 %v373
    %1024 = vmatpush1.bf16.msra.mxu0 %v372
    %1025 = vmatprep.subr.bf16.mxu0 %v377
    %1026 = vmatpush1.bf16.msra.mxu0 %v376
    %1027 = vmatprep.subr.bf16.mxu0 %v381
    %1028 = vmatpush1.bf16.msra.mxu0 %v380
    %1029 = vmatprep.subr.bf16.mxu0 %v385
    %1030 = vmatpush1.bf16.msra.mxu0 %v384
    %1031 = vmatprep.subr.bf16.mxu0 %v389
    %1032 = vmatpush1.bf16.msra.mxu0 %v388
    %1033 = vmatprep.mubr.bf16.mxu0 %v1000
    %1034 = vmatmul.mubr.bf16.gmra.mrb[0].mxu0 %v999
    %v1035 = vpop.f32.mrb[0].mxu0
    %v1036 = vadd.f32 %v119, %v1035
    %v1037 = vpop.f32.mrb[0].mxu0
    %v1038 = vadd.f32 %v123, %v1037
    %v1039 = vpop.f32.mrb[0].mxu0
    %v1040 = vpop.f32.mrb[0].mxu0
    %1041 = vdwg.mxu0
    %1042 = vmatprep.subr.bf16.mxu0 %v331
    %1043 = vmatpush1.bf16.msra.mxu0 %v330
    %1044 = vmatprep.subr.bf16.mxu0 %v335
    %1045 = vmatpush1.bf16.msra.mxu0 %v334
    %1046 = vmatprep.subr.bf16.mxu0 %v339
    %1047 = vmatpush1.bf16.msra.mxu0 %v338
    %1048 = vmatprep.subr.bf16.mxu0 %v343
    %1049 = vmatpush1.bf16.msra.mxu0 %v342
    %1050 = vmatprep.subr.bf16.mxu0 %v347
    %1051 = vmatpush1.bf16.msra.mxu0 %v346
    %1052 = vmatprep.subr.bf16.mxu0 %v351
    %1053 = vmatpush1.bf16.msra.mxu0 %v350
    %1054 = vmatprep.subr.bf16.mxu0 %v355
    %1055 = vmatpush1.bf16.msra.mxu0 %v354
    %1056 = vmatprep.subr.bf16.mxu0 %v359
    %1057 = vmatpush1.bf16.msra.mxu0 %v358
    %1058 = vmatprep.subr.bf16.mxu0 %v363
    %1059 = vmatpush1.bf16.msra.mxu0 %v362
    %1060 = vmatprep.subr.bf16.mxu0 %v367
    %1061 = vmatpush1.bf16.msra.mxu0 %v366
    %1062 = vmatprep.subr.bf16.mxu0 %v371
    %1063 = vmatpush1.bf16.msra.mxu0 %v370
    %1064 = vmatprep.subr.bf16.mxu0 %v375
    %1065 = vmatpush1.bf16.msra.mxu0 %v374
    %1066 = vmatprep.subr.bf16.mxu0 %v379
    %1067 = vmatpush1.bf16.msra.mxu0 %v378
    %1068 = vmatprep.subr.bf16.mxu0 %v383
    %1069 = vmatpush1.bf16.msra.mxu0 %v382
    %1070 = vmatprep.subr.bf16.mxu0 %v387
    %1071 = vmatpush1.bf16.msra.mxu0 %v386
    %1072 = vmatprep.subr.bf16.mxu0 %v391
    %1073 = vmatpush1.bf16.msra.mxu0 %v390
    %1074 = vmatprep.mubr.bf16.mxu0 %v1000
    %1075 = vmatmul.mubr.bf16.gmra.mrb[0].mxu0 %v999
    %v1076 = vpop.f32.mrb[0].mxu0
    %v1077 = vadd.f32 %v127, %v1076
    %v1078 = vpop.f32.mrb[0].mxu0
    %v1079 = vadd.f32 %v131, %v1078
    %v1080 = vpop.f32.mrb[0].mxu0
    %v1081 = vpop.f32.mrb[0].mxu0
    %1082 = vdwg.mxu0
    %v1083 = vxor.u32 %v1036, 2147483648
    %v1084 = vmul.f32 %v1083, 1.442695
    %v1085 = vpow.pop %v1084
    %v1086 = vadd.f32 %v1085, 1.0
    %v1087 = vrcp.pop %v1086
    %v1088 = vmul.f32 1.0, %v1087
    %v1089 = vxor.u32 %v1038, 2147483648
    %v1090 = vmul.f32 %v1089, 1.442695
    %v1091 = vpow.pop %v1090
    %v1092 = vadd.f32 %v1091, 1.0
    %v1093 = vrcp.pop %v1092
    %v1094 = vmul.f32 1.0, %v1093
    %v1095 = vtanh.pop %v1077
    %v1096 = vxor.u32 %v1079, 2147483648
    %v1097 = vmul.f32 %v1096, 1.442695
    %v1098 = vpow.pop %v1097
    %v1099 = vadd.f32 %v1098, 1.0
    %v1100 = vrcp.pop %v1099
    %v1101 = vmul.f32 1.0, %v1100
    %v1102 = vmul.f32 %v1094, %v995
    %v1103 = vmul.f32 %v1088, %v1095
    %v1104 = vadd.f32 %v1102, %v1103
    %v1105 = vtanh.pop %v1104
    %v1106 = vmul.f32 %v1101, %v1105
    %s1107 = scalar_lea.vmem %s2, 24
    %v1108 = vld [vmem:[%s1107] sm:$0xf]
    %v1109 = vpack.c.bf16 %v1106, %v1106
    %1110 = vmatprep.subr.bf16.mxu0 %v329
    %1111 = vmatpush1.bf16.msra.mxu0 %v328
    %1112 = vmatprep.subr.bf16.mxu0 %v333
    %1113 = vmatpush1.bf16.msra.mxu0 %v332
    %1114 = vmatprep.subr.bf16.mxu0 %v337
    %1115 = vmatpush1.bf16.msra.mxu0 %v336
    %1116 = vmatprep.subr.bf16.mxu0 %v341
    %1117 = vmatpush1.bf16.msra.mxu0 %v340
    %1118 = vmatprep.subr.bf16.mxu0 %v345
    %1119 = vmatpush1.bf16.msra.mxu0 %v344
    %1120 = vmatprep.subr.bf16.mxu0 %v349
    %1121 = vmatpush1.bf16.msra.mxu0 %v348
    %1122 = vmatprep.subr.bf16.mxu0 %v353
    %1123 = vmatpush1.bf16.msra.mxu0 %v352
    %1124 = vmatprep.subr.bf16.mxu0 %v357
    %1125 = vmatpush1.bf16.msra.mxu0 %v356
    %1126 = vmatprep.subr.bf16.mxu0 %v361
    %1127 = vmatpush1.bf16.msra.mxu0 %v360
    %1128 = vmatprep.subr.bf16.mxu0 %v365
    %1129 = vmatpush1.bf16.msra.mxu0 %v364
    %1130 = vmatprep.subr.bf16.mxu0 %v369
    %1131 = vmatpush1.bf16.msra.mxu0 %v368
    %1132 = vmatprep.subr.bf16.mxu0 %v373
    %1133 = vmatpush1.bf16.msra.mxu0 %v372
    %1134 = vmatprep.subr.bf16.mxu0 %v377
    %1135 = vmatpush1.bf16.msra.mxu0 %v376
    %1136 = vmatprep.subr.bf16.mxu0 %v381
    %1137 = vmatpush1.bf16.msra.mxu0 %v380
    %1138 = vmatprep.subr.bf16.mxu0 %v385
    %1139 = vmatpush1.bf16.msra.mxu0 %v384
    %1140 = vmatprep.subr.bf16.mxu0 %v389
    %1141 = vmatpush1.bf16.msra.mxu0 %v388
    %1142 = vmatprep.mubr.bf16.mxu0 %v1109
    %1143 = vmatmul.mubr.bf16.gmra.mrb[0].mxu0 %v1108
    %v1144 = vpop.f32.mrb[0].mxu0
    %v1145 = vadd.f32 %v119, %v1144
    %v1146 = vpop.f32.mrb[0].mxu0
    %v1147 = vadd.f32 %v123, %v1146
    %v1148 = vpop.f32.mrb[0].mxu0
    %v1149 = vpop.f32.mrb[0].mxu0
    %1150 = vdwg.mxu0
    %1151 = vmatprep.subr.bf16.mxu0 %v331
    %1152 = vmatpush1.bf16.msra.mxu0 %v330
    %1153 = vmatprep.subr.bf16.mxu0 %v335
    %1154 = vmatpush1.bf16.msra.mxu0 %v334
    %1155 = vmatprep.subr.bf16.mxu0 %v339
    %1156 = vmatpush1.bf16.msra.mxu0 %v338
    %1157 = vmatprep.subr.bf16.mxu0 %v343
    %1158 = vmatpush1.bf16.msra.mxu0 %v342
    %1159 = vmatprep.subr.bf16.mxu0 %v347
    %1160 = vmatpush1.bf16.msra.mxu0 %v346
    %1161 = vmatprep.subr.bf16.mxu0 %v351
    %1162 = vmatpush1.bf16.msra.mxu0 %v350
    %1163 = vmatprep.subr.bf16.mxu0 %v355
    %1164 = vmatpush1.bf16.msra.mxu0 %v354
    %1165 = vmatprep.subr.bf16.mxu0 %v359
    %1166 = vmatpush1.bf16.msra.mxu0 %v358
    %1167 = vmatprep.subr.bf16.mxu0 %v363
    %1168 = vmatpush1.bf16.msra.mxu0 %v362
    %1169 = vmatprep.subr.bf16.mxu0 %v367
    %1170 = vmatpush1.bf16.msra.mxu0 %v366
    %1171 = vmatprep.subr.bf16.mxu0 %v371
    %1172 = vmatpush1.bf16.msra.mxu0 %v370
    %1173 = vmatprep.subr.bf16.mxu0 %v375
    %1174 = vmatpush1.bf16.msra.mxu0 %v374
    %1175 = vmatprep.subr.bf16.mxu0 %v379
    %1176 = vmatpush1.bf16.msra.mxu0 %v378
    %1177 = vmatprep.subr.bf16.mxu0 %v383
    %1178 = vmatpush1.bf16.msra.mxu0 %v382
    %1179 = vmatprep.subr.bf16.mxu0 %v387
    %1180 = vmatpush1.bf16.msra.mxu0 %v386
    %1181 = vmatprep.subr.bf16.mxu0 %v391
    %1182 = vmatpush1.bf16.msra.mxu0 %v390
    %1183 = vmatprep.mubr.bf16.mxu0 %v1109
    %1184 = vmatmul.mubr.bf16.gmra.mrb[0].mxu0 %v1108
    %v1185 = vpop.f32.mrb[0].mxu0
    %v1186 = vadd.f32 %v127, %v1185
    %v1187 = vpop.f32.mrb[0].mxu0
    %v1188 = vadd.f32 %v131, %v1187
    %v1189 = vpop.f32.mrb[0].mxu0
    %v1190 = vpop.f32.mrb[0].mxu0
    %1191 = vdwg.mxu0
    %v1192 = vxor.u32 %v1145, 2147483648
    %v1193 = vmul.f32 %v1192, 1.442695
    %v1194 = vpow.pop %v1193
    %v1195 = vadd.f32 %v1194, 1.0
    %v1196 = vrcp.pop %v1195
    %v1197 = vmul.f32 1.0, %v1196
    %v1198 = vxor.u32 %v1147, 2147483648
    %v1199 = vmul.f32 %v1198, 1.442695
    %v1200 = vpow.pop %v1199
    %v1201 = vadd.f32 %v1200, 1.0
    %v1202 = vrcp.pop %v1201
    %v1203 = vmul.f32 1.0, %v1202
    %v1204 = vtanh.pop %v1186
    %v1205 = vxor.u32 %v1188, 2147483648
    %v1206 = vmul.f32 %v1205, 1.442695
    %v1207 = vpow.pop %v1206
    %v1208 = vadd.f32 %v1207, 1.0
    %v1209 = vrcp.pop %v1208
    %v1210 = vmul.f32 1.0, %v1209
    %v1211 = vmul.f32 %v1203, %v1104
    %v1212 = vmul.f32 %v1197, %v1204
    %v1213 = vadd.f32 %v1211, %v1212
    %v1214 = vtanh.pop %v1213
    %v1215 = vmul.f32 %v1210, %v1214
    %s1216 = scalar_lea.vmem %s2, 28
    %v1217 = vld [vmem:[%s1216] sm:$0xf]
    %v1218 = vpack.c.bf16 %v1215, %v1215
    %1219 = vmatprep.subr.bf16.mxu0 %v329
    %1220 = vmatpush1.bf16.msra.mxu0 %v328
    %1221 = vmatprep.subr.bf16.mxu0 %v333
    %1222 = vmatpush1.bf16.msra.mxu0 %v332
    %1223 = vmatprep.subr.bf16.mxu0 %v337
    %1224 = vmatpush1.bf16.msra.mxu0 %v336
    %1225 = vmatprep.subr.bf16.mxu0 %v341
    %1226 = vmatpush1.bf16.msra.mxu0 %v340
    %1227 = vmatprep.subr.bf16.mxu0 %v345
    %1228 = vmatpush1.bf16.msra.mxu0 %v344
    %1229 = vmatprep.subr.bf16.mxu0 %v349
    %1230 = vmatpush1.bf16.msra.mxu0 %v348
    %1231 = vmatprep.subr.bf16.mxu0 %v353
    %1232 = vmatpush1.bf16.msra.mxu0 %v352
    %1233 = vmatprep.subr.bf16.mxu0 %v357
    %1234 = vmatpush1.bf16.msra.mxu0 %v356
    %1235 = vmatprep.subr.bf16.mxu0 %v361
    %1236 = vmatpush1.bf16.msra.mxu0 %v360
    %1237 = vmatprep.subr.bf16.mxu0 %v365
    %1238 = vmatpush1.bf16.msra.mxu0 %v364
    %1239 = vmatprep.subr.bf16.mxu0 %v369
    %1240 = vmatpush1.bf16.msra.mxu0 %v368
    %1241 = vmatprep.subr.bf16.mxu0 %v373
    %1242 = vmatpush1.bf16.msra.mxu0 %v372
    %1243 = vmatprep.subr.bf16.mxu0 %v377
    %1244 = vmatpush1.bf16.msra.mxu0 %v376
    %1245 = vmatprep.subr.bf16.mxu0 %v381
    %1246 = vmatpush1.bf16.msra.mxu0 %v380
    %1247 = vmatprep.subr.bf16.mxu0 %v385
    %1248 = vmatpush1.bf16.msra.mxu0 %v384
    %1249 = vmatprep.subr.bf16.mxu0 %v389
    %1250 = vmatpush1.bf16.msra.mxu0 %v388
    %1251 = vmatprep.mubr.bf16.mxu0 %v1218
    %1252 = vmatmul.mubr.bf16.gmra.mrb[0].mxu0 %v1217
    %v1253 = vpop.f32.mrb[0].mxu0
    %v1254 = vadd.f32 %v119, %v1253
    %v1255 = vpop.f32.mrb[0].mxu0
    %v1256 = vadd.f32 %v123, %v1255
    %v1257 = vpop.f32.mrb[0].mxu0
    %v1258 = vpop.f32.mrb[0].mxu0
    %1259 = vdwg.mxu0
    %1260 = vmatprep.subr.bf16.mxu0 %v331
    %1261 = vmatpush1.bf16.msra.mxu0 %v330
    %1262 = vmatprep.subr.bf16.mxu0 %v335
    %1263 = vmatpush1.bf16.msra.mxu0 %v334
    %1264 = vmatprep.subr.bf16.mxu0 %v339
    %1265 = vmatpush1.bf16.msra.mxu0 %v338
    %1266 = vmatprep.subr.bf16.mxu0 %v343
    %1267 = vmatpush1.bf16.msra.mxu0 %v342
    %1268 = vmatprep.subr.bf16.mxu0 %v347
    %1269 = vmatpush1.bf16.msra.mxu0 %v346
    %1270 = vmatprep.subr.bf16.mxu0 %v351
    %1271 = vmatpush1.bf16.msra.mxu0 %v350
    %1272 = vmatprep.subr.bf16.mxu0 %v355
    %1273 = vmatpush1.bf16.msra.mxu0 %v354
    %1274 = vmatprep.subr.bf16.mxu0 %v359
    %1275 = vmatpush1.bf16.msra.mxu0 %v358
    %1276 = vmatprep.subr.bf16.mxu0 %v363
    %1277 = vmatpush1.bf16.msra.mxu0 %v362
    %1278 = vmatprep.subr.bf16.mxu0 %v367
    %1279 = vmatpush1.bf16.msra.mxu0 %v366
    %1280 = vmatprep.subr.bf16.mxu0 %v371
    %1281 = vmatpush1.bf16.msra.mxu0 %v370
    %1282 = vmatprep.subr.bf16.mxu0 %v375
    %1283 = vmatpush1.bf16.msra.mxu0 %v374
    %1284 = vmatprep.subr.bf16.mxu0 %v379
    %1285 = vmatpush1.bf16.msra.mxu0 %v378
    %1286 = vmatprep.subr.bf16.mxu0 %v383
    %1287 = vmatpush1.bf16.msra.mxu0 %v382
    %1288 = vmatprep.subr.bf16.mxu0 %v387
    %1289 = vmatpush1.bf16.msra.mxu0 %v386
    %1290 = vmatprep.subr.bf16.mxu0 %v391
    %1291 = vmatpush1.bf16.msra.mxu0 %v390
    %1292 = vmatprep.mubr.bf16.mxu0 %v1218
    %1293 = vmatmul.mubr.bf16.gmra.mrb[0].mxu0 %v1217
    %v1294 = vpop.f32.mrb[0].mxu0
    %v1295 = vadd.f32 %v127, %v1294
    %v1296 = vpop.f32.mrb[0].mxu0
    %v1297 = vadd.f32 %v131, %v1296
    %v1298 = vpop.f32.mrb[0].mxu0
    %v1299 = vpop.f32.mrb[0].mxu0
    %1300 = vdwg.mxu0
    %v1301 = vxor.u32 %v1254, 2147483648
    %v1302 = vmul.f32 %v1301, 1.442695
    %v1303 = vpow.pop %v1302
    %v1304 = vadd.f32 %v1303, 1.0
    %v1305 = vrcp.pop %v1304
    %v1306 = vmul.f32 1.0, %v1305
    %v1307 = vxor.u32 %v1256, 2147483648
    %v1308 = vmul.f32 %v1307, 1.442695
    %v1309 = vpow.pop %v1308
    %v1310 = vadd.f32 %v1309, 1.0
    %v1311 = vrcp.pop %v1310
    %v1312 = vmul.f32 1.0, %v1311
    %v1313 = vtanh.pop %v1295
    %v1314 = vxor.u32 %v1297, 2147483648
    %v1315 = vmul.f32 %v1314, 1.442695
    %v1316 = vpow.pop %v1315
    %v1317 = vadd.f32 %v1316, 1.0
    %v1318 = vrcp.pop %v1317
    %v1319 = vmul.f32 1.0, %v1318
    %v1320 = vmul.f32 %v1312, %v1213
    %v1321 = vmul.f32 %v1306, %v1313
    %v1322 = vadd.f32 %v1320, %v1321
    %v1323 = vtanh.pop %v1322
    %v1324 = vmul.f32 %v1319, %v1323
    %v1325 = vlaneseq
    %v1326 = vand.u32 %v1325, 127
    %v1327 = vcvt.s32.f32 %v1326
    %s1328 = sld [smem:[#allocation2]]
    %p1329 = scmp.gt.s32.totalorder %s1328, 0
    %v1330 = vld [vmem:[%s1] sm:$0xff]
    %s1331 = scalar_select %p1329, 1, 0
    %v1332 = vstv %s1331
    %vm1333 = vcmp.eq.s32.totalorder %v1332, 1
    %v1334 = vsel %vm1333, %v1330, 0
    %1335 = vset.pattern.permute.xlu0 0
    %1336 = vperm.xlu0 %1335, %v1334
    %v1337 = vpop.permute.xlu0 %1336
    %vm1338 = vcmp.eq.s32.totalorder %v1326, %v1337
    %v1339 = vsel %vm1338, 1, 0
    %v1340 = vcvt.s32.f32 %v1339
    %v1341 = vpack.c.bf16 %v1340, %v1340
    %v1342 = vld [vmem:[%s5] sm:$0xf]
    %v1343 = vld [vmem:[%s5 + $0x4] sm:$0xf]
    %v1344 = vld [vmem:[%s5 + $0x8] sm:$0xf]
    %v1345 = vld [vmem:[%s5 + $0xc] sm:$0xf]
    %v1346 = vld [vmem:[%s5 + $0x10] sm:$0xf]
    %v1347 = vld [vmem:[%s5 + $0x14] sm:$0xf]
    %v1348 = vld [vmem:[%s5 + $0x18] sm:$0xf]
    %v1349 = vld [vmem:[%s5 + $0x1c] sm:$0xf]
    %v1350 = vld [vmem:[%s5 + $0x20] sm:$0xf]
    %v1351 = vld [vmem:[%s5 + $0x24] sm:$0xf]
    %v1352 = vld [vmem:[%s5 + $0x28] sm:$0xf]
    %v1353 = vld [vmem:[%s5 + $0x2c] sm:$0xf]
    %v1354 = vld [vmem:[%s5 + $0x30] sm:$0xf]
    %v1355 = vld [vmem:[%s5 + $0x34] sm:$0xf]
    %v1356 = vld [vmem:[%s5 + $0x38] sm:$0xf]
    %v1357 = vld [vmem:[%s5 + $0x3c] sm:$0xf]
    %v1374 = vunpack.c.l.b16 %v1342
    %v1375 = vunpack.c.l.b16 %v1343
    %v1376 = vunpack.c.l.b16 %v1344
    %v1377 = vunpack.c.l.b16 %v1345
    %v1378 = vunpack.c.l.b16 %v1346
    %v1379 = vunpack.c.l.b16 %v1347
    %v1380 = vunpack.c.l.b16 %v1348
    %v1381 = vunpack.c.l.b16 %v1349
    %v1382 = vunpack.c.l.b16 %v1350
    %v1383 = vunpack.c.l.b16 %v1351
    %v1384 = vunpack.c.l.b16 %v1352
    %v1385 = vunpack.c.l.b16 %v1353
    %v1386 = vunpack.c.l.b16 %v1354
    %v1387 = vunpack.c.l.b16 %v1355
    %v1388 = vunpack.c.l.b16 %v1356
    %v1389 = vunpack.c.l.b16 %v1357
    %v1390 = vpack.c.b16 %v1375, %v1374
    %v1391 = vpack.c.b16 %v1377, %v1376
    %v1392 = vpack.c.b16 %v1379, %v1378
    %v1393 = vpack.c.b16 %v1381, %v1380
    %v1394 = vpack.c.b16 %v1383, %v1382
    %v1395 = vpack.c.b16 %v1385, %v1384
    %v1396 = vpack.c.b16 %v1387, %v1386
    %v1397 = vpack.c.b16 %v1389, %v1388
    %1406 = vmatprep.subr.bf16.mxu0 0
    %1407 = vmatpush1.bf16.msra.mxu0 %v1390
    %1408 = vmatprep.subr.bf16.mxu0 0
    %1409 = vmatpush1.bf16.msra.mxu0 %v1391
    %1410 = vmatprep.subr.bf16.mxu0 0
    %1411 = vmatpush1.bf16.msra.mxu0 %v1392
    %1412 = vmatprep.subr.bf16.mxu0 0
    %1413 = vmatpush1.bf16.msra.mxu0 %v1393
    %1414 = vmatprep.subr.bf16.mxu0 0
    %1415 = vmatpush1.bf16.msra.mxu0 %v1394
    %1416 = vmatprep.subr.bf16.mxu0 0
    %1417 = vmatpush1.bf16.msra.mxu0 %v1395
    %1418 = vmatprep.subr.bf16.mxu0 0
    %1419 = vmatpush1.bf16.msra.mxu0 %v1396
    %1420 = vmatprep.subr.bf16.mxu0 0
    %1421 = vmatpush1.bf16.msra.mxu0 %v1397
    %1422 = vmatprep.subr.bf16.mxu0 0
    %1423 = vmatpush1.bf16.msra.mxu0 0
    %1424 = vmatprep.subr.bf16.mxu0 0
    %1425 = vmatpush1.bf16.msra.mxu0 0
    %1426 = vmatprep.subr.bf16.mxu0 0
    %1427 = vmatpush1.bf16.msra.mxu0 0
    %1428 = vmatprep.subr.bf16.mxu0 0
    %1429 = vmatpush1.bf16.msra.mxu0 0
    %1430 = vmatprep.subr.bf16.mxu0 0
    %1431 = vmatpush1.bf16.msra.mxu0 0
    %1432 = vmatprep.subr.bf16.mxu0 0
    %1433 = vmatpush1.bf16.msra.mxu0 0
    %1434 = vmatprep.subr.bf16.mxu0 0
    %1435 = vmatpush1.bf16.msra.mxu0 0
    %1436 = vmatprep.subr.bf16.mxu0 0
    %1437 = vmatpush1.bf16.msra.mxu0 0
    %1438 = vmatprep.mubr.bf16.mxu0 0
    %1439 = vmatmul.mubr.bf16.gmra.mrb[0].mxu0 %v1341
    %v1440 = vpop.f32.mrb[0].mxu0
    %v1441 = vadd.f32 0.0, %v1440
    %v1442 = vpop.f32.mrb[0].mxu0
    %v1443 = vpop.f32.mrb[0].mxu0
    %v1444 = vpop.f32.mrb[0].mxu0
    %1445 = vdwg.mxu0
    %v1446 = vpack.c.bf16 %v1441, %v1441
    %v1447 = vpack.c.bf16 %v1324, %v1324
    %v1448 = vld [vmem:[%s6] sm:$0xff]
    %v1449 = vld [vmem:[%s6 + $0x8] sm:$0xff]
    %v1450 = vld [vmem:[%s6 + $0x10] sm:$0xff]
    %v1451 = vld [vmem:[%s6 + $0x18] sm:$0xff]
    %v1452 = vld [vmem:[%s6 + $0x20] sm:$0xff]
    %v1453 = vld [vmem:[%s6 + $0x28] sm:$0xff]
    %v1454 = vld [vmem:[%s6 + $0x30] sm:$0xff]
    %v1455 = vld [vmem:[%s6 + $0x38] sm:$0xff]
    %v1456 = vld [vmem:[%s6 + $0x40] sm:$0xff]
    %v1457 = vld [vmem:[%s6 + $0x48] sm:$0xff]
    %v1458 = vld [vmem:[%s6 + $0x50] sm:$0xff]
    %v1459 = vld [vmem:[%s6 + $0x58] sm:$0xff]
    %v1460 = vld [vmem:[%s6 + $0x60] sm:$0xff]
    %v1461 = vld [vmem:[%s6 + $0x68] sm:$0xff]
    %v1462 = vld [vmem:[%s6 + $0x70] sm:$0xff]
    %v1463 = vld [vmem:[%s6 + $0x78] sm:$0xff]
    %v1464 = vld [vmem:[%s6 + $0x80] sm:$0xff]
    %v1465 = vld [vmem:[%s6 + $0x88] sm:$0xff]
    %v1466 = vld [vmem:[%s6 + $0x90] sm:$0xff]
    %v1467 = vld [vmem:[%s6 + $0x98] sm:$0xff]
    %v1468 = vld [vmem:[%s6 + $0xa0] sm:$0xff]
    %v1469 = vld [vmem:[%s6 + $0xa8] sm:$0xff]
    %v1470 = vld [vmem:[%s6 + $0xb0] sm:$0xff]
    %v1471 = vld [vmem:[%s6 + $0xb8] sm:$0xff]
    %v1472 = vld [vmem:[%s6 + $0xc0] sm:$0xff]
    %v1473 = vld [vmem:[%s6 + $0xc8] sm:$0xff]
    %v1474 = vld [vmem:[%s6 + $0xd0] sm:$0xff]
    %v1475 = vld [vmem:[%s6 + $0xd8] sm:$0xff]
    %v1476 = vld [vmem:[%s6 + $0xe0] sm:$0xff]
    %v1477 = vld [vmem:[%s6 + $0xe8] sm:$0xff]
    %v1478 = vld [vmem:[%s6 + $0xf0] sm:$0xff]
    %v1479 = vld [vmem:[%s6 + $0xf8] sm:$0xff]
    %v1480 = vld [vmem:[%s6 + $0x100] sm:$0xff]
    %v1481 = vld [vmem:[%s6 + $0x108] sm:$0xff]
    %v1482 = vld [vmem:[%s6 + $0x110] sm:$0xff]
    %v1483 = vld [vmem:[%s6 + $0x118] sm:$0xff]
    %v1484 = vld [vmem:[%s6 + $0x120] sm:$0xff]
    %v1485 = vld [vmem:[%s6 + $0x128] sm:$0xff]
    %v1486 = vld [vmem:[%s6 + $0x130] sm:$0xff]
    %v1487 = vld [vmem:[%s6 + $0x138] sm:$0xff]
    %v1488 = vld [vmem:[%s6 + $0x140] sm:$0xff]
    %v1489 = vld [vmem:[%s6 + $0x148] sm:$0xff]
    %v1490 = vld [vmem:[%s6 + $0x150] sm:$0xff]
    %v1491 = vld [vmem:[%s6 + $0x158] sm:$0xff]
    %v1492 = vld [vmem:[%s6 + $0x160] sm:$0xff]
    %v1493 = vld [vmem:[%s6 + $0x168] sm:$0xff]
    %v1494 = vld [vmem:[%s6 + $0x170] sm:$0xff]
    %v1495 = vld [vmem:[%s6 + $0x178] sm:$0xff]
    %v1496 = vld [vmem:[%s6 + $0x180] sm:$0xff]
    %v1497 = vld [vmem:[%s6 + $0x188] sm:$0xff]
    %v1498 = vld [vmem:[%s6 + $0x190] sm:$0xff]
    %v1499 = vld [vmem:[%s6 + $0x198] sm:$0xff]
    %v1500 = vld [vmem:[%s6 + $0x1a0] sm:$0xff]
    %v1501 = vld [vmem:[%s6 + $0x1a8] sm:$0xff]
    %v1502 = vld [vmem:[%s6 + $0x1b0] sm:$0xff]
    %v1503 = vld [vmem:[%s6 + $0x1b8] sm:$0xff]
    %v1504 = vld [vmem:[%s6 + $0x1c0] sm:$0xff]
    %v1505 = vld [vmem:[%s6 + $0x1c8] sm:$0xff]
    %v1506 = vld [vmem:[%s6 + $0x1d0] sm:$0xff]
    %v1507 = vld [vmem:[%s6 + $0x1d8] sm:$0xff]
    %v1508 = vld [vmem:[%s6 + $0x1e0] sm:$0xff]
    %v1509 = vld [vmem:[%s6 + $0x1e8] sm:$0xff]
    %v1510 = vld [vmem:[%s6 + $0x1f0] sm:$0xff]
    %v1511 = vld [vmem:[%s6 + $0x1f8] sm:$0xff]
    %v1512 = vld [vmem:[%s7] sm:$0xf]
    %v1514 = vlaneseq
    %v1515 = vshrl.u32 %v1514, 7
    %v1516 = vsub.s32 0, %v1515
    %v1517 = vrot.slane %v1512, %v1516
    %v1518 = vlaneseq
    %v1519 = vshrl.u32 %v1518, 7
    %v1520 = vsub.s32 1, %v1519
    %v1521 = vrot.slane %v1512, %v1520
    %v1522 = vlaneseq
    %v1523 = vshrl.u32 %v1522, 7
    %v1524 = vsub.s32 2, %v1523
    %v1525 = vrot.slane %v1512, %v1524
    %v1526 = vlaneseq
    %v1527 = vshrl.u32 %v1526, 7
    %v1528 = vsub.s32 3, %v1527
    %v1529 = vrot.slane %v1512, %v1528
    %v1598 = vunpack.c.l.b16 %v1448
    %v1599 = vunpack.c.h.b16 %v1448
    %v1600 = vunpack.c.l.b16 %v1449
    %v1601 = vunpack.c.h.b16 %v1449
    %v1602 = vunpack.c.l.b16 %v1450
    %v1603 = vunpack.c.h.b16 %v1450
    %v1604 = vunpack.c.l.b16 %v1451
    %v1605 = vunpack.c.h.b16 %v1451
    %v1606 = vunpack.c.l.b16 %v1452
    %v1607 = vunpack.c.h.b16 %v1452
    %v1608 = vunpack.c.l.b16 %v1453
    %v1609 = vunpack.c.h.b16 %v1453
    %v1610 = vunpack.c.l.b16 %v1454
    %v1611 = vunpack.c.h.b16 %v1454
    %v1612 = vunpack.c.l.b16 %v1455
    %v1613 = vunpack.c.h.b16 %v1455
    %v1614 = vunpack.c.l.b16 %v1456
    %v1615 = vunpack.c.h.b16 %v1456
    %v1616 = vunpack.c.l.b16 %v1457
    %v1617 = vunpack.c.h.b16 %v1457
    %v1618 = vunpack.c.l.b16 %v1458
    %v1619 = vunpack.c.h.b16 %v1458
    %v1620 = vunpack.c.l.b16 %v1459
    %v1621 = vunpack.c.h.b16 %v1459
    %v1622 = vunpack.c.l.b16 %v1460
    %v1623 = vunpack.c.h.b16 %v1460
    %v1624 = vunpack.c.l.b16 %v1461
    %v1625 = vunpack.c.h.b16 %v1461
    %v1626 = vunpack.c.l.b16 %v1462
    %v1627 = vunpack.c.h.b16 %v1462
    %v1628 = vunpack.c.l.b16 %v1463
    %v1629 = vunpack.c.h.b16 %v1463
    %v1630 = vunpack.c.l.b16 %v1464
    %v1631 = vunpack.c.h.b16 %v1464
    %v1632 = vunpack.c.l.b16 %v1465
    %v1633 = vunpack.c.h.b16 %v1465
    %v1634 = vunpack.c.l.b16 %v1466
    %v1635 = vunpack.c.h.b16 %v1466
    %v1636 = vunpack.c.l.b16 %v1467
    %v1637 = vunpack.c.h.b16 %v1467
    %v1638 = vunpack.c.l.b16 %v1468
    %v1639 = vunpack.c.h.b16 %v1468
    %v1640 = vunpack.c.l.b16 %v1469
    %v1641 = vunpack.c.h.b16 %v1469
    %v1642 = vunpack.c.l.b16 %v1470
    %v1643 = vunpack.c.h.b16 %v1470
    %v1644 = vunpack.c.l.b16 %v1471
    %v1645 = vunpack.c.h.b16 %v1471
    %v1646 = vunpack.c.l.b16 %v1472
    %v1647 = vunpack.c.h.b16 %v1472
    %v1648 = vunpack.c.l.b16 %v1473
    %v1649 = vunpack.c.h.b16 %v1473
    %v1650 = vunpack.c.l.b16 %v1474
    %v1651 = vunpack.c.h.b16 %v1474
    %v1652 = vunpack.c.l.b16 %v1475
    %v1653 = vunpack.c.h.b16 %v1475
    %v1654 = vunpack.c.l.b16 %v1476
    %v1655 = vunpack.c.h.b16 %v1476
    %v1656 = vunpack.c.l.b16 %v1477
    %v1657 = vunpack.c.h.b16 %v1477
    %v1658 = vunpack.c.l.b16 %v1478
    %v1659 = vunpack.c.h.b16 %v1478
    %v1660 = vunpack.c.l.b16 %v1479
    %v1661 = vunpack.c.h.b16 %v1479
    %v1662 = vunpack.c.l.b16 %v1480
    %v1663 = vunpack.c.h.b16 %v1480
    %v1664 = vunpack.c.l.b16 %v1481
    %v1665 = vunpack.c.h.b16 %v1481
    %v1666 = vunpack.c.l.b16 %v1482
    %v1667 = vunpack.c.h.b16 %v1482
    %v1668 = vunpack.c.l.b16 %v1483
    %v1669 = vunpack.c.h.b16 %v1483
    %v1670 = vunpack.c.l.b16 %v1484
    %v1671 = vunpack.c.h.b16 %v1484
    %v1672 = vunpack.c.l.b16 %v1485
    %v1673 = vunpack.c.h.b16 %v1485
    %v1674 = vunpack.c.l.b16 %v1486
    %v1675 = vunpack.c.h.b16 %v1486
    %v1676 = vunpack.c.l.b16 %v1487
    %v1677 = vunpack.c.h.b16 %v1487
    %v1678 = vunpack.c.l.b16 %v1488
    %v1679 = vunpack.c.h.b16 %v1488
    %v1680 = vunpack.c.l.b16 %v1489
    %v1681 = vunpack.c.h.b16 %v1489
    %v1682 = vunpack.c.l.b16 %v1490
    %v1683 = vunpack.c.h.b16 %v1490
    %v1684 = vunpack.c.l.b16 %v1491
    %v1685 = vunpack.c.h.b16 %v1491
    %v1686 = vunpack.c.l.b16 %v1492
    %v1687 = vunpack.c.h.b16 %v1492
    %v1688 = vunpack.c.l.b16 %v1493
    %v1689 = vunpack.c.h.b16 %v1493
    %v1690 = vunpack.c.l.b16 %v1494
    %v1691 = vunpack.c.h.b16 %v1494
    %v1692 = vunpack.c.l.b16 %v1495
    %v1693 = vunpack.c.h.b16 %v1495
    %v1694 = vunpack.c.l.b16 %v1496
    %v1695 = vunpack.c.h.b16 %v1496
    %v1696 = vunpack.c.l.b16 %v1497
    %v1697 = vunpack.c.h.b16 %v1497
    %v1698 = vunpack.c.l.b16 %v1498
    %v1699 = vunpack.c.h.b16 %v1498
    %v1700 = vunpack.c.l.b16 %v1499
    %v1701 = vunpack.c.h.b16 %v1499
    %v1702 = vunpack.c.l.b16 %v1500
    %v1703 = vunpack.c.h.b16 %v1500
    %v1704 = vunpack.c.l.b16 %v1501
    %v1705 = vunpack.c.h.b16 %v1501
    %v1706 = vunpack.c.l.b16 %v1502
    %v1707 = vunpack.c.h.b16 %v1502
    %v1708 = vunpack.c.l.b16 %v1503
    %v1709 = vunpack.c.h.b16 %v1503
    %v1710 = vunpack.c.l.b16 %v1504
    %v1711 = vunpack.c.h.b16 %v1504
    %v1712 = vunpack.c.l.b16 %v1505
    %v1713 = vunpack.c.h.b16 %v1505
    %v1714 = vunpack.c.l.b16 %v1506
    %v1715 = vunpack.c.h.b16 %v1506
    %v1716 = vunpack.c.l.b16 %v1507
    %v1717 = vunpack.c.h.b16 %v1507
    %v1718 = vunpack.c.l.b16 %v1508
    %v1719 = vunpack.c.h.b16 %v1508
    %v1720 = vunpack.c.l.b16 %v1509
    %v1721 = vunpack.c.h.b16 %v1509
    %v1722 = vunpack.c.l.b16 %v1510
    %v1723 = vunpack.c.h.b16 %v1510
    %v1724 = vunpack.c.l.b16 %v1511
    %v1725 = vunpack.c.h.b16 %v1511
    %v1726 = vpack.c.b16 %v1602, %v1598
    %v1727 = vpack.c.b16 %v1603, %v1599
    %v1728 = vpack.c.b16 %v1604, %v1600
    %v1729 = vpack.c.b16 %v1605, %v1601
    %v1730 = vpack.c.b16 %v1610, %v1606
    %v1731 = vpack.c.b16 %v1611, %v1607
    %v1732 = vpack.c.b16 %v1612, %v1608
    %v1733 = vpack.c.b16 %v1613, %v1609
    %v1734 = vpack.c.b16 %v1618, %v1614
    %v1735 = vpack.c.b16 %v1619, %v1615
    %v1736 = vpack.c.b16 %v1620, %v1616
    %v1737 = vpack.c.b16 %v1621, %v1617
    %v1738 = vpack.c.b16 %v1626, %v1622
    %v1739 = vpack.c.b16 %v1627, %v1623
    %v1740 = vpack.c.b16 %v1628, %v1624
    %v1741 = vpack.c.b16 %v1629, %v1625
    %v1742 = vpack.c.b16 %v1634, %v1630
    %v1743 = vpack.c.b16 %v1635, %v1631
    %v1744 = vpack.c.b16 %v1636, %v1632
    %v1745 = vpack.c.b16 %v1637, %v1633
    %v1746 = vpack.c.b16 %v1642, %v1638
    %v1747 = vpack.c.b16 %v1643, %v1639
    %v1748 = vpack.c.b16 %v1644, %v1640
    %v1749 = vpack.c.b16 %v1645, %v1641
    %v1750 = vpack.c.b16 %v1650, %v1646
    %v1751 = vpack.c.b16 %v1651, %v1647
    %v1752 = vpack.c.b16 %v1652, %v1648
    %v1753 = vpack.c.b16 %v1653, %v1649
    %v1754 = vpack.c.b16 %v1658, %v1654
    %v1755 = vpack.c.b16 %v1659, %v1655
    %v1756 = vpack.c.b16 %v1660, %v1656
    %v1757 = vpack.c.b16 %v1661, %v1657
    %v1758 = vpack.c.b16 %v1666, %v1662
    %v1759 = vpack.c.b16 %v1667, %v1663
    %v1760 = vpack.c.b16 %v1668, %v1664
    %v1761 = vpack.c.b16 %v1669, %v1665
    %v1762 = vpack.c.b16 %v1674, %v1670
    %v1763 = vpack.c.b16 %v1675, %v1671
    %v1764 = vpack.c.b16 %v1676, %v1672
    %v1765 = vpack.c.b16 %v1677, %v1673
    %v1766 = vpack.c.b16 %v1682, %v1678
    %v1767 = vpack.c.b16 %v1683, %v1679
    %v1768 = vpack.c.b16 %v1684, %v1680
    %v1769 = vpack.c.b16 %v1685, %v1681
    %v1770 = vpack.c.b16 %v1690, %v1686
    %v1771 = vpack.c.b16 %v1691, %v1687
    %v1772 = vpack.c.b16 %v1692, %v1688
    %v1773 = vpack.c.b16 %v1693, %v1689
    %v1774 = vpack.c.b16 %v1698, %v1694
    %v1775 = vpack.c.b16 %v1699, %v1695
    %v1776 = vpack.c.b16 %v1700, %v1696
    %v1777 = vpack.c.b16 %v1701, %v1697
    %v1778 = vpack.c.b16 %v1706, %v1702
    %v1779 = vpack.c.b16 %v1707, %v1703
    %v1780 = vpack.c.b16 %v1708, %v1704
    %v1781 = vpack.c.b16 %v1709, %v1705
    %v1782 = vpack.c.b16 %v1714, %v1710
    %v1783 = vpack.c.b16 %v1715, %v1711
    %v1784 = vpack.c.b16 %v1716, %v1712
    %v1785 = vpack.c.b16 %v1717, %v1713
    %v1786 = vpack.c.b16 %v1722, %v1718
    %v1787 = vpack.c.b16 %v1723, %v1719
    %v1788 = vpack.c.b16 %v1724, %v1720
    %v1789 = vpack.c.b16 %v1725, %v1721
    %1854 = vmatprep.subr.bf16.mxu0 %v1727
    %1855 = vmatpush1.bf16.msra.mxu0 %v1726
    %1856 = vmatprep.subr.bf16.mxu0 %v1731
    %1857 = vmatpush1.bf16.msra.mxu0 %v1730
    %1858 = vmatprep.subr.bf16.mxu0 %v1735
    %1859 = vmatpush1.bf16.msra.mxu0 %v1734
    %1860 = vmatprep.subr.bf16.mxu0 %v1739
    %1861 = vmatpush1.bf16.msra.mxu0 %v1738
    %1862 = vmatprep.subr.bf16.mxu0 %v1743
    %1863 = vmatpush1.bf16.msra.mxu0 %v1742
    %1864 = vmatprep.subr.bf16.mxu0 %v1747
    %1865 = vmatpush1.bf16.msra.mxu0 %v1746
    %1866 = vmatprep.subr.bf16.mxu0 %v1751
    %1867 = vmatpush1.bf16.msra.mxu0 %v1750
    %1868 = vmatprep.subr.bf16.mxu0 %v1755
    %1869 = vmatpush1.bf16.msra.mxu0 %v1754
    %1870 = vmatprep.subr.bf16.mxu0 %v1759
    %1871 = vmatpush1.bf16.msra.mxu0 %v1758
    %1872 = vmatprep.subr.bf16.mxu0 %v1763
    %1873 = vmatpush1.bf16.msra.mxu0 %v1762
    %1874 = vmatprep.subr.bf16.mxu0 %v1767
    %1875 = vmatpush1.bf16.msra.mxu0 %v1766
    %1876 = vmatprep.subr.bf16.mxu0 %v1771
    %1877 = vmatpush1.bf16.msra.mxu0 %v1770
    %1878 = vmatprep.subr.bf16.mxu0 %v1775
    %1879 = vmatpush1.bf16.msra.mxu0 %v1774
    %1880 = vmatprep.subr.bf16.mxu0 %v1779
    %1881 = vmatpush1.bf16.msra.mxu0 %v1778
    %1882 = vmatprep.subr.bf16.mxu0 %v1783
    %1883 = vmatpush1.bf16.msra.mxu0 %v1782
    %1884 = vmatprep.subr.bf16.mxu0 %v1787
    %1885 = vmatpush1.bf16.msra.mxu0 %v1786
    %1886 = vmatprep.mubr.bf16.mxu0 %v1447
    %1887 = vmatmul.mubr.bf16.gmra.mrb[0].mxu0 %v1446
    %v1888 = vpop.f32.mrb[0].mxu0
    %v1889 = vadd.f32 %v1517, %v1888
    %v1890 = vpop.f32.mrb[0].mxu0
    %v1891 = vadd.f32 %v1521, %v1890
    %v1892 = vpop.f32.mrb[0].mxu0
    %v1893 = vpop.f32.mrb[0].mxu0
    %1894 = vdwg.mxu0
    %1895 = vmatprep.subr.bf16.mxu0 %v1729
    %1896 = vmatpush1.bf16.msra.mxu0 %v1728
    %1897 = vmatprep.subr.bf16.mxu0 %v1733
    %1898 = vmatpush1.bf16.msra.mxu0 %v1732
    %1899 = vmatprep.subr.bf16.mxu0 %v1737
    %1900 = vmatpush1.bf16.msra.mxu0 %v1736
    %1901 = vmatprep.subr.bf16.mxu0 %v1741
    %1902 = vmatpush1.bf16.msra.mxu0 %v1740
    %1903 = vmatprep.subr.bf16.mxu0 %v1745
    %1904 = vmatpush1.bf16.msra.mxu0 %v1744
    %1905 = vmatprep.subr.bf16.mxu0 %v1749
    %1906 = vmatpush1.bf16.msra.mxu0 %v1748
    %1907 = vmatprep.subr.bf16.mxu0 %v1753
    %1908 = vmatpush1.bf16.msra.mxu0 %v1752
    %1909 = vmatprep.subr.bf16.mxu0 %v1757
    %1910 = vmatpush1.bf16.msra.mxu0 %v1756
    %1911 = vmatprep.subr.bf16.mxu0 %v1761
    %1912 = vmatpush1.bf16.msra.mxu0 %v1760
    %1913 = vmatprep.subr.bf16.mxu0 %v1765
    %1914 = vmatpush1.bf16.msra.mxu0 %v1764
    %1915 = vmatprep.subr.bf16.mxu0 %v1769
    %1916 = vmatpush1.bf16.msra.mxu0 %v1768
    %1917 = vmatprep.subr.bf16.mxu0 %v1773
    %1918 = vmatpush1.bf16.msra.mxu0 %v1772
    %1919 = vmatprep.subr.bf16.mxu0 %v1777
    %1920 = vmatpush1.bf16.msra.mxu0 %v1776
    %1921 = vmatprep.subr.bf16.mxu0 %v1781
    %1922 = vmatpush1.bf16.msra.mxu0 %v1780
    %1923 = vmatprep.subr.bf16.mxu0 %v1785
    %1924 = vmatpush1.bf16.msra.mxu0 %v1784
    %1925 = vmatprep.subr.bf16.mxu0 %v1789
    %1926 = vmatpush1.bf16.msra.mxu0 %v1788
    %1927 = vmatprep.mubr.bf16.mxu0 %v1447
    %1928 = vmatmul.mubr.bf16.gmra.mrb[0].mxu0 %v1446
    %v1929 = vpop.f32.mrb[0].mxu0
    %v1930 = vadd.f32 %v1525, %v1929
    %v1931 = vpop.f32.mrb[0].mxu0
    %v1932 = vadd.f32 %v1529, %v1931
    %v1933 = vpop.f32.mrb[0].mxu0
    %v1934 = vpop.f32.mrb[0].mxu0
    %1935 = vdwg.mxu0
    %v1936 = vxor.u32 %v1889, 2147483648
    %v1937 = vmul.f32 %v1936, 1.442695
    %v1938 = vpow.pop %v1937
    %v1939 = vadd.f32 %v1938, 1.0
    %v1940 = vrcp.pop %v1939
    %v1941 = vmul.f32 1.0, %v1940
    %v1942 = vxor.u32 %v1891, 2147483648
    %v1943 = vmul.f32 %v1942, 1.442695
    %v1944 = vpow.pop %v1943
    %v1945 = vadd.f32 %v1944, 1.0
    %v1946 = vrcp.pop %v1945
    %v1947 = vmul.f32 1.0, %v1946
    %v1948 = vtanh.pop %v1930
    %v1949 = vxor.u32 %v1932, 2147483648
    %v1950 = vmul.f32 %v1949, 1.442695
    %v1951 = vpow.pop %v1950
    %v1952 = vadd.f32 %v1951, 1.0
    %v1953 = vrcp.pop %v1952
    %v1954 = vmul.f32 1.0, %v1953
    %v1955 = vmul.f32 %v1947, %v1322
    %v1956 = vmul.f32 %v1941, %v1948
    %v1957 = vadd.f32 %v1955, %v1956
    %v1958 = vtanh.pop %v1957
    %v1959 = vmul.f32 %v1954, %v1958
    %v1960 = vpack.c.bf16 %v1959, %v1959
    %v1961 = vld [vmem:[%s8] sm:$0xf]
    %v1962 = vld [vmem:[%s8 + $0x4] sm:$0xf]
    %v1963 = vld [vmem:[%s8 + $0x8] sm:$0xf]
    %v1964 = vld [vmem:[%s8 + $0xc] sm:$0xf]
    %v1965 = vld [vmem:[%s8 + $0x10] sm:$0xf]
    %v1966 = vld [vmem:[%s8 + $0x14] sm:$0xf]
    %v1967 = vld [vmem:[%s8 + $0x18] sm:$0xf]
    %v1968 = vld [vmem:[%s8 + $0x1c] sm:$0xf]
    %v1969 = vld [vmem:[%s8 + $0x20] sm:$0xf]
    %v1970 = vld [vmem:[%s8 + $0x24] sm:$0xf]
    %v1971 = vld [vmem:[%s8 + $0x28] sm:$0xf]
    %v1972 = vld [vmem:[%s8 + $0x2c] sm:$0xf]
    %v1973 = vld [vmem:[%s8 + $0x30] sm:$0xf]
    %v1974 = vld [vmem:[%s8 + $0x34] sm:$0xf]
    %v1975 = vld [vmem:[%s8 + $0x38] sm:$0xf]
    %v1976 = vld [vmem:[%s8 + $0x3c] sm:$0xf]
    %v1977 = vld [vmem:[%s9] sm:$0x1]
    %v1979 = vlaneseq
    %v1980 = vshrl.u32 %v1979, 7
    %v1981 = vsub.s32 0, %v1980
    %v1982 = vrot.slane %v1977, %v1981
    %v2000 = vunpack.c.l.b16 %v1961
    %v2001 = vunpack.c.l.b16 %v1962
    %v2002 = vunpack.c.l.b16 %v1963
    %v2003 = vunpack.c.l.b16 %v1964
    %v2004 = vunpack.c.l.b16 %v1965
    %v2005 = vunpack.c.l.b16 %v1966
    %v2006 = vunpack.c.l.b16 %v1967
    %v2007 = vunpack.c.l.b16 %v1968
    %v2008 = vunpack.c.l.b16 %v1969
    %v2009 = vunpack.c.l.b16 %v1970
    %v2010 = vunpack.c.l.b16 %v1971
    %v2011 = vunpack.c.l.b16 %v1972
    %v2012 = vunpack.c.l.b16 %v1973
    %v2013 = vunpack.c.l.b16 %v1974
    %v2014 = vunpack.c.l.b16 %v1975
    %v2015 = vunpack.c.l.b16 %v1976
    %v2016 = vpack.c.b16 %v2001, %v2000
    %v2017 = vpack.c.b16 %v2003, %v2002
    %v2018 = vpack.c.b16 %v2005, %v2004
    %v2019 = vpack.c.b16 %v2007, %v2006
    %v2020 = vpack.c.b16 %v2009, %v2008
    %v2021 = vpack.c.b16 %v2011, %v2010
    %v2022 = vpack.c.b16 %v2013, %v2012
    %v2023 = vpack.c.b16 %v2015, %v2014
    %2032 = vmatprep.subr.bf16.mxu0 0
    %2033 = vmatpush1.bf16.msra.mxu0 %v2016
    %2034 = vmatprep.subr.bf16.mxu0 0
    %2035 = vmatpush1.bf16.msra.mxu0 %v2017
    %2036 = vmatprep.subr.bf16.mxu0 0
    %2037 = vmatpush1.bf16.msra.mxu0 %v2018
    %2038 = vmatprep.subr.bf16.mxu0 0
    %2039 = vmatpush1.bf16.msra.mxu0 %v2019
    %2040 = vmatprep.subr.bf16.mxu0 0
    %2041 = vmatpush1.bf16.msra.mxu0 %v2020
    %2042 = vmatprep.subr.bf16.mxu0 0
    %2043 = vmatpush1.bf16.msra.mxu0 %v2021
    %2044 = vmatprep.subr.bf16.mxu0 0
    %2045 = vmatpush1.bf16.msra.mxu0 %v2022
    %2046 = vmatprep.subr.bf16.mxu0 0
    %2047 = vmatpush1.bf16.msra.mxu0 %v2023
    %2048 = vmatprep.subr.bf16.mxu0 0
    %2049 = vmatpush1.bf16.msra.mxu0 0
    %2050 = vmatprep.subr.bf16.mxu0 0
    %2051 = vmatpush1.bf16.msra.mxu0 0
    %2052 = vmatprep.subr.bf16.mxu0 0
    %2053 = vmatpush1.bf16.msra.mxu0 0
    %2054 = vmatprep.subr.bf16.mxu0 0
    %2055 = vmatpush1.bf16.msra.mxu0 0
    %2056 = vmatprep.subr.bf16.mxu0 0
    %2057 = vmatpush1.bf16.msra.mxu0 0
    %2058 = vmatprep.subr.bf16.mxu0 0
    %2059 = vmatpush1.bf16.msra.mxu0 0
    %2060 = vmatprep.subr.bf16.mxu0 0
    %2061 = vmatpush1.bf16.msra.mxu0 0
    %2062 = vmatprep.subr.bf16.mxu0 0
    %2063 = vmatpush1.bf16.msra.mxu0 0
    %2064 = vmatprep.mubr.bf16.mxu0 0
    %2065 = vmatmul.mubr.bf16.gmra.mrb[0].mxu0 %v1960
    %v2066 = vpop.f32.mrb[0].mxu0
    %v2067 = vadd.f32 %v1982, %v2066
    %v2068 = vpop.f32.mrb[0].mxu0
    %v2069 = vpop.f32.mrb[0].mxu0
    %v2070 = vpop.f32.mrb[0].mxu0
    %2071 = vdwg.mxu0
    %2072 = vst [vmem:[%s10] sm:$0xff] %v2067
    %2073 = vmax.xlane.f32.xlu0 %v2067
    %v2074 = vpop.xlane.xlu0 %2073
    %vm2075 = vcmp.eq.f32.partialorder %v2067, %v2074
    %v2076 = vsel %vm2075, %v1327, 128.0
    %2077 = vmin.xlane.f32.xlu0 %v2076
    %v2078 = vpop.xlane.xlu0 %2077
    %v2079 = vcvt.f32.s32.to.zero.pseudo %v2078
    %s2080 = sld [smem:[#allocation2 + $0x1]]
    %p2081 = scmp.gt.s32.totalorder %s2080, 0
    %s2082 = scalar_lea.vmem %s1, 8
    %v2083 = vld [vmem:[%s2082] sm:$0xff]
    %s2084 = scalar_select %p2081, 1, 0
    %v2085 = vstv %s2084
    %vm2086 = vcmp.eq.s32.totalorder %v2085, 1
    %v2087 = vsel %vm2086, %v2083, %v2079
    %2088 = vset.pattern.permute.xlu0 0
    %2089 = vperm.xlu0 %2088, %v2087
    %v2090 = vpop.permute.xlu0 %2089
    %vm2091 = vcmp.eq.s32.totalorder %v1326, %v2090
    %v2092 = vsel %vm2091, 1, 0
    %v2093 = vcvt.s32.f32 %v2092
    %v2094 = vpack.c.bf16 %v2093, %v2093
    %v2095 = vld [vmem:[%s5] sm:$0xf]
    %v2096 = vld [vmem:[%s5 + $0x4] sm:$0xf]
    %v2097 = vld [vmem:[%s5 + $0x8] sm:$0xf]
    %v2098 = vld [vmem:[%s5 + $0xc] sm:$0xf]
    %v2099 = vld [vmem:[%s5 + $0x10] sm:$0xf]
    %v2100 = vld [vmem:[%s5 + $0x14] sm:$0xf]
    %v2101 = vld [vmem:[%s5 + $0x18] sm:$0xf]
    %v2102 = vld [vmem:[%s5 + $0x1c] sm:$0xf]
    %v2103 = vld [vmem:[%s5 + $0x20] sm:$0xf]
    %v2104 = vld [vmem:[%s5 + $0x24] sm:$0xf]
    %v2105 = vld [vmem:[%s5 + $0x28] sm:$0xf]
    %v2106 = vld [vmem:[%s5 + $0x2c] sm:$0xf]
    %v2107 = vld [vmem:[%s5 + $0x30] sm:$0xf]
    %v2108 = vld [vmem:[%s5 + $0x34] sm:$0xf]
    %v2109 = vld [vmem:[%s5 + $0x38] sm:$0xf]
    %v2110 = vld [vmem:[%s5 + $0x3c] sm:$0xf]
    %v2127 = vunpack.c.l.b16 %v2095
    %v2128 = vunpack.c.l.b16 %v2096
    %v2129 = vunpack.c.l.b16 %v2097
    %v2130 = vunpack.c.l.b16 %v2098
    %v2131 = vunpack.c.l.b16 %v2099
    %v2132 = vunpack.c.l.b16 %v2100
    %v2133 = vunpack.c.l.b16 %v2101
    %v2134 = vunpack.c.l.b16 %v2102
    %v2135 = vunpack.c.l.b16 %v2103
    %v2136 = vunpack.c.l.b16 %v2104
    %v2137 = vunpack.c.l.b16 %v2105
    %v2138 = vunpack.c.l.b16 %v2106
    %v2139 = vunpack.c.l.b16 %v2107
    %v2140 = vunpack.c.l.b16 %v2108
    %v2141 = vunpack.c.l.b16 %v2109
    %v2142 = vunpack.c.l.b16 %v2110
    %v2143 = vpack.c.b16 %v2128, %v2127
    %v2144 = vpack.c.b16 %v2130, %v2129
    %v2145 = vpack.c.b16 %v2132, %v2131
    %v2146 = vpack.c.b16 %v2134, %v2133
    %v2147 = vpack.c.b16 %v2136, %v2135
    %v2148 = vpack.c.b16 %v2138, %v2137
    %v2149 = vpack.c.b16 %v2140, %v2139
    %v2150 = vpack.c.b16 %v2142, %v2141
    %2159 = vmatprep.subr.bf16.mxu0 0
    %2160 = vmatpush1.bf16.msra.mxu0 %v2143
    %2161 = vmatprep.subr.bf16.mxu0 0
    %2162 = vmatpush1.bf16.msra.mxu0 %v2144
    %2163 = vmatprep.subr.bf16.mxu0 0
    %2164 = vmatpush1.bf16.msra.mxu0 %v2145
    %2165 = vmatprep.subr.bf16.mxu0 0
    %2166 = vmatpush1.bf16.msra.mxu0 %v2146
    %2167 = vmatprep.subr.bf16.mxu0 0
    %2168 = vmatpush1.bf16.msra.mxu0 %v2147
    %2169 = vmatprep.subr.bf16.mxu0 0
    %2170 = vmatpush1.bf16.msra.mxu0 %v2148
    %2171 = vmatprep.subr.bf16.mxu0 0
    %2172 = vmatpush1.bf16.msra.mxu0 %v2149
    %2173 = vmatprep.subr.bf16.mxu0 0
    %2174 = vmatpush1.bf16.msra.mxu0 %v2150
    %2175 = vmatprep.subr.bf16.mxu0 0
    %2176 = vmatpush1.bf16.msra.mxu0 0
    %2177 = vmatprep.subr.bf16.mxu0 0
    %2178 = vmatpush1.bf16.msra.mxu0 0
    %2179 = vmatprep.subr.bf16.mxu0 0
    %2180 = vmatpush1.bf16.msra.mxu0 0
    %2181 = vmatprep.subr.bf16.mxu0 0
    %2182 = vmatpush1.bf16.msra.mxu0 0
    %2183 = vmatprep.subr.bf16.mxu0 0
    %2184 = vmatpush1.bf16.msra.mxu0 0
    %2185 = vmatprep.subr.bf16.mxu0 0
    %2186 = vmatpush1.bf16.msra.mxu0 0
    %2187 = vmatprep.subr.bf16.mxu0 0
    %2188 = vmatpush1.bf16.msra.mxu0 0
    %2189 = vmatprep.subr.bf16.mxu0 0
    %2190 = vmatpush1.bf16.msra.mxu0 0
    %2191 = vmatprep.mubr.bf16.mxu0 0
    %2192 = vmatmul.mubr.bf16.gmra.mrb[0].mxu0 %v2094
    %v2193 = vpop.f32.mrb[0].mxu0
    %v2194 = vadd.f32 0.0, %v2193
    %v2195 = vpop.f32.mrb[0].mxu0
    %v2196 = vpop.f32.mrb[0].mxu0
    %v2197 = vpop.f32.mrb[0].mxu0
    %2198 = vdwg.mxu0
    %v2199 = vpack.c.bf16 %v2194, %v2194
    %v2200 = vld [vmem:[%s6] sm:$0xff]
    %v2201 = vld [vmem:[%s6 + $0x8] sm:$0xff]
    %v2202 = vld [vmem:[%s6 + $0x10] sm:$0xff]
    %v2203 = vld [vmem:[%s6 + $0x18] sm:$0xff]
    %v2204 = vld [vmem:[%s6 + $0x20] sm:$0xff]
    %v2205 = vld [vmem:[%s6 + $0x28] sm:$0xff]
    %v2206 = vld [vmem:[%s6 + $0x30] sm:$0xff]
    %v2207 = vld [vmem:[%s6 + $0x38] sm:$0xff]
    %v2208 = vld [vmem:[%s6 + $0x40] sm:$0xff]
    %v2209 = vld [vmem:[%s6 + $0x48] sm:$0xff]
    %v2210 = vld [vmem:[%s6 + $0x50] sm:$0xff]
    %v2211 = vld [vmem:[%s6 + $0x58] sm:$0xff]
    %v2212 = vld [vmem:[%s6 + $0x60] sm:$0xff]
    %v2213 = vld [vmem:[%s6 + $0x68] sm:$0xff]
    %v2214 = vld [vmem:[%s6 + $0x70] sm:$0xff]
    %v2215 = vld [vmem:[%s6 + $0x78] sm:$0xff]
    %v2216 = vld [vmem:[%s6 + $0x80] sm:$0xff]
    %v2217 = vld [vmem:[%s6 + $0x88] sm:$0xff]
    %v2218 = vld [vmem:[%s6 + $0x90] sm:$0xff]
    %v2219 = vld [vmem:[%s6 + $0x98] sm:$0xff]
    %v2220 = vld [vmem:[%s6 + $0xa0] sm:$0xff]
    %v2221 = vld [vmem:[%s6 + $0xa8] sm:$0xff]
    %v2222 = vld [vmem:[%s6 + $0xb0] sm:$0xff]
    %v2223 = vld [vmem:[%s6 + $0xb8] sm:$0xff]
    %v2224 = vld [vmem:[%s6 + $0xc0] sm:$0xff]
    %v2225 = vld [vmem:[%s6 + $0xc8] sm:$0xff]
    %v2226 = vld [vmem:[%s6 + $0xd0] sm:$0xff]
    %v2227 = vld [vmem:[%s6 + $0xd8] sm:$0xff]
    %v2228 = vld [vmem:[%s6 + $0xe0] sm:$0xff]
    %v2229 = vld [vmem:[%s6 + $0xe8] sm:$0xff]
    %v2230 = vld [vmem:[%s6 + $0xf0] sm:$0xff]
    %v2231 = vld [vmem:[%s6 + $0xf8] sm:$0xff]
    %v2232 = vld [vmem:[%s6 + $0x100] sm:$0xff]
    %v2233 = vld [vmem:[%s6 + $0x108] sm:$0xff]
    %v2234 = vld [vmem:[%s6 + $0x110] sm:$0xff]
    %v2235 = vld [vmem:[%s6 + $0x118] sm:$0xff]
    %v2236 = vld [vmem:[%s6 + $0x120] sm:$0xff]
    %v2237 = vld [vmem:[%s6 + $0x128] sm:$0xff]
    %v2238 = vld [vmem:[%s6 + $0x130] sm:$0xff]
    %v2239 = vld [vmem:[%s6 + $0x138] sm:$0xff]
    %v2240 = vld [vmem:[%s6 + $0x140] sm:$0xff]
    %v2241 = vld [vmem:[%s6 + $0x148] sm:$0xff]
    %v2242 = vld [vmem:[%s6 + $0x150] sm:$0xff]
    %v2243 = vld [vmem:[%s6 + $0x158] sm:$0xff]
    %v2244 = vld [vmem:[%s6 + $0x160] sm:$0xff]
    %v2245 = vld [vmem:[%s6 + $0x168] sm:$0xff]
    %v2246 = vld [vmem:[%s6 + $0x170] sm:$0xff]
    %v2247 = vld [vmem:[%s6 + $0x178] sm:$0xff]
    %v2248 = vld [vmem:[%s6 + $0x180] sm:$0xff]
    %v2249 = vld [vmem:[%s6 + $0x188] sm:$0xff]
    %v2250 = vld [vmem:[%s6 + $0x190] sm:$0xff]
    %v2251 = vld [vmem:[%s6 + $0x198] sm:$0xff]
    %v2252 = vld [vmem:[%s6 + $0x1a0] sm:$0xff]
    %v2253 = vld [vmem:[%s6 + $0x1a8] sm:$0xff]
    %v2254 = vld [vmem:[%s6 + $0x1b0] sm:$0xff]
    %v2255 = vld [vmem:[%s6 + $0x1b8] sm:$0xff]
    %v2256 = vld [vmem:[%s6 + $0x1c0] sm:$0xff]
    %v2257 = vld [vmem:[%s6 + $0x1c8] sm:$0xff]
    %v2258 = vld [vmem:[%s6 + $0x1d0] sm:$0xff]
    %v2259 = vld [vmem:[%s6 + $0x1d8] sm:$0xff]
    %v2260 = vld [vmem:[%s6 + $0x1e0] sm:$0xff]
    %v2261 = vld [vmem:[%s6 + $0x1e8] sm:$0xff]
    %v2262 = vld [vmem:[%s6 + $0x1f0] sm:$0xff]
    %v2263 = vld [vmem:[%s6 + $0x1f8] sm:$0xff]
    %v2264 = vld [vmem:[%s7] sm:$0xf]
    %v2266 = vlaneseq
    %v2267 = vshrl.u32 %v2266, 7
    %v2268 = vsub.s32 0, %v2267
    %v2269 = vrot.slane %v2264, %v2268
    %v2270 = vlaneseq
    %v2271 = vshrl.u32 %v2270, 7
    %v2272 = vsub.s32 1, %v2271
    %v2273 = vrot.slane %v2264, %v2272
    %v2274 = vlaneseq
    %v2275 = vshrl.u32 %v2274, 7
    %v2276 = vsub.s32 2, %v2275
    %v2277 = vrot.slane %v2264, %v2276
    %v2278 = vlaneseq
    %v2279 = vshrl.u32 %v2278, 7
    %v2280 = vsub.s32 3, %v2279
    %v2281 = vrot.slane %v2264, %v2280
    %v2350 = vunpack.c.l.b16 %v2200
    %v2351 = vunpack.c.h.b16 %v2200
    %v2352 = vunpack.c.l.b16 %v2201
    %v2353 = vunpack.c.h.b16 %v2201
    %v2354 = vunpack.c.l.b16 %v2202
    %v2355 = vunpack.c.h.b16 %v2202
    %v2356 = vunpack.c.l.b16 %v2203
    %v2357 = vunpack.c.h.b16 %v2203
    %v2358 = vunpack.c.l.b16 %v2204
    %v2359 = vunpack.c.h.b16 %v2204
    %v2360 = vunpack.c.l.b16 %v2205
    %v2361 = vunpack.c.h.b16 %v2205
    %v2362 = vunpack.c.l.b16 %v2206
    %v2363 = vunpack.c.h.b16 %v2206
    %v2364 = vunpack.c.l.b16 %v2207
    %v2365 = vunpack.c.h.b16 %v2207
    %v2366 = vunpack.c.l.b16 %v2208
    %v2367 = vunpack.c.h.b16 %v2208
    %v2368 = vunpack.c.l.b16 %v2209
    %v2369 = vunpack.c.h.b16 %v2209
    %v2370 = vunpack.c.l.b16 %v2210
    %v2371 = vunpack.c.h.b16 %v2210
    %v2372 = vunpack.c.l.b16 %v2211
    %v2373 = vunpack.c.h.b16 %v2211
    %v2374 = vunpack.c.l.b16 %v2212
    %v2375 = vunpack.c.h.b16 %v2212
    %v2376 = vunpack.c.l.b16 %v2213
    %v2377 = vunpack.c.h.b16 %v2213
    %v2378 = vunpack.c.l.b16 %v2214
    %v2379 = vunpack.c.h.b16 %v2214
    %v2380 = vunpack.c.l.b16 %v2215
    %v2381 = vunpack.c.h.b16 %v2215
    %v2382 = vunpack.c.l.b16 %v2216
    %v2383 = vunpack.c.h.b16 %v2216
    %v2384 = vunpack.c.l.b16 %v2217
    %v2385 = vunpack.c.h.b16 %v2217
    %v2386 = vunpack.c.l.b16 %v2218
    %v2387 = vunpack.c.h.b16 %v2218
    %v2388 = vunpack.c.l.b16 %v2219
    %v2389 = vunpack.c.h.b16 %v2219
    %v2390 = vunpack.c.l.b16 %v2220
    %v2391 = vunpack.c.h.b16 %v2220
    %v2392 = vunpack.c.l.b16 %v2221
    %v2393 = vunpack.c.h.b16 %v2221
    %v2394 = vunpack.c.l.b16 %v2222
    %v2395 = vunpack.c.h.b16 %v2222
    %v2396 = vunpack.c.l.b16 %v2223
    %v2397 = vunpack.c.h.b16 %v2223
    %v2398 = vunpack.c.l.b16 %v2224
    %v2399 = vunpack.c.h.b16 %v2224
    %v2400 = vunpack.c.l.b16 %v2225
    %v2401 = vunpack.c.h.b16 %v2225
    %v2402 = vunpack.c.l.b16 %v2226
    %v2403 = vunpack.c.h.b16 %v2226
    %v2404 = vunpack.c.l.b16 %v2227
    %v2405 = vunpack.c.h.b16 %v2227
    %v2406 = vunpack.c.l.b16 %v2228
    %v2407 = vunpack.c.h.b16 %v2228
    %v2408 = vunpack.c.l.b16 %v2229
    %v2409 = vunpack.c.h.b16 %v2229
    %v2410 = vunpack.c.l.b16 %v2230
    %v2411 = vunpack.c.h.b16 %v2230
    %v2412 = vunpack.c.l.b16 %v2231
    %v2413 = vunpack.c.h.b16 %v2231
    %v2414 = vunpack.c.l.b16 %v2232
    %v2415 = vunpack.c.h.b16 %v2232
    %v2416 = vunpack.c.l.b16 %v2233
    %v2417 = vunpack.c.h.b16 %v2233
    %v2418 = vunpack.c.l.b16 %v2234
    %v2419 = vunpack.c.h.b16 %v2234
    %v2420 = vunpack.c.l.b16 %v2235
    %v2421 = vunpack.c.h.b16 %v2235
    %v2422 = vunpack.c.l.b16 %v2236
    %v2423 = vunpack.c.h.b16 %v2236
    %v2424 = vunpack.c.l.b16 %v2237
    %v2425 = vunpack.c.h.b16 %v2237
    %v2426 = vunpack.c.l.b16 %v2238
    %v2427 = vunpack.c.h.b16 %v2238
    %v2428 = vunpack.c.l.b16 %v2239
    %v2429 = vunpack.c.h.b16 %v2239
    %v2430 = vunpack.c.l.b16 %v2240
    %v2431 = vunpack.c.h.b16 %v2240
    %v2432 = vunpack.c.l.b16 %v2241
    %v2433 = vunpack.c.h.b16 %v2241
    %v2434 = vunpack.c.l.b16 %v2242
    %v2435 = vunpack.c.h.b16 %v2242
    %v2436 = vunpack.c.l.b16 %v2243
    %v2437 = vunpack.c.h.b16 %v2243
    %v2438 = vunpack.c.l.b16 %v2244
    %v2439 = vunpack.c.h.b16 %v2244
    %v2440 = vunpack.c.l.b16 %v2245
    %v2441 = vunpack.c.h.b16 %v2245
    %v2442 = vunpack.c.l.b16 %v2246
    %v2443 = vunpack.c.h.b16 %v2246
    %v2444 = vunpack.c.l.b16 %v2247
    %v2445 = vunpack.c.h.b16 %v2247
    %v2446 = vunpack.c.l.b16 %v2248
    %v2447 = vunpack.c.h.b16 %v2248
    %v2448 = vunpack.c.l.b16 %v2249
    %v2449 = vunpack.c.h.b16 %v2249
    %v2450 = vunpack.c.l.b16 %v2250
    %v2451 = vunpack.c.h.b16 %v2250
    %v2452 = vunpack.c.l.b16 %v2251
    %v2453 = vunpack.c.h.b16 %v2251
    %v2454 = vunpack.c.l.b16 %v2252
    %v2455 = vunpack.c.h.b16 %v2252
    %v2456 = vunpack.c.l.b16 %v2253
    %v2457 = vunpack.c.h.b16 %v2253
    %v2458 = vunpack.c.l.b16 %v2254
    %v2459 = vunpack.c.h.b16 %v2254
    %v2460 = vunpack.c.l.b16 %v2255
    %v2461 = vunpack.c.h.b16 %v2255
    %v2462 = vunpack.c.l.b16 %v2256
    %v2463 = vunpack.c.h.b16 %v2256
    %v2464 = vunpack.c.l.b16 %v2257
    %v2465 = vunpack.c.h.b16 %v2257
    %v2466 = vunpack.c.l.b16 %v2258
    %v2467 = vunpack.c.h.b16 %v2258
    %v2468 = vunpack.c.l.b16 %v2259
    %v2469 = vunpack.c.h.b16 %v2259
    %v2470 = vunpack.c.l.b16 %v2260
    %v2471 = vunpack.c.h.b16 %v2260
    %v2472 = vunpack.c.l.b16 %v2261
    %v2473 = vunpack.c.h.b16 %v2261
    %v2474 = vunpack.c.l.b16 %v2262
    %v2475 = vunpack.c.h.b16 %v2262
    %v2476 = vunpack.c.l.b16 %v2263
    %v2477 = vunpack.c.h.b16 %v2263
    %v2478 = vpack.c.b16 %v2354, %v2350
    %v2479 = vpack.c.b16 %v2355, %v2351
    %v2480 = vpack.c.b16 %v2356, %v2352
    %v2481 = vpack.c.b16 %v2357, %v2353
    %v2482 = vpack.c.b16 %v2362, %v2358
    %v2483 = vpack.c.b16 %v2363, %v2359
    %v2484 = vpack.c.b16 %v2364, %v2360
    %v2485 = vpack.c.b16 %v2365, %v2361
    %v2486 = vpack.c.b16 %v2370, %v2366
    %v2487 = vpack.c.b16 %v2371, %v2367
    %v2488 = vpack.c.b16 %v2372, %v2368
    %v2489 = vpack.c.b16 %v2373, %v2369
    %v2490 = vpack.c.b16 %v2378, %v2374
    %v2491 = vpack.c.b16 %v2379, %v2375
    %v2492 = vpack.c.b16 %v2380, %v2376
    %v2493 = vpack.c.b16 %v2381, %v2377
    %v2494 = vpack.c.b16 %v2386, %v2382
    %v2495 = vpack.c.b16 %v2387, %v2383
    %v2496 = vpack.c.b16 %v2388, %v2384
    %v2497 = vpack.c.b16 %v2389, %v2385
    %v2498 = vpack.c.b16 %v2394, %v2390
    %v2499 = vpack.c.b16 %v2395, %v2391
    %v2500 = vpack.c.b16 %v2396, %v2392
    %v2501 = vpack.c.b16 %v2397, %v2393
    %v2502 = vpack.c.b16 %v2402, %v2398
    %v2503 = vpack.c.b16 %v2403, %v2399
    %v2504 = vpack.c.b16 %v2404, %v2400
    %v2505 = vpack.c.b16 %v2405, %v2401
    %v2506 = vpack.c.b16 %v2410, %v2406
    %v2507 = vpack.c.b16 %v2411, %v2407
    %v2508 = vpack.c.b16 %v2412, %v2408
    %v2509 = vpack.c.b16 %v2413, %v2409
    %v2510 = vpack.c.b16 %v2418, %v2414
    %v2511 = vpack.c.b16 %v2419, %v2415
    %v2512 = vpack.c.b16 %v2420, %v2416
    %v2513 = vpack.c.b16 %v2421, %v2417
    %v2514 = vpack.c.b16 %v2426, %v2422
    %v2515 = vpack.c.b16 %v2427, %v2423
    %v2516 = vpack.c.b16 %v2428, %v2424
    %v2517 = vpack.c.b16 %v2429, %v2425
    %v2518 = vpack.c.b16 %v2434, %v2430
    %v2519 = vpack.c.b16 %v2435, %v2431
    %v2520 = vpack.c.b16 %v2436, %v2432
    %v2521 = vpack.c.b16 %v2437, %v2433
    %v2522 = vpack.c.b16 %v2442, %v2438
    %v2523 = vpack.c.b16 %v2443, %v2439
    %v2524 = vpack.c.b16 %v2444, %v2440
    %v2525 = vpack.c.b16 %v2445, %v2441
    %v2526 = vpack.c.b16 %v2450, %v2446
    %v2527 = vpack.c.b16 %v2451, %v2447
    %v2528 = vpack.c.b16 %v2452, %v2448
    %v2529 = vpack.c.b16 %v2453, %v2449
    %v2530 = vpack.c.b16 %v2458, %v2454
    %v2531 = vpack.c.b16 %v2459, %v2455
    %v2532 = vpack.c.b16 %v2460, %v2456
    %v2533 = vpack.c.b16 %v2461, %v2457
    %v2534 = vpack.c.b16 %v2466, %v2462
    %v2535 = vpack.c.b16 %v2467, %v2463
    %v2536 = vpack.c.b16 %v2468, %v2464
    %v2537 = vpack.c.b16 %v2469, %v2465
    %v2538 = vpack.c.b16 %v2474, %v2470
    %v2539 = vpack.c.b16 %v2475, %v2471
    %v2540 = vpack.c.b16 %v2476, %v2472
    %v2541 = vpack.c.b16 %v2477, %v2473
    %2606 = vmatprep.subr.bf16.mxu0 %v2479
    %2607 = vmatpush1.bf16.msra.mxu0 %v2478
    %2608 = vmatprep.subr.bf16.mxu0 %v2483
    %2609 = vmatpush1.bf16.msra.mxu0 %v2482
    %2610 = vmatprep.subr.bf16.mxu0 %v2487
    %2611 = vmatpush1.bf16.msra.mxu0 %v2486
    %2612 = vmatprep.subr.bf16.mxu0 %v2491
    %2613 = vmatpush1.bf16.msra.mxu0 %v2490
    %2614 = vmatprep.subr.bf16.mxu0 %v2495
    %2615 = vmatpush1.bf16.msra.mxu0 %v2494
    %2616 = vmatprep.subr.bf16.mxu0 %v2499
    %2617 = vmatpush1.bf16.msra.mxu0 %v2498
    %2618 = vmatprep.subr.bf16.mxu0 %v2503
    %2619 = vmatpush1.bf16.msra.mxu0 %v2502
    %2620 = vmatprep.subr.bf16.mxu0 %v2507
    %2621 = vmatpush1.bf16.msra.mxu0 %v2506
    %2622 = vmatprep.subr.bf16.mxu0 %v2511
    %2623 = vmatpush1.bf16.msra.mxu0 %v2510
    %2624 = vmatprep.subr.bf16.mxu0 %v2515
    %2625 = vmatpush1.bf16.msra.mxu0 %v2514
    %2626 = vmatprep.subr.bf16.mxu0 %v2519
    %2627 = vmatpush1.bf16.msra.mxu0 %v2518
    %2628 = vmatprep.subr.bf16.mxu0 %v2523
    %2629 = vmatpush1.bf16.msra.mxu0 %v2522
    %2630 = vmatprep.subr.bf16.mxu0 %v2527
    %2631 = vmatpush1.bf16.msra.mxu0 %v2526
    %2632 = vmatprep.subr.bf16.mxu0 %v2531
    %2633 = vmatpush1.bf16.msra.mxu0 %v2530
    %2634 = vmatprep.subr.bf16.mxu0 %v2535
    %2635 = vmatpush1.bf16.msra.mxu0 %v2534
    %2636 = vmatprep.subr.bf16.mxu0 %v2539
    %2637 = vmatpush1.bf16.msra.mxu0 %v2538
    %2638 = vmatprep.mubr.bf16.mxu0 %v1960
    %2639 = vmatmul.mubr.bf16.gmra.mrb[0].mxu0 %v2199
    %v2640 = vpop.f32.mrb[0].mxu0
    %v2641 = vadd.f32 %v2269, %v2640
    %v2642 = vpop.f32.mrb[0].mxu0
    %v2643 = vadd.f32 %v2273, %v2642
    %v2644 = vpop.f32.mrb[0].mxu0
    %v2645 = vpop.f32.mrb[0].mxu0
    %2646 = vdwg.mxu0
    %2647 = vmatprep.subr.bf16.mxu0 %v2481
    %2648 = vmatpush1.bf16.msra.mxu0 %v2480
    %2649 = vmatprep.subr.bf16.mxu0 %v2485
    %2650 = vmatpush1.bf16.msra.mxu0 %v2484
    %2651 = vmatprep.subr.bf16.mxu0 %v2489
    %2652 = vmatpush1.bf16.msra.mxu0 %v2488
    %2653 = vmatprep.subr.bf16.mxu0 %v2493
    %2654 = vmatpush1.bf16.msra.mxu0 %v2492
    %2655 = vmatprep.subr.bf16.mxu0 %v2497
    %2656 = vmatpush1.bf16.msra.mxu0 %v2496
    %2657 = vmatprep.subr.bf16.mxu0 %v2501
    %2658 = vmatpush1.bf16.msra.mxu0 %v2500
    %2659 = vmatprep.subr.bf16.mxu0 %v2505
    %2660 = vmatpush1.bf16.msra.mxu0 %v2504
    %2661 = vmatprep.subr.bf16.mxu0 %v2509
    %2662 = vmatpush1.bf16.msra.mxu0 %v2508
    %2663 = vmatprep.subr.bf16.mxu0 %v2513
    %2664 = vmatpush1.bf16.msra.mxu0 %v2512
    %2665 = vmatprep.subr.bf16.mxu0 %v2517
    %2666 = vmatpush1.bf16.msra.mxu0 %v2516
    %2667 = vmatprep.subr.bf16.mxu0 %v2521
    %2668 = vmatpush1.bf16.msra.mxu0 %v2520
    %2669 = vmatprep.subr.bf16.mxu0 %v2525
    %2670 = vmatpush1.bf16.msra.mxu0 %v2524
    %2671 = vmatprep.subr.bf16.mxu0 %v2529
    %2672 = vmatpush1.bf16.msra.mxu0 %v2528
    %2673 = vmatprep.subr.bf16.mxu0 %v2533
    %2674 = vmatpush1.bf16.msra.mxu0 %v2532
    %2675 = vmatprep.subr.bf16.mxu0 %v2537
    %2676 = vmatpush1.bf16.msra.mxu0 %v2536
    %2677 = vmatprep.subr.bf16.mxu0 %v2541
    %2678 = vmatpush1.bf16.msra.mxu0 %v2540
    %2679 = vmatprep.mubr.bf16.mxu0 %v1960
    %2680 = vmatmul.mubr.bf16.gmra.mrb[0].mxu0 %v2199
    %v2681 = vpop.f32.mrb[0].mxu0
    %v2682 = vadd.f32 %v2277, %v2681
    %v2683 = vpop.f32.mrb[0].mxu0
    %v2684 = vadd.f32 %v2281, %v2683
    %v2685 = vpop.f32.mrb[0].mxu0
    %v2686 = vpop.f32.mrb[0].mxu0
    %2687 = vdwg.mxu0
    %v2688 = vxor.u32 %v2641, 2147483648
    %v2689 = vmul.f32 %v2688, 1.442695
    %v2690 = vpow.pop %v2689
    %v2691 = vadd.f32 %v2690, 1.0
    %v2692 = vrcp.pop %v2691
    %v2693 = vmul.f32 1.0, %v2692
    %v2694 = vxor.u32 %v2643, 2147483648
    %v2695 = vmul.f32 %v2694, 1.442695
    %v2696 = vpow.pop %v2695
    %v2697 = vadd.f32 %v2696, 1.0
    %v2698 = vrcp.pop %v2697
    %v2699 = vmul.f32 1.0, %v2698
    %v2700 = vtanh.pop %v2682
    %v2701 = vxor.u32 %v2684, 2147483648
    %v2702 = vmul.f32 %v2701, 1.442695
    %v2703 = vpow.pop %v2702
    %v2704 = vadd.f32 %v2703, 1.0
    %v2705 = vrcp.pop %v2704
    %v2706 = vmul.f32 1.0, %v2705
    %v2707 = vmul.f32 %v2699, %v1957
    %v2708 = vmul.f32 %v2693, %v2700
    %v2709 = vadd.f32 %v2707, %v2708
    %v2710 = vtanh.pop %v2709
    %v2711 = vmul.f32 %v2706, %v2710
    %v2712 = vpack.c.bf16 %v2711, %v2711
    %v2713 = vld [vmem:[%s8] sm:$0xf]
    %v2714 = vld [vmem:[%s8 + $0x4] sm:$0xf]
    %v2715 = vld [vmem:[%s8 + $0x8] sm:$0xf]
    %v2716 = vld [vmem:[%s8 + $0xc] sm:$0xf]
    %v2717 = vld [vmem:[%s8 + $0x10] sm:$0xf]
    %v2718 = vld [vmem:[%s8 + $0x14] sm:$0xf]
    %v2719 = vld [vmem:[%s8 + $0x18] sm:$0xf]
    %v2720 = vld [vmem:[%s8 + $0x1c] sm:$0xf]
    %v2721 = vld [vmem:[%s8 + $0x20] sm:$0xf]
    %v2722 = vld [vmem:[%s8 + $0x24] sm:$0xf]
    %v2723 = vld [vmem:[%s8 + $0x28] sm:$0xf]
    %v2724 = vld [vmem:[%s8 + $0x2c] sm:$0xf]
    %v2725 = vld [vmem:[%s8 + $0x30] sm:$0xf]
    %v2726 = vld [vmem:[%s8 + $0x34] sm:$0xf]
    %v2727 = vld [vmem:[%s8 + $0x38] sm:$0xf]
    %v2728 = vld [vmem:[%s8 + $0x3c] sm:$0xf]
    %v2729 = vld [vmem:[%s9] sm:$0x1]
    %v2731 = vlaneseq
    %v2732 = vshrl.u32 %v2731, 7
    %v2733 = vsub.s32 0, %v2732
    %v2734 = vrot.slane %v2729, %v2733
    %v2752 = vunpack.c.l.b16 %v2713
    %v2753 = vunpack.c.l.b16 %v2714
    %v2754 = vunpack.c.l.b16 %v2715
    %v2755 = vunpack.c.l.b16 %v2716
    %v2756 = vunpack.c.l.b16 %v2717
    %v2757 = vunpack.c.l.b16 %v2718
    %v2758 = vunpack.c.l.b16 %v2719
    %v2759 = vunpack.c.l.b16 %v2720
    %v2760 = vunpack.c.l.b16 %v2721
    %v2761 = vunpack.c.l.b16 %v2722
    %v2762 = vunpack.c.l.b16 %v2723
    %v2763 = vunpack.c.l.b16 %v2724
    %v2764 = vunpack.c.l.b16 %v2725
    %v2765 = vunpack.c.l.b16 %v2726
    %v2766 = vunpack.c.l.b16 %v2727
    %v2767 = vunpack.c.l.b16 %v2728
    %v2768 = vpack.c.b16 %v2753, %v2752
    %v2769 = vpack.c.b16 %v2755, %v2754
    %v2770 = vpack.c.b16 %v2757, %v2756
    %v2771 = vpack.c.b16 %v2759, %v2758
    %v2772 = vpack.c.b16 %v2761, %v2760
    %v2773 = vpack.c.b16 %v2763, %v2762
    %v2774 = vpack.c.b16 %v2765, %v2764
    %v2775 = vpack.c.b16 %v2767, %v2766
    %2784 = vmatprep.subr.bf16.mxu0 0
    %2785 = vmatpush1.bf16.msra.mxu0 %v2768
    %2786 = vmatprep.subr.bf16.mxu0 0
    %2787 = vmatpush1.bf16.msra.mxu0 %v2769
    %2788 = vmatprep.subr.bf16.mxu0 0
    %2789 = vmatpush1.bf16.msra.mxu0 %v2770
    %2790 = vmatprep.subr.bf16.mxu0 0
    %2791 = vmatpush1.bf16.msra.mxu0 %v2771
    %2792 = vmatprep.subr.bf16.mxu0 0
    %2793 = vmatpush1.bf16.msra.mxu0 %v2772
    %2794 = vmatprep.subr.bf16.mxu0 0
    %2795 = vmatpush1.bf16.msra.mxu0 %v2773
    %2796 = vmatprep.subr.bf16.mxu0 0
    %2797 = vmatpush1.bf16.msra.mxu0 %v2774
    %2798 = vmatprep.subr.bf16.mxu0 0
    %2799 = vmatpush1.bf16.msra.mxu0 %v2775
    %2800 = vmatprep.subr.bf16.mxu0 0
    %2801 = vmatpush1.bf16.msra.mxu0 0
    %2802 = vmatprep.subr.bf16.mxu0 0
    %2803 = vmatpush1.bf16.msra.mxu0 0
    %2804 = vmatprep.subr.bf16.mxu0 0
    %2805 = vmatpush1.bf16.msra.mxu0 0
    %2806 = vmatprep.subr.bf16.mxu0 0
    %2807 = vmatpush1.bf16.msra.mxu0 0
    %2808 = vmatprep.subr.bf16.mxu0 0
    %2809 = vmatpush1.bf16.msra.mxu0 0
    %2810 = vmatprep.subr.bf16.mxu0 0
    %2811 = vmatpush1.bf16.msra.mxu0 0
    %2812 = vmatprep.subr.bf16.mxu0 0
    %2813 = vmatpush1.bf16.msra.mxu0 0
    %2814 = vmatprep.subr.bf16.mxu0 0
    %2815 = vmatpush1.bf16.msra.mxu0 0
    %2816 = vmatprep.mubr.bf16.mxu0 0
    %2817 = vmatmul.mubr.bf16.gmra.mrb[0].mxu0 %v2712
    %v2818 = vpop.f32.mrb[0].mxu0
    %v2819 = vadd.f32 %v2734, %v2818
    %v2820 = vpop.f32.mrb[0].mxu0
    %v2821 = vpop.f32.mrb[0].mxu0
    %v2822 = vpop.f32.mrb[0].mxu0
    %2823 = vdwg.mxu0
    %s2824 = scalar_lea.vmem %s10, 8
    %2825 = vst [vmem:[%s2824] sm:$0xff] %v2819
    %2826 = vmax.xlane.f32.xlu0 %v2819
    %v2827 = vpop.xlane.xlu0 %2826
    %vm2828 = vcmp.eq.f32.partialorder %v2819, %v2827
    %v2829 = vsel %vm2828, %v1327, 128.0
    %2830 = vmin.xlane.f32.xlu0 %v2829
    %v2831 = vpop.xlane.xlu0 %2830
    %v2832 = vcvt.f32.s32.to.zero.pseudo %v2831
    %s2833 = sld [smem:[#allocation2 + $0x2]]
    %p2834 = scmp.gt.s32.totalorder %s2833, 0
    %s2835 = scalar_lea.vmem %s1, 16
    %v2836 = vld [vmem:[%s2835] sm:$0xff]
    %s2837 = scalar_select %p2834, 1, 0
    %v2838 = vstv %s2837
    %vm2839 = vcmp.eq.s32.totalorder %v2838, 1
    %v2840 = vsel %vm2839, %v2836, %v2832
    %2841 = vset.pattern.permute.xlu0 0
    %2842 = vperm.xlu0 %2841, %v2840
    %v2843 = vpop.permute.xlu0 %2842
    %vm2844 = vcmp.eq.s32.totalorder %v1326, %v2843
    %v2845 = vsel %vm2844, 1, 0
    %v2846 = vcvt.s32.f32 %v2845
    %v2847 = vpack.c.bf16 %v2846, %v2846
    %v2848 = vld [vmem:[%s5] sm:$0xf]
    %v2849 = vld [vmem:[%s5 + $0x4] sm:$0xf]
    %v2850 = vld [vmem:[%s5 + $0x8] sm:$0xf]
    %v2851 = vld [vmem:[%s5 + $0xc] sm:$0xf]
    %v2852 = vld [vmem:[%s5 + $0x10] sm:$0xf]
    %v2853 = vld [vmem:[%s5 + $0x14] sm:$0xf]
    %v2854 = vld [vmem:[%s5 + $0x18] sm:$0xf]
    %v2855 = vld [vmem:[%s5 + $0x1c] sm:$0xf]
    %v2856 = vld [vmem:[%s5 + $0x20] sm:$0xf]
    %v2857 = vld [vmem:[%s5 + $0x24] sm:$0xf]
    %v2858 = vld [vmem:[%s5 + $0x28] sm:$0xf]
    %v2859 = vld [vmem:[%s5 + $0x2c] sm:$0xf]
    %v2860 = vld [vmem:[%s5 + $0x30] sm:$0xf]
    %v2861 = vld [vmem:[%s5 + $0x34] sm:$0xf]
    %v2862 = vld [vmem:[%s5 + $0x38] sm:$0xf]
    %v2863 = vld [vmem:[%s5 + $0x3c] sm:$0xf]
    %v2880 = vunpack.c.l.b16 %v2848
    %v2881 = vunpack.c.l.b16 %v2849
    %v2882 = vunpack.c.l.b16 %v2850
    %v2883 = vunpack.c.l.b16 %v2851
    %v2884 = vunpack.c.l.b16 %v2852
    %v2885 = vunpack.c.l.b16 %v2853
    %v2886 = vunpack.c.l.b16 %v2854
    %v2887 = vunpack.c.l.b16 %v2855
    %v2888 = vunpack.c.l.b16 %v2856
    %v2889 = vunpack.c.l.b16 %v2857
    %v2890 = vunpack.c.l.b16 %v2858
    %v2891 = vunpack.c.l.b16 %v2859
    %v2892 = vunpack.c.l.b16 %v2860
    %v2893 = vunpack.c.l.b16 %v2861
    %v2894 = vunpack.c.l.b16 %v2862
    %v2895 = vunpack.c.l.b16 %v2863
    %v2896 = vpack.c.b16 %v2881, %v2880
    %v2897 = vpack.c.b16 %v2883, %v2882
    %v2898 = vpack.c.b16 %v2885, %v2884
    %v2899 = vpack.c.b16 %v2887, %v2886
    %v2900 = vpack.c.b16 %v2889, %v2888
    %v2901 = vpack.c.b16 %v2891, %v2890
    %v2902 = vpack.c.b16 %v2893, %v2892
    %v2903 = vpack.c.b16 %v2895, %v2894
    %2912 = vmatprep.subr.bf16.mxu0 0
    %2913 = vmatpush1.bf16.msra.mxu0 %v2896
    %2914 = vmatprep.subr.bf16.mxu0 0
    %2915 = vmatpush1.bf16.msra.mxu0 %v2897
    %2916 = vmatprep.subr.bf16.mxu0 0
    %2917 = vmatpush1.bf16.msra.mxu0 %v2898
    %2918 = vmatprep.subr.bf16.mxu0 0
    %2919 = vmatpush1.bf16.msra.mxu0 %v2899
    %2920 = vmatprep.subr.bf16.mxu0 0
    %2921 = vmatpush1.bf16.msra.mxu0 %v2900
    %2922 = vmatprep.subr.bf16.mxu0 0
    %2923 = vmatpush1.bf16.msra.mxu0 %v2901
    %2924 = vmatprep.subr.bf16.mxu0 0
    %2925 = vmatpush1.bf16.msra.mxu0 %v2902
    %2926 = vmatprep.subr.bf16.mxu0 0
    %2927 = vmatpush1.bf16.msra.mxu0 %v2903
    %2928 = vmatprep.subr.bf16.mxu0 0
    %2929 = vmatpush1.bf16.msra.mxu0 0
    %2930 = vmatprep.subr.bf16.mxu0 0
    %2931 = vmatpush1.bf16.msra.mxu0 0
    %2932 = vmatprep.subr.bf16.mxu0 0
    %2933 = vmatpush1.bf16.msra.mxu0 0
    %2934 = vmatprep.subr.bf16.mxu0 0
    %2935 = vmatpush1.bf16.msra.mxu0 0
    %2936 = vmatprep.subr.bf16.mxu0 0
    %2937 = vmatpush1.bf16.msra.mxu0 0
    %2938 = vmatprep.subr.bf16.mxu0 0
    %2939 = vmatpush1.bf16.msra.mxu0 0
    %2940 = vmatprep.subr.bf16.mxu0 0
    %2941 = vmatpush1.bf16.msra.mxu0 0
    %2942 = vmatprep.subr.bf16.mxu0 0
    %2943 = vmatpush1.bf16.msra.mxu0 0
    %2944 = vmatprep.mubr.bf16.mxu0 0
    %2945 = vmatmul.mubr.bf16.gmra.mrb[0].mxu0 %v2847
    %v2946 = vpop.f32.mrb[0].mxu0
    %v2947 = vadd.f32 0.0, %v2946
    %v2948 = vpop.f32.mrb[0].mxu0
    %v2949 = vpop.f32.mrb[0].mxu0
    %v2950 = vpop.f32.mrb[0].mxu0
    %2951 = vdwg.mxu0
    %v2952 = vpack.c.bf16 %v2947, %v2947
    %v2953 = vld [vmem:[%s6] sm:$0xff]
    %v2954 = vld [vmem:[%s6 + $0x8] sm:$0xff]
    %v2955 = vld [vmem:[%s6 + $0x10] sm:$0xff]
    %v2956 = vld [vmem:[%s6 + $0x18] sm:$0xff]
    %v2957 = vld [vmem:[%s6 + $0x20] sm:$0xff]
    %v2958 = vld [vmem:[%s6 + $0x28] sm:$0xff]
    %v2959 = vld [vmem:[%s6 + $0x30] sm:$0xff]
    %v2960 = vld [vmem:[%s6 + $0x38] sm:$0xff]
    %v2961 = vld [vmem:[%s6 + $0x40] sm:$0xff]
    %v2962 = vld [vmem:[%s6 + $0x48] sm:$0xff]
    %v2963 = vld [vmem:[%s6 + $0x50] sm:$0xff]
    %v2964 = vld [vmem:[%s6 + $0x58] sm:$0xff]
    %v2965 = vld [vmem:[%s6 + $0x60] sm:$0xff]
    %v2966 = vld [vmem:[%s6 + $0x68] sm:$0xff]
    %v2967 = vld [vmem:[%s6 + $0x70] sm:$0xff]
    %v2968 = vld [vmem:[%s6 + $0x78] sm:$0xff]
    %v2969 = vld [vmem:[%s6 + $0x80] sm:$0xff]
    %v2970 = vld [vmem:[%s6 + $0x88] sm:$0xff]
    %v2971 = vld [vmem:[%s6 + $0x90] sm:$0xff]
    %v2972 = vld [vmem:[%s6 + $0x98] sm:$0xff]
    %v2973 = vld [vmem:[%s6 + $0xa0] sm:$0xff]
    %v2974 = vld [vmem:[%s6 + $0xa8] sm:$0xff]
    %v2975 = vld [vmem:[%s6 + $0xb0] sm:$0xff]
    %v2976 = vld [vmem:[%s6 + $0xb8] sm:$0xff]
    %v2977 = vld [vmem:[%s6 + $0xc0] sm:$0xff]
    %v2978 = vld [vmem:[%s6 + $0xc8] sm:$0xff]
    %v2979 = vld [vmem:[%s6 + $0xd0] sm:$0xff]
    %v2980 = vld [vmem:[%s6 + $0xd8] sm:$0xff]
    %v2981 = vld [vmem:[%s6 + $0xe0] sm:$0xff]
    %v2982 = vld [vmem:[%s6 + $0xe8] sm:$0xff]
    %v2983 = vld [vmem:[%s6 + $0xf0] sm:$0xff]
    %v2984 = vld [vmem:[%s6 + $0xf8] sm:$0xff]
    %v2985 = vld [vmem:[%s6 + $0x100] sm:$0xff]
    %v2986 = vld [vmem:[%s6 + $0x108] sm:$0xff]
    %v2987 = vld [vmem:[%s6 + $0x110] sm:$0xff]
    %v2988 = vld [vmem:[%s6 + $0x118] sm:$0xff]
    %v2989 = vld [vmem:[%s6 + $0x120] sm:$0xff]
    %v2990 = vld [vmem:[%s6 + $0x128] sm:$0xff]
    %v2991 = vld [vmem:[%s6 + $0x130] sm:$0xff]
    %v2992 = vld [vmem:[%s6 + $0x138] sm:$0xff]
    %v2993 = vld [vmem:[%s6 + $0x140] sm:$0xff]
    %v2994 = vld [vmem:[%s6 + $0x148] sm:$0xff]
    %v2995 = vld [vmem:[%s6 + $0x150] sm:$0xff]
    %v2996 = vld [vmem:[%s6 + $0x158] sm:$0xff]
    %v2997 = vld [vmem:[%s6 + $0x160] sm:$0xff]
    %v2998 = vld [vmem:[%s6 + $0x168] sm:$0xff]
    %v2999 = vld [vmem:[%s6 + $0x170] sm:$0xff]
    %v3000 = vld [vmem:[%s6 + $0x178] sm:$0xff]
    %v3001 = vld [vmem:[%s6 + $0x180] sm:$0xff]
    %v3002 = vld [vmem:[%s6 + $0x188] sm:$0xff]
    %v3003 = vld [vmem:[%s6 + $0x190] sm:$0xff]
    %v3004 = vld [vmem:[%s6 + $0x198] sm:$0xff]
    %v3005 = vld [vmem:[%s6 + $0x1a0] sm:$0xff]
    %v3006 = vld [vmem:[%s6 + $0x1a8] sm:$0xff]
    %v3007 = vld [vmem:[%s6 + $0x1b0] sm:$0xff]
    %v3008 = vld [vmem:[%s6 + $0x1b8] sm:$0xff]
    %v3009 = vld [vmem:[%s6 + $0x1c0] sm:$0xff]
    %v3010 = vld [vmem:[%s6 + $0x1c8] sm:$0xff]
    %v3011 = vld [vmem:[%s6 + $0x1d0] sm:$0xff]
    %v3012 = vld [vmem:[%s6 + $0x1d8] sm:$0xff]
    %v3013 = vld [vmem:[%s6 + $0x1e0] sm:$0xff]
    %v3014 = vld [vmem:[%s6 + $0x1e8] sm:$0xff]
    %v3015 = vld [vmem:[%s6 + $0x1f0] sm:$0xff]
    %v3016 = vld [vmem:[%s6 + $0x1f8] sm:$0xff]
    %v3017 = vld [vmem:[%s7] sm:$0xf]
    %v3019 = vlaneseq
    %v3020 = vshrl.u32 %v3019, 7
    %v3021 = vsub.s32 0, %v3020
    %v3022 = vrot.slane %v3017, %v3021
    %v3023 = vlaneseq
    %v3024 = vshrl.u32 %v3023, 7
    %v3025 = vsub.s32 1, %v3024
    %v3026 = vrot.slane %v3017, %v3025
    %v3027 = vlaneseq
    %v3028 = vshrl.u32 %v3027, 7
    %v3029 = vsub.s32 2, %v3028
    %v3030 = vrot.slane %v3017, %v3029
    %v3031 = vlaneseq
    %v3032 = vshrl.u32 %v3031, 7
    %v3033 = vsub.s32 3, %v3032
    %v3034 = vrot.slane %v3017, %v3033
    %v3103 = vunpack.c.l.b16 %v2953
    %v3104 = vunpack.c.h.b16 %v2953
    %v3105 = vunpack.c.l.b16 %v2954
    %v3106 = vunpack.c.h.b16 %v2954
    %v3107 = vunpack.c.l.b16 %v2955
    %v3108 = vunpack.c.h.b16 %v2955
    %v3109 = vunpack.c.l.b16 %v2956
    %v3110 = vunpack.c.h.b16 %v2956
    %v3111 = vunpack.c.l.b16 %v2957
    %v3112 = vunpack.c.h.b16 %v2957
    %v3113 = vunpack.c.l.b16 %v2958
    %v3114 = vunpack.c.h.b16 %v2958
    %v3115 = vunpack.c.l.b16 %v2959
    %v3116 = vunpack.c.h.b16 %v2959
    %v3117 = vunpack.c.l.b16 %v2960
    %v3118 = vunpack.c.h.b16 %v2960
    %v3119 = vunpack.c.l.b16 %v2961
    %v3120 = vunpack.c.h.b16 %v2961
    %v3121 = vunpack.c.l.b16 %v2962
    %v3122 = vunpack.c.h.b16 %v2962
    %v3123 = vunpack.c.l.b16 %v2963
    %v3124 = vunpack.c.h.b16 %v2963
    %v3125 = vunpack.c.l.b16 %v2964
    %v3126 = vunpack.c.h.b16 %v2964
    %v3127 = vunpack.c.l.b16 %v2965
    %v3128 = vunpack.c.h.b16 %v2965
    %v3129 = vunpack.c.l.b16 %v2966
    %v3130 = vunpack.c.h.b16 %v2966
    %v3131 = vunpack.c.l.b16 %v2967
    %v3132 = vunpack.c.h.b16 %v2967
    %v3133 = vunpack.c.l.b16 %v2968
    %v3134 = vunpack.c.h.b16 %v2968
    %v3135 = vunpack.c.l.b16 %v2969
    %v3136 = vunpack.c.h.b16 %v2969
    %v3137 = vunpack.c.l.b16 %v2970
    %v3138 = vunpack.c.h.b16 %v2970
    %v3139 = vunpack.c.l.b16 %v2971
    %v3140 = vunpack.c.h.b16 %v2971
    %v3141 = vunpack.c.l.b16 %v2972
    %v3142 = vunpack.c.h.b16 %v2972
    %v3143 = vunpack.c.l.b16 %v2973
    %v3144 = vunpack.c.h.b16 %v2973
    %v3145 = vunpack.c.l.b16 %v2974
    %v3146 = vunpack.c.h.b16 %v2974
    %v3147 = vunpack.c.l.b16 %v2975
    %v3148 = vunpack.c.h.b16 %v2975
    %v3149 = vunpack.c.l.b16 %v2976
    %v3150 = vunpack.c.h.b16 %v2976
    %v3151 = vunpack.c.l.b16 %v2977
    %v3152 = vunpack.c.h.b16 %v2977
    %v3153 = vunpack.c.l.b16 %v2978
    %v3154 = vunpack.c.h.b16 %v2978
    %v3155 = vunpack.c.l.b16 %v2979
    %v3156 = vunpack.c.h.b16 %v2979
    %v3157 = vunpack.c.l.b16 %v2980
    %v3158 = vunpack.c.h.b16 %v2980
    %v3159 = vunpack.c.l.b16 %v2981
    %v3160 = vunpack.c.h.b16 %v2981
    %v3161 = vunpack.c.l.b16 %v2982
    %v3162 = vunpack.c.h.b16 %v2982
    %v3163 = vunpack.c.l.b16 %v2983
    %v3164 = vunpack.c.h.b16 %v2983
    %v3165 = vunpack.c.l.b16 %v2984
    %v3166 = vunpack.c.h.b16 %v2984
    %v3167 = vunpack.c.l.b16 %v2985
    %v3168 = vunpack.c.h.b16 %v2985
    %v3169 = vunpack.c.l.b16 %v2986
    %v3170 = vunpack.c.h.b16 %v2986
    %v3171 = vunpack.c.l.b16 %v2987
    %v3172 = vunpack.c.h.b16 %v2987
    %v3173 = vunpack.c.l.b16 %v2988
    %v3174 = vunpack.c.h.b16 %v2988
    %v3175 = vunpack.c.l.b16 %v2989
    %v3176 = vunpack.c.h.b16 %v2989
    %v3177 = vunpack.c.l.b16 %v2990
    %v3178 = vunpack.c.h.b16 %v2990
    %v3179 = vunpack.c.l.b16 %v2991
    %v3180 = vunpack.c.h.b16 %v2991
    %v3181 = vunpack.c.l.b16 %v2992
    %v3182 = vunpack.c.h.b16 %v2992
    %v3183 = vunpack.c.l.b16 %v2993
    %v3184 = vunpack.c.h.b16 %v2993
    %v3185 = vunpack.c.l.b16 %v2994
    %v3186 = vunpack.c.h.b16 %v2994
    %v3187 = vunpack.c.l.b16 %v2995
    %v3188 = vunpack.c.h.b16 %v2995
    %v3189 = vunpack.c.l.b16 %v2996
    %v3190 = vunpack.c.h.b16 %v2996
    %v3191 = vunpack.c.l.b16 %v2997
    %v3192 = vunpack.c.h.b16 %v2997
    %v3193 = vunpack.c.l.b16 %v2998
    %v3194 = vunpack.c.h.b16 %v2998
    %v3195 = vunpack.c.l.b16 %v2999
    %v3196 = vunpack.c.h.b16 %v2999
    %v3197 = vunpack.c.l.b16 %v3000
    %v3198 = vunpack.c.h.b16 %v3000
    %v3199 = vunpack.c.l.b16 %v3001
    %v3200 = vunpack.c.h.b16 %v3001
    %v3201 = vunpack.c.l.b16 %v3002
    %v3202 = vunpack.c.h.b16 %v3002
    %v3203 = vunpack.c.l.b16 %v3003
    %v3204 = vunpack.c.h.b16 %v3003
    %v3205 = vunpack.c.l.b16 %v3004
    %v3206 = vunpack.c.h.b16 %v3004
    %v3207 = vunpack.c.l.b16 %v3005
    %v3208 = vunpack.c.h.b16 %v3005
    %v3209 = vunpack.c.l.b16 %v3006
    %v3210 = vunpack.c.h.b16 %v3006
    %v3211 = vunpack.c.l.b16 %v3007
    %v3212 = vunpack.c.h.b16 %v3007
    %v3213 = vunpack.c.l.b16 %v3008
    %v3214 = vunpack.c.h.b16 %v3008
    %v3215 = vunpack.c.l.b16 %v3009
    %v3216 = vunpack.c.h.b16 %v3009
    %v3217 = vunpack.c.l.b16 %v3010
    %v3218 = vunpack.c.h.b16 %v3010
    %v3219 = vunpack.c.l.b16 %v3011
    %v3220 = vunpack.c.h.b16 %v3011
    %v3221 = vunpack.c.l.b16 %v3012
    %v3222 = vunpack.c.h.b16 %v3012
    %v3223 = vunpack.c.l.b16 %v3013
    %v3224 = vunpack.c.h.b16 %v3013
    %v3225 = vunpack.c.l.b16 %v3014
    %v3226 = vunpack.c.h.b16 %v3014
    %v3227 = vunpack.c.l.b16 %v3015
    %v3228 = vunpack.c.h.b16 %v3015
    %v3229 = vunpack.c.l.b16 %v3016
    %v3230 = vunpack.c.h.b16 %v3016
    %v3231 = vpack.c.b16 %v3107, %v3103
    %v3232 = vpack.c.b16 %v3108, %v3104
    %v3233 = vpack.c.b16 %v3109, %v3105
    %v3234 = vpack.c.b16 %v3110, %v3106
    %v3235 = vpack.c.b16 %v3115, %v3111
    %v3236 = vpack.c.b16 %v3116, %v3112
    %v3237 = vpack.c.b16 %v3117, %v3113
    %v3238 = vpack.c.b16 %v3118, %v3114
    %v3239 = vpack.c.b16 %v3123, %v3119
    %v3240 = vpack.c.b16 %v3124, %v3120
    %v3241 = vpack.c.b16 %v3125, %v3121
    %v3242 = vpack.c.b16 %v3126, %v3122
    %v3243 = vpack.c.b16 %v3131, %v3127
    %v3244 = vpack.c.b16 %v3132, %v3128
    %v3245 = vpack.c.b16 %v3133, %v3129
    %v3246 = vpack.c.b16 %v3134, %v3130
    %v3247 = vpack.c.b16 %v3139, %v3135
    %v3248 = vpack.c.b16 %v3140, %v3136
    %v3249 = vpack.c.b16 %v3141, %v3137
    %v3250 = vpack.c.b16 %v3142, %v3138
    %v3251 = vpack.c.b16 %v3147, %v3143
    %v3252 = vpack.c.b16 %v3148, %v3144
    %v3253 = vpack.c.b16 %v3149, %v3145
    %v3254 = vpack.c.b16 %v3150, %v3146
    %v3255 = vpack.c.b16 %v3155, %v3151
    %v3256 = vpack.c.b16 %v3156, %v3152
    %v3257 = vpack.c.b16 %v3157, %v3153
    %v3258 = vpack.c.b16 %v3158, %v3154
    %v3259 = vpack.c.b16 %v3163, %v3159
    %v3260 = vpack.c.b16 %v3164, %v3160
    %v3261 = vpack.c.b16 %v3165, %v3161
    %v3262 = vpack.c.b16 %v3166, %v3162
    %v3263 = vpack.c.b16 %v3171, %v3167
    %v3264 = vpack.c.b16 %v3172, %v3168
    %v3265 = vpack.c.b16 %v3173, %v3169
    %v3266 = vpack.c.b16 %v3174, %v3170
    %v3267 = vpack.c.b16 %v3179, %v3175
    %v3268 = vpack.c.b16 %v3180, %v3176
    %v3269 = vpack.c.b16 %v3181, %v3177
    %v3270 = vpack.c.b16 %v3182, %v3178
    %v3271 = vpack.c.b16 %v3187, %v3183
    %v3272 = vpack.c.b16 %v3188, %v3184
    %v3273 = vpack.c.b16 %v3189, %v3185
    %v3274 = vpack.c.b16 %v3190, %v3186
    %v3275 = vpack.c.b16 %v3195, %v3191
    %v3276 = vpack.c.b16 %v3196, %v3192
    %v3277 = vpack.c.b16 %v3197, %v3193
    %v3278 = vpack.c.b16 %v3198, %v3194
    %v3279 = vpack.c.b16 %v3203, %v3199
    %v3280 = vpack.c.b16 %v3204, %v3200
    %v3281 = vpack.c.b16 %v3205, %v3201
    %v3282 = vpack.c.b16 %v3206, %v3202
    %v3283 = vpack.c.b16 %v3211, %v3207
    %v3284 = vpack.c.b16 %v3212, %v3208
    %v3285 = vpack.c.b16 %v3213, %v3209
    %v3286 = vpack.c.b16 %v3214, %v3210
    %v3287 = vpack.c.b16 %v3219, %v3215
    %v3288 = vpack.c.b16 %v3220, %v3216
    %v3289 = vpack.c.b16 %v3221, %v3217
    %v3290 = vpack.c.b16 %v3222, %v3218
    %v3291 = vpack.c.b16 %v3227, %v3223
    %v3292 = vpack.c.b16 %v3228, %v3224
    %v3293 = vpack.c.b16 %v3229, %v3225
    %v3294 = vpack.c.b16 %v3230, %v3226
    %3359 = vmatprep.subr.bf16.mxu0 %v3232
    %3360 = vmatpush1.bf16.msra.mxu0 %v3231
    %3361 = vmatprep.subr.bf16.mxu0 %v3236
    %3362 = vmatpush1.bf16.msra.mxu0 %v3235
    %3363 = vmatprep.subr.bf16.mxu0 %v3240
    %3364 = vmatpush1.bf16.msra.mxu0 %v3239
    %3365 = vmatprep.subr.bf16.mxu0 %v3244
    %3366 = vmatpush1.bf16.msra.mxu0 %v3243
    %3367 = vmatprep.subr.bf16.mxu0 %v3248
    %3368 = vmatpush1.bf16.msra.mxu0 %v3247
    %3369 = vmatprep.subr.bf16.mxu0 %v3252
    %3370 = vmatpush1.bf16.msra.mxu0 %v3251
    %3371 = vmatprep.subr.bf16.mxu0 %v3256
    %3372 = vmatpush1.bf16.msra.mxu0 %v3255
    %3373 = vmatprep.subr.bf16.mxu0 %v3260
    %3374 = vmatpush1.bf16.msra.mxu0 %v3259
    %3375 = vmatprep.subr.bf16.mxu0 %v3264
    %3376 = vmatpush1.bf16.msra.mxu0 %v3263
    %3377 = vmatprep.subr.bf16.mxu0 %v3268
    %3378 = vmatpush1.bf16.msra.mxu0 %v3267
    %3379 = vmatprep.subr.bf16.mxu0 %v3272
    %3380 = vmatpush1.bf16.msra.mxu0 %v3271
    %3381 = vmatprep.subr.bf16.mxu0 %v3276
    %3382 = vmatpush1.bf16.msra.mxu0 %v3275
    %3383 = vmatprep.subr.bf16.mxu0 %v3280
    %3384 = vmatpush1.bf16.msra.mxu0 %v3279
    %3385 = vmatprep.subr.bf16.mxu0 %v3284
    %3386 = vmatpush1.bf16.msra.mxu0 %v3283
    %3387 = vmatprep.subr.bf16.mxu0 %v3288
    %3388 = vmatpush1.bf16.msra.mxu0 %v3287
    %3389 = vmatprep.subr.bf16.mxu0 %v3292
    %3390 = vmatpush1.bf16.msra.mxu0 %v3291
    %3391 = vmatprep.mubr.bf16.mxu0 %v2712
    %3392 = vmatmul.mubr.bf16.gmra.mrb[0].mxu0 %v2952
    %v3393 = vpop.f32.mrb[0].mxu0
    %v3394 = vadd.f32 %v3022, %v3393
    %v3395 = vpop.f32.mrb[0].mxu0
    %v3396 = vadd.f32 %v3026, %v3395
    %v3397 = vpop.f32.mrb[0].mxu0
    %v3398 = vpop.f32.mrb[0].mxu0
    %3399 = vdwg.mxu0
    %3400 = vmatprep.subr.bf16.mxu0 %v3234
    %3401 = vmatpush1.bf16.msra.mxu0 %v3233
    %3402 = vmatprep.subr.bf16.mxu0 %v3238
    %3403 = vmatpush1.bf16.msra.mxu0 %v3237
    %3404 = vmatprep.subr.bf16.mxu0 %v3242
    %3405 = vmatpush1.bf16.msra.mxu0 %v3241
    %3406 = vmatprep.subr.bf16.mxu0 %v3246
    %3407 = vmatpush1.bf16.msra.mxu0 %v3245
    %3408 = vmatprep.subr.bf16.mxu0 %v3250
    %3409 = vmatpush1.bf16.msra.mxu0 %v3249
    %3410 = vmatprep.subr.bf16.mxu0 %v3254
    %3411 = vmatpush1.bf16.msra.mxu0 %v3253
    %3412 = vmatprep.subr.bf16.mxu0 %v3258
    %3413 = vmatpush1.bf16.msra.mxu0 %v3257
    %3414 = vmatprep.subr.bf16.mxu0 %v3262
    %3415 = vmatpush1.bf16.msra.mxu0 %v3261
    %3416 = vmatprep.subr.bf16.mxu0 %v3266
    %3417 = vmatpush1.bf16.msra.mxu0 %v3265
    %3418 = vmatprep.subr.bf16.mxu0 %v3270
    %3419 = vmatpush1.bf16.msra.mxu0 %v3269
    %3420 = vmatprep.subr.bf16.mxu0 %v3274
    %3421 = vmatpush1.bf16.msra.mxu0 %v3273
    %3422 = vmatprep.subr.bf16.mxu0 %v3278
    %3423 = vmatpush1.bf16.msra.mxu0 %v3277
    %3424 = vmatprep.subr.bf16.mxu0 %v3282
    %3425 = vmatpush1.bf16.msra.mxu0 %v3281
    %3426 = vmatprep.subr.bf16.mxu0 %v3286
    %3427 = vmatpush1.bf16.msra.mxu0 %v3285
    %3428 = vmatprep.subr.bf16.mxu0 %v3290
    %3429 = vmatpush1.bf16.msra.mxu0 %v3289
    %3430 = vmatprep.subr.bf16.mxu0 %v3294
    %3431 = vmatpush1.bf16.msra.mxu0 %v3293
    %3432 = vmatprep.mubr.bf16.mxu0 %v2712
    %3433 = vmatmul.mubr.bf16.gmra.mrb[0].mxu0 %v2952
    %v3434 = vpop.f32.mrb[0].mxu0
    %v3435 = vadd.f32 %v3030, %v3434
    %v3436 = vpop.f32.mrb[0].mxu0
    %v3437 = vadd.f32 %v3034, %v3436
    %v3438 = vpop.f32.mrb[0].mxu0
    %v3439 = vpop.f32.mrb[0].mxu0
    %3440 = vdwg.mxu0
    %v3441 = vxor.u32 %v3394, 2147483648
    %v3442 = vmul.f32 %v3441, 1.442695
    %v3443 = vpow.pop %v3442
    %v3444 = vadd.f32 %v3443, 1.0
    %v3445 = vrcp.pop %v3444
    %v3446 = vmul.f32 1.0, %v3445
    %v3447 = vxor.u32 %v3396, 2147483648
    %v3448 = vmul.f32 %v3447, 1.442695
    %v3449 = vpow.pop %v3448
    %v3450 = vadd.f32 %v3449, 1.0
    %v3451 = vrcp.pop %v3450
    %v3452 = vmul.f32 1.0, %v3451
    %v3453 = vtanh.pop %v3435
    %v3454 = vxor.u32 %v3437, 2147483648
    %v3455 = vmul.f32 %v3454, 1.442695
    %v3456 = vpow.pop %v3455
    %v3457 = vadd.f32 %v3456, 1.0
    %v3458 = vrcp.pop %v3457
    %v3459 = vmul.f32 1.0, %v3458
    %v3460 = vmul.f32 %v3452, %v2709
    %v3461 = vmul.f32 %v3446, %v3453
    %v3462 = vadd.f32 %v3460, %v3461
    %v3463 = vtanh.pop %v3462
    %v3464 = vmul.f32 %v3459, %v3463
    %v3465 = vpack.c.bf16 %v3464, %v3464
    %v3466 = vld [vmem:[%s8] sm:$0xf]
    %v3467 = vld [vmem:[%s8 + $0x4] sm:$0xf]
    %v3468 = vld [vmem:[%s8 + $0x8] sm:$0xf]
    %v3469 = vld [vmem:[%s8 + $0xc] sm:$0xf]
    %v3470 = vld [vmem:[%s8 + $0x10] sm:$0xf]
    %v3471 = vld [vmem:[%s8 + $0x14] sm:$0xf]
    %v3472 = vld [vmem:[%s8 + $0x18] sm:$0xf]
    %v3473 = vld [vmem:[%s8 + $0x1c] sm:$0xf]
    %v3474 = vld [vmem:[%s8 + $0x20] sm:$0xf]
    %v3475 = vld [vmem:[%s8 + $0x24] sm:$0xf]
    %v3476 = vld [vmem:[%s8 + $0x28] sm:$0xf]
    %v3477 = vld [vmem:[%s8 + $0x2c] sm:$0xf]
    %v3478 = vld [vmem:[%s8 + $0x30] sm:$0xf]
    %v3479 = vld [vmem:[%s8 + $0x34] sm:$0xf]
    %v3480 = vld [vmem:[%s8 + $0x38] sm:$0xf]
    %v3481 = vld [vmem:[%s8 + $0x3c] sm:$0xf]
    %v3482 = vld [vmem:[%s9] sm:$0x1]
    %v3484 = vlaneseq
    %v3485 = vshrl.u32 %v3484, 7
    %v3486 = vsub.s32 0, %v3485
    %v3487 = vrot.slane %v3482, %v3486
    %v3505 = vunpack.c.l.b16 %v3466
    %v3506 = vunpack.c.l.b16 %v3467
    %v3507 = vunpack.c.l.b16 %v3468
    %v3508 = vunpack.c.l.b16 %v3469
    %v3509 = vunpack.c.l.b16 %v3470
    %v3510 = vunpack.c.l.b16 %v3471
    %v3511 = vunpack.c.l.b16 %v3472
    %v3512 = vunpack.c.l.b16 %v3473
    %v3513 = vunpack.c.l.b16 %v3474
    %v3514 = vunpack.c.l.b16 %v3475
    %v3515 = vunpack.c.l.b16 %v3476
    %v3516 = vunpack.c.l.b16 %v3477
    %v3517 = vunpack.c.l.b16 %v3478
    %v3518 = vunpack.c.l.b16 %v3479
    %v3519 = vunpack.c.l.b16 %v3480
    %v3520 = vunpack.c.l.b16 %v3481
    %v3521 = vpack.c.b16 %v3506, %v3505
    %v3522 = vpack.c.b16 %v3508, %v3507
    %v3523 = vpack.c.b16 %v3510, %v3509
    %v3524 = vpack.c.b16 %v3512, %v3511
    %v3525 = vpack.c.b16 %v3514, %v3513
    %v3526 = vpack.c.b16 %v3516, %v3515
    %v3527 = vpack.c.b16 %v3518, %v3517
    %v3528 = vpack.c.b16 %v3520, %v3519
    %3537 = vmatprep.subr.bf16.mxu0 0
    %3538 = vmatpush1.bf16.msra.mxu0 %v3521
    %3539 = vmatprep.subr.bf16.mxu0 0
    %3540 = vmatpush1.bf16.msra.mxu0 %v3522
    %3541 = vmatprep.subr.bf16.mxu0 0
    %3542 = vmatpush1.bf16.msra.mxu0 %v3523
    %3543 = vmatprep.subr.bf16.mxu0 0
    %3544 = vmatpush1.bf16.msra.mxu0 %v3524
    %3545 = vmatprep.subr.bf16.mxu0 0
    %3546 = vmatpush1.bf16.msra.mxu0 %v3525
    %3547 = vmatprep.subr.bf16.mxu0 0
    %3548 = vmatpush1.bf16.msra.mxu0 %v3526
    %3549 = vmatprep.subr.bf16.mxu0 0
    %3550 = vmatpush1.bf16.msra.mxu0 %v3527
    %3551 = vmatprep.subr.bf16.mxu0 0
    %3552 = vmatpush1.bf16.msra.mxu0 %v3528
    %3553 = vmatprep.subr.bf16.mxu0 0
    %3554 = vmatpush1.bf16.msra.mxu0 0
    %3555 = vmatprep.subr.bf16.mxu0 0
    %3556 = vmatpush1.bf16.msra.mxu0 0
    %3557 = vmatprep.subr.bf16.mxu0 0
    %3558 = vmatpush1.bf16.msra.mxu0 0
    %3559 = vmatprep.subr.bf16.mxu0 0
    %3560 = vmatpush1.bf16.msra.mxu0 0
    %3561 = vmatprep.subr.bf16.mxu0 0
    %3562 = vmatpush1.bf16.msra.mxu0 0
    %3563 = vmatprep.subr.bf16.mxu0 0
    %3564 = vmatpush1.bf16.msra.mxu0 0
    %3565 = vmatprep.subr.bf16.mxu0 0
    %3566 = vmatpush1.bf16.msra.mxu0 0
    %3567 = vmatprep.subr.bf16.mxu0 0
    %3568 = vmatpush1.bf16.msra.mxu0 0
    %3569 = vmatprep.mubr.bf16.mxu0 0
    %3570 = vmatmul.mubr.bf16.gmra.mrb[0].mxu0 %v3465
    %v3571 = vpop.f32.mrb[0].mxu0
    %v3572 = vadd.f32 %v3487, %v3571
    %v3573 = vpop.f32.mrb[0].mxu0
    %v3574 = vpop.f32.mrb[0].mxu0
    %v3575 = vpop.f32.mrb[0].mxu0
    %3576 = vdwg.mxu0
    %s3577 = scalar_lea.vmem %s10, 16
    %3578 = vst [vmem:[%s3577] sm:$0xff] %v3572
    %3579 = vmax.xlane.f32.xlu0 %v3572
    %v3580 = vpop.xlane.xlu0 %3579
    %vm3581 = vcmp.eq.f32.partialorder %v3572, %v3580
    %v3582 = vsel %vm3581, %v1327, 128.0
    %3583 = vmin.xlane.f32.xlu0 %v3582
    %v3584 = vpop.xlane.xlu0 %3583
    %v3585 = vcvt.f32.s32.to.zero.pseudo %v3584
    %s3586 = sld [smem:[#allocation2 + $0x3]]
    %p3587 = scmp.gt.s32.totalorder %s3586, 0
    %s3588 = scalar_lea.vmem %s1, 24
    %v3589 = vld [vmem:[%s3588] sm:$0xff]
    %s3590 = scalar_select %p3587, 1, 0
    %v3591 = vstv %s3590
    %vm3592 = vcmp.eq.s32.totalorder %v3591, 1
    %v3593 = vsel %vm3592, %v3589, %v3585
    %3594 = vset.pattern.permute.xlu0 0
    %3595 = vperm.xlu0 %3594, %v3593
    %v3596 = vpop.permute.xlu0 %3595
    %vm3597 = vcmp.eq.s32.totalorder %v1326, %v3596
    %v3598 = vsel %vm3597, 1, 0
    %v3599 = vcvt.s32.f32 %v3598
    %v3600 = vpack.c.bf16 %v3599, %v3599
    %v3601 = vld [vmem:[%s5] sm:$0xf]
    %v3602 = vld [vmem:[%s5 + $0x4] sm:$0xf]
    %v3603 = vld [vmem:[%s5 + $0x8] sm:$0xf]
    %v3604 = vld [vmem:[%s5 + $0xc] sm:$0xf]
    %v3605 = vld [vmem:[%s5 + $0x10] sm:$0xf]
    %v3606 = vld [vmem:[%s5 + $0x14] sm:$0xf]
    %v3607 = vld [vmem:[%s5 + $0x18] sm:$0xf]
    %v3608 = vld [vmem:[%s5 + $0x1c] sm:$0xf]
    %v3609 = vld [vmem:[%s5 + $0x20] sm:$0xf]
    %v3610 = vld [vmem:[%s5 + $0x24] sm:$0xf]
    %v3611 = vld [vmem:[%s5 + $0x28] sm:$0xf]
    %v3612 = vld [vmem:[%s5 + $0x2c] sm:$0xf]
    %v3613 = vld [vmem:[%s5 + $0x30] sm:$0xf]
    %v3614 = vld [vmem:[%s5 + $0x34] sm:$0xf]
    %v3615 = vld [vmem:[%s5 + $0x38] sm:$0xf]
    %v3616 = vld [vmem:[%s5 + $0x3c] sm:$0xf]
    %v3633 = vunpack.c.l.b16 %v3601
    %v3634 = vunpack.c.l.b16 %v3602
    %v3635 = vunpack.c.l.b16 %v3603
    %v3636 = vunpack.c.l.b16 %v3604
    %v3637 = vunpack.c.l.b16 %v3605
    %v3638 = vunpack.c.l.b16 %v3606
    %v3639 = vunpack.c.l.b16 %v3607
    %v3640 = vunpack.c.l.b16 %v3608
    %v3641 = vunpack.c.l.b16 %v3609
    %v3642 = vunpack.c.l.b16 %v3610
    %v3643 = vunpack.c.l.b16 %v3611
    %v3644 = vunpack.c.l.b16 %v3612
    %v3645 = vunpack.c.l.b16 %v3613
    %v3646 = vunpack.c.l.b16 %v3614
    %v3647 = vunpack.c.l.b16 %v3615
    %v3648 = vunpack.c.l.b16 %v3616
    %v3649 = vpack.c.b16 %v3634, %v3633
    %v3650 = vpack.c.b16 %v3636, %v3635
    %v3651 = vpack.c.b16 %v3638, %v3637
    %v3652 = vpack.c.b16 %v3640, %v3639
    %v3653 = vpack.c.b16 %v3642, %v3641
    %v3654 = vpack.c.b16 %v3644, %v3643
    %v3655 = vpack.c.b16 %v3646, %v3645
    %v3656 = vpack.c.b16 %v3648, %v3647
    %3665 = vmatprep.subr.bf16.mxu0 0
    %3666 = vmatpush1.bf16.msra.mxu0 %v3649
    %3667 = vmatprep.subr.bf16.mxu0 0
    %3668 = vmatpush1.bf16.msra.mxu0 %v3650
    %3669 = vmatprep.subr.bf16.mxu0 0
    %3670 = vmatpush1.bf16.msra.mxu0 %v3651
    %3671 = vmatprep.subr.bf16.mxu0 0
    %3672 = vmatpush1.bf16.msra.mxu0 %v3652
    %3673 = vmatprep.subr.bf16.mxu0 0
    %3674 = vmatpush1.bf16.msra.mxu0 %v3653
    %3675 = vmatprep.subr.bf16.mxu0 0
    %3676 = vmatpush1.bf16.msra.mxu0 %v3654
    %3677 = vmatprep.subr.bf16.mxu0 0
    %3678 = vmatpush1.bf16.msra.mxu0 %v3655
    %3679 = vmatprep.subr.bf16.mxu0 0
    %3680 = vmatpush1.bf16.msra.mxu0 %v3656
    %3681 = vmatprep.subr.bf16.mxu0 0
    %3682 = vmatpush1.bf16.msra.mxu0 0
    %3683 = vmatprep.subr.bf16.mxu0 0
    %3684 = vmatpush1.bf16.msra.mxu0 0
    %3685 = vmatprep.subr.bf16.mxu0 0
    %3686 = vmatpush1.bf16.msra.mxu0 0
    %3687 = vmatprep.subr.bf16.mxu0 0
    %3688 = vmatpush1.bf16.msra.mxu0 0
    %3689 = vmatprep.subr.bf16.mxu0 0
    %3690 = vmatpush1.bf16.msra.mxu0 0
    %3691 = vmatprep.subr.bf16.mxu0 0
    %3692 = vmatpush1.bf16.msra.mxu0 0
    %3693 = vmatprep.subr.bf16.mxu0 0
    %3694 = vmatpush1.bf16.msra.mxu0 0
    %3695 = vmatprep.subr.bf16.mxu0 0
    %3696 = vmatpush1.bf16.msra.mxu0 0
    %3697 = vmatprep.mubr.bf16.mxu0 0
    %3698 = vmatmul.mubr.bf16.gmra.mrb[0].mxu0 %v3600
    %v3699 = vpop.f32.mrb[0].mxu0
    %v3700 = vadd.f32 0.0, %v3699
    %v3701 = vpop.f32.mrb[0].mxu0
    %v3702 = vpop.f32.mrb[0].mxu0
    %v3703 = vpop.f32.mrb[0].mxu0
    %3704 = vdwg.mxu0
    %v3705 = vpack.c.bf16 %v3700, %v3700
    %v3706 = vld [vmem:[%s6] sm:$0xff]
    %v3707 = vld [vmem:[%s6 + $0x8] sm:$0xff]
    %v3708 = vld [vmem:[%s6 + $0x10] sm:$0xff]
    %v3709 = vld [vmem:[%s6 + $0x18] sm:$0xff]
    %v3710 = vld [vmem:[%s6 + $0x20] sm:$0xff]
    %v3711 = vld [vmem:[%s6 + $0x28] sm:$0xff]
    %v3712 = vld [vmem:[%s6 + $0x30] sm:$0xff]
    %v3713 = vld [vmem:[%s6 + $0x38] sm:$0xff]
    %v3714 = vld [vmem:[%s6 + $0x40] sm:$0xff]
    %v3715 = vld [vmem:[%s6 + $0x48] sm:$0xff]
    %v3716 = vld [vmem:[%s6 + $0x50] sm:$0xff]
    %v3717 = vld [vmem:[%s6 + $0x58] sm:$0xff]
    %v3718 = vld [vmem:[%s6 + $0x60] sm:$0xff]
    %v3719 = vld [vmem:[%s6 + $0x68] sm:$0xff]
    %v3720 = vld [vmem:[%s6 + $0x70] sm:$0xff]
    %v3721 = vld [vmem:[%s6 + $0x78] sm:$0xff]
    %v3722 = vld [vmem:[%s6 + $0x80] sm:$0xff]
    %v3723 = vld [vmem:[%s6 + $0x88] sm:$0xff]
    %v3724 = vld [vmem:[%s6 + $0x90] sm:$0xff]
    %v3725 = vld [vmem:[%s6 + $0x98] sm:$0xff]
    %v3726 = vld [vmem:[%s6 + $0xa0] sm:$0xff]
    %v3727 = vld [vmem:[%s6 + $0xa8] sm:$0xff]
    %v3728 = vld [vmem:[%s6 + $0xb0] sm:$0xff]
    %v3729 = vld [vmem:[%s6 + $0xb8] sm:$0xff]
    %v3730 = vld [vmem:[%s6 + $0xc0] sm:$0xff]
    %v3731 = vld [vmem:[%s6 + $0xc8] sm:$0xff]
    %v3732 = vld [vmem:[%s6 + $0xd0] sm:$0xff]
    %v3733 = vld [vmem:[%s6 + $0xd8] sm:$0xff]
    %v3734 = vld [vmem:[%s6 + $0xe0] sm:$0xff]
    %v3735 = vld [vmem:[%s6 + $0xe8] sm:$0xff]
    %v3736 = vld [vmem:[%s6 + $0xf0] sm:$0xff]
    %v3737 = vld [vmem:[%s6 + $0xf8] sm:$0xff]
    %v3738 = vld [vmem:[%s6 + $0x100] sm:$0xff]
    %v3739 = vld [vmem:[%s6 + $0x108] sm:$0xff]
    %v3740 = vld [vmem:[%s6 + $0x110] sm:$0xff]
    %v3741 = vld [vmem:[%s6 + $0x118] sm:$0xff]
    %v3742 = vld [vmem:[%s6 + $0x120] sm:$0xff]
    %v3743 = vld [vmem:[%s6 + $0x128] sm:$0xff]
    %v3744 = vld [vmem:[%s6 + $0x130] sm:$0xff]
    %v3745 = vld [vmem:[%s6 + $0x138] sm:$0xff]
    %v3746 = vld [vmem:[%s6 + $0x140] sm:$0xff]
    %v3747 = vld [vmem:[%s6 + $0x148] sm:$0xff]
    %v3748 = vld [vmem:[%s6 + $0x150] sm:$0xff]
    %v3749 = vld [vmem:[%s6 + $0x158] sm:$0xff]
    %v3750 = vld [vmem:[%s6 + $0x160] sm:$0xff]
    %v3751 = vld [vmem:[%s6 + $0x168] sm:$0xff]
    %v3752 = vld [vmem:[%s6 + $0x170] sm:$0xff]
    %v3753 = vld [vmem:[%s6 + $0x178] sm:$0xff]
    %v3754 = vld [vmem:[%s6 + $0x180] sm:$0xff]
    %v3755 = vld [vmem:[%s6 + $0x188] sm:$0xff]
    %v3756 = vld [vmem:[%s6 + $0x190] sm:$0xff]
    %v3757 = vld [vmem:[%s6 + $0x198] sm:$0xff]
    %v3758 = vld [vmem:[%s6 + $0x1a0] sm:$0xff]
    %v3759 = vld [vmem:[%s6 + $0x1a8] sm:$0xff]
    %v3760 = vld [vmem:[%s6 + $0x1b0] sm:$0xff]
    %v3761 = vld [vmem:[%s6 + $0x1b8] sm:$0xff]
    %v3762 = vld [vmem:[%s6 + $0x1c0] sm:$0xff]
    %v3763 = vld [vmem:[%s6 + $0x1c8] sm:$0xff]
    %v3764 = vld [vmem:[%s6 + $0x1d0] sm:$0xff]
    %v3765 = vld [vmem:[%s6 + $0x1d8] sm:$0xff]
    %v3766 = vld [vmem:[%s6 + $0x1e0] sm:$0xff]
    %v3767 = vld [vmem:[%s6 + $0x1e8] sm:$0xff]
    %v3768 = vld [vmem:[%s6 + $0x1f0] sm:$0xff]
    %v3769 = vld [vmem:[%s6 + $0x1f8] sm:$0xff]
    %v3770 = vld [vmem:[%s7] sm:$0xf]
    %v3772 = vlaneseq
    %v3773 = vshrl.u32 %v3772, 7
    %v3774 = vsub.s32 0, %v3773
    %v3775 = vrot.slane %v3770, %v3774
    %v3776 = vlaneseq
    %v3777 = vshrl.u32 %v3776, 7
    %v3778 = vsub.s32 1, %v3777
    %v3779 = vrot.slane %v3770, %v3778
    %v3780 = vlaneseq
    %v3781 = vshrl.u32 %v3780, 7
    %v3782 = vsub.s32 2, %v3781
    %v3783 = vrot.slane %v3770, %v3782
    %v3784 = vlaneseq
    %v3785 = vshrl.u32 %v3784, 7
    %v3786 = vsub.s32 3, %v3785
    %v3787 = vrot.slane %v3770, %v3786
    %v3856 = vunpack.c.l.b16 %v3706
    %v3857 = vunpack.c.h.b16 %v3706
    %v3858 = vunpack.c.l.b16 %v3707
    %v3859 = vunpack.c.h.b16 %v3707
    %v3860 = vunpack.c.l.b16 %v3708
    %v3861 = vunpack.c.h.b16 %v3708
    %v3862 = vunpack.c.l.b16 %v3709
    %v3863 = vunpack.c.h.b16 %v3709
    %v3864 = vunpack.c.l.b16 %v3710
    %v3865 = vunpack.c.h.b16 %v3710
    %v3866 = vunpack.c.l.b16 %v3711
    %v3867 = vunpack.c.h.b16 %v3711
    %v3868 = vunpack.c.l.b16 %v3712
    %v3869 = vunpack.c.h.b16 %v3712
    %v3870 = vunpack.c.l.b16 %v3713
    %v3871 = vunpack.c.h.b16 %v3713
    %v3872 = vunpack.c.l.b16 %v3714
    %v3873 = vunpack.c.h.b16 %v3714
    %v3874 = vunpack.c.l.b16 %v3715
    %v3875 = vunpack.c.h.b16 %v3715
    %v3876 = vunpack.c.l.b16 %v3716
    %v3877 = vunpack.c.h.b16 %v3716
    %v3878 = vunpack.c.l.b16 %v3717
    %v3879 = vunpack.c.h.b16 %v3717
    %v3880 = vunpack.c.l.b16 %v3718
    %v3881 = vunpack.c.h.b16 %v3718
    %v3882 = vunpack.c.l.b16 %v3719
    %v3883 = vunpack.c.h.b16 %v3719
    %v3884 = vunpack.c.l.b16 %v3720
    %v3885 = vunpack.c.h.b16 %v3720
    %v3886 = vunpack.c.l.b16 %v3721
    %v3887 = vunpack.c.h.b16 %v3721
    %v3888 = vunpack.c.l.b16 %v3722
    %v3889 = vunpack.c.h.b16 %v3722
    %v3890 = vunpack.c.l.b16 %v3723
    %v3891 = vunpack.c.h.b16 %v3723
    %v3892 = vunpack.c.l.b16 %v3724
    %v3893 = vunpack.c.h.b16 %v3724
    %v3894 = vunpack.c.l.b16 %v3725
    %v3895 = vunpack.c.h.b16 %v3725
    %v3896 = vunpack.c.l.b16 %v3726
    %v3897 = vunpack.c.h.b16 %v3726
    %v3898 = vunpack.c.l.b16 %v3727
    %v3899 = vunpack.c.h.b16 %v3727
    %v3900 = vunpack.c.l.b16 %v3728
    %v3901 = vunpack.c.h.b16 %v3728
    %v3902 = vunpack.c.l.b16 %v3729
    %v3903 = vunpack.c.h.b16 %v3729
    %v3904 = vunpack.c.l.b16 %v3730
    %v3905 = vunpack.c.h.b16 %v3730
    %v3906 = vunpack.c.l.b16 %v3731
    %v3907 = vunpack.c.h.b16 %v3731
    %v3908 = vunpack.c.l.b16 %v3732
    %v3909 = vunpack.c.h.b16 %v3732
    %v3910 = vunpack.c.l.b16 %v3733
    %v3911 = vunpack.c.h.b16 %v3733
    %v3912 = vunpack.c.l.b16 %v3734
    %v3913 = vunpack.c.h.b16 %v3734
    %v3914 = vunpack.c.l.b16 %v3735
    %v3915 = vunpack.c.h.b16 %v3735
    %v3916 = vunpack.c.l.b16 %v3736
    %v3917 = vunpack.c.h.b16 %v3736
    %v3918 = vunpack.c.l.b16 %v3737
    %v3919 = vunpack.c.h.b16 %v3737
    %v3920 = vunpack.c.l.b16 %v3738
    %v3921 = vunpack.c.h.b16 %v3738
    %v3922 = vunpack.c.l.b16 %v3739
    %v3923 = vunpack.c.h.b16 %v3739
    %v3924 = vunpack.c.l.b16 %v3740
    %v3925 = vunpack.c.h.b16 %v3740
    %v3926 = vunpack.c.l.b16 %v3741
    %v3927 = vunpack.c.h.b16 %v3741
    %v3928 = vunpack.c.l.b16 %v3742
    %v3929 = vunpack.c.h.b16 %v3742
    %v3930 = vunpack.c.l.b16 %v3743
    %v3931 = vunpack.c.h.b16 %v3743
    %v3932 = vunpack.c.l.b16 %v3744
    %v3933 = vunpack.c.h.b16 %v3744
    %v3934 = vunpack.c.l.b16 %v3745
    %v3935 = vunpack.c.h.b16 %v3745
    %v3936 = vunpack.c.l.b16 %v3746
    %v3937 = vunpack.c.h.b16 %v3746
    %v3938 = vunpack.c.l.b16 %v3747
    %v3939 = vunpack.c.h.b16 %v3747
    %v3940 = vunpack.c.l.b16 %v3748
    %v3941 = vunpack.c.h.b16 %v3748
    %v3942 = vunpack.c.l.b16 %v3749
    %v3943 = vunpack.c.h.b16 %v3749
    %v3944 = vunpack.c.l.b16 %v3750
    %v3945 = vunpack.c.h.b16 %v3750
    %v3946 = vunpack.c.l.b16 %v3751
    %v3947 = vunpack.c.h.b16 %v3751
    %v3948 = vunpack.c.l.b16 %v3752
    %v3949 = vunpack.c.h.b16 %v3752
    %v3950 = vunpack.c.l.b16 %v3753
    %v3951 = vunpack.c.h.b16 %v3753
    %v3952 = vunpack.c.l.b16 %v3754
    %v3953 = vunpack.c.h.b16 %v3754
    %v3954 = vunpack.c.l.b16 %v3755
    %v3955 = vunpack.c.h.b16 %v3755
    %v3956 = vunpack.c.l.b16 %v3756
    %v3957 = vunpack.c.h.b16 %v3756
    %v3958 = vunpack.c.l.b16 %v3757
    %v3959 = vunpack.c.h.b16 %v3757
    %v3960 = vunpack.c.l.b16 %v3758
    %v3961 = vunpack.c.h.b16 %v3758
    %v3962 = vunpack.c.l.b16 %v3759
    %v3963 = vunpack.c.h.b16 %v3759
    %v3964 = vunpack.c.l.b16 %v3760
    %v3965 = vunpack.c.h.b16 %v3760
    %v3966 = vunpack.c.l.b16 %v3761
    %v3967 = vunpack.c.h.b16 %v3761
    %v3968 = vunpack.c.l.b16 %v3762
    %v3969 = vunpack.c.h.b16 %v3762
    %v3970 = vunpack.c.l.b16 %v3763
    %v3971 = vunpack.c.h.b16 %v3763
    %v3972 = vunpack.c.l.b16 %v3764
    %v3973 = vunpack.c.h.b16 %v3764
    %v3974 = vunpack.c.l.b16 %v3765
    %v3975 = vunpack.c.h.b16 %v3765
    %v3976 = vunpack.c.l.b16 %v3766
    %v3977 = vunpack.c.h.b16 %v3766
    %v3978 = vunpack.c.l.b16 %v3767
    %v3979 = vunpack.c.h.b16 %v3767
    %v3980 = vunpack.c.l.b16 %v3768
    %v3981 = vunpack.c.h.b16 %v3768
    %v3982 = vunpack.c.l.b16 %v3769
    %v3983 = vunpack.c.h.b16 %v3769
    %v3984 = vpack.c.b16 %v3860, %v3856
    %v3985 = vpack.c.b16 %v3861, %v3857
    %v3986 = vpack.c.b16 %v3862, %v3858
    %v3987 = vpack.c.b16 %v3863, %v3859
    %v3988 = vpack.c.b16 %v3868, %v3864
    %v3989 = vpack.c.b16 %v3869, %v3865
    %v3990 = vpack.c.b16 %v3870, %v3866
    %v3991 = vpack.c.b16 %v3871, %v3867
    %v3992 = vpack.c.b16 %v3876, %v3872
    %v3993 = vpack.c.b16 %v3877, %v3873
    %v3994 = vpack.c.b16 %v3878, %v3874
    %v3995 = vpack.c.b16 %v3879, %v3875
    %v3996 = vpack.c.b16 %v3884, %v3880
    %v3997 = vpack.c.b16 %v3885, %v3881
    %v3998 = vpack.c.b16 %v3886, %v3882
    %v3999 = vpack.c.b16 %v3887, %v3883
    %v4000 = vpack.c.b16 %v3892, %v3888
    %v4001 = vpack.c.b16 %v3893, %v3889
    %v4002 = vpack.c.b16 %v3894, %v3890
    %v4003 = vpack.c.b16 %v3895, %v3891
    %v4004 = vpack.c.b16 %v3900, %v3896
    %v4005 = vpack.c.b16 %v3901, %v3897
    %v4006 = vpack.c.b16 %v3902, %v3898
    %v4007 = vpack.c.b16 %v3903, %v3899
    %v4008 = vpack.c.b16 %v3908, %v3904
    %v4009 = vpack.c.b16 %v3909, %v3905
    %v4010 = vpack.c.b16 %v3910, %v3906
    %v4011 = vpack.c.b16 %v3911, %v3907
    %v4012 = vpack.c.b16 %v3916, %v3912
    %v4013 = vpack.c.b16 %v3917, %v3913
    %v4014 = vpack.c.b16 %v3918, %v3914
    %v4015 = vpack.c.b16 %v3919, %v3915
    %v4016 = vpack.c.b16 %v3924, %v3920
    %v4017 = vpack.c.b16 %v3925, %v3921
    %v4018 = vpack.c.b16 %v3926, %v3922
    %v4019 = vpack.c.b16 %v3927, %v3923
    %v4020 = vpack.c.b16 %v3932, %v3928
    %v4021 = vpack.c.b16 %v3933, %v3929
    %v4022 = vpack.c.b16 %v3934, %v3930
    %v4023 = vpack.c.b16 %v3935, %v3931
    %v4024 = vpack.c.b16 %v3940, %v3936
    %v4025 = vpack.c.b16 %v3941, %v3937
    %v4026 = vpack.c.b16 %v3942, %v3938
    %v4027 = vpack.c.b16 %v3943, %v3939
    %v4028 = vpack.c.b16 %v3948, %v3944
    %v4029 = vpack.c.b16 %v3949, %v3945
    %v4030 = vpack.c.b16 %v3950, %v3946
    %v4031 = vpack.c.b16 %v3951, %v3947
    %v4032 = vpack.c.b16 %v3956, %v3952
    %v4033 = vpack.c.b16 %v3957, %v3953
    %v4034 = vpack.c.b16 %v3958, %v3954
    %v4035 = vpack.c.b16 %v3959, %v3955
    %v4036 = vpack.c.b16 %v3964, %v3960
    %v4037 = vpack.c.b16 %v3965, %v3961
    %v4038 = vpack.c.b16 %v3966, %v3962
    %v4039 = vpack.c.b16 %v3967, %v3963
    %v4040 = vpack.c.b16 %v3972, %v3968
    %v4041 = vpack.c.b16 %v3973, %v3969
    %v4042 = vpack.c.b16 %v3974, %v3970
    %v4043 = vpack.c.b16 %v3975, %v3971
    %v4044 = vpack.c.b16 %v3980, %v3976
    %v4045 = vpack.c.b16 %v3981, %v3977
    %v4046 = vpack.c.b16 %v3982, %v3978
    %v4047 = vpack.c.b16 %v3983, %v3979
    %4112 = vmatprep.subr.bf16.mxu0 %v3985
    %4113 = vmatpush1.bf16.msra.mxu0 %v3984
    %4114 = vmatprep.subr.bf16.mxu0 %v3989
    %4115 = vmatpush1.bf16.msra.mxu0 %v3988
    %4116 = vmatprep.subr.bf16.mxu0 %v3993
    %4117 = vmatpush1.bf16.msra.mxu0 %v3992
    %4118 = vmatprep.subr.bf16.mxu0 %v3997
    %4119 = vmatpush1.bf16.msra.mxu0 %v3996
    %4120 = vmatprep.subr.bf16.mxu0 %v4001
    %4121 = vmatpush1.bf16.msra.mxu0 %v4000
    %4122 = vmatprep.subr.bf16.mxu0 %v4005
    %4123 = vmatpush1.bf16.msra.mxu0 %v4004
    %4124 = vmatprep.subr.bf16.mxu0 %v4009
    %4125 = vmatpush1.bf16.msra.mxu0 %v4008
    %4126 = vmatprep.subr.bf16.mxu0 %v4013
    %4127 = vmatpush1.bf16.msra.mxu0 %v4012
    %4128 = vmatprep.subr.bf16.mxu0 %v4017
    %4129 = vmatpush1.bf16.msra.mxu0 %v4016
    %4130 = vmatprep.subr.bf16.mxu0 %v4021
    %4131 = vmatpush1.bf16.msra.mxu0 %v4020
    %4132 = vmatprep.subr.bf16.mxu0 %v4025
    %4133 = vmatpush1.bf16.msra.mxu0 %v4024
    %4134 = vmatprep.subr.bf16.mxu0 %v4029
    %4135 = vmatpush1.bf16.msra.mxu0 %v4028
    %4136 = vmatprep.subr.bf16.mxu0 %v4033
    %4137 = vmatpush1.bf16.msra.mxu0 %v4032
    %4138 = vmatprep.subr.bf16.mxu0 %v4037
    %4139 = vmatpush1.bf16.msra.mxu0 %v4036
    %4140 = vmatprep.subr.bf16.mxu0 %v4041
    %4141 = vmatpush1.bf16.msra.mxu0 %v4040
    %4142 = vmatprep.subr.bf16.mxu0 %v4045
    %4143 = vmatpush1.bf16.msra.mxu0 %v4044
    %4144 = vmatprep.mubr.bf16.mxu0 %v3465
    %4145 = vmatmul.mubr.bf16.gmra.mrb[0].mxu0 %v3705
    %v4146 = vpop.f32.mrb[0].mxu0
    %v4147 = vadd.f32 %v3775, %v4146
    %v4148 = vpop.f32.mrb[0].mxu0
    %v4149 = vadd.f32 %v3779, %v4148
    %v4150 = vpop.f32.mrb[0].mxu0
    %v4151 = vpop.f32.mrb[0].mxu0
    %4152 = vdwg.mxu0
    %4153 = vmatprep.subr.bf16.mxu0 %v3987
    %4154 = vmatpush1.bf16.msra.mxu0 %v3986
    %4155 = vmatprep.subr.bf16.mxu0 %v3991
    %4156 = vmatpush1.bf16.msra.mxu0 %v3990
    %4157 = vmatprep.subr.bf16.mxu0 %v3995
    %4158 = vmatpush1.bf16.msra.mxu0 %v3994
    %4159 = vmatprep.subr.bf16.mxu0 %v3999
    %4160 = vmatpush1.bf16.msra.mxu0 %v3998
    %4161 = vmatprep.subr.bf16.mxu0 %v4003
    %4162 = vmatpush1.bf16.msra.mxu0 %v4002
    %4163 = vmatprep.subr.bf16.mxu0 %v4007
    %4164 = vmatpush1.bf16.msra.mxu0 %v4006
    %4165 = vmatprep.subr.bf16.mxu0 %v4011
    %4166 = vmatpush1.bf16.msra.mxu0 %v4010
    %4167 = vmatprep.subr.bf16.mxu0 %v4015
    %4168 = vmatpush1.bf16.msra.mxu0 %v4014
    %4169 = vmatprep.subr.bf16.mxu0 %v4019
    %4170 = vmatpush1.bf16.msra.mxu0 %v4018
    %4171 = vmatprep.subr.bf16.mxu0 %v4023
    %4172 = vmatpush1.bf16.msra.mxu0 %v4022
    %4173 = vmatprep.subr.bf16.mxu0 %v4027
    %4174 = vmatpush1.bf16.msra.mxu0 %v4026
    %4175 = vmatprep.subr.bf16.mxu0 %v4031
    %4176 = vmatpush1.bf16.msra.mxu0 %v4030
    %4177 = vmatprep.subr.bf16.mxu0 %v4035
    %4178 = vmatpush1.bf16.msra.mxu0 %v4034
    %4179 = vmatprep.subr.bf16.mxu0 %v4039
    %4180 = vmatpush1.bf16.msra.mxu0 %v4038
    %4181 = vmatprep.subr.bf16.mxu0 %v4043
    %4182 = vmatpush1.bf16.msra.mxu0 %v4042
    %4183 = vmatprep.subr.bf16.mxu0 %v4047
    %4184 = vmatpush1.bf16.msra.mxu0 %v4046
    %4185 = vmatprep.mubr.bf16.mxu0 %v3465
    %4186 = vmatmul.mubr.bf16.gmra.mrb[0].mxu0 %v3705
    %v4187 = vpop.f32.mrb[0].mxu0
    %v4188 = vadd.f32 %v3783, %v4187
    %v4189 = vpop.f32.mrb[0].mxu0
    %v4190 = vadd.f32 %v3787, %v4189
    %v4191 = vpop.f32.mrb[0].mxu0
    %v4192 = vpop.f32.mrb[0].mxu0
    %4193 = vdwg.mxu0
    %v4194 = vxor.u32 %v4147, 2147483648
    %v4195 = vmul.f32 %v4194, 1.442695
    %v4196 = vpow.pop %v4195
    %v4197 = vadd.f32 %v4196, 1.0
    %v4198 = vrcp.pop %v4197
    %v4199 = vmul.f32 1.0, %v4198
    %v4200 = vxor.u32 %v4149, 2147483648
    %v4201 = vmul.f32 %v4200, 1.442695
    %v4202 = vpow.pop %v4201
    %v4203 = vadd.f32 %v4202, 1.0
    %v4204 = vrcp.pop %v4203
    %v4205 = vmul.f32 1.0, %v4204
    %v4206 = vtanh.pop %v4188
    %v4207 = vxor.u32 %v4190, 2147483648
    %v4208 = vmul.f32 %v4207, 1.442695
    %v4209 = vpow.pop %v4208
    %v4210 = vadd.f32 %v4209, 1.0
    %v4211 = vrcp.pop %v4210
    %v4212 = vmul.f32 1.0, %v4211
    %v4213 = vmul.f32 %v4205, %v3462
    %v4214 = vmul.f32 %v4199, %v4206
    %v4215 = vadd.f32 %v4213, %v4214
    %v4216 = vtanh.pop %v4215
    %v4217 = vmul.f32 %v4212, %v4216
    %v4218 = vpack.c.bf16 %v4217, %v4217
    %v4219 = vld [vmem:[%s8] sm:$0xf]
    %v4220 = vld [vmem:[%s8 + $0x4] sm:$0xf]
    %v4221 = vld [vmem:[%s8 + $0x8] sm:$0xf]
    %v4222 = vld [vmem:[%s8 + $0xc] sm:$0xf]
    %v4223 = vld [vmem:[%s8 + $0x10] sm:$0xf]
    %v4224 = vld [vmem:[%s8 + $0x14] sm:$0xf]
    %v4225 = vld [vmem:[%s8 + $0x18] sm:$0xf]
    %v4226 = vld [vmem:[%s8 + $0x1c] sm:$0xf]
    %v4227 = vld [vmem:[%s8 + $0x20] sm:$0xf]
    %v4228 = vld [vmem:[%s8 + $0x24] sm:$0xf]
    %v4229 = vld [vmem:[%s8 + $0x28] sm:$0xf]
    %v4230 = vld [vmem:[%s8 + $0x2c] sm:$0xf]
    %v4231 = vld [vmem:[%s8 + $0x30] sm:$0xf]
    %v4232 = vld [vmem:[%s8 + $0x34] sm:$0xf]
    %v4233 = vld [vmem:[%s8 + $0x38] sm:$0xf]
    %v4234 = vld [vmem:[%s8 + $0x3c] sm:$0xf]
    %v4235 = vld [vmem:[%s9] sm:$0x1]
    %v4237 = vlaneseq
    %v4238 = vshrl.u32 %v4237, 7
    %v4239 = vsub.s32 0, %v4238
    %v4240 = vrot.slane %v4235, %v4239
    %v4258 = vunpack.c.l.b16 %v4219
    %v4259 = vunpack.c.l.b16 %v4220
    %v4260 = vunpack.c.l.b16 %v4221
    %v4261 = vunpack.c.l.b16 %v4222
    %v4262 = vunpack.c.l.b16 %v4223
    %v4263 = vunpack.c.l.b16 %v4224
    %v4264 = vunpack.c.l.b16 %v4225
    %v4265 = vunpack.c.l.b16 %v4226
    %v4266 = vunpack.c.l.b16 %v4227
    %v4267 = vunpack.c.l.b16 %v4228
    %v4268 = vunpack.c.l.b16 %v4229
    %v4269 = vunpack.c.l.b16 %v4230
    %v4270 = vunpack.c.l.b16 %v4231
    %v4271 = vunpack.c.l.b16 %v4232
    %v4272 = vunpack.c.l.b16 %v4233
    %v4273 = vunpack.c.l.b16 %v4234
    %v4274 = vpack.c.b16 %v4259, %v4258
    %v4275 = vpack.c.b16 %v4261, %v4260
    %v4276 = vpack.c.b16 %v4263, %v4262
    %v4277 = vpack.c.b16 %v4265, %v4264
    %v4278 = vpack.c.b16 %v4267, %v4266
    %v4279 = vpack.c.b16 %v4269, %v4268
    %v4280 = vpack.c.b16 %v4271, %v4270
    %v4281 = vpack.c.b16 %v4273, %v4272
    %4290 = vmatprep.subr.bf16.mxu0 0
    %4291 = vmatpush1.bf16.msra.mxu0 %v4274
    %4292 = vmatprep.subr.bf16.mxu0 0
    %4293 = vmatpush1.bf16.msra.mxu0 %v4275
    %4294 = vmatprep.subr.bf16.mxu0 0
    %4295 = vmatpush1.bf16.msra.mxu0 %v4276
    %4296 = vmatprep.subr.bf16.mxu0 0
    %4297 = vmatpush1.bf16.msra.mxu0 %v4277
    %4298 = vmatprep.subr.bf16.mxu0 0
    %4299 = vmatpush1.bf16.msra.mxu0 %v4278
    %4300 = vmatprep.subr.bf16.mxu0 0
    %4301 = vmatpush1.bf16.msra.mxu0 %v4279
    %4302 = vmatprep.subr.bf16.mxu0 0
    %4303 = vmatpush1.bf16.msra.mxu0 %v4280
    %4304 = vmatprep.subr.bf16.mxu0 0
    %4305 = vmatpush1.bf16.msra.mxu0 %v4281
    %4306 = vmatprep.subr.bf16.mxu0 0
    %4307 = vmatpush1.bf16.msra.mxu0 0
    %4308 = vmatprep.subr.bf16.mxu0 0
    %4309 = vmatpush1.bf16.msra.mxu0 0
    %4310 = vmatprep.subr.bf16.mxu0 0
    %4311 = vmatpush1.bf16.msra.mxu0 0
    %4312 = vmatprep.subr.bf16.mxu0 0
    %4313 = vmatpush1.bf16.msra.mxu0 0
    %4314 = vmatprep.subr.bf16.mxu0 0
    %4315 = vmatpush1.bf16.msra.mxu0 0
    %4316 = vmatprep.subr.bf16.mxu0 0
    %4317 = vmatpush1.bf16.msra.mxu0 0
    %4318 = vmatprep.subr.bf16.mxu0 0
    %4319 = vmatpush1.bf16.msra.mxu0 0
    %4320 = vmatprep.subr.bf16.mxu0 0
    %4321 = vmatpush1.bf16.msra.mxu0 0
    %4322 = vmatprep.mubr.bf16.mxu0 0
    %4323 = vmatmul.mubr.bf16.gmra.mrb[0].mxu0 %v4218
    %v4324 = vpop.f32.mrb[0].mxu0
    %v4325 = vadd.f32 %v4240, %v4324
    %v4326 = vpop.f32.mrb[0].mxu0
    %v4327 = vpop.f32.mrb[0].mxu0
    %v4328 = vpop.f32.mrb[0].mxu0
    %4329 = vdwg.mxu0
    %s4330 = scalar_lea.vmem %s10, 24
    %4331 = vst [vmem:[%s4330] sm:$0xff] %v4325
    %4332 = vmax.xlane.f32.xlu0 %v4325
    %v4333 = vpop.xlane.xlu0 %4332
    %vm4334 = vcmp.eq.f32.partialorder %v4325, %v4333
    %v4335 = vsel %vm4334, %v1327, 128.0
    %4336 = vmin.xlane.f32.xlu0 %v4335
    %v4337 = vpop.xlane.xlu0 %4336
    %v4338 = vcvt.f32.s32.to.zero.pseudo %v4337
    %s4339 = sld [smem:[#allocation2 + $0x4]]
    %p4340 = scmp.gt.s32.totalorder %s4339, 0
    %s4341 = scalar_lea.vmem %s1, 32
    %v4342 = vld [vmem:[%s4341] sm:$0xff]
    %s4343 = scalar_select %p4340, 1, 0
    %v4344 = vstv %s4343
    %vm4345 = vcmp.eq.s32.totalorder %v4344, 1
    %v4346 = vsel %vm4345, %v4342, %v4338
    %4347 = vset.pattern.permute.xlu0 0
    %4348 = vperm.xlu0 %4347, %v4346
    %v4349 = vpop.permute.xlu0 %4348
    %vm4350 = vcmp.eq.s32.totalorder %v1326, %v4349
    %v4351 = vsel %vm4350, 1, 0
    %v4352 = vcvt.s32.f32 %v4351
    %v4353 = vpack.c.bf16 %v4352, %v4352
    %v4354 = vld [vmem:[%s5] sm:$0xf]
    %v4355 = vld [vmem:[%s5 + $0x4] sm:$0xf]
    %v4356 = vld [vmem:[%s5 + $0x8] sm:$0xf]
    %v4357 = vld [vmem:[%s5 + $0xc] sm:$0xf]
    %v4358 = vld [vmem:[%s5 + $0x10] sm:$0xf]
    %v4359 = vld [vmem:[%s5 + $0x14] sm:$0xf]
    %v4360 = vld [vmem:[%s5 + $0x18] sm:$0xf]
    %v4361 = vld [vmem:[%s5 + $0x1c] sm:$0xf]
    %v4362 = vld [vmem:[%s5 + $0x20] sm:$0xf]
    %v4363 = vld [vmem:[%s5 + $0x24] sm:$0xf]
    %v4364 = vld [vmem:[%s5 + $0x28] sm:$0xf]
    %v4365 = vld [vmem:[%s5 + $0x2c] sm:$0xf]
    %v4366 = vld [vmem:[%s5 + $0x30] sm:$0xf]
    %v4367 = vld [vmem:[%s5 + $0x34] sm:$0xf]
    %v4368 = vld [vmem:[%s5 + $0x38] sm:$0xf]
    %v4369 = vld [vmem:[%s5 + $0x3c] sm:$0xf]
    %v4386 = vunpack.c.l.b16 %v4354
    %v4387 = vunpack.c.l.b16 %v4355
    %v4388 = vunpack.c.l.b16 %v4356
    %v4389 = vunpack.c.l.b16 %v4357
    %v4390 = vunpack.c.l.b16 %v4358
    %v4391 = vunpack.c.l.b16 %v4359
    %v4392 = vunpack.c.l.b16 %v4360
    %v4393 = vunpack.c.l.b16 %v4361
    %v4394 = vunpack.c.l.b16 %v4362
    %v4395 = vunpack.c.l.b16 %v4363
    %v4396 = vunpack.c.l.b16 %v4364
    %v4397 = vunpack.c.l.b16 %v4365
    %v4398 = vunpack.c.l.b16 %v4366
    %v4399 = vunpack.c.l.b16 %v4367
    %v4400 = vunpack.c.l.b16 %v4368
    %v4401 = vunpack.c.l.b16 %v4369
    %v4402 = vpack.c.b16 %v4387, %v4386
    %v4403 = vpack.c.b16 %v4389, %v4388
    %v4404 = vpack.c.b16 %v4391, %v4390
    %v4405 = vpack.c.b16 %v4393, %v4392
    %v4406 = vpack.c.b16 %v4395, %v4394
    %v4407 = vpack.c.b16 %v4397, %v4396
    %v4408 = vpack.c.b16 %v4399, %v4398
    %v4409 = vpack.c.b16 %v4401, %v4400
    %4418 = vmatprep.subr.bf16.mxu0 0
    %4419 = vmatpush1.bf16.msra.mxu0 %v4402
    %4420 = vmatprep.subr.bf16.mxu0 0
    %4421 = vmatpush1.bf16.msra.mxu0 %v4403
    %4422 = vmatprep.subr.bf16.mxu0 0
    %4423 = vmatpush1.bf16.msra.mxu0 %v4404
    %4424 = vmatprep.subr.bf16.mxu0 0
    %4425 = vmatpush1.bf16.msra.mxu0 %v4405
    %4426 = vmatprep.subr.bf16.mxu0 0
    %4427 = vmatpush1.bf16.msra.mxu0 %v4406
    %4428 = vmatprep.subr.bf16.mxu0 0
    %4429 = vmatpush1.bf16.msra.mxu0 %v4407
    %4430 = vmatprep.subr.bf16.mxu0 0
    %4431 = vmatpush1.bf16.msra.mxu0 %v4408
    %4432 = vmatprep.subr.bf16.mxu0 0
    %4433 = vmatpush1.bf16.msra.mxu0 %v4409
    %4434 = vmatprep.subr.bf16.mxu0 0
    %4435 = vmatpush1.bf16.msra.mxu0 0
    %4436 = vmatprep.subr.bf16.mxu0 0
    %4437 = vmatpush1.bf16.msra.mxu0 0
    %4438 = vmatprep.subr.bf16.mxu0 0
    %4439 = vmatpush1.bf16.msra.mxu0 0
    %4440 = vmatprep.subr.bf16.mxu0 0
    %4441 = vmatpush1.bf16.msra.mxu0 0
    %4442 = vmatprep.subr.bf16.mxu0 0
    %4443 = vmatpush1.bf16.msra.mxu0 0
    %4444 = vmatprep.subr.bf16.mxu0 0
    %4445 = vmatpush1.bf16.msra.mxu0 0
    %4446 = vmatprep.subr.bf16.mxu0 0
    %4447 = vmatpush1.bf16.msra.mxu0 0
    %4448 = vmatprep.subr.bf16.mxu0 0
    %4449 = vmatpush1.bf16.msra.mxu0 0
    %4450 = vmatprep.mubr.bf16.mxu0 0
    %4451 = vmatmul.mubr.bf16.gmra.mrb[0].mxu0 %v4353
    %v4452 = vpop.f32.mrb[0].mxu0
    %v4453 = vadd.f32 0.0, %v4452
    %v4454 = vpop.f32.mrb[0].mxu0
    %v4455 = vpop.f32.mrb[0].mxu0
    %v4456 = vpop.f32.mrb[0].mxu0
    %4457 = vdwg.mxu0
    %v4458 = vpack.c.bf16 %v4453, %v4453
    %v4459 = vld [vmem:[%s6] sm:$0xff]
    %v4460 = vld [vmem:[%s6 + $0x8] sm:$0xff]
    %v4461 = vld [vmem:[%s6 + $0x10] sm:$0xff]
    %v4462 = vld [vmem:[%s6 + $0x18] sm:$0xff]
    %v4463 = vld [vmem:[%s6 + $0x20] sm:$0xff]
    %v4464 = vld [vmem:[%s6 + $0x28] sm:$0xff]
    %v4465 = vld [vmem:[%s6 + $0x30] sm:$0xff]
    %v4466 = vld [vmem:[%s6 + $0x38] sm:$0xff]
    %v4467 = vld [vmem:[%s6 + $0x40] sm:$0xff]
    %v4468 = vld [vmem:[%s6 + $0x48] sm:$0xff]
    %v4469 = vld [vmem:[%s6 + $0x50] sm:$0xff]
    %v4470 = vld [vmem:[%s6 + $0x58] sm:$0xff]
    %v4471 = vld [vmem:[%s6 + $0x60] sm:$0xff]
    %v4472 = vld [vmem:[%s6 + $0x68] sm:$0xff]
    %v4473 = vld [vmem:[%s6 + $0x70] sm:$0xff]
    %v4474 = vld [vmem:[%s6 + $0x78] sm:$0xff]
    %v4475 = vld [vmem:[%s6 + $0x80] sm:$0xff]
    %v4476 = vld [vmem:[%s6 + $0x88] sm:$0xff]
    %v4477 = vld [vmem:[%s6 + $0x90] sm:$0xff]
    %v4478 = vld [vmem:[%s6 + $0x98] sm:$0xff]
    %v4479 = vld [vmem:[%s6 + $0xa0] sm:$0xff]
    %v4480 = vld [vmem:[%s6 + $0xa8] sm:$0xff]
    %v4481 = vld [vmem:[%s6 + $0xb0] sm:$0xff]
    %v4482 = vld [vmem:[%s6 + $0xb8] sm:$0xff]
    %v4483 = vld [vmem:[%s6 + $0xc0] sm:$0xff]
    %v4484 = vld [vmem:[%s6 + $0xc8] sm:$0xff]
    %v4485 = vld [vmem:[%s6 + $0xd0] sm:$0xff]
    %v4486 = vld [vmem:[%s6 + $0xd8] sm:$0xff]
    %v4487 = vld [vmem:[%s6 + $0xe0] sm:$0xff]
    %v4488 = vld [vmem:[%s6 + $0xe8] sm:$0xff]
    %v4489 = vld [vmem:[%s6 + $0xf0] sm:$0xff]
    %v4490 = vld [vmem:[%s6 + $0xf8] sm:$0xff]
    %v4491 = vld [vmem:[%s6 + $0x100] sm:$0xff]
    %v4492 = vld [vmem:[%s6 + $0x108] sm:$0xff]
    %v4493 = vld [vmem:[%s6 + $0x110] sm:$0xff]
    %v4494 = vld [vmem:[%s6 + $0x118] sm:$0xff]
    %v4495 = vld [vmem:[%s6 + $0x120] sm:$0xff]
    %v4496 = vld [vmem:[%s6 + $0x128] sm:$0xff]
    %v4497 = vld [vmem:[%s6 + $0x130] sm:$0xff]
    %v4498 = vld [vmem:[%s6 + $0x138] sm:$0xff]
    %v4499 = vld [vmem:[%s6 + $0x140] sm:$0xff]
    %v4500 = vld [vmem:[%s6 + $0x148] sm:$0xff]
    %v4501 = vld [vmem:[%s6 + $0x150] sm:$0xff]
    %v4502 = vld [vmem:[%s6 + $0x158] sm:$0xff]
    %v4503 = vld [vmem:[%s6 + $0x160] sm:$0xff]
    %v4504 = vld [vmem:[%s6 + $0x168] sm:$0xff]
    %v4505 = vld [vmem:[%s6 + $0x170] sm:$0xff]
    %v4506 = vld [vmem:[%s6 + $0x178] sm:$0xff]
    %v4507 = vld [vmem:[%s6 + $0x180] sm:$0xff]
    %v4508 = vld [vmem:[%s6 + $0x188] sm:$0xff]
    %v4509 = vld [vmem:[%s6 + $0x190] sm:$0xff]
    %v4510 = vld [vmem:[%s6 + $0x198] sm:$0xff]
    %v4511 = vld [vmem:[%s6 + $0x1a0] sm:$0xff]
    %v4512 = vld [vmem:[%s6 + $0x1a8] sm:$0xff]
    %v4513 = vld [vmem:[%s6 + $0x1b0] sm:$0xff]
    %v4514 = vld [vmem:[%s6 + $0x1b8] sm:$0xff]
    %v4515 = vld [vmem:[%s6 + $0x1c0] sm:$0xff]
    %v4516 = vld [vmem:[%s6 + $0x1c8] sm:$0xff]
    %v4517 = vld [vmem:[%s6 + $0x1d0] sm:$0xff]
    %v4518 = vld [vmem:[%s6 + $0x1d8] sm:$0xff]
    %v4519 = vld [vmem:[%s6 + $0x1e0] sm:$0xff]
    %v4520 = vld [vmem:[%s6 + $0x1e8] sm:$0xff]
    %v4521 = vld [vmem:[%s6 + $0x1f0] sm:$0xff]
    %v4522 = vld [vmem:[%s6 + $0x1f8] sm:$0xff]
    %v4523 = vld [vmem:[%s7] sm:$0xf]
    %v4525 = vlaneseq
    %v4526 = vshrl.u32 %v4525, 7
    %v4527 = vsub.s32 0, %v4526
    %v4528 = vrot.slane %v4523, %v4527
    %v4529 = vlaneseq
    %v4530 = vshrl.u32 %v4529, 7
    %v4531 = vsub.s32 1, %v4530
    %v4532 = vrot.slane %v4523, %v4531
    %v4533 = vlaneseq
    %v4534 = vshrl.u32 %v4533, 7
    %v4535 = vsub.s32 2, %v4534
    %v4536 = vrot.slane %v4523, %v4535
    %v4537 = vlaneseq
    %v4538 = vshrl.u32 %v4537, 7
    %v4539 = vsub.s32 3, %v4538
    %v4540 = vrot.slane %v4523, %v4539
    %v4609 = vunpack.c.l.b16 %v4459
    %v4610 = vunpack.c.h.b16 %v4459
    %v4611 = vunpack.c.l.b16 %v4460
    %v4612 = vunpack.c.h.b16 %v4460
    %v4613 = vunpack.c.l.b16 %v4461
    %v4614 = vunpack.c.h.b16 %v4461
    %v4615 = vunpack.c.l.b16 %v4462
    %v4616 = vunpack.c.h.b16 %v4462
    %v4617 = vunpack.c.l.b16 %v4463
    %v4618 = vunpack.c.h.b16 %v4463
    %v4619 = vunpack.c.l.b16 %v4464
    %v4620 = vunpack.c.h.b16 %v4464
    %v4621 = vunpack.c.l.b16 %v4465
    %v4622 = vunpack.c.h.b16 %v4465
    %v4623 = vunpack.c.l.b16 %v4466
    %v4624 = vunpack.c.h.b16 %v4466
    %v4625 = vunpack.c.l.b16 %v4467
    %v4626 = vunpack.c.h.b16 %v4467
    %v4627 = vunpack.c.l.b16 %v4468
    %v4628 = vunpack.c.h.b16 %v4468
    %v4629 = vunpack.c.l.b16 %v4469
    %v4630 = vunpack.c.h.b16 %v4469
    %v4631 = vunpack.c.l.b16 %v4470
    %v4632 = vunpack.c.h.b16 %v4470
    %v4633 = vunpack.c.l.b16 %v4471
    %v4634 = vunpack.c.h.b16 %v4471
    %v4635 = vunpack.c.l.b16 %v4472
    %v4636 = vunpack.c.h.b16 %v4472
    %v4637 = vunpack.c.l.b16 %v4473
    %v4638 = vunpack.c.h.b16 %v4473
    %v4639 = vunpack.c.l.b16 %v4474
    %v4640 = vunpack.c.h.b16 %v4474
    %v4641 = vunpack.c.l.b16 %v4475
    %v4642 = vunpack.c.h.b16 %v4475
    %v4643 = vunpack.c.l.b16 %v4476
    %v4644 = vunpack.c.h.b16 %v4476
    %v4645 = vunpack.c.l.b16 %v4477
    %v4646 = vunpack.c.h.b16 %v4477
    %v4647 = vunpack.c.l.b16 %v4478
    %v4648 = vunpack.c.h.b16 %v4478
    %v4649 = vunpack.c.l.b16 %v4479
    %v4650 = vunpack.c.h.b16 %v4479
    %v4651 = vunpack.c.l.b16 %v4480
    %v4652 = vunpack.c.h.b16 %v4480
    %v4653 = vunpack.c.l.b16 %v4481
    %v4654 = vunpack.c.h.b16 %v4481
    %v4655 = vunpack.c.l.b16 %v4482
    %v4656 = vunpack.c.h.b16 %v4482
    %v4657 = vunpack.c.l.b16 %v4483
    %v4658 = vunpack.c.h.b16 %v4483
    %v4659 = vunpack.c.l.b16 %v4484
    %v4660 = vunpack.c.h.b16 %v4484
    %v4661 = vunpack.c.l.b16 %v4485
    %v4662 = vunpack.c.h.b16 %v4485
    %v4663 = vunpack.c.l.b16 %v4486
    %v4664 = vunpack.c.h.b16 %v4486
    %v4665 = vunpack.c.l.b16 %v4487
    %v4666 = vunpack.c.h.b16 %v4487
    %v4667 = vunpack.c.l.b16 %v4488
    %v4668 = vunpack.c.h.b16 %v4488
    %v4669 = vunpack.c.l.b16 %v4489
    %v4670 = vunpack.c.h.b16 %v4489
    %v4671 = vunpack.c.l.b16 %v4490
    %v4672 = vunpack.c.h.b16 %v4490
    %v4673 = vunpack.c.l.b16 %v4491
    %v4674 = vunpack.c.h.b16 %v4491
    %v4675 = vunpack.c.l.b16 %v4492
    %v4676 = vunpack.c.h.b16 %v4492
    %v4677 = vunpack.c.l.b16 %v4493
    %v4678 = vunpack.c.h.b16 %v4493
    %v4679 = vunpack.c.l.b16 %v4494
    %v4680 = vunpack.c.h.b16 %v4494
    %v4681 = vunpack.c.l.b16 %v4495
    %v4682 = vunpack.c.h.b16 %v4495
    %v4683 = vunpack.c.l.b16 %v4496
    %v4684 = vunpack.c.h.b16 %v4496
    %v4685 = vunpack.c.l.b16 %v4497
    %v4686 = vunpack.c.h.b16 %v4497
    %v4687 = vunpack.c.l.b16 %v4498
    %v4688 = vunpack.c.h.b16 %v4498
    %v4689 = vunpack.c.l.b16 %v4499
    %v4690 = vunpack.c.h.b16 %v4499
    %v4691 = vunpack.c.l.b16 %v4500
    %v4692 = vunpack.c.h.b16 %v4500
    %v4693 = vunpack.c.l.b16 %v4501
    %v4694 = vunpack.c.h.b16 %v4501
    %v4695 = vunpack.c.l.b16 %v4502
    %v4696 = vunpack.c.h.b16 %v4502
    %v4697 = vunpack.c.l.b16 %v4503
    %v4698 = vunpack.c.h.b16 %v4503
    %v4699 = vunpack.c.l.b16 %v4504
    %v4700 = vunpack.c.h.b16 %v4504
    %v4701 = vunpack.c.l.b16 %v4505
    %v4702 = vunpack.c.h.b16 %v4505
    %v4703 = vunpack.c.l.b16 %v4506
    %v4704 = vunpack.c.h.b16 %v4506
    %v4705 = vunpack.c.l.b16 %v4507
    %v4706 = vunpack.c.h.b16 %v4507
    %v4707 = vunpack.c.l.b16 %v4508
    %v4708 = vunpack.c.h.b16 %v4508
    %v4709 = vunpack.c.l.b16 %v4509
    %v4710 = vunpack.c.h.b16 %v4509
    %v4711 = vunpack.c.l.b16 %v4510
    %v4712 = vunpack.c.h.b16 %v4510
    %v4713 = vunpack.c.l.b16 %v4511
    %v4714 = vunpack.c.h.b16 %v4511
    %v4715 = vunpack.c.l.b16 %v4512
    %v4716 = vunpack.c.h.b16 %v4512
    %v4717 = vunpack.c.l.b16 %v4513
    %v4718 = vunpack.c.h.b16 %v4513
    %v4719 = vunpack.c.l.b16 %v4514
    %v4720 = vunpack.c.h.b16 %v4514
    %v4721 = vunpack.c.l.b16 %v4515
    %v4722 = vunpack.c.h.b16 %v4515
    %v4723 = vunpack.c.l.b16 %v4516
    %v4724 = vunpack.c.h.b16 %v4516
    %v4725 = vunpack.c.l.b16 %v4517
    %v4726 = vunpack.c.h.b16 %v4517
    %v4727 = vunpack.c.l.b16 %v4518
    %v4728 = vunpack.c.h.b16 %v4518
    %v4729 = vunpack.c.l.b16 %v4519
    %v4730 = vunpack.c.h.b16 %v4519
    %v4731 = vunpack.c.l.b16 %v4520
    %v4732 = vunpack.c.h.b16 %v4520
    %v4733 = vunpack.c.l.b16 %v4521
    %v4734 = vunpack.c.h.b16 %v4521
    %v4735 = vunpack.c.l.b16 %v4522
    %v4736 = vunpack.c.h.b16 %v4522
    %v4737 = vpack.c.b16 %v4613, %v4609
    %v4738 = vpack.c.b16 %v4614, %v4610
    %v4739 = vpack.c.b16 %v4615, %v4611
    %v4740 = vpack.c.b16 %v4616, %v4612
    %v4741 = vpack.c.b16 %v4621, %v4617
    %v4742 = vpack.c.b16 %v4622, %v4618
    %v4743 = vpack.c.b16 %v4623, %v4619
    %v4744 = vpack.c.b16 %v4624, %v4620
    %v4745 = vpack.c.b16 %v4629, %v4625
    %v4746 = vpack.c.b16 %v4630, %v4626
    %v4747 = vpack.c.b16 %v4631, %v4627
    %v4748 = vpack.c.b16 %v4632, %v4628
    %v4749 = vpack.c.b16 %v4637, %v4633
    %v4750 = vpack.c.b16 %v4638, %v4634
    %v4751 = vpack.c.b16 %v4639, %v4635
    %v4752 = vpack.c.b16 %v4640, %v4636
    %v4753 = vpack.c.b16 %v4645, %v4641
    %v4754 = vpack.c.b16 %v4646, %v4642
    %v4755 = vpack.c.b16 %v4647, %v4643
    %v4756 = vpack.c.b16 %v4648, %v4644
    %v4757 = vpack.c.b16 %v4653, %v4649
    %v4758 = vpack.c.b16 %v4654, %v4650
    %v4759 = vpack.c.b16 %v4655, %v4651
    %v4760 = vpack.c.b16 %v4656, %v4652
    %v4761 = vpack.c.b16 %v4661, %v4657
    %v4762 = vpack.c.b16 %v4662, %v4658
    %v4763 = vpack.c.b16 %v4663, %v4659
    %v4764 = vpack.c.b16 %v4664, %v4660
    %v4765 = vpack.c.b16 %v4669, %v4665
    %v4766 = vpack.c.b16 %v4670, %v4666
    %v4767 = vpack.c.b16 %v4671, %v4667
    %v4768 = vpack.c.b16 %v4672, %v4668
    %v4769 = vpack.c.b16 %v4677, %v4673
    %v4770 = vpack.c.b16 %v4678, %v4674
    %v4771 = vpack.c.b16 %v4679, %v4675
    %v4772 = vpack.c.b16 %v4680, %v4676
    %v4773 = vpack.c.b16 %v4685, %v4681
    %v4774 = vpack.c.b16 %v4686, %v4682
    %v4775 = vpack.c.b16 %v4687, %v4683
    %v4776 = vpack.c.b16 %v4688, %v4684
    %v4777 = vpack.c.b16 %v4693, %v4689
    %v4778 = vpack.c.b16 %v4694, %v4690
    %v4779 = vpack.c.b16 %v4695, %v4691
    %v4780 = vpack.c.b16 %v4696, %v4692
    %v4781 = vpack.c.b16 %v4701, %v4697
    %v4782 = vpack.c.b16 %v4702, %v4698
    %v4783 = vpack.c.b16 %v4703, %v4699
    %v4784 = vpack.c.b16 %v4704, %v4700
    %v4785 = vpack.c.b16 %v4709, %v4705
    %v4786 = vpack.c.b16 %v4710, %v4706
    %v4787 = vpack.c.b16 %v4711, %v4707
    %v4788 = vpack.c.b16 %v4712, %v4708
    %v4789 = vpack.c.b16 %v4717, %v4713
    %v4790 = vpack.c.b16 %v4718, %v4714
    %v4791 = vpack.c.b16 %v4719, %v4715
    %v4792 = vpack.c.b16 %v4720, %v4716
    %v4793 = vpack.c.b16 %v4725, %v4721
    %v4794 = vpack.c.b16 %v4726, %v4722
    %v4795 = vpack.c.b16 %v4727, %v4723
    %v4796 = vpack.c.b16 %v4728, %v4724
    %v4797 = vpack.c.b16 %v4733, %v4729
    %v4798 = vpack.c.b16 %v4734, %v4730
    %v4799 = vpack.c.b16 %v4735, %v4731
    %v4800 = vpack.c.b16 %v4736, %v4732
    %4865 = vmatprep.subr.bf16.mxu0 %v4738
    %4866 = vmatpush1.bf16.msra.mxu0 %v4737
    %4867 = vmatprep.subr.bf16.mxu0 %v4742
    %4868 = vmatpush1.bf16.msra.mxu0 %v4741
    %4869 = vmatprep.subr.bf16.mxu0 %v4746
    %4870 = vmatpush1.bf16.msra.mxu0 %v4745
    %4871 = vmatprep.subr.bf16.mxu0 %v4750
    %4872 = vmatpush1.bf16.msra.mxu0 %v4749
    %4873 = vmatprep.subr.bf16.mxu0 %v4754
    %4874 = vmatpush1.bf16.msra.mxu0 %v4753
    %4875 = vmatprep.subr.bf16.mxu0 %v4758
    %4876 = vmatpush1.bf16.msra.mxu0 %v4757
    %4877 = vmatprep.subr.bf16.mxu0 %v4762
    %4878 = vmatpush1.bf16.msra.mxu0 %v4761
    %4879 = vmatprep.subr.bf16.mxu0 %v4766
    %4880 = vmatpush1.bf16.msra.mxu0 %v4765
    %4881 = vmatprep.subr.bf16.mxu0 %v4770
    %4882 = vmatpush1.bf16.msra.mxu0 %v4769
    %4883 = vmatprep.subr.bf16.mxu0 %v4774
    %4884 = vmatpush1.bf16.msra.mxu0 %v4773
    %4885 = vmatprep.subr.bf16.mxu0 %v4778
    %4886 = vmatpush1.bf16.msra.mxu0 %v4777
    %4887 = vmatprep.subr.bf16.mxu0 %v4782
    %4888 = vmatpush1.bf16.msra.mxu0 %v4781
    %4889 = vmatprep.subr.bf16.mxu0 %v4786
    %4890 = vmatpush1.bf16.msra.mxu0 %v4785
    %4891 = vmatprep.subr.bf16.mxu0 %v4790
    %4892 = vmatpush1.bf16.msra.mxu0 %v4789
    %4893 = vmatprep.subr.bf16.mxu0 %v4794
    %4894 = vmatpush1.bf16.msra.mxu0 %v4793
    %4895 = vmatprep.subr.bf16.mxu0 %v4798
    %4896 = vmatpush1.bf16.msra.mxu0 %v4797
    %4897 = vmatprep.mubr.bf16.mxu0 %v4218
    %4898 = vmatmul.mubr.bf16.gmra.mrb[0].mxu0 %v4458
    %v4899 = vpop.f32.mrb[0].mxu0
    %v4900 = vadd.f32 %v4528, %v4899
    %v4901 = vpop.f32.mrb[0].mxu0
    %v4902 = vadd.f32 %v4532, %v4901
    %v4903 = vpop.f32.mrb[0].mxu0
    %v4904 = vpop.f32.mrb[0].mxu0
    %4905 = vdwg.mxu0
    %4906 = vmatprep.subr.bf16.mxu0 %v4740
    %4907 = vmatpush1.bf16.msra.mxu0 %v4739
    %4908 = vmatprep.subr.bf16.mxu0 %v4744
    %4909 = vmatpush1.bf16.msra.mxu0 %v4743
    %4910 = vmatprep.subr.bf16.mxu0 %v4748
    %4911 = vmatpush1.bf16.msra.mxu0 %v4747
    %4912 = vmatprep.subr.bf16.mxu0 %v4752
    %4913 = vmatpush1.bf16.msra.mxu0 %v4751
    %4914 = vmatprep.subr.bf16.mxu0 %v4756
    %4915 = vmatpush1.bf16.msra.mxu0 %v4755
    %4916 = vmatprep.subr.bf16.mxu0 %v4760
    %4917 = vmatpush1.bf16.msra.mxu0 %v4759
    %4918 = vmatprep.subr.bf16.mxu0 %v4764
    %4919 = vmatpush1.bf16.msra.mxu0 %v4763
    %4920 = vmatprep.subr.bf16.mxu0 %v4768
    %4921 = vmatpush1.bf16.msra.mxu0 %v4767
    %4922 = vmatprep.subr.bf16.mxu0 %v4772
    %4923 = vmatpush1.bf16.msra.mxu0 %v4771
    %4924 = vmatprep.subr.bf16.mxu0 %v4776
    %4925 = vmatpush1.bf16.msra.mxu0 %v4775
    %4926 = vmatprep.subr.bf16.mxu0 %v4780
    %4927 = vmatpush1.bf16.msra.mxu0 %v4779
    %4928 = vmatprep.subr.bf16.mxu0 %v4784
    %4929 = vmatpush1.bf16.msra.mxu0 %v4783
    %4930 = vmatprep.subr.bf16.mxu0 %v4788
    %4931 = vmatpush1.bf16.msra.mxu0 %v4787
    %4932 = vmatprep.subr.bf16.mxu0 %v4792
    %4933 = vmatpush1.bf16.msra.mxu0 %v4791
    %4934 = vmatprep.subr.bf16.mxu0 %v4796
    %4935 = vmatpush1.bf16.msra.mxu0 %v4795
    %4936 = vmatprep.subr.bf16.mxu0 %v4800
    %4937 = vmatpush1.bf16.msra.mxu0 %v4799
    %4938 = vmatprep.mubr.bf16.mxu0 %v4218
    %4939 = vmatmul.mubr.bf16.gmra.mrb[0].mxu0 %v4458
    %v4940 = vpop.f32.mrb[0].mxu0
    %v4941 = vadd.f32 %v4536, %v4940
    %v4942 = vpop.f32.mrb[0].mxu0
    %v4943 = vadd.f32 %v4540, %v4942
    %v4944 = vpop.f32.mrb[0].mxu0
    %v4945 = vpop.f32.mrb[0].mxu0
    %4946 = vdwg.mxu0
    %v4947 = vxor.u32 %v4900, 2147483648
    %v4948 = vmul.f32 %v4947, 1.442695
    %v4949 = vpow.pop %v4948
    %v4950 = vadd.f32 %v4949, 1.0
    %v4951 = vrcp.pop %v4950
    %v4952 = vmul.f32 1.0, %v4951
    %v4953 = vxor.u32 %v4902, 2147483648
    %v4954 = vmul.f32 %v4953, 1.442695
    %v4955 = vpow.pop %v4954
    %v4956 = vadd.f32 %v4955, 1.0
    %v4957 = vrcp.pop %v4956
    %v4958 = vmul.f32 1.0, %v4957
    %v4959 = vtanh.pop %v4941
    %v4960 = vxor.u32 %v4943, 2147483648
    %v4961 = vmul.f32 %v4960, 1.442695
    %v4962 = vpow.pop %v4961
    %v4963 = vadd.f32 %v4962, 1.0
    %v4964 = vrcp.pop %v4963
    %v4965 = vmul.f32 1.0, %v4964
    %v4966 = vmul.f32 %v4958, %v4215
    %v4967 = vmul.f32 %v4952, %v4959
    %v4968 = vadd.f32 %v4966, %v4967
    %v4969 = vtanh.pop %v4968
    %v4970 = vmul.f32 %v4965, %v4969
    %v4971 = vpack.c.bf16 %v4970, %v4970
    %v4972 = vld [vmem:[%s8] sm:$0xf]
    %v4973 = vld [vmem:[%s8 + $0x4] sm:$0xf]
    %v4974 = vld [vmem:[%s8 + $0x8] sm:$0xf]
    %v4975 = vld [vmem:[%s8 + $0xc] sm:$0xf]
    %v4976 = vld [vmem:[%s8 + $0x10] sm:$0xf]
    %v4977 = vld [vmem:[%s8 + $0x14] sm:$0xf]
    %v4978 = vld [vmem:[%s8 + $0x18] sm:$0xf]
    %v4979 = vld [vmem:[%s8 + $0x1c] sm:$0xf]
    %v4980 = vld [vmem:[%s8 + $0x20] sm:$0xf]
    %v4981 = vld [vmem:[%s8 + $0x24] sm:$0xf]
    %v4982 = vld [vmem:[%s8 + $0x28] sm:$0xf]
    %v4983 = vld [vmem:[%s8 + $0x2c] sm:$0xf]
    %v4984 = vld [vmem:[%s8 + $0x30] sm:$0xf]
    %v4985 = vld [vmem:[%s8 + $0x34] sm:$0xf]
    %v4986 = vld [vmem:[%s8 + $0x38] sm:$0xf]
    %v4987 = vld [vmem:[%s8 + $0x3c] sm:$0xf]
    %v4988 = vld [vmem:[%s9] sm:$0x1]
    %v4990 = vlaneseq
    %v4991 = vshrl.u32 %v4990, 7
    %v4992 = vsub.s32 0, %v4991
    %v4993 = vrot.slane %v4988, %v4992
    %v5011 = vunpack.c.l.b16 %v4972
    %v5012 = vunpack.c.l.b16 %v4973
    %v5013 = vunpack.c.l.b16 %v4974
    %v5014 = vunpack.c.l.b16 %v4975
    %v5015 = vunpack.c.l.b16 %v4976
    %v5016 = vunpack.c.l.b16 %v4977
    %v5017 = vunpack.c.l.b16 %v4978
    %v5018 = vunpack.c.l.b16 %v4979
    %v5019 = vunpack.c.l.b16 %v4980
    %v5020 = vunpack.c.l.b16 %v4981
    %v5021 = vunpack.c.l.b16 %v4982
    %v5022 = vunpack.c.l.b16 %v4983
    %v5023 = vunpack.c.l.b16 %v4984
    %v5024 = vunpack.c.l.b16 %v4985
    %v5025 = vunpack.c.l.b16 %v4986
    %v5026 = vunpack.c.l.b16 %v4987
    %v5027 = vpack.c.b16 %v5012, %v5011
    %v5028 = vpack.c.b16 %v5014, %v5013
    %v5029 = vpack.c.b16 %v5016, %v5015
    %v5030 = vpack.c.b16 %v5018, %v5017
    %v5031 = vpack.c.b16 %v5020, %v5019
    %v5032 = vpack.c.b16 %v5022, %v5021
    %v5033 = vpack.c.b16 %v5024, %v5023
    %v5034 = vpack.c.b16 %v5026, %v5025
    %5043 = vmatprep.subr.bf16.mxu0 0
    %5044 = vmatpush1.bf16.msra.mxu0 %v5027
    %5045 = vmatprep.subr.bf16.mxu0 0
    %5046 = vmatpush1.bf16.msra.mxu0 %v5028
    %5047 = vmatprep.subr.bf16.mxu0 0
    %5048 = vmatpush1.bf16.msra.mxu0 %v5029
    %5049 = vmatprep.subr.bf16.mxu0 0
    %5050 = vmatpush1.bf16.msra.mxu0 %v5030
    %5051 = vmatprep.subr.bf16.mxu0 0
    %5052 = vmatpush1.bf16.msra.mxu0 %v5031
    %5053 = vmatprep.subr.bf16.mxu0 0
    %5054 = vmatpush1.bf16.msra.mxu0 %v5032
    %5055 = vmatprep.subr.bf16.mxu0 0
    %5056 = vmatpush1.bf16.msra.mxu0 %v5033
    %5057 = vmatprep.subr.bf16.mxu0 0
    %5058 = vmatpush1.bf16.msra.mxu0 %v5034
    %5059 = vmatprep.subr.bf16.mxu0 0
    %5060 = vmatpush1.bf16.msra.mxu0 0
    %5061 = vmatprep.subr.bf16.mxu0 0
    %5062 = vmatpush1.bf16.msra.mxu0 0
    %5063 = vmatprep.subr.bf16.mxu0 0
    %5064 = vmatpush1.bf16.msra.mxu0 0
    %5065 = vmatprep.subr.bf16.mxu0 0
    %5066 = vmatpush1.bf16.msra.mxu0 0
    %5067 = vmatprep.subr.bf16.mxu0 0
    %5068 = vmatpush1.bf16.msra.mxu0 0
    %5069 = vmatprep.subr.bf16.mxu0 0
    %5070 = vmatpush1.bf16.msra.mxu0 0
    %5071 = vmatprep.subr.bf16.mxu0 0
    %5072 = vmatpush1.bf16.msra.mxu0 0
    %5073 = vmatprep.subr.bf16.mxu0 0
    %5074 = vmatpush1.bf16.msra.mxu0 0
    %5075 = vmatprep.mubr.bf16.mxu0 0
    %5076 = vmatmul.mubr.bf16.gmra.mrb[0].mxu0 %v4971
    %v5077 = vpop.f32.mrb[0].mxu0
    %v5078 = vadd.f32 %v4993, %v5077
    %v5079 = vpop.f32.mrb[0].mxu0
    %v5080 = vpop.f32.mrb[0].mxu0
    %v5081 = vpop.f32.mrb[0].mxu0
    %5082 = vdwg.mxu0
    %s5083 = scalar_lea.vmem %s10, 32
    %5084 = vst [vmem:[%s5083] sm:$0xff] %v5078
    %5085 = vmax.xlane.f32.xlu0 %v5078
    %v5086 = vpop.xlane.xlu0 %5085
    %vm5087 = vcmp.eq.f32.partialorder %v5078, %v5086
    %v5088 = vsel %vm5087, %v1327, 128.0
    %5089 = vmin.xlane.f32.xlu0 %v5088
    %v5090 = vpop.xlane.xlu0 %5089
    %v5091 = vcvt.f32.s32.to.zero.pseudo %v5090
    %s5092 = sld [smem:[#allocation2 + $0x5]]
    %p5093 = scmp.gt.s32.totalorder %s5092, 0
    %s5094 = scalar_lea.vmem %s1, 40
    %v5095 = vld [vmem:[%s5094] sm:$0xff]
    %s5096 = scalar_select %p5093, 1, 0
    %v5097 = vstv %s5096
    %vm5098 = vcmp.eq.s32.totalorder %v5097, 1
    %v5099 = vsel %vm5098, %v5095, %v5091
    %5100 = vset.pattern.permute.xlu0 0
    %5101 = vperm.xlu0 %5100, %v5099
    %v5102 = vpop.permute.xlu0 %5101
    %vm5103 = vcmp.eq.s32.totalorder %v1326, %v5102
    %v5104 = vsel %vm5103, 1, 0
    %v5105 = vcvt.s32.f32 %v5104
    %v5106 = vpack.c.bf16 %v5105, %v5105
    %v5107 = vld [vmem:[%s5] sm:$0xf]
    %v5108 = vld [vmem:[%s5 + $0x4] sm:$0xf]
    %v5109 = vld [vmem:[%s5 + $0x8] sm:$0xf]
    %v5110 = vld [vmem:[%s5 + $0xc] sm:$0xf]
    %v5111 = vld [vmem:[%s5 + $0x10] sm:$0xf]
    %v5112 = vld [vmem:[%s5 + $0x14] sm:$0xf]
    %v5113 = vld [vmem:[%s5 + $0x18] sm:$0xf]
    %v5114 = vld [vmem:[%s5 + $0x1c] sm:$0xf]
    %v5115 = vld [vmem:[%s5 + $0x20] sm:$0xf]
    %v5116 = vld [vmem:[%s5 + $0x24] sm:$0xf]
    %v5117 = vld [vmem:[%s5 + $0x28] sm:$0xf]
    %v5118 = vld [vmem:[%s5 + $0x2c] sm:$0xf]
    %v5119 = vld [vmem:[%s5 + $0x30] sm:$0xf]
    %v5120 = vld [vmem:[%s5 + $0x34] sm:$0xf]
    %v5121 = vld [vmem:[%s5 + $0x38] sm:$0xf]
    %v5122 = vld [vmem:[%s5 + $0x3c] sm:$0xf]
    %v5139 = vunpack.c.l.b16 %v5107
    %v5140 = vunpack.c.l.b16 %v5108
    %v5141 = vunpack.c.l.b16 %v5109
    %v5142 = vunpack.c.l.b16 %v5110
    %v5143 = vunpack.c.l.b16 %v5111
    %v5144 = vunpack.c.l.b16 %v5112
    %v5145 = vunpack.c.l.b16 %v5113
    %v5146 = vunpack.c.l.b16 %v5114
    %v5147 = vunpack.c.l.b16 %v5115
    %v5148 = vunpack.c.l.b16 %v5116
    %v5149 = vunpack.c.l.b16 %v5117
    %v5150 = vunpack.c.l.b16 %v5118
    %v5151 = vunpack.c.l.b16 %v5119
    %v5152 = vunpack.c.l.b16 %v5120
    %v5153 = vunpack.c.l.b16 %v5121
    %v5154 = vunpack.c.l.b16 %v5122
    %v5155 = vpack.c.b16 %v5140, %v5139
    %v5156 = vpack.c.b16 %v5142, %v5141
    %v5157 = vpack.c.b16 %v5144, %v5143
    %v5158 = vpack.c.b16 %v5146, %v5145
    %v5159 = vpack.c.b16 %v5148, %v5147
    %v5160 = vpack.c.b16 %v5150, %v5149
    %v5161 = vpack.c.b16 %v5152, %v5151
    %v5162 = vpack.c.b16 %v5154, %v5153
    %5171 = vmatprep.subr.bf16.mxu0 0
    %5172 = vmatpush1.bf16.msra.mxu0 %v5155
    %5173 = vmatprep.subr.bf16.mxu0 0
    %5174 = vmatpush1.bf16.msra.mxu0 %v5156
    %5175 = vmatprep.subr.bf16.mxu0 0
    %5176 = vmatpush1.bf16.msra.mxu0 %v5157
    %5177 = vmatprep.subr.bf16.mxu0 0
    %5178 = vmatpush1.bf16.msra.mxu0 %v5158
    %5179 = vmatprep.subr.bf16.mxu0 0
    %5180 = vmatpush1.bf16.msra.mxu0 %v5159
    %5181 = vmatprep.subr.bf16.mxu0 0
    %5182 = vmatpush1.bf16.msra.mxu0 %v5160
    %5183 = vmatprep.subr.bf16.mxu0 0
    %5184 = vmatpush1.bf16.msra.mxu0 %v5161
    %5185 = vmatprep.subr.bf16.mxu0 0
    %5186 = vmatpush1.bf16.msra.mxu0 %v5162
    %5187 = vmatprep.subr.bf16.mxu0 0
    %5188 = vmatpush1.bf16.msra.mxu0 0
    %5189 = vmatprep.subr.bf16.mxu0 0
    %5190 = vmatpush1.bf16.msra.mxu0 0
    %5191 = vmatprep.subr.bf16.mxu0 0
    %5192 = vmatpush1.bf16.msra.mxu0 0
    %5193 = vmatprep.subr.bf16.mxu0 0
    %5194 = vmatpush1.bf16.msra.mxu0 0
    %5195 = vmatprep.subr.bf16.mxu0 0
    %5196 = vmatpush1.bf16.msra.mxu0 0
    %5197 = vmatprep.subr.bf16.mxu0 0
    %5198 = vmatpush1.bf16.msra.mxu0 0
    %5199 = vmatprep.subr.bf16.mxu0 0
    %5200 = vmatpush1.bf16.msra.mxu0 0
    %5201 = vmatprep.subr.bf16.mxu0 0
    %5202 = vmatpush1.bf16.msra.mxu0 0
    %5203 = vmatprep.mubr.bf16.mxu0 0
    %5204 = vmatmul.mubr.bf16.gmra.mrb[0].mxu0 %v5106
    %v5205 = vpop.f32.mrb[0].mxu0
    %v5206 = vadd.f32 0.0, %v5205
    %v5207 = vpop.f32.mrb[0].mxu0
    %v5208 = vpop.f32.mrb[0].mxu0
    %v5209 = vpop.f32.mrb[0].mxu0
    %5210 = vdwg.mxu0
    %v5211 = vpack.c.bf16 %v5206, %v5206
    %v5212 = vld [vmem:[%s6] sm:$0xff]
    %v5213 = vld [vmem:[%s6 + $0x8] sm:$0xff]
    %v5214 = vld [vmem:[%s6 + $0x10] sm:$0xff]
    %v5215 = vld [vmem:[%s6 + $0x18] sm:$0xff]
    %v5216 = vld [vmem:[%s6 + $0x20] sm:$0xff]
    %v5217 = vld [vmem:[%s6 + $0x28] sm:$0xff]
    %v5218 = vld [vmem:[%s6 + $0x30] sm:$0xff]
    %v5219 = vld [vmem:[%s6 + $0x38] sm:$0xff]
    %v5220 = vld [vmem:[%s6 + $0x40] sm:$0xff]
    %v5221 = vld [vmem:[%s6 + $0x48] sm:$0xff]
    %v5222 = vld [vmem:[%s6 + $0x50] sm:$0xff]
    %v5223 = vld [vmem:[%s6 + $0x58] sm:$0xff]
    %v5224 = vld [vmem:[%s6 + $0x60] sm:$0xff]
    %v5225 = vld [vmem:[%s6 + $0x68] sm:$0xff]
    %v5226 = vld [vmem:[%s6 + $0x70] sm:$0xff]
    %v5227 = vld [vmem:[%s6 + $0x78] sm:$0xff]
    %v5228 = vld [vmem:[%s6 + $0x80] sm:$0xff]
    %v5229 = vld [vmem:[%s6 + $0x88] sm:$0xff]
    %v5230 = vld [vmem:[%s6 + $0x90] sm:$0xff]
    %v5231 = vld [vmem:[%s6 + $0x98] sm:$0xff]
    %v5232 = vld [vmem:[%s6 + $0xa0] sm:$0xff]
    %v5233 = vld [vmem:[%s6 + $0xa8] sm:$0xff]
    %v5234 = vld [vmem:[%s6 + $0xb0] sm:$0xff]
    %v5235 = vld [vmem:[%s6 + $0xb8] sm:$0xff]
    %v5236 = vld [vmem:[%s6 + $0xc0] sm:$0xff]
    %v5237 = vld [vmem:[%s6 + $0xc8] sm:$0xff]
    %v5238 = vld [vmem:[%s6 + $0xd0] sm:$0xff]
    %v5239 = vld [vmem:[%s6 + $0xd8] sm:$0xff]
    %v5240 = vld [vmem:[%s6 + $0xe0] sm:$0xff]
    %v5241 = vld [vmem:[%s6 + $0xe8] sm:$0xff]
    %v5242 = vld [vmem:[%s6 + $0xf0] sm:$0xff]
    %v5243 = vld [vmem:[%s6 + $0xf8] sm:$0xff]
    %v5244 = vld [vmem:[%s6 + $0x100] sm:$0xff]
    %v5245 = vld [vmem:[%s6 + $0x108] sm:$0xff]
    %v5246 = vld [vmem:[%s6 + $0x110] sm:$0xff]
    %v5247 = vld [vmem:[%s6 + $0x118] sm:$0xff]
    %v5248 = vld [vmem:[%s6 + $0x120] sm:$0xff]
    %v5249 = vld [vmem:[%s6 + $0x128] sm:$0xff]
    %v5250 = vld [vmem:[%s6 + $0x130] sm:$0xff]
    %v5251 = vld [vmem:[%s6 + $0x138] sm:$0xff]
    %v5252 = vld [vmem:[%s6 + $0x140] sm:$0xff]
    %v5253 = vld [vmem:[%s6 + $0x148] sm:$0xff]
    %v5254 = vld [vmem:[%s6 + $0x150] sm:$0xff]
    %v5255 = vld [vmem:[%s6 + $0x158] sm:$0xff]
    %v5256 = vld [vmem:[%s6 + $0x160] sm:$0xff]
    %v5257 = vld [vmem:[%s6 + $0x168] sm:$0xff]
    %v5258 = vld [vmem:[%s6 + $0x170] sm:$0xff]
    %v5259 = vld [vmem:[%s6 + $0x178] sm:$0xff]
    %v5260 = vld [vmem:[%s6 + $0x180] sm:$0xff]
    %v5261 = vld [vmem:[%s6 + $0x188] sm:$0xff]
    %v5262 = vld [vmem:[%s6 + $0x190] sm:$0xff]
    %v5263 = vld [vmem:[%s6 + $0x198] sm:$0xff]
    %v5264 = vld [vmem:[%s6 + $0x1a0] sm:$0xff]
    %v5265 = vld [vmem:[%s6 + $0x1a8] sm:$0xff]
    %v5266 = vld [vmem:[%s6 + $0x1b0] sm:$0xff]
    %v5267 = vld [vmem:[%s6 + $0x1b8] sm:$0xff]
    %v5268 = vld [vmem:[%s6 + $0x1c0] sm:$0xff]
    %v5269 = vld [vmem:[%s6 + $0x1c8] sm:$0xff]
    %v5270 = vld [vmem:[%s6 + $0x1d0] sm:$0xff]
    %v5271 = vld [vmem:[%s6 + $0x1d8] sm:$0xff]
    %v5272 = vld [vmem:[%s6 + $0x1e0] sm:$0xff]
    %v5273 = vld [vmem:[%s6 + $0x1e8] sm:$0xff]
    %v5274 = vld [vmem:[%s6 + $0x1f0] sm:$0xff]
    %v5275 = vld [vmem:[%s6 + $0x1f8] sm:$0xff]
    %v5276 = vld [vmem:[%s7] sm:$0xf]
    %v5278 = vlaneseq
    %v5279 = vshrl.u32 %v5278, 7
    %v5280 = vsub.s32 0, %v5279
    %v5281 = vrot.slane %v5276, %v5280
    %v5282 = vlaneseq
    %v5283 = vshrl.u32 %v5282, 7
    %v5284 = vsub.s32 1, %v5283
    %v5285 = vrot.slane %v5276, %v5284
    %v5286 = vlaneseq
    %v5287 = vshrl.u32 %v5286, 7
    %v5288 = vsub.s32 2, %v5287
    %v5289 = vrot.slane %v5276, %v5288
    %v5290 = vlaneseq
    %v5291 = vshrl.u32 %v5290, 7
    %v5292 = vsub.s32 3, %v5291
    %v5293 = vrot.slane %v5276, %v5292
    %v5362 = vunpack.c.l.b16 %v5212
    %v5363 = vunpack.c.h.b16 %v5212
    %v5364 = vunpack.c.l.b16 %v5213
    %v5365 = vunpack.c.h.b16 %v5213
    %v5366 = vunpack.c.l.b16 %v5214
    %v5367 = vunpack.c.h.b16 %v5214
    %v5368 = vunpack.c.l.b16 %v5215
    %v5369 = vunpack.c.h.b16 %v5215
    %v5370 = vunpack.c.l.b16 %v5216
    %v5371 = vunpack.c.h.b16 %v5216
    %v5372 = vunpack.c.l.b16 %v5217
    %v5373 = vunpack.c.h.b16 %v5217
    %v5374 = vunpack.c.l.b16 %v5218
    %v5375 = vunpack.c.h.b16 %v5218
    %v5376 = vunpack.c.l.b16 %v5219
    %v5377 = vunpack.c.h.b16 %v5219
    %v5378 = vunpack.c.l.b16 %v5220
    %v5379 = vunpack.c.h.b16 %v5220
    %v5380 = vunpack.c.l.b16 %v5221
    %v5381 = vunpack.c.h.b16 %v5221
    %v5382 = vunpack.c.l.b16 %v5222
    %v5383 = vunpack.c.h.b16 %v5222
    %v5384 = vunpack.c.l.b16 %v5223
    %v5385 = vunpack.c.h.b16 %v5223
    %v5386 = vunpack.c.l.b16 %v5224
    %v5387 = vunpack.c.h.b16 %v5224
    %v5388 = vunpack.c.l.b16 %v5225
    %v5389 = vunpack.c.h.b16 %v5225
    %v5390 = vunpack.c.l.b16 %v5226
    %v5391 = vunpack.c.h.b16 %v5226
    %v5392 = vunpack.c.l.b16 %v5227
    %v5393 = vunpack.c.h.b16 %v5227
    %v5394 = vunpack.c.l.b16 %v5228
    %v5395 = vunpack.c.h.b16 %v5228
    %v5396 = vunpack.c.l.b16 %v5229
    %v5397 = vunpack.c.h.b16 %v5229
    %v5398 = vunpack.c.l.b16 %v5230
    %v5399 = vunpack.c.h.b16 %v5230
    %v5400 = vunpack.c.l.b16 %v5231
    %v5401 = vunpack.c.h.b16 %v5231
    %v5402 = vunpack.c.l.b16 %v5232
    %v5403 = vunpack.c.h.b16 %v5232
    %v5404 = vunpack.c.l.b16 %v5233
    %v5405 = vunpack.c.h.b16 %v5233
    %v5406 = vunpack.c.l.b16 %v5234
    %v5407 = vunpack.c.h.b16 %v5234
    %v5408 = vunpack.c.l.b16 %v5235
    %v5409 = vunpack.c.h.b16 %v5235
    %v5410 = vunpack.c.l.b16 %v5236
    %v5411 = vunpack.c.h.b16 %v5236
    %v5412 = vunpack.c.l.b16 %v5237
    %v5413 = vunpack.c.h.b16 %v5237
    %v5414 = vunpack.c.l.b16 %v5238
    %v5415 = vunpack.c.h.b16 %v5238
    %v5416 = vunpack.c.l.b16 %v5239
    %v5417 = vunpack.c.h.b16 %v5239
    %v5418 = vunpack.c.l.b16 %v5240
    %v5419 = vunpack.c.h.b16 %v5240
    %v5420 = vunpack.c.l.b16 %v5241
    %v5421 = vunpack.c.h.b16 %v5241
    %v5422 = vunpack.c.l.b16 %v5242
    %v5423 = vunpack.c.h.b16 %v5242
    %v5424 = vunpack.c.l.b16 %v5243
    %v5425 = vunpack.c.h.b16 %v5243
    %v5426 = vunpack.c.l.b16 %v5244
    %v5427 = vunpack.c.h.b16 %v5244
    %v5428 = vunpack.c.l.b16 %v5245
    %v5429 = vunpack.c.h.b16 %v5245
    %v5430 = vunpack.c.l.b16 %v5246
    %v5431 = vunpack.c.h.b16 %v5246
    %v5432 = vunpack.c.l.b16 %v5247
    %v5433 = vunpack.c.h.b16 %v5247
    %v5434 = vunpack.c.l.b16 %v5248
    %v5435 = vunpack.c.h.b16 %v5248
    %v5436 = vunpack.c.l.b16 %v5249
    %v5437 = vunpack.c.h.b16 %v5249
    %v5438 = vunpack.c.l.b16 %v5250
    %v5439 = vunpack.c.h.b16 %v5250
    %v5440 = vunpack.c.l.b16 %v5251
    %v5441 = vunpack.c.h.b16 %v5251
    %v5442 = vunpack.c.l.b16 %v5252
    %v5443 = vunpack.c.h.b16 %v5252
    %v5444 = vunpack.c.l.b16 %v5253
    %v5445 = vunpack.c.h.b16 %v5253
    %v5446 = vunpack.c.l.b16 %v5254
    %v5447 = vunpack.c.h.b16 %v5254
    %v5448 = vunpack.c.l.b16 %v5255
    %v5449 = vunpack.c.h.b16 %v5255
    %v5450 = vunpack.c.l.b16 %v5256
    %v5451 = vunpack.c.h.b16 %v5256
    %v5452 = vunpack.c.l.b16 %v5257
    %v5453 = vunpack.c.h.b16 %v5257
    %v5454 = vunpack.c.l.b16 %v5258
    %v5455 = vunpack.c.h.b16 %v5258
    %v5456 = vunpack.c.l.b16 %v5259
    %v5457 = vunpack.c.h.b16 %v5259
    %v5458 = vunpack.c.l.b16 %v5260
    %v5459 = vunpack.c.h.b16 %v5260
    %v5460 = vunpack.c.l.b16 %v5261
    %v5461 = vunpack.c.h.b16 %v5261
    %v5462 = vunpack.c.l.b16 %v5262
    %v5463 = vunpack.c.h.b16 %v5262
    %v5464 = vunpack.c.l.b16 %v5263
    %v5465 = vunpack.c.h.b16 %v5263
    %v5466 = vunpack.c.l.b16 %v5264
    %v5467 = vunpack.c.h.b16 %v5264
    %v5468 = vunpack.c.l.b16 %v5265
    %v5469 = vunpack.c.h.b16 %v5265
    %v5470 = vunpack.c.l.b16 %v5266
    %v5471 = vunpack.c.h.b16 %v5266
    %v5472 = vunpack.c.l.b16 %v5267
    %v5473 = vunpack.c.h.b16 %v5267
    %v5474 = vunpack.c.l.b16 %v5268
    %v5475 = vunpack.c.h.b16 %v5268
    %v5476 = vunpack.c.l.b16 %v5269
    %v5477 = vunpack.c.h.b16 %v5269
    %v5478 = vunpack.c.l.b16 %v5270
    %v5479 = vunpack.c.h.b16 %v5270
    %v5480 = vunpack.c.l.b16 %v5271
    %v5481 = vunpack.c.h.b16 %v5271
    %v5482 = vunpack.c.l.b16 %v5272
    %v5483 = vunpack.c.h.b16 %v5272
    %v5484 = vunpack.c.l.b16 %v5273
    %v5485 = vunpack.c.h.b16 %v5273
    %v5486 = vunpack.c.l.b16 %v5274
    %v5487 = vunpack.c.h.b16 %v5274
    %v5488 = vunpack.c.l.b16 %v5275
    %v5489 = vunpack.c.h.b16 %v5275
    %v5490 = vpack.c.b16 %v5366, %v5362
    %v5491 = vpack.c.b16 %v5367, %v5363
    %v5492 = vpack.c.b16 %v5368, %v5364
    %v5493 = vpack.c.b16 %v5369, %v5365
    %v5494 = vpack.c.b16 %v5374, %v5370
    %v5495 = vpack.c.b16 %v5375, %v5371
    %v5496 = vpack.c.b16 %v5376, %v5372
    %v5497 = vpack.c.b16 %v5377, %v5373
    %v5498 = vpack.c.b16 %v5382, %v5378
    %v5499 = vpack.c.b16 %v5383, %v5379
    %v5500 = vpack.c.b16 %v5384, %v5380
    %v5501 = vpack.c.b16 %v5385, %v5381
    %v5502 = vpack.c.b16 %v5390, %v5386
    %v5503 = vpack.c.b16 %v5391, %v5387
    %v5504 = vpack.c.b16 %v5392, %v5388
    %v5505 = vpack.c.b16 %v5393, %v5389
    %v5506 = vpack.c.b16 %v5398, %v5394
    %v5507 = vpack.c.b16 %v5399, %v5395
    %v5508 = vpack.c.b16 %v5400, %v5396
    %v5509 = vpack.c.b16 %v5401, %v5397
    %v5510 = vpack.c.b16 %v5406, %v5402
    %v5511 = vpack.c.b16 %v5407, %v5403
    %v5512 = vpack.c.b16 %v5408, %v5404
    %v5513 = vpack.c.b16 %v5409, %v5405
    %v5514 = vpack.c.b16 %v5414, %v5410
    %v5515 = vpack.c.b16 %v5415, %v5411
    %v5516 = vpack.c.b16 %v5416, %v5412
    %v5517 = vpack.c.b16 %v5417, %v5413
    %v5518 = vpack.c.b16 %v5422, %v5418
    %v5519 = vpack.c.b16 %v5423, %v5419
    %v5520 = vpack.c.b16 %v5424, %v5420
    %v5521 = vpack.c.b16 %v5425, %v5421
    %v5522 = vpack.c.b16 %v5430, %v5426
    %v5523 = vpack.c.b16 %v5431, %v5427
    %v5524 = vpack.c.b16 %v5432, %v5428
    %v5525 = vpack.c.b16 %v5433, %v5429
    %v5526 = vpack.c.b16 %v5438, %v5434
    %v5527 = vpack.c.b16 %v5439, %v5435
    %v5528 = vpack.c.b16 %v5440, %v5436
    %v5529 = vpack.c.b16 %v5441, %v5437
    %v5530 = vpack.c.b16 %v5446, %v5442
    %v5531 = vpack.c.b16 %v5447, %v5443
    %v5532 = vpack.c.b16 %v5448, %v5444
    %v5533 = vpack.c.b16 %v5449, %v5445
    %v5534 = vpack.c.b16 %v5454, %v5450
    %v5535 = vpack.c.b16 %v5455, %v5451
    %v5536 = vpack.c.b16 %v5456, %v5452
    %v5537 = vpack.c.b16 %v5457, %v5453
    %v5538 = vpack.c.b16 %v5462, %v5458
    %v5539 = vpack.c.b16 %v5463, %v5459
    %v5540 = vpack.c.b16 %v5464, %v5460
    %v5541 = vpack.c.b16 %v5465, %v5461
    %v5542 = vpack.c.b16 %v5470, %v5466
    %v5543 = vpack.c.b16 %v5471, %v5467
    %v5544 = vpack.c.b16 %v5472, %v5468
    %v5545 = vpack.c.b16 %v5473, %v5469
    %v5546 = vpack.c.b16 %v5478, %v5474
    %v5547 = vpack.c.b16 %v5479, %v5475
    %v5548 = vpack.c.b16 %v5480, %v5476
    %v5549 = vpack.c.b16 %v5481, %v5477
    %v5550 = vpack.c.b16 %v5486, %v5482
    %v5551 = vpack.c.b16 %v5487, %v5483
    %v5552 = vpack.c.b16 %v5488, %v5484
    %v5553 = vpack.c.b16 %v5489, %v5485
    %5618 = vmatprep.subr.bf16.mxu0 %v5491
    %5619 = vmatpush1.bf16.msra.mxu0 %v5490
    %5620 = vmatprep.subr.bf16.mxu0 %v5495
    %5621 = vmatpush1.bf16.msra.mxu0 %v5494
    %5622 = vmatprep.subr.bf16.mxu0 %v5499
    %5623 = vmatpush1.bf16.msra.mxu0 %v5498
    %5624 = vmatprep.subr.bf16.mxu0 %v5503
    %5625 = vmatpush1.bf16.msra.mxu0 %v5502
    %5626 = vmatprep.subr.bf16.mxu0 %v5507
    %5627 = vmatpush1.bf16.msra.mxu0 %v5506
    %5628 = vmatprep.subr.bf16.mxu0 %v5511
    %5629 = vmatpush1.bf16.msra.mxu0 %v5510
    %5630 = vmatprep.subr.bf16.mxu0 %v5515
    %5631 = vmatpush1.bf16.msra.mxu0 %v5514
    %5632 = vmatprep.subr.bf16.mxu0 %v5519
    %5633 = vmatpush1.bf16.msra.mxu0 %v5518
    %5634 = vmatprep.subr.bf16.mxu0 %v5523
    %5635 = vmatpush1.bf16.msra.mxu0 %v5522
    %5636 = vmatprep.subr.bf16.mxu0 %v5527
    %5637 = vmatpush1.bf16.msra.mxu0 %v5526
    %5638 = vmatprep.subr.bf16.mxu0 %v5531
    %5639 = vmatpush1.bf16.msra.mxu0 %v5530
    %5640 = vmatprep.subr.bf16.mxu0 %v5535
    %5641 = vmatpush1.bf16.msra.mxu0 %v5534
    %5642 = vmatprep.subr.bf16.mxu0 %v5539
    %5643 = vmatpush1.bf16.msra.mxu0 %v5538
    %5644 = vmatprep.subr.bf16.mxu0 %v5543
    %5645 = vmatpush1.bf16.msra.mxu0 %v5542
    %5646 = vmatprep.subr.bf16.mxu0 %v5547
    %5647 = vmatpush1.bf16.msra.mxu0 %v5546
    %5648 = vmatprep.subr.bf16.mxu0 %v5551
    %5649 = vmatpush1.bf16.msra.mxu0 %v5550
    %5650 = vmatprep.mubr.bf16.mxu0 %v4971
    %5651 = vmatmul.mubr.bf16.gmra.mrb[0].mxu0 %v5211
    %v5652 = vpop.f32.mrb[0].mxu0
    %v5653 = vadd.f32 %v5281, %v5652
    %v5654 = vpop.f32.mrb[0].mxu0
    %v5655 = vadd.f32 %v5285, %v5654
    %v5656 = vpop.f32.mrb[0].mxu0
    %v5657 = vpop.f32.mrb[0].mxu0
    %5658 = vdwg.mxu0
    %5659 = vmatprep.subr.bf16.mxu0 %v5493
    %5660 = vmatpush1.bf16.msra.mxu0 %v5492
    %5661 = vmatprep.subr.bf16.mxu0 %v5497
    %5662 = vmatpush1.bf16.msra.mxu0 %v5496
    %5663 = vmatprep.subr.bf16.mxu0 %v5501
    %5664 = vmatpush1.bf16.msra.mxu0 %v5500
    %5665 = vmatprep.subr.bf16.mxu0 %v5505
    %5666 = vmatpush1.bf16.msra.mxu0 %v5504
    %5667 = vmatprep.subr.bf16.mxu0 %v5509
    %5668 = vmatpush1.bf16.msra.mxu0 %v5508
    %5669 = vmatprep.subr.bf16.mxu0 %v5513
    %5670 = vmatpush1.bf16.msra.mxu0 %v5512
    %5671 = vmatprep.subr.bf16.mxu0 %v5517
    %5672 = vmatpush1.bf16.msra.mxu0 %v5516
    %5673 = vmatprep.subr.bf16.mxu0 %v5521
    %5674 = vmatpush1.bf16.msra.mxu0 %v5520
    %5675 = vmatprep.subr.bf16.mxu0 %v5525
    %5676 = vmatpush1.bf16.msra.mxu0 %v5524
    %5677 = vmatprep.subr.bf16.mxu0 %v5529
    %5678 = vmatpush1.bf16.msra.mxu0 %v5528
    %5679 = vmatprep.subr.bf16.mxu0 %v5533
    %5680 = vmatpush1.bf16.msra.mxu0 %v5532
    %5681 = vmatprep.subr.bf16.mxu0 %v5537
    %5682 = vmatpush1.bf16.msra.mxu0 %v5536
    %5683 = vmatprep.subr.bf16.mxu0 %v5541
    %5684 = vmatpush1.bf16.msra.mxu0 %v5540
    %5685 = vmatprep.subr.bf16.mxu0 %v5545
    %5686 = vmatpush1.bf16.msra.mxu0 %v5544
    %5687 = vmatprep.subr.bf16.mxu0 %v5549
    %5688 = vmatpush1.bf16.msra.mxu0 %v5548
    %5689 = vmatprep.subr.bf16.mxu0 %v5553
    %5690 = vmatpush1.bf16.msra.mxu0 %v5552
    %5691 = vmatprep.mubr.bf16.mxu0 %v4971
    %5692 = vmatmul.mubr.bf16.gmra.mrb[0].mxu0 %v5211
    %v5693 = vpop.f32.mrb[0].mxu0
    %v5694 = vadd.f32 %v5289, %v5693
    %v5695 = vpop.f32.mrb[0].mxu0
    %v5696 = vadd.f32 %v5293, %v5695
    %v5697 = vpop.f32.mrb[0].mxu0
    %v5698 = vpop.f32.mrb[0].mxu0
    %5699 = vdwg.mxu0
    %v5700 = vxor.u32 %v5653, 2147483648
    %v5701 = vmul.f32 %v5700, 1.442695
    %v5702 = vpow.pop %v5701
    %v5703 = vadd.f32 %v5702, 1.0
    %v5704 = vrcp.pop %v5703
    %v5705 = vmul.f32 1.0, %v5704
    %v5706 = vxor.u32 %v5655, 2147483648
    %v5707 = vmul.f32 %v5706, 1.442695
    %v5708 = vpow.pop %v5707
    %v5709 = vadd.f32 %v5708, 1.0
    %v5710 = vrcp.pop %v5709
    %v5711 = vmul.f32 1.0, %v5710
    %v5712 = vtanh.pop %v5694
    %v5713 = vxor.u32 %v5696, 2147483648
    %v5714 = vmul.f32 %v5713, 1.442695
    %v5715 = vpow.pop %v5714
    %v5716 = vadd.f32 %v5715, 1.0
    %v5717 = vrcp.pop %v5716
    %v5718 = vmul.f32 1.0, %v5717
    %v5719 = vmul.f32 %v5711, %v4968
    %v5720 = vmul.f32 %v5705, %v5712
    %v5721 = vadd.f32 %v5719, %v5720
    %v5722 = vtanh.pop %v5721
    %v5723 = vmul.f32 %v5718, %v5722
    %v5724 = vpack.c.bf16 %v5723, %v5723
    %v5725 = vld [vmem:[%s8] sm:$0xf]
    %v5726 = vld [vmem:[%s8 + $0x4] sm:$0xf]
    %v5727 = vld [vmem:[%s8 + $0x8] sm:$0xf]
    %v5728 = vld [vmem:[%s8 + $0xc] sm:$0xf]
    %v5729 = vld [vmem:[%s8 + $0x10] sm:$0xf]
    %v5730 = vld [vmem:[%s8 + $0x14] sm:$0xf]
    %v5731 = vld [vmem:[%s8 + $0x18] sm:$0xf]
    %v5732 = vld [vmem:[%s8 + $0x1c] sm:$0xf]
    %v5733 = vld [vmem:[%s8 + $0x20] sm:$0xf]
    %v5734 = vld [vmem:[%s8 + $0x24] sm:$0xf]
    %v5735 = vld [vmem:[%s8 + $0x28] sm:$0xf]
    %v5736 = vld [vmem:[%s8 + $0x2c] sm:$0xf]
    %v5737 = vld [vmem:[%s8 + $0x30] sm:$0xf]
    %v5738 = vld [vmem:[%s8 + $0x34] sm:$0xf]
    %v5739 = vld [vmem:[%s8 + $0x38] sm:$0xf]
    %v5740 = vld [vmem:[%s8 + $0x3c] sm:$0xf]
    %v5741 = vld [vmem:[%s9] sm:$0x1]
    %v5743 = vlaneseq
    %v5744 = vshrl.u32 %v5743, 7
    %v5745 = vsub.s32 0, %v5744
    %v5746 = vrot.slane %v5741, %v5745
    %v5764 = vunpack.c.l.b16 %v5725
    %v5765 = vunpack.c.l.b16 %v5726
    %v5766 = vunpack.c.l.b16 %v5727
    %v5767 = vunpack.c.l.b16 %v5728
    %v5768 = vunpack.c.l.b16 %v5729
    %v5769 = vunpack.c.l.b16 %v5730
    %v5770 = vunpack.c.l.b16 %v5731
    %v5771 = vunpack.c.l.b16 %v5732
    %v5772 = vunpack.c.l.b16 %v5733
    %v5773 = vunpack.c.l.b16 %v5734
    %v5774 = vunpack.c.l.b16 %v5735
    %v5775 = vunpack.c.l.b16 %v5736
    %v5776 = vunpack.c.l.b16 %v5737
    %v5777 = vunpack.c.l.b16 %v5738
    %v5778 = vunpack.c.l.b16 %v5739
    %v5779 = vunpack.c.l.b16 %v5740
    %v5780 = vpack.c.b16 %v5765, %v5764
    %v5781 = vpack.c.b16 %v5767, %v5766
    %v5782 = vpack.c.b16 %v5769, %v5768
    %v5783 = vpack.c.b16 %v5771, %v5770
    %v5784 = vpack.c.b16 %v5773, %v5772
    %v5785 = vpack.c.b16 %v5775, %v5774
    %v5786 = vpack.c.b16 %v5777, %v5776
    %v5787 = vpack.c.b16 %v5779, %v5778
    %5796 = vmatprep.subr.bf16.mxu0 0
    %5797 = vmatpush1.bf16.msra.mxu0 %v5780
    %5798 = vmatprep.subr.bf16.mxu0 0
    %5799 = vmatpush1.bf16.msra.mxu0 %v5781
    %5800 = vmatprep.subr.bf16.mxu0 0
    %5801 = vmatpush1.bf16.msra.mxu0 %v5782
    %5802 = vmatprep.subr.bf16.mxu0 0
    %5803 = vmatpush1.bf16.msra.mxu0 %v5783
    %5804 = vmatprep.subr.bf16.mxu0 0
    %5805 = vmatpush1.bf16.msra.mxu0 %v5784
    %5806 = vmatprep.subr.bf16.mxu0 0
    %5807 = vmatpush1.bf16.msra.mxu0 %v5785
    %5808 = vmatprep.subr.bf16.mxu0 0
    %5809 = vmatpush1.bf16.msra.mxu0 %v5786
    %5810 = vmatprep.subr.bf16.mxu0 0
    %5811 = vmatpush1.bf16.msra.mxu0 %v5787
    %5812 = vmatprep.subr.bf16.mxu0 0
    %5813 = vmatpush1.bf16.msra.mxu0 0
    %5814 = vmatprep.subr.bf16.mxu0 0
    %5815 = vmatpush1.bf16.msra.mxu0 0
    %5816 = vmatprep.subr.bf16.mxu0 0
    %5817 = vmatpush1.bf16.msra.mxu0 0
    %5818 = vmatprep.subr.bf16.mxu0 0
    %5819 = vmatpush1.bf16.msra.mxu0 0
    %5820 = vmatprep.subr.bf16.mxu0 0
    %5821 = vmatpush1.bf16.msra.mxu0 0
    %5822 = vmatprep.subr.bf16.mxu0 0
    %5823 = vmatpush1.bf16.msra.mxu0 0
    %5824 = vmatprep.subr.bf16.mxu0 0
    %5825 = vmatpush1.bf16.msra.mxu0 0
    %5826 = vmatprep.subr.bf16.mxu0 0
    %5827 = vmatpush1.bf16.msra.mxu0 0
    %5828 = vmatprep.mubr.bf16.mxu0 0
    %5829 = vmatmul.mubr.bf16.gmra.mrb[0].mxu0 %v5724
    %v5830 = vpop.f32.mrb[0].mxu0
    %v5831 = vadd.f32 %v5746, %v5830
    %v5832 = vpop.f32.mrb[0].mxu0
    %v5833 = vpop.f32.mrb[0].mxu0
    %v5834 = vpop.f32.mrb[0].mxu0
    %5835 = vdwg.mxu0
    %s5836 = scalar_lea.vmem %s10, 40
    %5837 = vst [vmem:[%s5836] sm:$0xff] %v5831
    %5838 = vmax.xlane.f32.xlu0 %v5831
    %v5839 = vpop.xlane.xlu0 %5838
    %vm5840 = vcmp.eq.f32.partialorder %v5831, %v5839
    %v5841 = vsel %vm5840, %v1327, 128.0
    %5842 = vmin.xlane.f32.xlu0 %v5841
    %v5843 = vpop.xlane.xlu0 %5842
    %v5844 = vcvt.f32.s32.to.zero.pseudo %v5843
    %s5845 = sld [smem:[#allocation2 + $0x6]]
    %p5846 = scmp.gt.s32.totalorder %s5845, 0
    %s5847 = scalar_lea.vmem %s1, 48
    %v5848 = vld [vmem:[%s5847] sm:$0xff]
    %s5849 = scalar_select %p5846, 1, 0
    %v5850 = vstv %s5849
    %vm5851 = vcmp.eq.s32.totalorder %v5850, 1
    %v5852 = vsel %vm5851, %v5848, %v5844
    %5853 = vset.pattern.permute.xlu0 0
    %5854 = vperm.xlu0 %5853, %v5852
    %v5855 = vpop.permute.xlu0 %5854
    %vm5856 = vcmp.eq.s32.totalorder %v1326, %v5855
    %v5857 = vsel %vm5856, 1, 0
    %v5858 = vcvt.s32.f32 %v5857
    %v5859 = vpack.c.bf16 %v5858, %v5858
    %v5860 = vld [vmem:[%s5] sm:$0xf]
    %v5861 = vld [vmem:[%s5 + $0x4] sm:$0xf]
    %v5862 = vld [vmem:[%s5 + $0x8] sm:$0xf]
    %v5863 = vld [vmem:[%s5 + $0xc] sm:$0xf]
    %v5864 = vld [vmem:[%s5 + $0x10] sm:$0xf]
    %v5865 = vld [vmem:[%s5 + $0x14] sm:$0xf]
    %v5866 = vld [vmem:[%s5 + $0x18] sm:$0xf]
    %v5867 = vld [vmem:[%s5 + $0x1c] sm:$0xf]
    %v5868 = vld [vmem:[%s5 + $0x20] sm:$0xf]
    %v5869 = vld [vmem:[%s5 + $0x24] sm:$0xf]
    %v5870 = vld [vmem:[%s5 + $0x28] sm:$0xf]
    %v5871 = vld [vmem:[%s5 + $0x2c] sm:$0xf]
    %v5872 = vld [vmem:[%s5 + $0x30] sm:$0xf]
    %v5873 = vld [vmem:[%s5 + $0x34] sm:$0xf]
    %v5874 = vld [vmem:[%s5 + $0x38] sm:$0xf]
    %v5875 = vld [vmem:[%s5 + $0x3c] sm:$0xf]
    %v5892 = vunpack.c.l.b16 %v5860
    %v5893 = vunpack.c.l.b16 %v5861
    %v5894 = vunpack.c.l.b16 %v5862
    %v5895 = vunpack.c.l.b16 %v5863
    %v5896 = vunpack.c.l.b16 %v5864
    %v5897 = vunpack.c.l.b16 %v5865
    %v5898 = vunpack.c.l.b16 %v5866
    %v5899 = vunpack.c.l.b16 %v5867
    %v5900 = vunpack.c.l.b16 %v5868
    %v5901 = vunpack.c.l.b16 %v5869
    %v5902 = vunpack.c.l.b16 %v5870
    %v5903 = vunpack.c.l.b16 %v5871
    %v5904 = vunpack.c.l.b16 %v5872
    %v5905 = vunpack.c.l.b16 %v5873
    %v5906 = vunpack.c.l.b16 %v5874
    %v5907 = vunpack.c.l.b16 %v5875
    %v5908 = vpack.c.b16 %v5893, %v5892
    %v5909 = vpack.c.b16 %v5895, %v5894
    %v5910 = vpack.c.b16 %v5897, %v5896
    %v5911 = vpack.c.b16 %v5899, %v5898
    %v5912 = vpack.c.b16 %v5901, %v5900
    %v5913 = vpack.c.b16 %v5903, %v5902
    %v5914 = vpack.c.b16 %v5905, %v5904
    %v5915 = vpack.c.b16 %v5907, %v5906
    %5924 = vmatprep.subr.bf16.mxu0 0
    %5925 = vmatpush1.bf16.msra.mxu0 %v5908
    %5926 = vmatprep.subr.bf16.mxu0 0
    %5927 = vmatpush1.bf16.msra.mxu0 %v5909
    %5928 = vmatprep.subr.bf16.mxu0 0
    %5929 = vmatpush1.bf16.msra.mxu0 %v5910
    %5930 = vmatprep.subr.bf16.mxu0 0
    %5931 = vmatpush1.bf16.msra.mxu0 %v5911
    %5932 = vmatprep.subr.bf16.mxu0 0
    %5933 = vmatpush1.bf16.msra.mxu0 %v5912
    %5934 = vmatprep.subr.bf16.mxu0 0
    %5935 = vmatpush1.bf16.msra.mxu0 %v5913
    %5936 = vmatprep.subr.bf16.mxu0 0
    %5937 = vmatpush1.bf16.msra.mxu0 %v5914
    %5938 = vmatprep.subr.bf16.mxu0 0
    %5939 = vmatpush1.bf16.msra.mxu0 %v5915
    %5940 = vmatprep.subr.bf16.mxu0 0
    %5941 = vmatpush1.bf16.msra.mxu0 0
    %5942 = vmatprep.subr.bf16.mxu0 0
    %5943 = vmatpush1.bf16.msra.mxu0 0
    %5944 = vmatprep.subr.bf16.mxu0 0
    %5945 = vmatpush1.bf16.msra.mxu0 0
    %5946 = vmatprep.subr.bf16.mxu0 0
    %5947 = vmatpush1.bf16.msra.mxu0 0
    %5948 = vmatprep.subr.bf16.mxu0 0
    %5949 = vmatpush1.bf16.msra.mxu0 0
    %5950 = vmatprep.subr.bf16.mxu0 0
    %5951 = vmatpush1.bf16.msra.mxu0 0
    %5952 = vmatprep.subr.bf16.mxu0 0
    %5953 = vmatpush1.bf16.msra.mxu0 0
    %5954 = vmatprep.subr.bf16.mxu0 0
    %5955 = vmatpush1.bf16.msra.mxu0 0
    %5956 = vmatprep.mubr.bf16.mxu0 0
    %5957 = vmatmul.mubr.bf16.gmra.mrb[0].mxu0 %v5859
    %v5958 = vpop.f32.mrb[0].mxu0
    %v5959 = vadd.f32 0.0, %v5958
    %v5960 = vpop.f32.mrb[0].mxu0
    %v5961 = vpop.f32.mrb[0].mxu0
    %v5962 = vpop.f32.mrb[0].mxu0
    %5963 = vdwg.mxu0
    %v5964 = vpack.c.bf16 %v5959, %v5959
    %v5965 = vld [vmem:[%s6] sm:$0xff]
    %v5966 = vld [vmem:[%s6 + $0x8] sm:$0xff]
    %v5967 = vld [vmem:[%s6 + $0x10] sm:$0xff]
    %v5968 = vld [vmem:[%s6 + $0x18] sm:$0xff]
    %v5969 = vld [vmem:[%s6 + $0x20] sm:$0xff]
    %v5970 = vld [vmem:[%s6 + $0x28] sm:$0xff]
    %v5971 = vld [vmem:[%s6 + $0x30] sm:$0xff]
    %v5972 = vld [vmem:[%s6 + $0x38] sm:$0xff]
    %v5973 = vld [vmem:[%s6 + $0x40] sm:$0xff]
    %v5974 = vld [vmem:[%s6 + $0x48] sm:$0xff]
    %v5975 = vld [vmem:[%s6 + $0x50] sm:$0xff]
    %v5976 = vld [vmem:[%s6 + $0x58] sm:$0xff]
    %v5977 = vld [vmem:[%s6 + $0x60] sm:$0xff]
    %v5978 = vld [vmem:[%s6 + $0x68] sm:$0xff]
    %v5979 = vld [vmem:[%s6 + $0x70] sm:$0xff]
    %v5980 = vld [vmem:[%s6 + $0x78] sm:$0xff]
    %v5981 = vld [vmem:[%s6 + $0x80] sm:$0xff]
    %v5982 = vld [vmem:[%s6 + $0x88] sm:$0xff]
    %v5983 = vld [vmem:[%s6 + $0x90] sm:$0xff]
    %v5984 = vld [vmem:[%s6 + $0x98] sm:$0xff]
    %v5985 = vld [vmem:[%s6 + $0xa0] sm:$0xff]
    %v5986 = vld [vmem:[%s6 + $0xa8] sm:$0xff]
    %v5987 = vld [vmem:[%s6 + $0xb0] sm:$0xff]
    %v5988 = vld [vmem:[%s6 + $0xb8] sm:$0xff]
    %v5989 = vld [vmem:[%s6 + $0xc0] sm:$0xff]
    %v5990 = vld [vmem:[%s6 + $0xc8] sm:$0xff]
    %v5991 = vld [vmem:[%s6 + $0xd0] sm:$0xff]
    %v5992 = vld [vmem:[%s6 + $0xd8] sm:$0xff]
    %v5993 = vld [vmem:[%s6 + $0xe0] sm:$0xff]
    %v5994 = vld [vmem:[%s6 + $0xe8] sm:$0xff]
    %v5995 = vld [vmem:[%s6 + $0xf0] sm:$0xff]
    %v5996 = vld [vmem:[%s6 + $0xf8] sm:$0xff]
    %v5997 = vld [vmem:[%s6 + $0x100] sm:$0xff]
    %v5998 = vld [vmem:[%s6 + $0x108] sm:$0xff]
    %v5999 = vld [vmem:[%s6 + $0x110] sm:$0xff]
    %v6000 = vld [vmem:[%s6 + $0x118] sm:$0xff]
    %v6001 = vld [vmem:[%s6 + $0x120] sm:$0xff]
    %v6002 = vld [vmem:[%s6 + $0x128] sm:$0xff]
    %v6003 = vld [vmem:[%s6 + $0x130] sm:$0xff]
    %v6004 = vld [vmem:[%s6 + $0x138] sm:$0xff]
    %v6005 = vld [vmem:[%s6 + $0x140] sm:$0xff]
    %v6006 = vld [vmem:[%s6 + $0x148] sm:$0xff]
    %v6007 = vld [vmem:[%s6 + $0x150] sm:$0xff]
    %v6008 = vld [vmem:[%s6 + $0x158] sm:$0xff]
    %v6009 = vld [vmem:[%s6 + $0x160] sm:$0xff]
    %v6010 = vld [vmem:[%s6 + $0x168] sm:$0xff]
    %v6011 = vld [vmem:[%s6 + $0x170] sm:$0xff]
    %v6012 = vld [vmem:[%s6 + $0x178] sm:$0xff]
    %v6013 = vld [vmem:[%s6 + $0x180] sm:$0xff]
    %v6014 = vld [vmem:[%s6 + $0x188] sm:$0xff]
    %v6015 = vld [vmem:[%s6 + $0x190] sm:$0xff]
    %v6016 = vld [vmem:[%s6 + $0x198] sm:$0xff]
    %v6017 = vld [vmem:[%s6 + $0x1a0] sm:$0xff]
    %v6018 = vld [vmem:[%s6 + $0x1a8] sm:$0xff]
    %v6019 = vld [vmem:[%s6 + $0x1b0] sm:$0xff]
    %v6020 = vld [vmem:[%s6 + $0x1b8] sm:$0xff]
    %v6021 = vld [vmem:[%s6 + $0x1c0] sm:$0xff]
    %v6022 = vld [vmem:[%s6 + $0x1c8] sm:$0xff]
    %v6023 = vld [vmem:[%s6 + $0x1d0] sm:$0xff]
    %v6024 = vld [vmem:[%s6 + $0x1d8] sm:$0xff]
    %v6025 = vld [vmem:[%s6 + $0x1e0] sm:$0xff]
    %v6026 = vld [vmem:[%s6 + $0x1e8] sm:$0xff]
    %v6027 = vld [vmem:[%s6 + $0x1f0] sm:$0xff]
    %v6028 = vld [vmem:[%s6 + $0x1f8] sm:$0xff]
    %v6029 = vld [vmem:[%s7] sm:$0xf]
    %v6031 = vlaneseq
    %v6032 = vshrl.u32 %v6031, 7
    %v6033 = vsub.s32 0, %v6032
    %v6034 = vrot.slane %v6029, %v6033
    %v6035 = vlaneseq
    %v6036 = vshrl.u32 %v6035, 7
    %v6037 = vsub.s32 1, %v6036
    %v6038 = vrot.slane %v6029, %v6037
    %v6039 = vlaneseq
    %v6040 = vshrl.u32 %v6039, 7
    %v6041 = vsub.s32 2, %v6040
    %v6042 = vrot.slane %v6029, %v6041
    %v6043 = vlaneseq
    %v6044 = vshrl.u32 %v6043, 7
    %v6045 = vsub.s32 3, %v6044
    %v6046 = vrot.slane %v6029, %v6045
    %v6115 = vunpack.c.l.b16 %v5965
    %v6116 = vunpack.c.h.b16 %v5965
    %v6117 = vunpack.c.l.b16 %v5966
    %v6118 = vunpack.c.h.b16 %v5966
    %v6119 = vunpack.c.l.b16 %v5967
    %v6120 = vunpack.c.h.b16 %v5967
    %v6121 = vunpack.c.l.b16 %v5968
    %v6122 = vunpack.c.h.b16 %v5968
    %v6123 = vunpack.c.l.b16 %v5969
    %v6124 = vunpack.c.h.b16 %v5969
    %v6125 = vunpack.c.l.b16 %v5970
    %v6126 = vunpack.c.h.b16 %v5970
    %v6127 = vunpack.c.l.b16 %v5971
    %v6128 = vunpack.c.h.b16 %v5971
    %v6129 = vunpack.c.l.b16 %v5972
    %v6130 = vunpack.c.h.b16 %v5972
    %v6131 = vunpack.c.l.b16 %v5973
    %v6132 = vunpack.c.h.b16 %v5973
    %v6133 = vunpack.c.l.b16 %v5974
    %v6134 = vunpack.c.h.b16 %v5974
    %v6135 = vunpack.c.l.b16 %v5975
    %v6136 = vunpack.c.h.b16 %v5975
    %v6137 = vunpack.c.l.b16 %v5976
    %v6138 = vunpack.c.h.b16 %v5976
    %v6139 = vunpack.c.l.b16 %v5977
    %v6140 = vunpack.c.h.b16 %v5977
    %v6141 = vunpack.c.l.b16 %v5978
    %v6142 = vunpack.c.h.b16 %v5978
    %v6143 = vunpack.c.l.b16 %v5979
    %v6144 = vunpack.c.h.b16 %v5979
    %v6145 = vunpack.c.l.b16 %v5980
    %v6146 = vunpack.c.h.b16 %v5980
    %v6147 = vunpack.c.l.b16 %v5981
    %v6148 = vunpack.c.h.b16 %v5981
    %v6149 = vunpack.c.l.b16 %v5982
    %v6150 = vunpack.c.h.b16 %v5982
    %v6151 = vunpack.c.l.b16 %v5983
    %v6152 = vunpack.c.h.b16 %v5983
    %v6153 = vunpack.c.l.b16 %v5984
    %v6154 = vunpack.c.h.b16 %v5984
    %v6155 = vunpack.c.l.b16 %v5985
    %v6156 = vunpack.c.h.b16 %v5985
    %v6157 = vunpack.c.l.b16 %v5986
    %v6158 = vunpack.c.h.b16 %v5986
    %v6159 = vunpack.c.l.b16 %v5987
    %v6160 = vunpack.c.h.b16 %v5987
    %v6161 = vunpack.c.l.b16 %v5988
    %v6162 = vunpack.c.h.b16 %v5988
    %v6163 = vunpack.c.l.b16 %v5989
    %v6164 = vunpack.c.h.b16 %v5989
    %v6165 = vunpack.c.l.b16 %v5990
    %v6166 = vunpack.c.h.b16 %v5990
    %v6167 = vunpack.c.l.b16 %v5991
    %v6168 = vunpack.c.h.b16 %v5991
    %v6169 = vunpack.c.l.b16 %v5992
    %v6170 = vunpack.c.h.b16 %v5992
    %v6171 = vunpack.c.l.b16 %v5993
    %v6172 = vunpack.c.h.b16 %v5993
    %v6173 = vunpack.c.l.b16 %v5994
    %v6174 = vunpack.c.h.b16 %v5994
    %v6175 = vunpack.c.l.b16 %v5995
    %v6176 = vunpack.c.h.b16 %v5995
    %v6177 = vunpack.c.l.b16 %v5996
    %v6178 = vunpack.c.h.b16 %v5996
    %v6179 = vunpack.c.l.b16 %v5997
    %v6180 = vunpack.c.h.b16 %v5997
    %v6181 = vunpack.c.l.b16 %v5998
    %v6182 = vunpack.c.h.b16 %v5998
    %v6183 = vunpack.c.l.b16 %v5999
    %v6184 = vunpack.c.h.b16 %v5999
    %v6185 = vunpack.c.l.b16 %v6000
    %v6186 = vunpack.c.h.b16 %v6000
    %v6187 = vunpack.c.l.b16 %v6001
    %v6188 = vunpack.c.h.b16 %v6001
    %v6189 = vunpack.c.l.b16 %v6002
    %v6190 = vunpack.c.h.b16 %v6002
    %v6191 = vunpack.c.l.b16 %v6003
    %v6192 = vunpack.c.h.b16 %v6003
    %v6193 = vunpack.c.l.b16 %v6004
    %v6194 = vunpack.c.h.b16 %v6004
    %v6195 = vunpack.c.l.b16 %v6005
    %v6196 = vunpack.c.h.b16 %v6005
    %v6197 = vunpack.c.l.b16 %v6006
    %v6198 = vunpack.c.h.b16 %v6006
    %v6199 = vunpack.c.l.b16 %v6007
    %v6200 = vunpack.c.h.b16 %v6007
    %v6201 = vunpack.c.l.b16 %v6008
    %v6202 = vunpack.c.h.b16 %v6008
    %v6203 = vunpack.c.l.b16 %v6009
    %v6204 = vunpack.c.h.b16 %v6009
    %v6205 = vunpack.c.l.b16 %v6010
    %v6206 = vunpack.c.h.b16 %v6010
    %v6207 = vunpack.c.l.b16 %v6011
    %v6208 = vunpack.c.h.b16 %v6011
    %v6209 = vunpack.c.l.b16 %v6012
    %v6210 = vunpack.c.h.b16 %v6012
    %v6211 = vunpack.c.l.b16 %v6013
    %v6212 = vunpack.c.h.b16 %v6013
    %v6213 = vunpack.c.l.b16 %v6014
    %v6214 = vunpack.c.h.b16 %v6014
    %v6215 = vunpack.c.l.b16 %v6015
    %v6216 = vunpack.c.h.b16 %v6015
    %v6217 = vunpack.c.l.b16 %v6016
    %v6218 = vunpack.c.h.b16 %v6016
    %v6219 = vunpack.c.l.b16 %v6017
    %v6220 = vunpack.c.h.b16 %v6017
    %v6221 = vunpack.c.l.b16 %v6018
    %v6222 = vunpack.c.h.b16 %v6018
    %v6223 = vunpack.c.l.b16 %v6019
    %v6224 = vunpack.c.h.b16 %v6019
    %v6225 = vunpack.c.l.b16 %v6020
    %v6226 = vunpack.c.h.b16 %v6020
    %v6227 = vunpack.c.l.b16 %v6021
    %v6228 = vunpack.c.h.b16 %v6021
    %v6229 = vunpack.c.l.b16 %v6022
    %v6230 = vunpack.c.h.b16 %v6022
    %v6231 = vunpack.c.l.b16 %v6023
    %v6232 = vunpack.c.h.b16 %v6023
    %v6233 = vunpack.c.l.b16 %v6024
    %v6234 = vunpack.c.h.b16 %v6024
    %v6235 = vunpack.c.l.b16 %v6025
    %v6236 = vunpack.c.h.b16 %v6025
    %v6237 = vunpack.c.l.b16 %v6026
    %v6238 = vunpack.c.h.b16 %v6026
    %v6239 = vunpack.c.l.b16 %v6027
    %v6240 = vunpack.c.h.b16 %v6027
    %v6241 = vunpack.c.l.b16 %v6028
    %v6242 = vunpack.c.h.b16 %v6028
    %v6243 = vpack.c.b16 %v6119, %v6115
    %v6244 = vpack.c.b16 %v6120, %v6116
    %v6245 = vpack.c.b16 %v6121, %v6117
    %v6246 = vpack.c.b16 %v6122, %v6118
    %v6247 = vpack.c.b16 %v6127, %v6123
    %v6248 = vpack.c.b16 %v6128, %v6124
    %v6249 = vpack.c.b16 %v6129, %v6125
    %v6250 = vpack.c.b16 %v6130, %v6126
    %v6251 = vpack.c.b16 %v6135, %v6131
    %v6252 = vpack.c.b16 %v6136, %v6132
    %v6253 = vpack.c.b16 %v6137, %v6133
    %v6254 = vpack.c.b16 %v6138, %v6134
    %v6255 = vpack.c.b16 %v6143, %v6139
    %v6256 = vpack.c.b16 %v6144, %v6140
    %v6257 = vpack.c.b16 %v6145, %v6141
    %v6258 = vpack.c.b16 %v6146, %v6142
    %v6259 = vpack.c.b16 %v6151, %v6147
    %v6260 = vpack.c.b16 %v6152, %v6148
    %v6261 = vpack.c.b16 %v6153, %v6149
    %v6262 = vpack.c.b16 %v6154, %v6150
    %v6263 = vpack.c.b16 %v6159, %v6155
    %v6264 = vpack.c.b16 %v6160, %v6156
    %v6265 = vpack.c.b16 %v6161, %v6157
    %v6266 = vpack.c.b16 %v6162, %v6158
    %v6267 = vpack.c.b16 %v6167, %v6163
    %v6268 = vpack.c.b16 %v6168, %v6164
    %v6269 = vpack.c.b16 %v6169, %v6165
    %v6270 = vpack.c.b16 %v6170, %v6166
    %v6271 = vpack.c.b16 %v6175, %v6171
    %v6272 = vpack.c.b16 %v6176, %v6172
    %v6273 = vpack.c.b16 %v6177, %v6173
    %v6274 = vpack.c.b16 %v6178, %v6174
    %v6275 = vpack.c.b16 %v6183, %v6179
    %v6276 = vpack.c.b16 %v6184, %v6180
    %v6277 = vpack.c.b16 %v6185, %v6181
    %v6278 = vpack.c.b16 %v6186, %v6182
    %v6279 = vpack.c.b16 %v6191, %v6187
    %v6280 = vpack.c.b16 %v6192, %v6188
    %v6281 = vpack.c.b16 %v6193, %v6189
    %v6282 = vpack.c.b16 %v6194, %v6190
    %v6283 = vpack.c.b16 %v6199, %v6195
    %v6284 = vpack.c.b16 %v6200, %v6196
    %v6285 = vpack.c.b16 %v6201, %v6197
    %v6286 = vpack.c.b16 %v6202, %v6198
    %v6287 = vpack.c.b16 %v6207, %v6203
    %v6288 = vpack.c.b16 %v6208, %v6204
    %v6289 = vpack.c.b16 %v6209, %v6205
    %v6290 = vpack.c.b16 %v6210, %v6206
    %v6291 = vpack.c.b16 %v6215, %v6211
    %v6292 = vpack.c.b16 %v6216, %v6212
    %v6293 = vpack.c.b16 %v6217, %v6213
    %v6294 = vpack.c.b16 %v6218, %v6214
    %v6295 = vpack.c.b16 %v6223, %v6219
    %v6296 = vpack.c.b16 %v6224, %v6220
    %v6297 = vpack.c.b16 %v6225, %v6221
    %v6298 = vpack.c.b16 %v6226, %v6222
    %v6299 = vpack.c.b16 %v6231, %v6227
    %v6300 = vpack.c.b16 %v6232, %v6228
    %v6301 = vpack.c.b16 %v6233, %v6229
    %v6302 = vpack.c.b16 %v6234, %v6230
    %v6303 = vpack.c.b16 %v6239, %v6235
    %v6304 = vpack.c.b16 %v6240, %v6236
    %v6305 = vpack.c.b16 %v6241, %v6237
    %v6306 = vpack.c.b16 %v6242, %v6238
    %6371 = vmatprep.subr.bf16.mxu0 %v6244
    %6372 = vmatpush1.bf16.msra.mxu0 %v6243
    %6373 = vmatprep.subr.bf16.mxu0 %v6248
    %6374 = vmatpush1.bf16.msra.mxu0 %v6247
    %6375 = vmatprep.subr.bf16.mxu0 %v6252
    %6376 = vmatpush1.bf16.msra.mxu0 %v6251
    %6377 = vmatprep.subr.bf16.mxu0 %v6256
    %6378 = vmatpush1.bf16.msra.mxu0 %v6255
    %6379 = vmatprep.subr.bf16.mxu0 %v6260
    %6380 = vmatpush1.bf16.msra.mxu0 %v6259
    %6381 = vmatprep.subr.bf16.mxu0 %v6264
    %6382 = vmatpush1.bf16.msra.mxu0 %v6263
    %6383 = vmatprep.subr.bf16.mxu0 %v6268
    %6384 = vmatpush1.bf16.msra.mxu0 %v6267
    %6385 = vmatprep.subr.bf16.mxu0 %v6272
    %6386 = vmatpush1.bf16.msra.mxu0 %v6271
    %6387 = vmatprep.subr.bf16.mxu0 %v6276
    %6388 = vmatpush1.bf16.msra.mxu0 %v6275
    %6389 = vmatprep.subr.bf16.mxu0 %v6280
    %6390 = vmatpush1.bf16.msra.mxu0 %v6279
    %6391 = vmatprep.subr.bf16.mxu0 %v6284
    %6392 = vmatpush1.bf16.msra.mxu0 %v6283
    %6393 = vmatprep.subr.bf16.mxu0 %v6288
    %6394 = vmatpush1.bf16.msra.mxu0 %v6287
    %6395 = vmatprep.subr.bf16.mxu0 %v6292
    %6396 = vmatpush1.bf16.msra.mxu0 %v6291
    %6397 = vmatprep.subr.bf16.mxu0 %v6296
    %6398 = vmatpush1.bf16.msra.mxu0 %v6295
    %6399 = vmatprep.subr.bf16.mxu0 %v6300
    %6400 = vmatpush1.bf16.msra.mxu0 %v6299
    %6401 = vmatprep.subr.bf16.mxu0 %v6304
    %6402 = vmatpush1.bf16.msra.mxu0 %v6303
    %6403 = vmatprep.mubr.bf16.mxu0 %v5724
    %6404 = vmatmul.mubr.bf16.gmra.mrb[0].mxu0 %v5964
    %v6405 = vpop.f32.mrb[0].mxu0
    %v6406 = vadd.f32 %v6034, %v6405
    %v6407 = vpop.f32.mrb[0].mxu0
    %v6408 = vadd.f32 %v6038, %v6407
    %v6409 = vpop.f32.mrb[0].mxu0
    %v6410 = vpop.f32.mrb[0].mxu0
    %6411 = vdwg.mxu0
    %6412 = vmatprep.subr.bf16.mxu0 %v6246
    %6413 = vmatpush1.bf16.msra.mxu0 %v6245
    %6414 = vmatprep.subr.bf16.mxu0 %v6250
    %6415 = vmatpush1.bf16.msra.mxu0 %v6249
    %6416 = vmatprep.subr.bf16.mxu0 %v6254
    %6417 = vmatpush1.bf16.msra.mxu0 %v6253
    %6418 = vmatprep.subr.bf16.mxu0 %v6258
    %6419 = vmatpush1.bf16.msra.mxu0 %v6257
    %6420 = vmatprep.subr.bf16.mxu0 %v6262
    %6421 = vmatpush1.bf16.msra.mxu0 %v6261
    %6422 = vmatprep.subr.bf16.mxu0 %v6266
    %6423 = vmatpush1.bf16.msra.mxu0 %v6265
    %6424 = vmatprep.subr.bf16.mxu0 %v6270
    %6425 = vmatpush1.bf16.msra.mxu0 %v6269
    %6426 = vmatprep.subr.bf16.mxu0 %v6274
    %6427 = vmatpush1.bf16.msra.mxu0 %v6273
    %6428 = vmatprep.subr.bf16.mxu0 %v6278
    %6429 = vmatpush1.bf16.msra.mxu0 %v6277
    %6430 = vmatprep.subr.bf16.mxu0 %v6282
    %6431 = vmatpush1.bf16.msra.mxu0 %v6281
    %6432 = vmatprep.subr.bf16.mxu0 %v6286
    %6433 = vmatpush1.bf16.msra.mxu0 %v6285
    %6434 = vmatprep.subr.bf16.mxu0 %v6290
    %6435 = vmatpush1.bf16.msra.mxu0 %v6289
    %6436 = vmatprep.subr.bf16.mxu0 %v6294
    %6437 = vmatpush1.bf16.msra.mxu0 %v6293
    %6438 = vmatprep.subr.bf16.mxu0 %v6298
    %6439 = vmatpush1.bf16.msra.mxu0 %v6297
    %6440 = vmatprep.subr.bf16.mxu0 %v6302
    %6441 = vmatpush1.bf16.msra.mxu0 %v6301
    %6442 = vmatprep.subr.bf16.mxu0 %v6306
    %6443 = vmatpush1.bf16.msra.mxu0 %v6305
    %6444 = vmatprep.mubr.bf16.mxu0 %v5724
    %6445 = vmatmul.mubr.bf16.gmra.mrb[0].mxu0 %v5964
    %v6446 = vpop.f32.mrb[0].mxu0
    %v6447 = vadd.f32 %v6042, %v6446
    %v6448 = vpop.f32.mrb[0].mxu0
    %v6449 = vadd.f32 %v6046, %v6448
    %v6450 = vpop.f32.mrb[0].mxu0
    %v6451 = vpop.f32.mrb[0].mxu0
    %6452 = vdwg.mxu0
    %v6453 = vxor.u32 %v6406, 2147483648
    %v6454 = vmul.f32 %v6453, 1.442695
    %v6455 = vpow.pop %v6454
    %v6456 = vadd.f32 %v6455, 1.0
    %v6457 = vrcp.pop %v6456
    %v6458 = vmul.f32 1.0, %v6457
    %v6459 = vxor.u32 %v6408, 2147483648
    %v6460 = vmul.f32 %v6459, 1.442695
    %v6461 = vpow.pop %v6460
    %v6462 = vadd.f32 %v6461, 1.0
    %v6463 = vrcp.pop %v6462
    %v6464 = vmul.f32 1.0, %v6463
    %v6465 = vtanh.pop %v6447
    %v6466 = vxor.u32 %v6449, 2147483648
    %v6467 = vmul.f32 %v6466, 1.442695
    %v6468 = vpow.pop %v6467
    %v6469 = vadd.f32 %v6468, 1.0
    %v6470 = vrcp.pop %v6469
    %v6471 = vmul.f32 1.0, %v6470
    %v6472 = vmul.f32 %v6464, %v5721
    %v6473 = vmul.f32 %v6458, %v6465
    %v6474 = vadd.f32 %v6472, %v6473
    %v6475 = vtanh.pop %v6474
    %v6476 = vmul.f32 %v6471, %v6475
    %v6477 = vpack.c.bf16 %v6476, %v6476
    %v6478 = vld [vmem:[%s8] sm:$0xf]
    %v6479 = vld [vmem:[%s8 + $0x4] sm:$0xf]
    %v6480 = vld [vmem:[%s8 + $0x8] sm:$0xf]
    %v6481 = vld [vmem:[%s8 + $0xc] sm:$0xf]
    %v6482 = vld [vmem:[%s8 + $0x10] sm:$0xf]
    %v6483 = vld [vmem:[%s8 + $0x14] sm:$0xf]
    %v6484 = vld [vmem:[%s8 + $0x18] sm:$0xf]
    %v6485 = vld [vmem:[%s8 + $0x1c] sm:$0xf]
    %v6486 = vld [vmem:[%s8 + $0x20] sm:$0xf]
    %v6487 = vld [vmem:[%s8 + $0x24] sm:$0xf]
    %v6488 = vld [vmem:[%s8 + $0x28] sm:$0xf]
    %v6489 = vld [vmem:[%s8 + $0x2c] sm:$0xf]
    %v6490 = vld [vmem:[%s8 + $0x30] sm:$0xf]
    %v6491 = vld [vmem:[%s8 + $0x34] sm:$0xf]
    %v6492 = vld [vmem:[%s8 + $0x38] sm:$0xf]
    %v6493 = vld [vmem:[%s8 + $0x3c] sm:$0xf]
    %v6494 = vld [vmem:[%s9] sm:$0x1]
    %v6496 = vlaneseq
    %v6497 = vshrl.u32 %v6496, 7
    %v6498 = vsub.s32 0, %v6497
    %v6499 = vrot.slane %v6494, %v6498
    %v6517 = vunpack.c.l.b16 %v6478
    %v6518 = vunpack.c.l.b16 %v6479
    %v6519 = vunpack.c.l.b16 %v6480
    %v6520 = vunpack.c.l.b16 %v6481
    %v6521 = vunpack.c.l.b16 %v6482
    %v6522 = vunpack.c.l.b16 %v6483
    %v6523 = vunpack.c.l.b16 %v6484
    %v6524 = vunpack.c.l.b16 %v6485
    %v6525 = vunpack.c.l.b16 %v6486
    %v6526 = vunpack.c.l.b16 %v6487
    %v6527 = vunpack.c.l.b16 %v6488
    %v6528 = vunpack.c.l.b16 %v6489
    %v6529 = vunpack.c.l.b16 %v6490
    %v6530 = vunpack.c.l.b16 %v6491
    %v6531 = vunpack.c.l.b16 %v6492
    %v6532 = vunpack.c.l.b16 %v6493
    %v6533 = vpack.c.b16 %v6518, %v6517
    %v6534 = vpack.c.b16 %v6520, %v6519
    %v6535 = vpack.c.b16 %v6522, %v6521
    %v6536 = vpack.c.b16 %v6524, %v6523
    %v6537 = vpack.c.b16 %v6526, %v6525
    %v6538 = vpack.c.b16 %v6528, %v6527
    %v6539 = vpack.c.b16 %v6530, %v6529
    %v6540 = vpack.c.b16 %v6532, %v6531
    %6549 = vmatprep.subr.bf16.mxu0 0
    %6550 = vmatpush1.bf16.msra.mxu0 %v6533
    %6551 = vmatprep.subr.bf16.mxu0 0
    %6552 = vmatpush1.bf16.msra.mxu0 %v6534
    %6553 = vmatprep.subr.bf16.mxu0 0
    %6554 = vmatpush1.bf16.msra.mxu0 %v6535
    %6555 = vmatprep.subr.bf16.mxu0 0
    %6556 = vmatpush1.bf16.msra.mxu0 %v6536
    %6557 = vmatprep.subr.bf16.mxu0 0
    %6558 = vmatpush1.bf16.msra.mxu0 %v6537
    %6559 = vmatprep.subr.bf16.mxu0 0
    %6560 = vmatpush1.bf16.msra.mxu0 %v6538
    %6561 = vmatprep.subr.bf16.mxu0 0
    %6562 = vmatpush1.bf16.msra.mxu0 %v6539
    %6563 = vmatprep.subr.bf16.mxu0 0
    %6564 = vmatpush1.bf16.msra.mxu0 %v6540
    %6565 = vmatprep.subr.bf16.mxu0 0
    %6566 = vmatpush1.bf16.msra.mxu0 0
    %6567 = vmatprep.subr.bf16.mxu0 0
    %6568 = vmatpush1.bf16.msra.mxu0 0
    %6569 = vmatprep.subr.bf16.mxu0 0
    %6570 = vmatpush1.bf16.msra.mxu0 0
    %6571 = vmatprep.subr.bf16.mxu0 0
    %6572 = vmatpush1.bf16.msra.mxu0 0
    %6573 = vmatprep.subr.bf16.mxu0 0
    %6574 = vmatpush1.bf16.msra.mxu0 0
    %6575 = vmatprep.subr.bf16.mxu0 0
    %6576 = vmatpush1.bf16.msra.mxu0 0
    %6577 = vmatprep.subr.bf16.mxu0 0
    %6578 = vmatpush1.bf16.msra.mxu0 0
    %6579 = vmatprep.subr.bf16.mxu0 0
    %6580 = vmatpush1.bf16.msra.mxu0 0
    %6581 = vmatprep.mubr.bf16.mxu0 0
    %6582 = vmatmul.mubr.bf16.gmra.mrb[0].mxu0 %v6477
    %v6583 = vpop.f32.mrb[0].mxu0
    %v6584 = vadd.f32 %v6499, %v6583
    %v6585 = vpop.f32.mrb[0].mxu0
    %v6586 = vpop.f32.mrb[0].mxu0
    %v6587 = vpop.f32.mrb[0].mxu0
    %6588 = vdwg.mxu0
    %s6589 = scalar_lea.vmem %s10, 48
    %6590 = vst [vmem:[%s6589] sm:$0xff] %v6584
    // Predicated region
    $region46: #{seq2seq_forward.1} parent=1 // pred_check
      _
    $region47: #{seq2seq_forward.1} parent=1 // pred_check_branch
      %6592 = sbr.rel (0) target = $region49
    $region48: #{seq2seq_forward.1} parent=1 // pred_region
      _
    $region49: #{seq2seq_forward.1} parent=1 // pred_fallthru
      _
    // Predicated region
    $region50: #{seq2seq_forward.1} parent=1 // pred_check
      _
    $region51: #{seq2seq_forward.1} parent=1 // pred_check_branch
      %6594 = sbr.rel (0) target = $region53
    $region52: #{seq2seq_forward.1} parent=1 // pred_region
      _
    $region53: #{seq2seq_forward.1} parent=1 // pred_fallthru
      _
    %6595 = vsyncpa [#allocation3], 1

</llo_original>
